<compile_context>
chip_gen: v7x
topology: tpu7x:2x2x1
jax: 0.10.0
libtpu: 0.0.40
codegen_flags: <defaults>
</compile_context>

<pallas_src>
import jax
import jax.numpy as jnp
from jax import lax
from jax.experimental import pallas as pl
from jax.experimental.pallas import tpu as pltpu

C_MID = 128  # output channels of conv_out3 / conv_out4


# ---------------------------------------------------------------------------
# Fused kernel: conv_out3 (s2) + conv_out4 (s1) + conv_to_node, all in VMEM
# ---------------------------------------------------------------------------
def _make_fused_kernel(h, w, num_points):
    wf = w + 2          # padded row width (flat stride)
    L = h * wf          # flat interior length
    Lpad = (h + 3) * wf # zero-bordered flat frame length

    def kernel(x3_ref, x4_ref, w1_ref, b1_ref, w2_ref, b2_ref,
               w3a_ref, w3b_ref, b3_ref, m_ref, o_ref, f3_ref, f4_ref):
        mask = m_ref[...]                                     # (L, 1) f32

        # ---- stage 1: conv_out3 (3x3, stride 2) + BN + ReLU ----------------
        acc = jnp.zeros((L, C_MID), jnp.float32)
        for t in range(9):
            dy, dx = t // 3, t % 3
            phase = (dy & 1) * 2 + (dx & 1)
            off = (dy >> 1) * wf + (dx >> 1)
            win = x3_ref[0, phase, pl.ds(off, L), :]          # (L, c3) bf16
            acc = acc + jnp.dot(win, w1_ref[t],
                                preferred_element_type=jnp.float32)
        r = jnp.maximum(acc + b1_ref[...], 0.0) * mask
        f3_ref[...] = jnp.zeros(f3_ref.shape, f3_ref.dtype)   # zero border
        f3_ref[pl.ds(w + 3, L), :] = r.astype(f3_ref.dtype)   # interior

        # ---- stage 2: conv_out4 (3x3, stride 1) + BN + ReLU ----------------
        acc = jnp.zeros((L, C_MID), jnp.float32)
        for t in range(9):
            dy, dx = t // 3, t % 3
            off = dy * wf + dx
            win = x4_ref[0, pl.ds(off, L), :]                 # (L, c4) bf16
            acc = acc + jnp.dot(win, w2_ref[t],
                                preferred_element_type=jnp.float32)
        r = jnp.maximum(acc + b2_ref[...], 0.0) * mask
        f4_ref[...] = jnp.zeros(f4_ref.shape, f4_ref.dtype)
        f4_ref[pl.ds(w + 3, L), :] = r.astype(f4_ref.dtype)

        # ---- stage 3: conv_to_node over the (virtual) channel concat -------
        acc = jnp.zeros((L, num_points), jnp.float32)
        for t in range(9):
            dy, dx = t // 3, t % 3
            off = dy * wf + dx
            xa = f3_ref[pl.ds(off, L), :]                     # (L, 128) bf16
            xb = f4_ref[pl.ds(off, L), :]
            acc = acc + jnp.dot(xa, w3a_ref[t],
                                preferred_element_type=jnp.float32)
            acc = acc + jnp.dot(xb, w3b_ref[t],
                                preferred_element_type=jnp.float32)
        res = jnp.maximum(acc + b3_ref[...], 0.0)             # (L, P) f32
        o_ref[0] = jnp.transpose(res)                         # (P, L) channel-major

    return kernel


def _fused_map_to_node(x3_phases, x4_flat, w1, b1, w2, b2, w3a, w3b, b3, mask,
                       *, h, w, num_points):
    N = x4_flat.shape[0]
    c3 = x3_phases.shape[-1]
    c4 = x4_flat.shape[-1]
    wf = w + 2
    L = h * wf
    Lpad = (h + 3) * wf
    Lp1 = (h + 2) * wf
    kernel = _make_fused_kernel(h, w, num_points)
    return pl.pallas_call(
        kernel,
        out_shape=jax.ShapeDtypeStruct((N, num_points, L), jnp.float32),
        grid=(N,),
        in_specs=[
            pl.BlockSpec((1, 4, Lp1, c3), lambda n: (n, 0, 0, 0)),
            pl.BlockSpec((1, Lpad, c4), lambda n: (n, 0, 0)),
            pl.BlockSpec((9, c3, C_MID), lambda n: (0, 0, 0)),
            pl.BlockSpec((1, C_MID), lambda n: (0, 0)),
            pl.BlockSpec((9, c4, C_MID), lambda n: (0, 0, 0)),
            pl.BlockSpec((1, C_MID), lambda n: (0, 0)),
            pl.BlockSpec((9, C_MID, num_points), lambda n: (0, 0, 0)),
            pl.BlockSpec((9, C_MID, num_points), lambda n: (0, 0, 0)),
            pl.BlockSpec((1, num_points), lambda n: (0, 0)),
            pl.BlockSpec((L, 1), lambda n: (0, 0)),
        ],
        out_specs=pl.BlockSpec((1, num_points, L), lambda n: (n, 0, 0)),
        scratch_shapes=[pltpu.VMEM((Lpad, C_MID), jnp.bfloat16),
                        pltpu.VMEM((Lpad, C_MID), jnp.bfloat16)],
        compiler_params=pltpu.CompilerParams(
            dimension_semantics=("parallel",)),
    )(x3_phases, x4_flat, w1, b1, w2, b2, w3a, w3b, b3, mask)


# ---------------------------------------------------------------------------
# Parameter init + BN folding (synthetic, PyTorch (C_out, C_in, 3, 3) layout)
# ---------------------------------------------------------------------------
def init_conv_bn(key, c_in, c_out):
    kw, kb, kg, kbe, km = jax.random.split(key, 5)
    fan_in = 9 * c_in
    return {
        "w": jax.random.normal(kw, (c_out, c_in, 3, 3), jnp.float32)
             * jnp.sqrt(2.0 / fan_in),
        "conv_b": 0.01 * jax.random.normal(kb, (c_out,), jnp.float32),
        "gamma": 1.0 + 0.1 * jax.random.normal(kg, (c_out,), jnp.float32),
        "beta": 0.1 * jax.random.normal(kbe, (c_out,), jnp.float32),
        "mean": 0.1 * jax.random.normal(km, (c_out,), jnp.float32),
        "var": jnp.ones((c_out,), jnp.float32),
    }


def init_map_to_node(key, in_channels, num_points):
    _, _, c3, c4 = in_channels
    k3, k4, kn = jax.random.split(key, 3)
    return {
        "conv_out3": init_conv_bn(k3, c3, C_MID),
        "conv_out4": init_conv_bn(k4, c4, C_MID),
        "conv_to_node": init_conv_bn(kn, 2 * C_MID, num_points),
    }


def _fold_bn(p, eps=1e-5):
    # -> weights (9, C_in, C_out), tap index t = ky*3 + kx; BN(eval)+conv bias folded.
    scale = p["gamma"] / jnp.sqrt(p["var"] + eps)
    bias = p["beta"] + (p["conv_b"] - p["mean"]) * scale
    c_out, c_in = p["w"].shape[0], p["w"].shape[1]
    w9 = jnp.transpose(p["w"], (2, 3, 1, 0)).reshape(9, c_in, c_out)
    return (w9 * scale[None, None, :]).astype(jnp.bfloat16), bias


# ---------------------------------------------------------------------------
# Layout prep (cheap XLA passes: pad / even-odd phase split, no 9x blowup)
# ---------------------------------------------------------------------------
def _prep_stride1_input(x_nhwc, h, w):
    N, _, _, C = x_nhwc.shape
    xp = jnp.pad(x_nhwc, ((0, 0), (1, 2), (1, 1), (0, 0)))          # (N,h+3,w+2,C)
    return xp.reshape(N, (h + 3) * (w + 2), C).astype(jnp.bfloat16)


def _prep_stride2_phases(x_nhwc, h, w):
    N, H, W, C = x_nhwc.shape
    xp = jnp.pad(x_nhwc, ((0, 0), (1, 1), (1, 1), (0, 0)))          # (N,H+2,W+2,C)
    phases = []
    for a in range(2):
        for b in range(2):
            ph = xp[:, a::2, b::2, :]                               # (N,h+1,w+1,C)
            ph = jnp.pad(ph, ((0, 0), (0, (h + 2) - ph.shape[1]),
                              (0, (w + 2) - ph.shape[2]), (0, 0)))
            phases.append(ph.reshape(N, (h + 2) * (w + 2), C))
    return jnp.stack(phases, axis=1).astype(jnp.bfloat16)           # (N,4,Lp1,C)


# ---------------------------------------------------------------------------
# Forward pass (matches MapToNode.forward, BN in eval mode)
# ---------------------------------------------------------------------------
@jax.jit
def map_to_node_forward(params, in3_nchw, in4_nchw):
    in3 = jnp.transpose(in3_nchw, (0, 2, 3, 1))                     # NCHW -> NHWC
    in4 = jnp.transpose(in4_nchw, (0, 2, 3, 1))
    N, h, w, _ = in4.shape
    _, H, W, _ = in3.shape
    assert H == 2 * h and W == 2 * w, "out3 must be 2x the spatial size of out4"

    wf = w + 2
    L = h * wf
    # 1.0 on valid output columns, 0.0 on the 2 junk (pad-stride) columns.
    mask = (jnp.arange(L) % wf < w).astype(jnp.float32)[:, None]    # (L, 1)

    w1, b1 = _fold_bn(params["conv_out3"])                          # (9, c3, 128)
    w2, b2 = _fold_bn(params["conv_out4"])                          # (9, c4, 128)
    w3, b3 = _fold_bn(params["conv_to_node"])                       # (9, 256, P)
    num_points = params["conv_to_node"]["w"].shape[0]
    w3a, w3b = w3[:, :C_MID, :], w3[:, C_MID:, :]                   # concat split

    x3 = _prep_stride2_phases(in3, h, w)
    x4 = _prep_stride1_input(in4, h, w)

    out = _fused_map_to_node(
        x3, x4, w1, b1.reshape(1, -1), w2, b2.reshape(1, -1),
        w3a, w3b, b3.reshape(1, -1), mask,
        h=h, w=w, num_points=num_points)                            # (N, P, h*wf)

    # drop the 2 junk columns -> (N, P, h*w)  (== NCHW out.view(N, P, -1))
    out = out.reshape(N, num_points, h, wf)[:, :, :, :w]
    return out.reshape(N, num_points, h * w)


# ---------------------------------------------------------------------------
# Plain-JAX reference (numerical cross-check)
# ---------------------------------------------------------------------------
def _ref_conv_bn_relu(x_nhwc, p, stride, eps=1e-5):
    y = lax.conv_general_dilated(
        x_nhwc, p["w"], window_strides=(stride, stride),
        padding=((1, 1), (1, 1)),
        dimension_numbers=("NHWC", "OIHW", "NHWC"))
    y = y + p["conv_b"][None, None, None, :]
    scale = p["gamma"] / jnp.sqrt(p["var"] + eps)
    y = (y - p["mean"]) * scale + p["beta"]
    return jnp.maximum(y, 0.0)


def map_to_node_reference(params, in3_nchw, in4_nchw):
    in3 = jnp.transpose(in3_nchw, (0, 2, 3, 1))
    in4 = jnp.transpose(in4_nchw, (0, 2, 3, 1))
    o3 = _ref_conv_bn_relu(in3, params["conv_out3"], 2)
    o4 = _ref_conv_bn_relu(in4, params["conv_out4"], 1)
    o = jnp.concatenate([o3, o4], axis=-1)
    o = _ref_conv_bn_relu(o, params["conv_to_node"], 1)
    N, h, w, P = o.shape
    return jnp.transpose(o, (0, 3, 1, 2)).reshape(N, P, h * w)


if __name__ == "__main__":
    key = jax.random.PRNGKey(0)
    k_p, k_x3, k_x4 = jax.random.split(key, 3)

    in_channels = (4, 4, 8, 16)
    num_points = 32
    # out3 branch has 2x the spatial size of out4 so stride-2 aligns them.
    in3 = jax.random.normal(k_x3, (2, 8, 16, 16), jnp.float32)   # NCHW
    in4 = jax.random.normal(k_x4, (2, 16, 8, 8), jnp.float32)    # NCHW

    params = init_map_to_node(k_p, in_channels, num_points)

    out = map_to_node_forward(params, in3, in4)
    jax.block_until_ready(out)
    assert out.shape == (2, num_points, 8 * 8), out.shape

    # loose tolerance: kernel uses bf16 matmul operands / bf16 intermediates
    ref = map_to_node_reference(params, in3, in4)
    assert bool(jnp.allclose(out, ref, rtol=0.05, atol=0.3)), (
        float(jnp.max(jnp.abs(out - ref))))

    print("KERNEL_OK")
</pallas_src>

<mosaic_0001>
module attributes {stable_mosaic.version = 11 : i64} {
  func.func @kernel(%arg0: i32, %arg1: memref<1x4x100x8xbf16, #tpu.memory_space<vmem>>, %arg2: memref<1x110x16xbf16, #tpu.memory_space<vmem>>, %arg3: memref<9x8x128xbf16, #tpu.memory_space<vmem>>, %arg4: memref<1x128xf32, #tpu.memory_space<vmem>>, %arg5: memref<9x16x128xbf16, #tpu.memory_space<vmem>>, %arg6: memref<1x128xf32, #tpu.memory_space<vmem>>, %arg7: memref<9x128x32xbf16, #tpu.memory_space<vmem>>, %arg8: memref<9x128x32xbf16, #tpu.memory_space<vmem>>, %arg9: memref<1x32xf32, #tpu.memory_space<vmem>>, %arg10: memref<80x1xf32, #tpu.memory_space<vmem>>, %arg11: memref<1x32x80xf32, #tpu.memory_space<vmem>>, %arg12: memref<110x128xbf16, #tpu.memory_space<vmem>>, %arg13: memref<110x128xbf16, #tpu.memory_space<vmem>>) attributes {dimension_semantics = [#tpu.dimension_semantics<parallel>], iteration_bounds = array<i64: 2>, scalar_prefetch = 0 : i64, scratch_operands = 2 : i64, tpu.core_type = #tpu.core_type<tc>, window_params = [{transform_indices = @transform_0, window_bounds = array<i64: 1, 4, 100, 8>}, {transform_indices = @transform_1, window_bounds = array<i64: 1, 110, 16>}, {pipeline_mode = #tpu.pipeline_mode<synchronous>, transform_indices = @transform_2, window_bounds = array<i64: 9, 8, 128>}, {pipeline_mode = #tpu.pipeline_mode<synchronous>, transform_indices = @transform_3, window_bounds = array<i64: 1, 128>}, {pipeline_mode = #tpu.pipeline_mode<synchronous>, transform_indices = @transform_4, window_bounds = array<i64: 9, 16, 128>}, {pipeline_mode = #tpu.pipeline_mode<synchronous>, transform_indices = @transform_5, window_bounds = array<i64: 1, 128>}, {pipeline_mode = #tpu.pipeline_mode<synchronous>, transform_indices = @transform_6, window_bounds = array<i64: 9, 128, 32>}, {pipeline_mode = #tpu.pipeline_mode<synchronous>, transform_indices = @transform_7, window_bounds = array<i64: 9, 128, 32>}, {pipeline_mode = #tpu.pipeline_mode<synchronous>, transform_indices = @transform_8, window_bounds = array<i64: 1, 32>}, {pipeline_mode = #tpu.pipeline_mode<synchronous>, transform_indices = @transform_9, window_bounds = array<i64: 80, 1>}, {transform_indices = @transform_10, window_bounds = array<i64: 1, 32, 80>}]} {
    %c0 = arith.constant 0 : index
    %c0_0 = arith.constant 0 : index
    %0 = vector.load %arg10[%c0, %c0_0] : memref<80x1xf32, #tpu.memory_space<vmem>>, vector<80x1xf32>
    %cst = arith.constant 0.000000e+00 : f32
    %1 = vector.broadcast %cst : f32 to vector<80x128xf32>
    %c0_1 = arith.constant 0 : index
    %c0_2 = arith.constant 0 : index
    %c0_3 = arith.constant 0 : index
    %c0_4 = arith.constant 0 : index
    %2 = vector.load %arg1[%c0_1, %c0_2, %c0_3, %c0_4] : memref<1x4x100x8xbf16, #tpu.memory_space<vmem>>, vector<1x1x80x8xbf16>
    %3 = vector.shape_cast %2 : vector<1x1x80x8xbf16> to vector<80x8xbf16>
    %c0_5 = arith.constant 0 : index
    %c0_6 = arith.constant 0 : index
    %c0_7 = arith.constant 0 : index
    %4 = vector.load %arg3[%c0_5, %c0_6, %c0_7] : memref<9x8x128xbf16, #tpu.memory_space<vmem>>, vector<1x8x128xbf16>
    %5 = vector.shape_cast %4 : vector<1x8x128xbf16> to vector<8x128xbf16>
    %cst_8 = arith.constant dense<0.000000e+00> : vector<80x128xf32>
    %6 = tpu.matmul %3, %5, %cst_8 {dimension_numbers = #tpu.dot_dimension_numbers<[1], [0], [0], [1], [0, 0, 1, 1], [], []>} : vector<80x8xbf16>, vector<8x128xbf16>, vector<80x128xf32> -> vector<80x128xf32>
    %7 = arith.addf %1, %6 : vector<80x128xf32>
    %c0_9 = arith.constant 0 : index
    %c1 = arith.constant 1 : index
    %c0_10 = arith.constant 0 : index
    %c0_11 = arith.constant 0 : index
    %8 = vector.load %arg1[%c0_9, %c1, %c0_10, %c0_11] : memref<1x4x100x8xbf16, #tpu.memory_space<vmem>>, vector<1x1x80x8xbf16>
    %9 = vector.shape_cast %8 : vector<1x1x80x8xbf16> to vector<80x8xbf16>
    %c1_12 = arith.constant 1 : index
    %c0_13 = arith.constant 0 : index
    %c0_14 = arith.constant 0 : index
    %10 = vector.load %arg3[%c1_12, %c0_13, %c0_14] : memref<9x8x128xbf16, #tpu.memory_space<vmem>>, vector<1x8x128xbf16>
    %11 = vector.shape_cast %10 : vector<1x8x128xbf16> to vector<8x128xbf16>
    %cst_15 = arith.constant dense<0.000000e+00> : vector<80x128xf32>
    %12 = tpu.matmul %9, %11, %cst_15 {dimension_numbers = #tpu.dot_dimension_numbers<[1], [0], [0], [1], [0, 0, 1, 1], [], []>} : vector<80x8xbf16>, vector<8x128xbf16>, vector<80x128xf32> -> vector<80x128xf32>
    %13 = arith.addf %7, %12 : vector<80x128xf32>
    %c0_16 = arith.constant 0 : index
    %c0_17 = arith.constant 0 : index
    %c1_18 = arith.constant 1 : index
    %c0_19 = arith.constant 0 : index
    %14 = vector.load %arg1[%c0_16, %c0_17, %c1_18, %c0_19] : memref<1x4x100x8xbf16, #tpu.memory_space<vmem>>, vector<1x1x80x8xbf16>
    %15 = vector.shape_cast %14 : vector<1x1x80x8xbf16> to vector<80x8xbf16>
    %c2 = arith.constant 2 : index
    %c0_20 = arith.constant 0 : index
    %c0_21 = arith.constant 0 : index
    %16 = vector.load %arg3[%c2, %c0_20, %c0_21] : memref<9x8x128xbf16, #tpu.memory_space<vmem>>, vector<1x8x128xbf16>
    %17 = vector.shape_cast %16 : vector<1x8x128xbf16> to vector<8x128xbf16>
    %cst_22 = arith.constant dense<0.000000e+00> : vector<80x128xf32>
    %18 = tpu.matmul %15, %17, %cst_22 {dimension_numbers = #tpu.dot_dimension_numbers<[1], [0], [0], [1], [0, 0, 1, 1], [], []>} : vector<80x8xbf16>, vector<8x128xbf16>, vector<80x128xf32> -> vector<80x128xf32>
    %19 = arith.addf %13, %18 : vector<80x128xf32>
    %c0_23 = arith.constant 0 : index
    %c2_24 = arith.constant 2 : index
    %c0_25 = arith.constant 0 : index
    %c0_26 = arith.constant 0 : index
    %20 = vector.load %arg1[%c0_23, %c2_24, %c0_25, %c0_26] : memref<1x4x100x8xbf16, #tpu.memory_space<vmem>>, vector<1x1x80x8xbf16>
    %21 = vector.shape_cast %20 : vector<1x1x80x8xbf16> to vector<80x8xbf16>
    %c3 = arith.constant 3 : index
    %c0_27 = arith.constant 0 : index
    %c0_28 = arith.constant 0 : index
    %22 = vector.load %arg3[%c3, %c0_27, %c0_28] : memref<9x8x128xbf16, #tpu.memory_space<vmem>>, vector<1x8x128xbf16>
    %23 = vector.shape_cast %22 : vector<1x8x128xbf16> to vector<8x128xbf16>
    %cst_29 = arith.constant dense<0.000000e+00> : vector<80x128xf32>
    %24 = tpu.matmul %21, %23, %cst_29 {dimension_numbers = #tpu.dot_dimension_numbers<[1], [0], [0], [1], [0, 0, 1, 1], [], []>} : vector<80x8xbf16>, vector<8x128xbf16>, vector<80x128xf32> -> vector<80x128xf32>
    %25 = arith.addf %19, %24 : vector<80x128xf32>
    %c0_30 = arith.constant 0 : index
    %c3_31 = arith.constant 3 : index
    %c0_32 = arith.constant 0 : index
    %c0_33 = arith.constant 0 : index
    %26 = vector.load %arg1[%c0_30, %c3_31, %c0_32, %c0_33] : memref<1x4x100x8xbf16, #tpu.memory_space<vmem>>, vector<1x1x80x8xbf16>
    %27 = vector.shape_cast %26 : vector<1x1x80x8xbf16> to vector<80x8xbf16>
    %c4 = arith.constant 4 : index
    %c0_34 = arith.constant 0 : index
    %c0_35 = arith.constant 0 : index
    %28 = vector.load %arg3[%c4, %c0_34, %c0_35] : memref<9x8x128xbf16, #tpu.memory_space<vmem>>, vector<1x8x128xbf16>
    %29 = vector.shape_cast %28 : vector<1x8x128xbf16> to vector<8x128xbf16>
    %cst_36 = arith.constant dense<0.000000e+00> : vector<80x128xf32>
    %30 = tpu.matmul %27, %29, %cst_36 {dimension_numbers = #tpu.dot_dimension_numbers<[1], [0], [0], [1], [0, 0, 1, 1], [], []>} : vector<80x8xbf16>, vector<8x128xbf16>, vector<80x128xf32> -> vector<80x128xf32>
    %31 = arith.addf %25, %30 : vector<80x128xf32>
    %c0_37 = arith.constant 0 : index
    %c2_38 = arith.constant 2 : index
    %c1_39 = arith.constant 1 : index
    %c0_40 = arith.constant 0 : index
    %32 = vector.load %arg1[%c0_37, %c2_38, %c1_39, %c0_40] : memref<1x4x100x8xbf16, #tpu.memory_space<vmem>>, vector<1x1x80x8xbf16>
    %33 = vector.shape_cast %32 : vector<1x1x80x8xbf16> to vector<80x8xbf16>
    %c5 = arith.constant 5 : index
    %c0_41 = arith.constant 0 : index
    %c0_42 = arith.constant 0 : index
    %34 = vector.load %arg3[%c5, %c0_41, %c0_42] : memref<9x8x128xbf16, #tpu.memory_space<vmem>>, vector<1x8x128xbf16>
    %35 = vector.shape_cast %34 : vector<1x8x128xbf16> to vector<8x128xbf16>
    %cst_43 = arith.constant dense<0.000000e+00> : vector<80x128xf32>
    %36 = tpu.matmul %33, %35, %cst_43 {dimension_numbers = #tpu.dot_dimension_numbers<[1], [0], [0], [1], [0, 0, 1, 1], [], []>} : vector<80x8xbf16>, vector<8x128xbf16>, vector<80x128xf32> -> vector<80x128xf32>
    %37 = arith.addf %31, %36 : vector<80x128xf32>
    %c0_44 = arith.constant 0 : index
    %c0_45 = arith.constant 0 : index
    %c10 = arith.constant 10 : index
    %c0_46 = arith.constant 0 : index
    %38 = vector.load %arg1[%c0_44, %c0_45, %c10, %c0_46] : memref<1x4x100x8xbf16, #tpu.memory_space<vmem>>, vector<1x1x80x8xbf16>
    %39 = vector.shape_cast %38 : vector<1x1x80x8xbf16> to vector<80x8xbf16>
    %c6 = arith.constant 6 : index
    %c0_47 = arith.constant 0 : index
    %c0_48 = arith.constant 0 : index
    %40 = vector.load %arg3[%c6, %c0_47, %c0_48] : memref<9x8x128xbf16, #tpu.memory_space<vmem>>, vector<1x8x128xbf16>
    %41 = vector.shape_cast %40 : vector<1x8x128xbf16> to vector<8x128xbf16>
    %cst_49 = arith.constant dense<0.000000e+00> : vector<80x128xf32>
    %42 = tpu.matmul %39, %41, %cst_49 {dimension_numbers = #tpu.dot_dimension_numbers<[1], [0], [0], [1], [0, 0, 1, 1], [], []>} : vector<80x8xbf16>, vector<8x128xbf16>, vector<80x128xf32> -> vector<80x128xf32>
    %43 = arith.addf %37, %42 : vector<80x128xf32>
    %c0_50 = arith.constant 0 : index
    %c1_51 = arith.constant 1 : index
    %c10_52 = arith.constant 10 : index
    %c0_53 = arith.constant 0 : index
    %44 = vector.load %arg1[%c0_50, %c1_51, %c10_52, %c0_53] : memref<1x4x100x8xbf16, #tpu.memory_space<vmem>>, vector<1x1x80x8xbf16>
    %45 = vector.shape_cast %44 : vector<1x1x80x8xbf16> to vector<80x8xbf16>
    %c7 = arith.constant 7 : index
    %c0_54 = arith.constant 0 : index
    %c0_55 = arith.constant 0 : index
    %46 = vector.load %arg3[%c7, %c0_54, %c0_55] : memref<9x8x128xbf16, #tpu.memory_space<vmem>>, vector<1x8x128xbf16>
    %47 = vector.shape_cast %46 : vector<1x8x128xbf16> to vector<8x128xbf16>
    %cst_56 = arith.constant dense<0.000000e+00> : vector<80x128xf32>
    %48 = tpu.matmul %45, %47, %cst_56 {dimension_numbers = #tpu.dot_dimension_numbers<[1], [0], [0], [1], [0, 0, 1, 1], [], []>} : vector<80x8xbf16>, vector<8x128xbf16>, vector<80x128xf32> -> vector<80x128xf32>
    %49 = arith.addf %43, %48 : vector<80x128xf32>
    %c0_57 = arith.constant 0 : index
    %c0_58 = arith.constant 0 : index
    %c11 = arith.constant 11 : index
    %c0_59 = arith.constant 0 : index
    %50 = vector.load %arg1[%c0_57, %c0_58, %c11, %c0_59] : memref<1x4x100x8xbf16, #tpu.memory_space<vmem>>, vector<1x1x80x8xbf16>
    %51 = vector.shape_cast %50 : vector<1x1x80x8xbf16> to vector<80x8xbf16>
    %c8 = arith.constant 8 : index
    %c0_60 = arith.constant 0 : index
    %c0_61 = arith.constant 0 : index
    %52 = vector.load %arg3[%c8, %c0_60, %c0_61] : memref<9x8x128xbf16, #tpu.memory_space<vmem>>, vector<1x8x128xbf16>
    %53 = vector.shape_cast %52 : vector<1x8x128xbf16> to vector<8x128xbf16>
    %cst_62 = arith.constant dense<0.000000e+00> : vector<80x128xf32>
    %54 = tpu.matmul %51, %53, %cst_62 {dimension_numbers = #tpu.dot_dimension_numbers<[1], [0], [0], [1], [0, 0, 1, 1], [], []>} : vector<80x8xbf16>, vector<8x128xbf16>, vector<80x128xf32> -> vector<80x128xf32>
    %55 = arith.addf %49, %54 : vector<80x128xf32>
    %c0_63 = arith.constant 0 : index
    %c0_64 = arith.constant 0 : index
    %56 = vector.load %arg4[%c0_63, %c0_64] : memref<1x128xf32, #tpu.memory_space<vmem>>, vector<1x128xf32>
    %57 = vector.broadcast %56 : vector<1x128xf32> to vector<80x128xf32>
    %58 = arith.addf %55, %57 : vector<80x128xf32>
    %cst_65 = arith.constant 0.000000e+00 : f32
    %59 = vector.broadcast %cst_65 : f32 to vector<80x128xf32>
    %60 = arith.maximumf %58, %59 : vector<80x128xf32>
    %61 = vector.broadcast %0 : vector<80x1xf32> to vector<80x128xf32>
    %62 = arith.mulf %60, %61 : vector<80x128xf32>
    %cst_66 = arith.constant 0.000000e+00 : bf16
    %63 = vector.broadcast %cst_66 : bf16 to vector<110x128xbf16>
    %c0_67 = arith.constant 0 : index
    %c0_68 = arith.constant 0 : index
    %64 = vector.load %arg12[%c0_67, %c0_68] : memref<110x128xbf16, #tpu.memory_space<vmem>>, vector<110x128xbf16>
    tpu.vector_store %arg12[%c0_67, %c0_68], %63 {strides = array<i32>} : memref<110x128xbf16, #tpu.memory_space<vmem>>, vector<110x128xbf16>,
    %65 = arith.truncf %62 : vector<80x128xf32> to vector<80x128xbf16>
    %c11_69 = arith.constant 11 : index
    %c0_70 = arith.constant 0 : index
    %66 = vector.load %arg12[%c11_69, %c0_70] : memref<110x128xbf16, #tpu.memory_space<vmem>>, vector<80x128xbf16>
    tpu.vector_store %arg12[%c11_69, %c0_70], %65 {strides = array<i32>} : memref<110x128xbf16, #tpu.memory_space<vmem>>, vector<80x128xbf16>,
    %cst_71 = arith.constant 0.000000e+00 : f32
    %67 = vector.broadcast %cst_71 : f32 to vector<80x128xf32>
    %c0_72 = arith.constant 0 : index
    %c0_73 = arith.constant 0 : index
    %c0_74 = arith.constant 0 : index
    %68 = vector.load %arg2[%c0_72, %c0_73, %c0_74] : memref<1x110x16xbf16, #tpu.memory_space<vmem>>, vector<1x80x16xbf16>
    %69 = vector.shape_cast %68 : vector<1x80x16xbf16> to vector<80x16xbf16>
    %c0_75 = arith.constant 0 : index
    %c0_76 = arith.constant 0 : index
    %c0_77 = arith.constant 0 : index
    %70 = vector.load %arg5[%c0_75, %c0_76, %c0_77] : memref<9x16x128xbf16, #tpu.memory_space<vmem>>, vector<1x16x128xbf16>
    %71 = vector.shape_cast %70 : vector<1x16x128xbf16> to vector<16x128xbf16>
    %cst_78 = arith.constant dense<0.000000e+00> : vector<80x128xf32>
    %72 = tpu.matmul %69, %71, %cst_78 {dimension_numbers = #tpu.dot_dimension_numbers<[1], [0], [0], [1], [0, 0, 1, 1], [], []>} : vector<80x16xbf16>, vector<16x128xbf16>, vector<80x128xf32> -> vector<80x128xf32>
    %73 = arith.addf %67, %72 : vector<80x128xf32>
    %c0_79 = arith.constant 0 : index
    %c1_80 = arith.constant 1 : index
    %c0_81 = arith.constant 0 : index
    %74 = vector.load %arg2[%c0_79, %c1_80, %c0_81] : memref<1x110x16xbf16, #tpu.memory_space<vmem>>, vector<1x80x16xbf16>
    %75 = vector.shape_cast %74 : vector<1x80x16xbf16> to vector<80x16xbf16>
    %c1_82 = arith.constant 1 : index
    %c0_83 = arith.constant 0 : index
    %c0_84 = arith.constant 0 : index
    %76 = vector.load %arg5[%c1_82, %c0_83, %c0_84] : memref<9x16x128xbf16, #tpu.memory_space<vmem>>, vector<1x16x128xbf16>
    %77 = vector.shape_cast %76 : vector<1x16x128xbf16> to vector<16x128xbf16>
    %cst_85 = arith.constant dense<0.000000e+00> : vector<80x128xf32>
    %78 = tpu.matmul %75, %77, %cst_85 {dimension_numbers = #tpu.dot_dimension_numbers<[1], [0], [0], [1], [0, 0, 1, 1], [], []>} : vector<80x16xbf16>, vector<16x128xbf16>, vector<80x128xf32> -> vector<80x128xf32>
    %79 = arith.addf %73, %78 : vector<80x128xf32>
    %c0_86 = arith.constant 0 : index
    %c2_87 = arith.constant 2 : index
    %c0_88 = arith.constant 0 : index
    %80 = vector.load %arg2[%c0_86, %c2_87, %c0_88] : memref<1x110x16xbf16, #tpu.memory_space<vmem>>, vector<1x80x16xbf16>
    %81 = vector.shape_cast %80 : vector<1x80x16xbf16> to vector<80x16xbf16>
    %c2_89 = arith.constant 2 : index
    %c0_90 = arith.constant 0 : index
    %c0_91 = arith.constant 0 : index
    %82 = vector.load %arg5[%c2_89, %c0_90, %c0_91] : memref<9x16x128xbf16, #tpu.memory_space<vmem>>, vector<1x16x128xbf16>
    %83 = vector.shape_cast %82 : vector<1x16x128xbf16> to vector<16x128xbf16>
    %cst_92 = arith.constant dense<0.000000e+00> : vector<80x128xf32>
    %84 = tpu.matmul %81, %83, %cst_92 {dimension_numbers = #tpu.dot_dimension_numbers<[1], [0], [0], [1], [0, 0, 1, 1], [], []>} : vector<80x16xbf16>, vector<16x128xbf16>, vector<80x128xf32> -> vector<80x128xf32>
    %85 = arith.addf %79, %84 : vector<80x128xf32>
    %c0_93 = arith.constant 0 : index
    %c10_94 = arith.constant 10 : index
    %c0_95 = arith.constant 0 : index
    %86 = vector.load %arg2[%c0_93, %c10_94, %c0_95] : memref<1x110x16xbf16, #tpu.memory_space<vmem>>, vector<1x80x16xbf16>
    %87 = vector.shape_cast %86 : vector<1x80x16xbf16> to vector<80x16xbf16>
    %c3_96 = arith.constant 3 : index
    %c0_97 = arith.constant 0 : index
    %c0_98 = arith.constant 0 : index
    %88 = vector.load %arg5[%c3_96, %c0_97, %c0_98] : memref<9x16x128xbf16, #tpu.memory_space<vmem>>, vector<1x16x128xbf16>
    %89 = vector.shape_cast %88 : vector<1x16x128xbf16> to vector<16x128xbf16>
    %cst_99 = arith.constant dense<0.000000e+00> : vector<80x128xf32>
    %90 = tpu.matmul %87, %89, %cst_99 {dimension_numbers = #tpu.dot_dimension_numbers<[1], [0], [0], [1], [0, 0, 1, 1], [], []>} : vector<80x16xbf16>, vector<16x128xbf16>, vector<80x128xf32> -> vector<80x128xf32>
    %91 = arith.addf %85, %90 : vector<80x128xf32>
    %c0_100 = arith.constant 0 : index
    %c11_101 = arith.constant 11 : index
    %c0_102 = arith.constant 0 : index
    %92 = vector.load %arg2[%c0_100, %c11_101, %c0_102] : memref<1x110x16xbf16, #tpu.memory_space<vmem>>, vector<1x80x16xbf16>
    %93 = vector.shape_cast %92 : vector<1x80x16xbf16> to vector<80x16xbf16>
    %c4_103 = arith.constant 4 : index
    %c0_104 = arith.constant 0 : index
    %c0_105 = arith.constant 0 : index
    %94 = vector.load %arg5[%c4_103, %c0_104, %c0_105] : memref<9x16x128xbf16, #tpu.memory_space<vmem>>, vector<1x16x128xbf16>
    %95 = vector.shape_cast %94 : vector<1x16x128xbf16> to vector<16x128xbf16>
    %cst_106 = arith.constant dense<0.000000e+00> : vector<80x128xf32>
    %96 = tpu.matmul %93, %95, %cst_106 {dimension_numbers = #tpu.dot_dimension_numbers<[1], [0], [0], [1], [0, 0, 1, 1], [], []>} : vector<80x16xbf16>, vector<16x128xbf16>, vector<80x128xf32> -> vector<80x128xf32>
    %97 = arith.addf %91, %96 : vector<80x128xf32>
    %c0_107 = arith.constant 0 : index
    %c12 = arith.constant 12 : index
    %c0_108 = arith.constant 0 : index
    %98 = vector.load %arg2[%c0_107, %c12, %c0_108] : memref<1x110x16xbf16, #tpu.memory_space<vmem>>, vector<1x80x16xbf16>
    %99 = vector.shape_cast %98 : vector<1x80x16xbf16> to vector<80x16xbf16>
    %c5_109 = arith.constant 5 : index
    %c0_110 = arith.constant 0 : index
    %c0_111 = arith.constant 0 : index
    %100 = vector.load %arg5[%c5_109, %c0_110, %c0_111] : memref<9x16x128xbf16, #tpu.memory_space<vmem>>, vector<1x16x128xbf16>
    %101 = vector.shape_cast %100 : vector<1x16x128xbf16> to vector<16x128xbf16>
    %cst_112 = arith.constant dense<0.000000e+00> : vector<80x128xf32>
    %102 = tpu.matmul %99, %101, %cst_112 {dimension_numbers = #tpu.dot_dimension_numbers<[1], [0], [0], [1], [0, 0, 1, 1], [], []>} : vector<80x16xbf16>, vector<16x128xbf16>, vector<80x128xf32> -> vector<80x128xf32>
    %103 = arith.addf %97, %102 : vector<80x128xf32>
    %c0_113 = arith.constant 0 : index
    %c20 = arith.constant 20 : index
    %c0_114 = arith.constant 0 : index
    %104 = vector.load %arg2[%c0_113, %c20, %c0_114] : memref<1x110x16xbf16, #tpu.memory_space<vmem>>, vector<1x80x16xbf16>
    %105 = vector.shape_cast %104 : vector<1x80x16xbf16> to vector<80x16xbf16>
    %c6_115 = arith.constant 6 : index
    %c0_116 = arith.constant 0 : index
    %c0_117 = arith.constant 0 : index
    %106 = vector.load %arg5[%c6_115, %c0_116, %c0_117] : memref<9x16x128xbf16, #tpu.memory_space<vmem>>, vector<1x16x128xbf16>
    %107 = vector.shape_cast %106 : vector<1x16x128xbf16> to vector<16x128xbf16>
    %cst_118 = arith.constant dense<0.000000e+00> : vector<80x128xf32>
    %108 = tpu.matmul %105, %107, %cst_118 {dimension_numbers = #tpu.dot_dimension_numbers<[1], [0], [0], [1], [0, 0, 1, 1], [], []>} : vector<80x16xbf16>, vector<16x128xbf16>, vector<80x128xf32> -> vector<80x128xf32>
    %109 = arith.addf %103, %108 : vector<80x128xf32>
    %c0_119 = arith.constant 0 : index
    %c21 = arith.constant 21 : index
    %c0_120 = arith.constant 0 : index
    %110 = vector.load %arg2[%c0_119, %c21, %c0_120] : memref<1x110x16xbf16, #tpu.memory_space<vmem>>, vector<1x80x16xbf16>
    %111 = vector.shape_cast %110 : vector<1x80x16xbf16> to vector<80x16xbf16>
    %c7_121 = arith.constant 7 : index
    %c0_122 = arith.constant 0 : index
    %c0_123 = arith.constant 0 : index
    %112 = vector.load %arg5[%c7_121, %c0_122, %c0_123] : memref<9x16x128xbf16, #tpu.memory_space<vmem>>, vector<1x16x128xbf16>
    %113 = vector.shape_cast %112 : vector<1x16x128xbf16> to vector<16x128xbf16>
    %cst_124 = arith.constant dense<0.000000e+00> : vector<80x128xf32>
    %114 = tpu.matmul %111, %113, %cst_124 {dimension_numbers = #tpu.dot_dimension_numbers<[1], [0], [0], [1], [0, 0, 1, 1], [], []>} : vector<80x16xbf16>, vector<16x128xbf16>, vector<80x128xf32> -> vector<80x128xf32>
    %115 = arith.addf %109, %114 : vector<80x128xf32>
    %c0_125 = arith.constant 0 : index
    %c22 = arith.constant 22 : index
    %c0_126 = arith.constant 0 : index
    %116 = vector.load %arg2[%c0_125, %c22, %c0_126] : memref<1x110x16xbf16, #tpu.memory_space<vmem>>, vector<1x80x16xbf16>
    %117 = vector.shape_cast %116 : vector<1x80x16xbf16> to vector<80x16xbf16>
    %c8_127 = arith.constant 8 : index
    %c0_128 = arith.constant 0 : index
    %c0_129 = arith.constant 0 : index
    %118 = vector.load %arg5[%c8_127, %c0_128, %c0_129] : memref<9x16x128xbf16, #tpu.memory_space<vmem>>, vector<1x16x128xbf16>
    %119 = vector.shape_cast %118 : vector<1x16x128xbf16> to vector<16x128xbf16>
    %cst_130 = arith.constant dense<0.000000e+00> : vector<80x128xf32>
    %120 = tpu.matmul %117, %119, %cst_130 {dimension_numbers = #tpu.dot_dimension_numbers<[1], [0], [0], [1], [0, 0, 1, 1], [], []>} : vector<80x16xbf16>, vector<16x128xbf16>, vector<80x128xf32> -> vector<80x128xf32>
    %121 = arith.addf %115, %120 : vector<80x128xf32>
    %c0_131 = arith.constant 0 : index
    %c0_132 = arith.constant 0 : index
    %122 = vector.load %arg6[%c0_131, %c0_132] : memref<1x128xf32, #tpu.memory_space<vmem>>, vector<1x128xf32>
    %123 = vector.broadcast %122 : vector<1x128xf32> to vector<80x128xf32>
    %124 = arith.addf %121, %123 : vector<80x128xf32>
    %cst_133 = arith.constant 0.000000e+00 : f32
    %125 = vector.broadcast %cst_133 : f32 to vector<80x128xf32>
    %126 = arith.maximumf %124, %125 : vector<80x128xf32>
    %127 = vector.broadcast %0 : vector<80x1xf32> to vector<80x128xf32>
    %128 = arith.mulf %126, %127 : vector<80x128xf32>
    %cst_134 = arith.constant 0.000000e+00 : bf16
    %129 = vector.broadcast %cst_134 : bf16 to vector<110x128xbf16>
    %c0_135 = arith.constant 0 : index
    %c0_136 = arith.constant 0 : index
    %130 = vector.load %arg13[%c0_135, %c0_136] : memref<110x128xbf16, #tpu.memory_space<vmem>>, vector<110x128xbf16>
    tpu.vector_store %arg13[%c0_135, %c0_136], %129 {strides = array<i32>} : memref<110x128xbf16, #tpu.memory_space<vmem>>, vector<110x128xbf16>,
    %131 = arith.truncf %128 : vector<80x128xf32> to vector<80x128xbf16>
    %c11_137 = arith.constant 11 : index
    %c0_138 = arith.constant 0 : index
    %132 = vector.load %arg13[%c11_137, %c0_138] : memref<110x128xbf16, #tpu.memory_space<vmem>>, vector<80x128xbf16>
    tpu.vector_store %arg13[%c11_137, %c0_138], %131 {strides = array<i32>} : memref<110x128xbf16, #tpu.memory_space<vmem>>, vector<80x128xbf16>,
    %cst_139 = arith.constant 0.000000e+00 : f32
    %133 = vector.broadcast %cst_139 : f32 to vector<80x32xf32>
    %c0_140 = arith.constant 0 : index
    %c0_141 = arith.constant 0 : index
    %134 = vector.load %arg12[%c0_140, %c0_141] : memref<110x128xbf16, #tpu.memory_space<vmem>>, vector<80x128xbf16>
    %c0_142 = arith.constant 0 : index
    %c0_143 = arith.constant 0 : index
    %135 = vector.load %arg13[%c0_142, %c0_143] : memref<110x128xbf16, #tpu.memory_space<vmem>>, vector<80x128xbf16>
    %c0_144 = arith.constant 0 : index
    %c0_145 = arith.constant 0 : index
    %c0_146 = arith.constant 0 : index
    %136 = vector.load %arg7[%c0_144, %c0_145, %c0_146] : memref<9x128x32xbf16, #tpu.memory_space<vmem>>, vector<1x128x32xbf16>
    %137 = vector.shape_cast %136 : vector<1x128x32xbf16> to vector<128x32xbf16>
    %cst_147 = arith.constant dense<0.000000e+00> : vector<80x32xf32>
    %138 = tpu.matmul %134, %137, %cst_147 {dimension_numbers = #tpu.dot_dimension_numbers<[1], [0], [0], [1], [0, 0, 1, 1], [], []>} : vector<80x128xbf16>, vector<128x32xbf16>, vector<80x32xf32> -> vector<80x32xf32>
    %139 = arith.addf %133, %138 : vector<80x32xf32>
    %c0_148 = arith.constant 0 : index
    %c0_149 = arith.constant 0 : index
    %c0_150 = arith.constant 0 : index
    %140 = vector.load %arg8[%c0_148, %c0_149, %c0_150] : memref<9x128x32xbf16, #tpu.memory_space<vmem>>, vector<1x128x32xbf16>
    %141 = vector.shape_cast %140 : vector<1x128x32xbf16> to vector<128x32xbf16>
    %cst_151 = arith.constant dense<0.000000e+00> : vector<80x32xf32>
    %142 = tpu.matmul %135, %141, %cst_151 {dimension_numbers = #tpu.dot_dimension_numbers<[1], [0], [0], [1], [0, 0, 1, 1], [], []>} : vector<80x128xbf16>, vector<128x32xbf16>, vector<80x32xf32> -> vector<80x32xf32>
    %143 = arith.addf %139, %142 : vector<80x32xf32>
    %c1_152 = arith.constant 1 : index
    %c0_153 = arith.constant 0 : index
    %144 = vector.load %arg12[%c1_152, %c0_153] : memref<110x128xbf16, #tpu.memory_space<vmem>>, vector<80x128xbf16>
    %c1_154 = arith.constant 1 : index
    %c0_155 = arith.constant 0 : index
    %145 = vector.load %arg13[%c1_154, %c0_155] : memref<110x128xbf16, #tpu.memory_space<vmem>>, vector<80x128xbf16>
    %c1_156 = arith.constant 1 : index
    %c0_157 = arith.constant 0 : index
    %c0_158 = arith.constant 0 : index
    %146 = vector.load %arg7[%c1_156, %c0_157, %c0_158] : memref<9x128x32xbf16, #tpu.memory_space<vmem>>, vector<1x128x32xbf16>
    %147 = vector.shape_cast %146 : vector<1x128x32xbf16> to vector<128x32xbf16>
    %cst_159 = arith.constant dense<0.000000e+00> : vector<80x32xf32>
    %148 = tpu.matmul %144, %147, %cst_159 {dimension_numbers = #tpu.dot_dimension_numbers<[1], [0], [0], [1], [0, 0, 1, 1], [], []>} : vector<80x128xbf16>, vector<128x32xbf16>, vector<80x32xf32> -> vector<80x32xf32>
    %149 = arith.addf %143, %148 : vector<80x32xf32>
    %c1_160 = arith.constant 1 : index
    %c0_161 = arith.constant 0 : index
    %c0_162 = arith.constant 0 : index
    %150 = vector.load %arg8[%c1_160, %c0_161, %c0_162] : memref<9x128x32xbf16, #tpu.memory_space<vmem>>, vector<1x128x32xbf16>
    %151 = vector.shape_cast %150 : vector<1x128x32xbf16> to vector<128x32xbf16>
    %cst_163 = arith.constant dense<0.000000e+00> : vector<80x32xf32>
    %152 = tpu.matmul %145, %151, %cst_163 {dimension_numbers = #tpu.dot_dimension_numbers<[1], [0], [0], [1], [0, 0, 1, 1], [], []>} : vector<80x128xbf16>, vector<128x32xbf16>, vector<80x32xf32> -> vector<80x32xf32>
    %153 = arith.addf %149, %152 : vector<80x32xf32>
    %c2_164 = arith.constant 2 : index
    %c0_165 = arith.constant 0 : index
    %154 = vector.load %arg12[%c2_164, %c0_165] : memref<110x128xbf16, #tpu.memory_space<vmem>>, vector<80x128xbf16>
    %c2_166 = arith.constant 2 : index
    %c0_167 = arith.constant 0 : index
    %155 = vector.load %arg13[%c2_166, %c0_167] : memref<110x128xbf16, #tpu.memory_space<vmem>>, vector<80x128xbf16>
    %c2_168 = arith.constant 2 : index
    %c0_169 = arith.constant 0 : index
    %c0_170 = arith.constant 0 : index
    %156 = vector.load %arg7[%c2_168, %c0_169, %c0_170] : memref<9x128x32xbf16, #tpu.memory_space<vmem>>, vector<1x128x32xbf16>
    %157 = vector.shape_cast %156 : vector<1x128x32xbf16> to vector<128x32xbf16>
    %cst_171 = arith.constant dense<0.000000e+00> : vector<80x32xf32>
    %158 = tpu.matmul %154, %157, %cst_171 {dimension_numbers = #tpu.dot_dimension_numbers<[1], [0], [0], [1], [0, 0, 1, 1], [], []>} : vector<80x128xbf16>, vector<128x32xbf16>, vector<80x32xf32> -> vector<80x32xf32>
    %159 = arith.addf %153, %158 : vector<80x32xf32>
    %c2_172 = arith.constant 2 : index
    %c0_173 = arith.constant 0 : index
    %c0_174 = arith.constant 0 : index
    %160 = vector.load %arg8[%c2_172, %c0_173, %c0_174] : memref<9x128x32xbf16, #tpu.memory_space<vmem>>, vector<1x128x32xbf16>
    %161 = vector.shape_cast %160 : vector<1x128x32xbf16> to vector<128x32xbf16>
    %cst_175 = arith.constant dense<0.000000e+00> : vector<80x32xf32>
    %162 = tpu.matmul %155, %161, %cst_175 {dimension_numbers = #tpu.dot_dimension_numbers<[1], [0], [0], [1], [0, 0, 1, 1], [], []>} : vector<80x128xbf16>, vector<128x32xbf16>, vector<80x32xf32> -> vector<80x32xf32>
    %163 = arith.addf %159, %162 : vector<80x32xf32>
    %c10_176 = arith.constant 10 : index
    %c0_177 = arith.constant 0 : index
    %164 = vector.load %arg12[%c10_176, %c0_177] : memref<110x128xbf16, #tpu.memory_space<vmem>>, vector<80x128xbf16>
    %c10_178 = arith.constant 10 : index
    %c0_179 = arith.constant 0 : index
    %165 = vector.load %arg13[%c10_178, %c0_179] : memref<110x128xbf16, #tpu.memory_space<vmem>>, vector<80x128xbf16>
    %c3_180 = arith.constant 3 : index
    %c0_181 = arith.constant 0 : index
    %c0_182 = arith.constant 0 : index
    %166 = vector.load %arg7[%c3_180, %c0_181, %c0_182] : memref<9x128x32xbf16, #tpu.memory_space<vmem>>, vector<1x128x32xbf16>
    %167 = vector.shape_cast %166 : vector<1x128x32xbf16> to vector<128x32xbf16>
    %cst_183 = arith.constant dense<0.000000e+00> : vector<80x32xf32>
    %168 = tpu.matmul %164, %167, %cst_183 {dimension_numbers = #tpu.dot_dimension_numbers<[1], [0], [0], [1], [0, 0, 1, 1], [], []>} : vector<80x128xbf16>, vector<128x32xbf16>, vector<80x32xf32> -> vector<80x32xf32>
    %169 = arith.addf %163, %168 : vector<80x32xf32>
    %c3_184 = arith.constant 3 : index
    %c0_185 = arith.constant 0 : index
    %c0_186 = arith.constant 0 : index
    %170 = vector.load %arg8[%c3_184, %c0_185, %c0_186] : memref<9x128x32xbf16, #tpu.memory_space<vmem>>, vector<1x128x32xbf16>
    %171 = vector.shape_cast %170 : vector<1x128x32xbf16> to vector<128x32xbf16>
    %cst_187 = arith.constant dense<0.000000e+00> : vector<80x32xf32>
    %172 = tpu.matmul %165, %171, %cst_187 {dimension_numbers = #tpu.dot_dimension_numbers<[1], [0], [0], [1], [0, 0, 1, 1], [], []>} : vector<80x128xbf16>, vector<128x32xbf16>, vector<80x32xf32> -> vector<80x32xf32>
    %173 = arith.addf %169, %172 : vector<80x32xf32>
    %c11_188 = arith.constant 11 : index
    %c0_189 = arith.constant 0 : index
    %174 = vector.load %arg12[%c11_188, %c0_189] : memref<110x128xbf16, #tpu.memory_space<vmem>>, vector<80x128xbf16>
    %c11_190 = arith.constant 11 : index
    %c0_191 = arith.constant 0 : index
    %175 = vector.load %arg13[%c11_190, %c0_191] : memref<110x128xbf16, #tpu.memory_space<vmem>>, vector<80x128xbf16>
    %c4_192 = arith.constant 4 : index
    %c0_193 = arith.constant 0 : index
    %c0_194 = arith.constant 0 : index
    %176 = vector.load %arg7[%c4_192, %c0_193, %c0_194] : memref<9x128x32xbf16, #tpu.memory_space<vmem>>, vector<1x128x32xbf16>
    %177 = vector.shape_cast %176 : vector<1x128x32xbf16> to vector<128x32xbf16>
    %cst_195 = arith.constant dense<0.000000e+00> : vector<80x32xf32>
    %178 = tpu.matmul %174, %177, %cst_195 {dimension_numbers = #tpu.dot_dimension_numbers<[1], [0], [0], [1], [0, 0, 1, 1], [], []>} : vector<80x128xbf16>, vector<128x32xbf16>, vector<80x32xf32> -> vector<80x32xf32>
    %179 = arith.addf %173, %178 : vector<80x32xf32>
    %c4_196 = arith.constant 4 : index
    %c0_197 = arith.constant 0 : index
    %c0_198 = arith.constant 0 : index
    %180 = vector.load %arg8[%c4_196, %c0_197, %c0_198] : memref<9x128x32xbf16, #tpu.memory_space<vmem>>, vector<1x128x32xbf16>
    %181 = vector.shape_cast %180 : vector<1x128x32xbf16> to vector<128x32xbf16>
    %cst_199 = arith.constant dense<0.000000e+00> : vector<80x32xf32>
    %182 = tpu.matmul %175, %181, %cst_199 {dimension_numbers = #tpu.dot_dimension_numbers<[1], [0], [0], [1], [0, 0, 1, 1], [], []>} : vector<80x128xbf16>, vector<128x32xbf16>, vector<80x32xf32> -> vector<80x32xf32>
    %183 = arith.addf %179, %182 : vector<80x32xf32>
    %c12_200 = arith.constant 12 : index
    %c0_201 = arith.constant 0 : index
    %184 = vector.load %arg12[%c12_200, %c0_201] : memref<110x128xbf16, #tpu.memory_space<vmem>>, vector<80x128xbf16>
    %c12_202 = arith.constant 12 : index
    %c0_203 = arith.constant 0 : index
    %185 = vector.load %arg13[%c12_202, %c0_203] : memref<110x128xbf16, #tpu.memory_space<vmem>>, vector<80x128xbf16>
    %c5_204 = arith.constant 5 : index
    %c0_205 = arith.constant 0 : index
    %c0_206 = arith.constant 0 : index
    %186 = vector.load %arg7[%c5_204, %c0_205, %c0_206] : memref<9x128x32xbf16, #tpu.memory_space<vmem>>, vector<1x128x32xbf16>
    %187 = vector.shape_cast %186 : vector<1x128x32xbf16> to vector<128x32xbf16>
    %cst_207 = arith.constant dense<0.000000e+00> : vector<80x32xf32>
    %188 = tpu.matmul %184, %187, %cst_207 {dimension_numbers = #tpu.dot_dimension_numbers<[1], [0], [0], [1], [0, 0, 1, 1], [], []>} : vector<80x128xbf16>, vector<128x32xbf16>, vector<80x32xf32> -> vector<80x32xf32>
    %189 = arith.addf %183, %188 : vector<80x32xf32>
    %c5_208 = arith.constant 5 : index
    %c0_209 = arith.constant 0 : index
    %c0_210 = arith.constant 0 : index
    %190 = vector.load %arg8[%c5_208, %c0_209, %c0_210] : memref<9x128x32xbf16, #tpu.memory_space<vmem>>, vector<1x128x32xbf16>
    %191 = vector.shape_cast %190 : vector<1x128x32xbf16> to vector<128x32xbf16>
    %cst_211 = arith.constant dense<0.000000e+00> : vector<80x32xf32>
    %192 = tpu.matmul %185, %191, %cst_211 {dimension_numbers = #tpu.dot_dimension_numbers<[1], [0], [0], [1], [0, 0, 1, 1], [], []>} : vector<80x128xbf16>, vector<128x32xbf16>, vector<80x32xf32> -> vector<80x32xf32>
    %193 = arith.addf %189, %192 : vector<80x32xf32>
    %c20_212 = arith.constant 20 : index
    %c0_213 = arith.constant 0 : index
    %194 = vector.load %arg12[%c20_212, %c0_213] : memref<110x128xbf16, #tpu.memory_space<vmem>>, vector<80x128xbf16>
    %c20_214 = arith.constant 20 : index
    %c0_215 = arith.constant 0 : index
    %195 = vector.load %arg13[%c20_214, %c0_215] : memref<110x128xbf16, #tpu.memory_space<vmem>>, vector<80x128xbf16>
    %c6_216 = arith.constant 6 : index
    %c0_217 = arith.constant 0 : index
    %c0_218 = arith.constant 0 : index
    %196 = vector.load %arg7[%c6_216, %c0_217, %c0_218] : memref<9x128x32xbf16, #tpu.memory_space<vmem>>, vector<1x128x32xbf16>
    %197 = vector.shape_cast %196 : vector<1x128x32xbf16> to vector<128x32xbf16>
    %cst_219 = arith.constant dense<0.000000e+00> : vector<80x32xf32>
    %198 = tpu.matmul %194, %197, %cst_219 {dimension_numbers = #tpu.dot_dimension_numbers<[1], [0], [0], [1], [0, 0, 1, 1], [], []>} : vector<80x128xbf16>, vector<128x32xbf16>, vector<80x32xf32> -> vector<80x32xf32>
    %199 = arith.addf %193, %198 : vector<80x32xf32>
    %c6_220 = arith.constant 6 : index
    %c0_221 = arith.constant 0 : index
    %c0_222 = arith.constant 0 : index
    %200 = vector.load %arg8[%c6_220, %c0_221, %c0_222] : memref<9x128x32xbf16, #tpu.memory_space<vmem>>, vector<1x128x32xbf16>
    %201 = vector.shape_cast %200 : vector<1x128x32xbf16> to vector<128x32xbf16>
    %cst_223 = arith.constant dense<0.000000e+00> : vector<80x32xf32>
    %202 = tpu.matmul %195, %201, %cst_223 {dimension_numbers = #tpu.dot_dimension_numbers<[1], [0], [0], [1], [0, 0, 1, 1], [], []>} : vector<80x128xbf16>, vector<128x32xbf16>, vector<80x32xf32> -> vector<80x32xf32>
    %203 = arith.addf %199, %202 : vector<80x32xf32>
    %c21_224 = arith.constant 21 : index
    %c0_225 = arith.constant 0 : index
    %204 = vector.load %arg12[%c21_224, %c0_225] : memref<110x128xbf16, #tpu.memory_space<vmem>>, vector<80x128xbf16>
    %c21_226 = arith.constant 21 : index
    %c0_227 = arith.constant 0 : index
    %205 = vector.load %arg13[%c21_226, %c0_227] : memref<110x128xbf16, #tpu.memory_space<vmem>>, vector<80x128xbf16>
    %c7_228 = arith.constant 7 : index
    %c0_229 = arith.constant 0 : index
    %c0_230 = arith.constant 0 : index
    %206 = vector.load %arg7[%c7_228, %c0_229, %c0_230] : memref<9x128x32xbf16, #tpu.memory_space<vmem>>, vector<1x128x32xbf16>
    %207 = vector.shape_cast %206 : vector<1x128x32xbf16> to vector<128x32xbf16>
    %cst_231 = arith.constant dense<0.000000e+00> : vector<80x32xf32>
    %208 = tpu.matmul %204, %207, %cst_231 {dimension_numbers = #tpu.dot_dimension_numbers<[1], [0], [0], [1], [0, 0, 1, 1], [], []>} : vector<80x128xbf16>, vector<128x32xbf16>, vector<80x32xf32> -> vector<80x32xf32>
    %209 = arith.addf %203, %208 : vector<80x32xf32>
    %c7_232 = arith.constant 7 : index
    %c0_233 = arith.constant 0 : index
    %c0_234 = arith.constant 0 : index
    %210 = vector.load %arg8[%c7_232, %c0_233, %c0_234] : memref<9x128x32xbf16, #tpu.memory_space<vmem>>, vector<1x128x32xbf16>
    %211 = vector.shape_cast %210 : vector<1x128x32xbf16> to vector<128x32xbf16>
    %cst_235 = arith.constant dense<0.000000e+00> : vector<80x32xf32>
    %212 = tpu.matmul %205, %211, %cst_235 {dimension_numbers = #tpu.dot_dimension_numbers<[1], [0], [0], [1], [0, 0, 1, 1], [], []>} : vector<80x128xbf16>, vector<128x32xbf16>, vector<80x32xf32> -> vector<80x32xf32>
    %213 = arith.addf %209, %212 : vector<80x32xf32>
    %c22_236 = arith.constant 22 : index
    %c0_237 = arith.constant 0 : index
    %214 = vector.load %arg12[%c22_236, %c0_237] : memref<110x128xbf16, #tpu.memory_space<vmem>>, vector<80x128xbf16>
    %c22_238 = arith.constant 22 : index
    %c0_239 = arith.constant 0 : index
    %215 = vector.load %arg13[%c22_238, %c0_239] : memref<110x128xbf16, #tpu.memory_space<vmem>>, vector<80x128xbf16>
    %c8_240 = arith.constant 8 : index
    %c0_241 = arith.constant 0 : index
    %c0_242 = arith.constant 0 : index
    %216 = vector.load %arg7[%c8_240, %c0_241, %c0_242] : memref<9x128x32xbf16, #tpu.memory_space<vmem>>, vector<1x128x32xbf16>
    %217 = vector.shape_cast %216 : vector<1x128x32xbf16> to vector<128x32xbf16>
    %cst_243 = arith.constant dense<0.000000e+00> : vector<80x32xf32>
    %218 = tpu.matmul %214, %217, %cst_243 {dimension_numbers = #tpu.dot_dimension_numbers<[1], [0], [0], [1], [0, 0, 1, 1], [], []>} : vector<80x128xbf16>, vector<128x32xbf16>, vector<80x32xf32> -> vector<80x32xf32>
    %219 = arith.addf %213, %218 : vector<80x32xf32>
    %c8_244 = arith.constant 8 : index
    %c0_245 = arith.constant 0 : index
    %c0_246 = arith.constant 0 : index
    %220 = vector.load %arg8[%c8_244, %c0_245, %c0_246] : memref<9x128x32xbf16, #tpu.memory_space<vmem>>, vector<1x128x32xbf16>
    %221 = vector.shape_cast %220 : vector<1x128x32xbf16> to vector<128x32xbf16>
    %cst_247 = arith.constant dense<0.000000e+00> : vector<80x32xf32>
    %222 = tpu.matmul %215, %221, %cst_247 {dimension_numbers = #tpu.dot_dimension_numbers<[1], [0], [0], [1], [0, 0, 1, 1], [], []>} : vector<80x128xbf16>, vector<128x32xbf16>, vector<80x32xf32> -> vector<80x32xf32>
    %223 = arith.addf %219, %222 : vector<80x32xf32>
    %c0_248 = arith.constant 0 : index
    %c0_249 = arith.constant 0 : index
    %224 = vector.load %arg9[%c0_248, %c0_249] : memref<1x32xf32, #tpu.memory_space<vmem>>, vector<1x32xf32>
    %225 = vector.broadcast %224 : vector<1x32xf32> to vector<80x32xf32>
    %226 = arith.addf %223, %225 : vector<80x32xf32>
    %cst_250 = arith.constant 0.000000e+00 : f32
    %227 = vector.broadcast %cst_250 : f32 to vector<80x32xf32>
    %228 = arith.maximumf %226, %227 : vector<80x32xf32>
    %229 = tpu.transpose %228, [1, 0] : vector<80x32xf32> -> vector<32x80xf32>
    %c0_251 = arith.constant 0 : index
    %c0_252 = arith.constant 0 : index
    %c0_253 = arith.constant 0 : index
    %230 = vector.load %arg11[%c0_251, %c0_252, %c0_253] : memref<1x32x80xf32, #tpu.memory_space<vmem>>, vector<1x32x80xf32>
    %231 = vector.shape_cast %230 : vector<1x32x80xf32> to vector<32x80xf32>
    %232 = vector.shape_cast %229 : vector<32x80xf32> to vector<1x32x80xf32>
    tpu.vector_store %arg11[%c0_251, %c0_252, %c0_253], %232 {strides = array<i32>} : memref<1x32x80xf32, #tpu.memory_space<vmem>>, vector<1x32x80xf32>,
    return
  }
  func.func @transform_0(%arg0: i32) -> (i32, i32, i32, i32) {
    %c0_i32 = arith.constant 0 : i32
    %c0_i32_0 = arith.constant 0 : i32
    %c0_i32_1 = arith.constant 0 : i32
    %c0_i32_2 = arith.constant 0 : i32
    return %arg0, %c0_i32, %c0_i32_0, %c0_i32_1 : i32, i32, i32, i32
  }
  func.func @transform_1(%arg0: i32) -> (i32, i32, i32) {
    %c0_i32 = arith.constant 0 : i32
    %c0_i32_0 = arith.constant 0 : i32
    %c0_i32_1 = arith.constant 0 : i32
    return %arg0, %c0_i32, %c0_i32_0 : i32, i32, i32
  }
  func.func @transform_2(%arg0: i32) -> (i32, i32, i32) {
    %c0_i32 = arith.constant 0 : i32
    %c0_i32_0 = arith.constant 0 : i32
    %c0_i32_1 = arith.constant 0 : i32
    %c0_i32_2 = arith.constant 0 : i32
    return %c0_i32, %c0_i32_0, %c0_i32_1 : i32, i32, i32
  }
  func.func @transform_3(%arg0: i32) -> (i32, i32) {
    %c0_i32 = arith.constant 0 : i32
    %c0_i32_0 = arith.constant 0 : i32
    %c0_i32_1 = arith.constant 0 : i32
    return %c0_i32, %c0_i32_0 : i32, i32
  }
  func.func @transform_4(%arg0: i32) -> (i32, i32, i32) {
    %c0_i32 = arith.constant 0 : i32
    %c0_i32_0 = arith.constant 0 : i32
    %c0_i32_1 = arith.constant 0 : i32
    %c0_i32_2 = arith.constant 0 : i32
    return %c0_i32, %c0_i32_0, %c0_i32_1 : i32, i32, i32
  }
  func.func @transform_5(%arg0: i32) -> (i32, i32) {
    %c0_i32 = arith.constant 0 : i32
    %c0_i32_0 = arith.constant 0 : i32
    %c0_i32_1 = arith.constant 0 : i32
    return %c0_i32, %c0_i32_0 : i32, i32
  }
  func.func @transform_6(%arg0: i32) -> (i32, i32, i32) {
    %c0_i32 = arith.constant 0 : i32
    %c0_i32_0 = arith.constant 0 : i32
    %c0_i32_1 = arith.constant 0 : i32
    %c0_i32_2 = arith.constant 0 : i32
    return %c0_i32, %c0_i32_0, %c0_i32_1 : i32, i32, i32
  }
  func.func @transform_7(%arg0: i32) -> (i32, i32, i32) {
    %c0_i32 = arith.constant 0 : i32
    %c0_i32_0 = arith.constant 0 : i32
    %c0_i32_1 = arith.constant 0 : i32
    %c0_i32_2 = arith.constant 0 : i32
    return %c0_i32, %c0_i32_0, %c0_i32_1 : i32, i32, i32
  }
  func.func @transform_8(%arg0: i32) -> (i32, i32) {
    %c0_i32 = arith.constant 0 : i32
    %c0_i32_0 = arith.constant 0 : i32
    %c0_i32_1 = arith.constant 0 : i32
    return %c0_i32, %c0_i32_0 : i32, i32
  }
  func.func @transform_9(%arg0: i32) -> (i32, i32) {
    %c0_i32 = arith.constant 0 : i32
    %c0_i32_0 = arith.constant 0 : i32
    %c0_i32_1 = arith.constant 0 : i32
    return %c0_i32, %c0_i32_0 : i32, i32
  }
  func.func @transform_10(%arg0: i32) -> (i32, i32, i32) {
    %c0_i32 = arith.constant 0 : i32
    %c0_i32_0 = arith.constant 0 : i32
    %c0_i32_1 = arith.constant 0 : i32
    return %arg0, %c0_i32, %c0_i32_0 : i32, i32, i32
  }
}

</mosaic_0001>

<llo_original>
// kernel: map_to_node_forward.1
$region0: #{map_to_node_forward.1}
  #allocation0 [shape = 'u32[]', space=smem, size = 0x4, offset = 0x4, fixed_abs, tag = 'smem constant byte address 0x4 - core index']
  #allocation1 [shape = 'u32[144,128]{1,0:T(1,128)}', space=vmem, size = 0x12000, scoped, tag = 'internal scratch']
  #allocation2 [shape = 'bf16[110,128]{1,0:T(8,128)(2,1)}', space=vmem, size = 0x7000, scoped, tag = 'scratch operand']
  #allocation3 [shape = 'bf16[110,128]{1,0:T(8,128)(2,1)}', space=vmem, size = 0x7000, scoped, tag = 'scratch operand']
  %s0 = inlined_call_operand.vmem [shape: bf16[2,4,100,8], index: 0, kind: input, shape index: {}]
  %s1 = inlined_call_operand.vmem [shape: bf16[2,110,16], index: 1, kind: input, shape index: {}]
  %s2 = inlined_call_operand.vmem [shape: bf16[9,8,128], index: 2, kind: input, shape index: {}]
  %s3 = inlined_call_operand.vmem [shape: f32[1,128], index: 3, kind: input, shape index: {}]
  %s4 = inlined_call_operand.vmem [shape: bf16[9,16,128], index: 4, kind: input, shape index: {}]
  %s5 = inlined_call_operand.vmem [shape: f32[1,128], index: 5, kind: input, shape index: {}]
  %s6 = inlined_call_operand.vmem [shape: bf16[9,128,32], index: 6, kind: input, shape index: {}]
  %s7 = inlined_call_operand.vmem [shape: bf16[9,128,32], index: 7, kind: input, shape index: {}]
  %s8 = inlined_call_operand.vmem [shape: f32[1,32], index: 8, kind: input, shape index: {}]
  %s9 = inlined_call_operand.vmem [shape: f32[80,1], index: 9, kind: input, shape index: {}]
  %s10 = inlined_call_operand.vmem [shape: f32[2,32,80], index: 10, kind: output, shape index: {}]
  %s11 = sld [smem:[#allocation0]]
  $region73: #{map_to_node_forward.1} parent=0
    _
  %s13 = ssub.s32 1, %s11
  %s14 = scalar_select 0, %s13, %s11
  loop: start=0, step=1, limit=4
  $region2: #{map_to_node_forward.1} parent=0 // loop_pre_header
    _
  $region3: #{map_to_node_forward.1} parent=0 // loop_header
    %s16 = sphi 0, %s20
    %p17 = scmp.ge.s32.totalorder %s16, 4
    %s26 = sphi 0, %s28
    %s29 = sphi 0, %s26
    %s30 = sphi 0, %s29
    %s46 = sphi 0, %s30
    %s52 = sphi 0, %s54
    %s55 = sphi 0, %s52
    %s56 = sphi 0, %s55
    %s72 = sphi 0, %s56
    %s76 = sphi 0, %s76
    %s78 = sphi 0, %s76
    %s79 = sphi 0, %s78
    %s93 = sphi 0, %s79
    %s97 = sphi 0, %s97
    %s99 = sphi 0, %s97
    %s100 = sphi 0, %s99
    %s114 = sphi 0, %s100
    %s118 = sphi 0, %s118
    %s120 = sphi 0, %s118
    %s121 = sphi 0, %s120
    %s135 = sphi 0, %s121
    %s139 = sphi 0, %s139
    %s141 = sphi 0, %s139
    %s142 = sphi 0, %s141
    %s156 = sphi 0, %s142
    %s160 = sphi 0, %s160
    %s162 = sphi 0, %s160
    %s163 = sphi 0, %s162
    %s177 = sphi 0, %s163
    %s181 = sphi 0, %s181
    %s183 = sphi 0, %s181
    %s184 = sphi 0, %s183
    %s198 = sphi 0, %s184
    %s202 = sphi 0, %s202
    %s204 = sphi 0, %s202
    %s205 = sphi 0, %s204
    %s219 = sphi 0, %s205
    %s223 = sphi 0, %s223
    %s225 = sphi 0, %s223
    %s226 = sphi 0, %s225
    %s240 = sphi 0, %s226
    %s246 = sphi 0, %s248
    %s249 = sphi 0, %s246
    %s250 = sphi 0, %s249
    %s266 = sphi 0, %s250
  $region4: #{map_to_node_forward.1} parent=0 // loop_header_branch
    %19 = sbr.rel (%p17) target = $region8
  $region5: #{map_to_node_forward.1} parent=0 // loop_body
    %s21 = ssub.s32 %s16, 1
    %s22 = ssub.s32 %s16, 2
    %s23 = sadd.s32 %s16, 1
    %s24 = ssub.s32 %s16, %s23
    %p25 = scmp.eq.s32.totalorder %s24, 0
    %s27 = sadd.s32 %s26, 1
    %s28 = scalar_select %p25, %s26, %s27
    %p31 = pneg %p25
    %p32 = scmp.eq.s32.totalorder %s16, 1
    %p33 = por %p31, %p32
    %p34 = scmp.ne.s32.totalorder %s26, %s29
    %p35 = scmp.eq.s32.totalorder %s16, 0
    %p36 = por %p34, %p35
    %p37 = scmp.ne.s32.totalorder %s26, %s29
    %p38 = scmp.eq.s32.totalorder %s21, 1
    %p39 = por %p37, %p38
    %p40 = scmp.ne.s32.totalorder %s29, %s30
    %p41 = scmp.eq.s32.totalorder %s21, 0
    %p42 = por %p40, %p41
    %p43 = scmp.ne.s32.totalorder %s29, %s30
    %p44 = scmp.eq.s32.totalorder %s22, 1
    %p45 = por %p43, %p44
    %p47 = scmp.ne.s32.totalorder %s30, %s46
    %p48 = scmp.eq.s32.totalorder %s22, 0
    %p49 = por %p47, %p48
    %s50 = ssub.s32 %s16, %s23
    %p51 = scmp.eq.s32.totalorder %s50, 0
    %s53 = sadd.s32 %s52, 1
    %s54 = scalar_select %p51, %s52, %s53
    %p57 = pneg %p51
    %p58 = scmp.eq.s32.totalorder %s16, 1
    %p59 = por %p57, %p58
    %p60 = scmp.ne.s32.totalorder %s52, %s55
    %p61 = scmp.eq.s32.totalorder %s16, 0
    %p62 = por %p60, %p61
    %p63 = scmp.ne.s32.totalorder %s52, %s55
    %p64 = scmp.eq.s32.totalorder %s21, 1
    %p65 = por %p63, %p64
    %p66 = scmp.ne.s32.totalorder %s55, %s56
    %p67 = scmp.eq.s32.totalorder %s21, 0
    %p68 = por %p66, %p67
    %p69 = scmp.ne.s32.totalorder %s55, %s56
    %p70 = scmp.eq.s32.totalorder %s22, 1
    %p71 = por %p69, %p70
    %p73 = scmp.ne.s32.totalorder %s56, %s72
    %p74 = scmp.eq.s32.totalorder %s22, 0
    %p75 = por %p73, %p74
    %s77 = sadd.s32 %s76, 1
    %p80 = scmp.eq.s32.totalorder %s16, 1
    %p81 = scmp.ne.s32.totalorder %s76, %s78
    %p82 = scmp.eq.s32.totalorder %s16, 0
    %p83 = por %p81, %p82
    %p84 = scmp.ne.s32.totalorder %s76, %s78
    %p85 = scmp.eq.s32.totalorder %s21, 1
    %p86 = por %p84, %p85
    %p87 = scmp.ne.s32.totalorder %s78, %s79
    %p88 = scmp.eq.s32.totalorder %s21, 0
    %p89 = por %p87, %p88
    %p90 = scmp.ne.s32.totalorder %s78, %s79
    %p91 = scmp.eq.s32.totalorder %s22, 1
    %p92 = por %p90, %p91
    %p94 = scmp.ne.s32.totalorder %s79, %s93
    %p95 = scmp.eq.s32.totalorder %s22, 0
    %p96 = por %p94, %p95
    %s98 = sadd.s32 %s97, 1
    %p101 = scmp.eq.s32.totalorder %s16, 1
    %p102 = scmp.ne.s32.totalorder %s97, %s99
    %p103 = scmp.eq.s32.totalorder %s16, 0
    %p104 = por %p102, %p103
    %p105 = scmp.ne.s32.totalorder %s97, %s99
    %p106 = scmp.eq.s32.totalorder %s21, 1
    %p107 = por %p105, %p106
    %p108 = scmp.ne.s32.totalorder %s99, %s100
    %p109 = scmp.eq.s32.totalorder %s21, 0
    %p110 = por %p108, %p109
    %p111 = scmp.ne.s32.totalorder %s99, %s100
    %p112 = scmp.eq.s32.totalorder %s22, 1
    %p113 = por %p111, %p112
    %p115 = scmp.ne.s32.totalorder %s100, %s114
    %p116 = scmp.eq.s32.totalorder %s22, 0
    %p117 = por %p115, %p116
    %s119 = sadd.s32 %s118, 1
    %p122 = scmp.eq.s32.totalorder %s16, 1
    %p123 = scmp.ne.s32.totalorder %s118, %s120
    %p124 = scmp.eq.s32.totalorder %s16, 0
    %p125 = por %p123, %p124
    %p126 = scmp.ne.s32.totalorder %s118, %s120
    %p127 = scmp.eq.s32.totalorder %s21, 1
    %p128 = por %p126, %p127
    %p129 = scmp.ne.s32.totalorder %s120, %s121
    %p130 = scmp.eq.s32.totalorder %s21, 0
    %p131 = por %p129, %p130
    %p132 = scmp.ne.s32.totalorder %s120, %s121
    %p133 = scmp.eq.s32.totalorder %s22, 1
    %p134 = por %p132, %p133
    %p136 = scmp.ne.s32.totalorder %s121, %s135
    %p137 = scmp.eq.s32.totalorder %s22, 0
    %p138 = por %p136, %p137
    %s140 = sadd.s32 %s139, 1
    %p143 = scmp.eq.s32.totalorder %s16, 1
    %p144 = scmp.ne.s32.totalorder %s139, %s141
    %p145 = scmp.eq.s32.totalorder %s16, 0
    %p146 = por %p144, %p145
    %p147 = scmp.ne.s32.totalorder %s139, %s141
    %p148 = scmp.eq.s32.totalorder %s21, 1
    %p149 = por %p147, %p148
    %p150 = scmp.ne.s32.totalorder %s141, %s142
    %p151 = scmp.eq.s32.totalorder %s21, 0
    %p152 = por %p150, %p151
    %p153 = scmp.ne.s32.totalorder %s141, %s142
    %p154 = scmp.eq.s32.totalorder %s22, 1
    %p155 = por %p153, %p154
    %p157 = scmp.ne.s32.totalorder %s142, %s156
    %p158 = scmp.eq.s32.totalorder %s22, 0
    %p159 = por %p157, %p158
    %s161 = sadd.s32 %s160, 1
    %p164 = scmp.eq.s32.totalorder %s16, 1
    %p165 = scmp.ne.s32.totalorder %s160, %s162
    %p166 = scmp.eq.s32.totalorder %s16, 0
    %p167 = por %p165, %p166
    %p168 = scmp.ne.s32.totalorder %s160, %s162
    %p169 = scmp.eq.s32.totalorder %s21, 1
    %p170 = por %p168, %p169
    %p171 = scmp.ne.s32.totalorder %s162, %s163
    %p172 = scmp.eq.s32.totalorder %s21, 0
    %p173 = por %p171, %p172
    %p174 = scmp.ne.s32.totalorder %s162, %s163
    %p175 = scmp.eq.s32.totalorder %s22, 1
    %p176 = por %p174, %p175
    %p178 = scmp.ne.s32.totalorder %s163, %s177
    %p179 = scmp.eq.s32.totalorder %s22, 0
    %p180 = por %p178, %p179
    %s182 = sadd.s32 %s181, 1
    %p185 = scmp.eq.s32.totalorder %s16, 1
    %p186 = scmp.ne.s32.totalorder %s181, %s183
    %p187 = scmp.eq.s32.totalorder %s16, 0
    %p188 = por %p186, %p187
    %p189 = scmp.ne.s32.totalorder %s181, %s183
    %p190 = scmp.eq.s32.totalorder %s21, 1
    %p191 = por %p189, %p190
    %p192 = scmp.ne.s32.totalorder %s183, %s184
    %p193 = scmp.eq.s32.totalorder %s21, 0
    %p194 = por %p192, %p193
    %p195 = scmp.ne.s32.totalorder %s183, %s184
    %p196 = scmp.eq.s32.totalorder %s22, 1
    %p197 = por %p195, %p196
    %p199 = scmp.ne.s32.totalorder %s184, %s198
    %p200 = scmp.eq.s32.totalorder %s22, 0
    %p201 = por %p199, %p200
    %s203 = sadd.s32 %s202, 1
    %p206 = scmp.eq.s32.totalorder %s16, 1
    %p207 = scmp.ne.s32.totalorder %s202, %s204
    %p208 = scmp.eq.s32.totalorder %s16, 0
    %p209 = por %p207, %p208
    %p210 = scmp.ne.s32.totalorder %s202, %s204
    %p211 = scmp.eq.s32.totalorder %s21, 1
    %p212 = por %p210, %p211
    %p213 = scmp.ne.s32.totalorder %s204, %s205
    %p214 = scmp.eq.s32.totalorder %s21, 0
    %p215 = por %p213, %p214
    %p216 = scmp.ne.s32.totalorder %s204, %s205
    %p217 = scmp.eq.s32.totalorder %s22, 1
    %p218 = por %p216, %p217
    %p220 = scmp.ne.s32.totalorder %s205, %s219
    %p221 = scmp.eq.s32.totalorder %s22, 0
    %p222 = por %p220, %p221
    %s224 = sadd.s32 %s223, 1
    %p227 = scmp.eq.s32.totalorder %s16, 1
    %p228 = scmp.ne.s32.totalorder %s223, %s225
    %p229 = scmp.eq.s32.totalorder %s16, 0
    %p230 = por %p228, %p229
    %p231 = scmp.ne.s32.totalorder %s223, %s225
    %p232 = scmp.eq.s32.totalorder %s21, 1
    %p233 = por %p231, %p232
    %p234 = scmp.ne.s32.totalorder %s225, %s226
    %p235 = scmp.eq.s32.totalorder %s21, 0
    %p236 = por %p234, %p235
    %p237 = scmp.ne.s32.totalorder %s225, %s226
    %p238 = scmp.eq.s32.totalorder %s22, 1
    %p239 = por %p237, %p238
    %p241 = scmp.ne.s32.totalorder %s226, %s240
    %p242 = scmp.eq.s32.totalorder %s22, 0
    %p243 = por %p241, %p242
    %s244 = ssub.s32 %s16, %s23
    %p245 = scmp.eq.s32.totalorder %s244, 0
    %s247 = sadd.s32 %s246, 1
    %s248 = scalar_select %p245, %s246, %s247
    %p251 = pneg %p245
    %p252 = scmp.eq.s32.totalorder %s16, 1
    %p253 = por %p251, %p252
    %p254 = scmp.ne.s32.totalorder %s246, %s249
    %p255 = scmp.eq.s32.totalorder %s16, 0
    %p256 = por %p254, %p255
    %p257 = scmp.ne.s32.totalorder %s246, %s249
    %p258 = scmp.eq.s32.totalorder %s21, 1
    %p259 = por %p257, %p258
    %p260 = scmp.ne.s32.totalorder %s249, %s250
    %p261 = scmp.eq.s32.totalorder %s21, 0
    %p262 = por %p260, %p261
    %p263 = scmp.ne.s32.totalorder %s249, %s250
    %p264 = scmp.eq.s32.totalorder %s22, 1
    %p265 = por %p263, %p264
    %p267 = scmp.ne.s32.totalorder %s250, %s266
    %p268 = scmp.eq.s32.totalorder %s22, 0
    %p269 = por %p267, %p268
    %p270 = scmp.le.s32.totalorder 1, %s16
    %p271 = scmp.lt.s32.totalorder %s16, 3
    %p272 = pnand %p270, %p271
    %p273 = pneg %p272
    // Predicated region
    $region9: #{map_to_node_forward.1} parent=5 // pred_check
      _
    $region10: #{map_to_node_forward.1} parent=5 // pred_check_branch
      %275 = sbr.rel (%p272) target = $region12
    $region11: #{map_to_node_forward.1} parent=5 // pred_region
      %s276 = ssub.s32 %s16, 1
      // Predicated region
      $region13: #{map_to_node_forward.1} parent=11 // pred_check
        %p277 = pneg %p89
      $region14: #{map_to_node_forward.1} parent=11 // pred_check_branch
        %279 = sbr.rel (%p277) target = $region16
      $region15: #{map_to_node_forward.1} parent=11 // pred_region
        _
      $region16: #{map_to_node_forward.1} parent=11 // pred_fallthru
        _
      // Predicated region
      $region17: #{map_to_node_forward.1} parent=11 // pred_check
        %p280 = pneg %p110
      $region18: #{map_to_node_forward.1} parent=11 // pred_check_branch
        %282 = sbr.rel (%p280) target = $region20
      $region19: #{map_to_node_forward.1} parent=11 // pred_region
        _
      $region20: #{map_to_node_forward.1} parent=11 // pred_fallthru
        _
      // Predicated region
      $region21: #{map_to_node_forward.1} parent=11 // pred_check
        %p283 = pneg %p131
      $region22: #{map_to_node_forward.1} parent=11 // pred_check_branch
        %285 = sbr.rel (%p283) target = $region24
      $region23: #{map_to_node_forward.1} parent=11 // pred_region
        _
      $region24: #{map_to_node_forward.1} parent=11 // pred_fallthru
        _
      // Predicated region
      $region25: #{map_to_node_forward.1} parent=11 // pred_check
        %p286 = pneg %p152
      $region26: #{map_to_node_forward.1} parent=11 // pred_check_branch
        %288 = sbr.rel (%p286) target = $region28
      $region27: #{map_to_node_forward.1} parent=11 // pred_region
        _
      $region28: #{map_to_node_forward.1} parent=11 // pred_fallthru
        _
      // Predicated region
      $region29: #{map_to_node_forward.1} parent=11 // pred_check
        %p289 = pneg %p173
      $region30: #{map_to_node_forward.1} parent=11 // pred_check_branch
        %291 = sbr.rel (%p289) target = $region32
      $region31: #{map_to_node_forward.1} parent=11 // pred_region
        _
      $region32: #{map_to_node_forward.1} parent=11 // pred_fallthru
        _
      // Predicated region
      $region33: #{map_to_node_forward.1} parent=11 // pred_check
        %p292 = pneg %p194
      $region34: #{map_to_node_forward.1} parent=11 // pred_check_branch
        %294 = sbr.rel (%p292) target = $region36
      $region35: #{map_to_node_forward.1} parent=11 // pred_region
        _
      $region36: #{map_to_node_forward.1} parent=11 // pred_fallthru
        _
      // Predicated region
      $region37: #{map_to_node_forward.1} parent=11 // pred_check
        %p295 = pneg %p215
      $region38: #{map_to_node_forward.1} parent=11 // pred_check_branch
        %297 = sbr.rel (%p295) target = $region40
      $region39: #{map_to_node_forward.1} parent=11 // pred_region
        _
      $region40: #{map_to_node_forward.1} parent=11 // pred_fallthru
        _
      // Predicated region
      $region41: #{map_to_node_forward.1} parent=11 // pred_check
        %p298 = pneg %p236
      $region42: #{map_to_node_forward.1} parent=11 // pred_check_branch
        %300 = sbr.rel (%p298) target = $region44
      $region43: #{map_to_node_forward.1} parent=11 // pred_region
        _
      $region44: #{map_to_node_forward.1} parent=11 // pred_fallthru
        _
    $region12: #{map_to_node_forward.1} parent=5 // pred_fallthru
      _
    %p301 = scmp.lt.s32.totalorder %s16, 2
    // Predicated region
    $region45: #{map_to_node_forward.1} parent=5 // pred_check
      %p302 = pneg %p301
    $region46: #{map_to_node_forward.1} parent=5 // pred_check_branch
      %304 = sbr.rel (%p302) target = $region48
    $region47: #{map_to_node_forward.1} parent=5 // pred_region
      // Predicated region
      $region49: #{map_to_node_forward.1} parent=47 // pred_check
        %p305 = pneg %p36
      $region50: #{map_to_node_forward.1} parent=47 // pred_check_branch
        %307 = sbr.rel (%p305) target = $region52
      $region51: #{map_to_node_forward.1} parent=47 // pred_region
        %p308 = scmp.lt.s32.totalorder %s16, 1
        %s309 = scalar_select %p308, %s16, 1
        %s310 = smul.addr %s309, 52
        %s311 = smul.addr %s310, 4
        %s312 = scalar_lea.vmem %s0, %s311
      $region52: #{map_to_node_forward.1} parent=47 // pred_fallthru
        _
      // Predicated region
      $region53: #{map_to_node_forward.1} parent=47 // pred_check
        %p313 = pneg %p62
      $region54: #{map_to_node_forward.1} parent=47 // pred_check_branch
        %315 = sbr.rel (%p313) target = $region56
      $region55: #{map_to_node_forward.1} parent=47 // pred_region
        %p316 = scmp.lt.s32.totalorder %s16, 1
        %s317 = scalar_select %p316, %s16, 1
        %s318 = smul.addr %s317, 14
        %s319 = smul.addr %s318, 4
        %s320 = scalar_lea.vmem %s1, %s319
      $region56: #{map_to_node_forward.1} parent=47 // pred_fallthru
        _
    $region48: #{map_to_node_forward.1} parent=5 // pred_fallthru
      _
    %p321 = scmp.le.s32.totalorder 1, %s16
    %p322 = scmp.lt.s32.totalorder %s16, 3
    %p323 = pnand %p321, %p322
    %p324 = pneg %p323
    // Predicated region
    $region57: #{map_to_node_forward.1} parent=5 // pred_check
      _
    $region58: #{map_to_node_forward.1} parent=5 // pred_check_branch
      %326 = sbr.rel (%p323) target = $region60
    $region59: #{map_to_node_forward.1} parent=5 // pred_region
      %s327 = ssub.s32 %s16, 1
      %p328 = scmp.lt.s32.totalorder %s21, 1
      %s329 = scalar_select %p328, %s21, 1
      %s330 = smul.addr %s329, 52
      %s331 = smul.addr %s330, 4
      %s332 = scalar_lea.vmem %s0, %s331
      %p333 = pneg %p42
      %p334 = pneg %p39
      %p335 = scmp.lt.s32.totalorder %s21, 1
      %s336 = scalar_select %p335, %s21, 1
      %s337 = smul.addr %s336, 14
      %s338 = smul.addr %s337, 4
      %s339 = scalar_lea.vmem %s1, %s338
      %p340 = pneg %p68
      %p341 = pneg %p65
      %p342 = pneg %p89
      %p343 = pneg %p86
      %p344 = pneg %p110
      %p345 = pneg %p107
      %p346 = pneg %p131
      %p347 = pneg %p128
      %p348 = pneg %p152
      %p349 = pneg %p149
      %p350 = pneg %p173
      %p351 = pneg %p170
      %p352 = pneg %p194
      %p353 = pneg %p191
      %p354 = pneg %p215
      %p355 = pneg %p212
      %p356 = pneg %p236
      %p357 = pneg %p233
      %p358 = pneg %p262
      %p359 = pneg %p259
      %p360 = scmp.lt.s32.totalorder %s21, 1
      %s361 = scalar_select %p360, %s21, 1
      %s362 = smul.addr %s361, 4
      %s363 = smul.addr %s362, 8
      %s364 = scalar_lea.vmem %s10, %s363
      %p365 = scmp.lt.s32.totalorder %s21, 1
      %s366 = scalar_select %p365, %s21, 1
      %s367 = smul.addr %s366, 52
      %s368 = smul.addr %s367, 4
      %s369 = scalar_lea.vmem %s0, %s368
      %p370 = scmp.lt.s32.totalorder %s21, 1
      %s371 = scalar_select %p370, %s21, 1
      %s372 = smul.addr %s371, 14
      %s373 = smul.addr %s372, 4
      %s374 = scalar_lea.vmem %s1, %s373
      %p375 = scmp.lt.s32.totalorder %s21, 1
      %s376 = scalar_select %p375, %s21, 1
      %s377 = smul.addr %s376, 4
      %s378 = smul.addr %s377, 8
      %s379 = scalar_lea.vmem %s10, %s378
      %v381 = vld [vmem:[%s9] sm:$0xff]
      %v382 = vld [vmem:[%s9 + $0x8] sm:$0xff]
      %v383 = vld [vmem:[%s9 + $0x10] sm:$0xff]
      %v384 = vld [vmem:[%s9 + $0x18] sm:$0xff]
      %v385 = vld [vmem:[%s9 + $0x20] sm:$0xff]
      %v386 = vld [vmem:[%s9 + $0x28] sm:$0xff]
      %v387 = vld [vmem:[%s9 + $0x30] sm:$0xff]
      %v388 = vld [vmem:[%s9 + $0x38] sm:$0xff]
      %v389 = vld [vmem:[%s9 + $0x40] sm:$0xff]
      %v390 = vld [vmem:[%s9 + $0x48] sm:$0xff]
      %v391 = vld [vmem:[%s369] sm:$0xf]
      %v392 = vld [vmem:[%s369 + $0x4] sm:$0xf]
      %v393 = vld [vmem:[%s369 + $0x8] sm:$0xf]
      %v394 = vld [vmem:[%s369 + $0xc] sm:$0xf]
      %v395 = vld [vmem:[%s369 + $0x10] sm:$0xf]
      %v396 = vld [vmem:[%s369 + $0x14] sm:$0xf]
      %v397 = vld [vmem:[%s369 + $0x18] sm:$0xf]
      %v398 = vld [vmem:[%s369 + $0x1c] sm:$0xf]
      %v399 = vld [vmem:[%s369 + $0x20] sm:$0xf]
      %v400 = vld [vmem:[%s369 + $0x24] sm:$0xf]
      %v401 = vld [vmem:[%s2] sm:$0xf]
      %s402 = scalar_lea.vmem %s369, 52
      %v403 = vld [vmem:[%s402] sm:$0xf]
      %v404 = vld [vmem:[%s402 + $0x4] sm:$0xf]
      %v405 = vld [vmem:[%s402 + $0x8] sm:$0xf]
      %v406 = vld [vmem:[%s402 + $0xc] sm:$0xf]
      %v407 = vld [vmem:[%s402 + $0x10] sm:$0xf]
      %v408 = vld [vmem:[%s402 + $0x14] sm:$0xf]
      %v409 = vld [vmem:[%s402 + $0x18] sm:$0xf]
      %v410 = vld [vmem:[%s402 + $0x1c] sm:$0xf]
      %v411 = vld [vmem:[%s402 + $0x20] sm:$0xf]
      %v412 = vld [vmem:[%s402 + $0x24] sm:$0xf]
      %s413 = scalar_lea.vmem %s2, 4
      %v414 = vld [vmem:[%s413] sm:$0xf]
      %v425 = vunpack.c.l.b16 %v403
      %v426 = vunpack.c.l.b16 %v404
      %v427 = vunpack.c.l.b16 %v405
      %v428 = vunpack.c.l.b16 %v406
      %v429 = vunpack.c.l.b16 %v407
      %v430 = vunpack.c.l.b16 %v408
      %v431 = vunpack.c.l.b16 %v409
      %v432 = vunpack.c.l.b16 %v410
      %v433 = vunpack.c.l.b16 %v411
      %v434 = vunpack.c.l.b16 %v412
      %v435 = vpack.c.b16 %v426, %v425
      %v436 = vpack.c.b16 %v428, %v427
      %v437 = vpack.c.b16 %v430, %v429
      %v438 = vpack.c.b16 %v432, %v431
      %v439 = vpack.c.b16 %v434, %v433
      %vm440 = vcmask 64512
      %v442 = vsel %vm440, %v435, 0
      %v445 = vsel %vm440, %v436, 0
      %v448 = vsel %vm440, %v437, 0
      %v451 = vsel %vm440, %v438, 0
      %v454 = vsel %vm440, %v439, 0
      %vm456 = vcmask 1043456
      %v458 = vsel %vm456, %v414, 0
      %460 = vmatprep.subr.bf16.mxu0 0
      %461 = vmatpush1.bf16.msra.mxu0 %v458
      %462 = vmatprep.subr.bf16.mxu0 0
      %463 = vmatpush1.bf16.msra.mxu0 0
      %464 = vmatprep.subr.bf16.mxu0 0
      %465 = vmatpush1.bf16.msra.mxu0 0
      %466 = vmatprep.subr.bf16.mxu0 0
      %467 = vmatpush1.bf16.msra.mxu0 0
      %468 = vmatprep.subr.bf16.mxu0 0
      %469 = vmatpush1.bf16.msra.mxu0 0
      %470 = vmatprep.subr.bf16.mxu0 0
      %471 = vmatpush1.bf16.msra.mxu0 0
      %472 = vmatprep.subr.bf16.mxu0 0
      %473 = vmatpush1.bf16.msra.mxu0 0
      %474 = vmatprep.subr.bf16.mxu0 0
      %475 = vmatpush1.bf16.msra.mxu0 0
      %476 = vmatprep.subr.bf16.mxu0 0
      %477 = vmatpush1.bf16.msra.mxu0 0
      %478 = vmatprep.subr.bf16.mxu0 0
      %479 = vmatpush1.bf16.msra.mxu0 0
      %480 = vmatprep.subr.bf16.mxu0 0
      %481 = vmatpush1.bf16.msra.mxu0 0
      %482 = vmatprep.subr.bf16.mxu0 0
      %483 = vmatpush1.bf16.msra.mxu0 0
      %484 = vmatprep.subr.bf16.mxu0 0
      %485 = vmatpush1.bf16.msra.mxu0 0
      %486 = vmatprep.subr.bf16.mxu0 0
      %487 = vmatpush1.bf16.msra.mxu0 0
      %488 = vmatprep.subr.bf16.mxu0 0
      %489 = vmatpush1.bf16.msra.mxu0 0
      %490 = vmatprep.subr.bf16.mxu0 0
      %491 = vmatpush1.bf16.msra.mxu0 0
      %492 = vmatprep.mubr.bf16.mxu0 0
      %493 = vmatmul.mubr.bf16.gmra.mrb[0].mxu0 %v442
      %v494 = vpop.f32.mrb[0].mxu0
      %v495 = vadd.f32 0.0, %v494
      %v496 = vpop.f32.mrb[0].mxu0
      %v497 = vpop.f32.mrb[0].mxu0
      %v498 = vadd.f32 0.0, %v497
      %v499 = vpop.f32.mrb[0].mxu0
      %500 = vmatprep.mubr.bf16.mxu0 0
      %501 = vmatmul.mubr.bf16.gmra.mrb[0].mxu0 %v445
      %v502 = vpop.f32.mrb[0].mxu0
      %v503 = vadd.f32 0.0, %v502
      %v504 = vpop.f32.mrb[0].mxu0
      %v505 = vpop.f32.mrb[0].mxu0
      %v506 = vadd.f32 0.0, %v505
      %v507 = vpop.f32.mrb[0].mxu0
      %508 = vmatprep.mubr.bf16.mxu0 0
      %509 = vmatmul.mubr.bf16.gmra.mrb[0].mxu0 %v448
      %v510 = vpop.f32.mrb[0].mxu0
      %v511 = vadd.f32 0.0, %v510
      %v512 = vpop.f32.mrb[0].mxu0
      %v513 = vpop.f32.mrb[0].mxu0
      %v514 = vadd.f32 0.0, %v513
      %v515 = vpop.f32.mrb[0].mxu0
      %516 = vmatprep.mubr.bf16.mxu0 0
      %517 = vmatmul.mubr.bf16.gmra.mrb[0].mxu0 %v451
      %v518 = vpop.f32.mrb[0].mxu0
      %v519 = vadd.f32 0.0, %v518
      %v520 = vpop.f32.mrb[0].mxu0
      %v521 = vpop.f32.mrb[0].mxu0
      %v522 = vadd.f32 0.0, %v521
      %v523 = vpop.f32.mrb[0].mxu0
      %524 = vmatprep.mubr.bf16.mxu0 0
      %525 = vmatmul.mubr.bf16.gmra.mrb[0].mxu0 %v454
      %v526 = vpop.f32.mrb[0].mxu0
      %v527 = vadd.f32 0.0, %v526
      %v528 = vpop.f32.mrb[0].mxu0
      %v529 = vpop.f32.mrb[0].mxu0
      %v530 = vadd.f32 0.0, %v529
      %v531 = vpop.f32.mrb[0].mxu0
      %532 = vdwg.mxu0
      %v543 = vunpack.c.l.b16 %v391
      %v544 = vunpack.c.l.b16 %v392
      %v545 = vunpack.c.l.b16 %v393
      %v546 = vunpack.c.l.b16 %v394
      %v547 = vunpack.c.l.b16 %v395
      %v548 = vunpack.c.l.b16 %v396
      %v549 = vunpack.c.l.b16 %v397
      %v550 = vunpack.c.l.b16 %v398
      %v551 = vunpack.c.l.b16 %v399
      %v552 = vunpack.c.l.b16 %v400
      %v553 = vpack.c.b16 %v544, %v543
      %v554 = vpack.c.b16 %v546, %v545
      %v555 = vpack.c.b16 %v548, %v547
      %v556 = vpack.c.b16 %v550, %v549
      %v557 = vpack.c.b16 %v552, %v551
      %v559 = vsel %vm440, %v553, 0
      %v562 = vsel %vm440, %v554, 0
      %v565 = vsel %vm440, %v555, 0
      %v568 = vsel %vm440, %v556, 0
      %v571 = vsel %vm440, %v557, 0
      %v574 = vsel %vm456, %v401, 0
      %576 = vmatprep.subr.bf16.mxu0 0
      %577 = vmatpush1.bf16.msra.mxu0 %v574
      %578 = vmatprep.subr.bf16.mxu0 0
      %579 = vmatpush1.bf16.msra.mxu0 0
      %580 = vmatprep.subr.bf16.mxu0 0
      %581 = vmatpush1.bf16.msra.mxu0 0
      %582 = vmatprep.subr.bf16.mxu0 0
      %583 = vmatpush1.bf16.msra.mxu0 0
      %584 = vmatprep.subr.bf16.mxu0 0
      %585 = vmatpush1.bf16.msra.mxu0 0
      %586 = vmatprep.subr.bf16.mxu0 0
      %587 = vmatpush1.bf16.msra.mxu0 0
      %588 = vmatprep.subr.bf16.mxu0 0
      %589 = vmatpush1.bf16.msra.mxu0 0
      %590 = vmatprep.subr.bf16.mxu0 0
      %591 = vmatpush1.bf16.msra.mxu0 0
      %592 = vmatprep.subr.bf16.mxu0 0
      %593 = vmatpush1.bf16.msra.mxu0 0
      %594 = vmatprep.subr.bf16.mxu0 0
      %595 = vmatpush1.bf16.msra.mxu0 0
      %596 = vmatprep.subr.bf16.mxu0 0
      %597 = vmatpush1.bf16.msra.mxu0 0
      %598 = vmatprep.subr.bf16.mxu0 0
      %599 = vmatpush1.bf16.msra.mxu0 0
      %600 = vmatprep.subr.bf16.mxu0 0
      %601 = vmatpush1.bf16.msra.mxu0 0
      %602 = vmatprep.subr.bf16.mxu0 0
      %603 = vmatpush1.bf16.msra.mxu0 0
      %604 = vmatprep.subr.bf16.mxu0 0
      %605 = vmatpush1.bf16.msra.mxu0 0
      %606 = vmatprep.subr.bf16.mxu0 0
      %607 = vmatpush1.bf16.msra.mxu0 0
      %608 = vmatprep.mubr.bf16.mxu0 0
      %609 = vmatmul.mubr.bf16.gmra.mrb[0].mxu0 %v559
      %v610 = vpop.f32.mrb[0].mxu0
      %v611 = vadd.f32 %v495, %v610
      %v612 = vpop.f32.mrb[0].mxu0
      %v613 = vpop.f32.mrb[0].mxu0
      %v614 = vadd.f32 %v498, %v613
      %v615 = vpop.f32.mrb[0].mxu0
      %616 = vmatprep.mubr.bf16.mxu0 0
      %617 = vmatmul.mubr.bf16.gmra.mrb[0].mxu0 %v562
      %v618 = vpop.f32.mrb[0].mxu0
      %v619 = vadd.f32 %v503, %v618
      %v620 = vpop.f32.mrb[0].mxu0
      %v621 = vpop.f32.mrb[0].mxu0
      %v622 = vadd.f32 %v506, %v621
      %v623 = vpop.f32.mrb[0].mxu0
      %624 = vmatprep.mubr.bf16.mxu0 0
      %625 = vmatmul.mubr.bf16.gmra.mrb[0].mxu0 %v565
      %v626 = vpop.f32.mrb[0].mxu0
      %v627 = vadd.f32 %v511, %v626
      %v628 = vpop.f32.mrb[0].mxu0
      %v629 = vpop.f32.mrb[0].mxu0
      %v630 = vadd.f32 %v514, %v629
      %v631 = vpop.f32.mrb[0].mxu0
      %632 = vmatprep.mubr.bf16.mxu0 0
      %633 = vmatmul.mubr.bf16.gmra.mrb[0].mxu0 %v568
      %v634 = vpop.f32.mrb[0].mxu0
      %v635 = vadd.f32 %v519, %v634
      %v636 = vpop.f32.mrb[0].mxu0
      %v637 = vpop.f32.mrb[0].mxu0
      %v638 = vadd.f32 %v522, %v637
      %v639 = vpop.f32.mrb[0].mxu0
      %640 = vmatprep.mubr.bf16.mxu0 0
      %641 = vmatmul.mubr.bf16.gmra.mrb[0].mxu0 %v571
      %v642 = vpop.f32.mrb[0].mxu0
      %v643 = vadd.f32 %v527, %v642
      %v644 = vpop.f32.mrb[0].mxu0
      %v645 = vpop.f32.mrb[0].mxu0
      %v646 = vadd.f32 %v530, %v645
      %v647 = vpop.f32.mrb[0].mxu0
      %648 = vdwg.mxu0
      %v649 = vld [vmem:[%s369] sm:$0xf]
      %v650 = vld [vmem:[%s369 + $0x4] sm:$0xf]
      %v651 = vld [vmem:[%s369 + $0x8] sm:$0xf]
      %v652 = vld [vmem:[%s369 + $0xc] sm:$0xf]
      %v653 = vld [vmem:[%s369 + $0x10] sm:$0xf]
      %v654 = vld [vmem:[%s369 + $0x14] sm:$0xf]
      %v655 = vld [vmem:[%s369 + $0x18] sm:$0xf]
      %v656 = vld [vmem:[%s369 + $0x1c] sm:$0xf]
      %v657 = vld [vmem:[%s369 + $0x20] sm:$0xf]
      %v658 = vld [vmem:[%s369 + $0x24] sm:$0xf]
      %v659 = vld [vmem:[%s369 + $0x28] sm:$0x1]
      %s660 = scalar_lea.vmem %s2, 8
      %v661 = vld [vmem:[%s660] sm:$0xf]
      %v673 = vunpack.c.l.b16 %v649
      %v674 = vunpack.c.l.b16 %v650
      %v675 = vunpack.c.l.b16 %v651
      %v676 = vunpack.c.l.b16 %v652
      %v677 = vunpack.c.l.b16 %v653
      %v678 = vunpack.c.l.b16 %v654
      %v679 = vunpack.c.l.b16 %v655
      %v680 = vunpack.c.l.b16 %v656
      %v681 = vunpack.c.l.b16 %v657
      %v682 = vunpack.c.l.b16 %v658
      %v683 = vunpack.c.l.b16 %v659
      %v684 = vpack.c.b16 %v674, %v673
      %v685 = vpack.c.b16 %v676, %v675
      %v686 = vpack.c.b16 %v678, %v677
      %v687 = vpack.c.b16 %v680, %v679
      %v688 = vpack.c.b16 %v682, %v681
      %v689 = vpack.c.b16 %v683, %v683
      %vm690 = vsmask.f32 7424
      %v692 = vshrl.u32 %v684, 16
      %v694 = vshll.u32 %v684, 16
      %v696 = vrot.slane %v694, 1
      %v697 = vor.u32 %v692, %v696
      %v699 = vshll.u32 %v685, 16
      %v701 = vrot.slane %v699, 1
      %v702 = vsel %vm690, %v697, %v701
      %v703 = vshrl.u32 %v685, 16
      %v705 = vor.u32 %v703, %v701
      %v707 = vshll.u32 %v686, 16
      %v709 = vrot.slane %v707, 1
      %v710 = vsel %vm690, %v705, %v709
      %v711 = vshrl.u32 %v686, 16
      %v713 = vor.u32 %v711, %v709
      %v715 = vshll.u32 %v687, 16
      %v717 = vrot.slane %v715, 1
      %v718 = vsel %vm690, %v713, %v717
      %v719 = vshrl.u32 %v687, 16
      %v721 = vor.u32 %v719, %v717
      %v723 = vshll.u32 %v688, 16
      %v725 = vrot.slane %v723, 1
      %v726 = vsel %vm690, %v721, %v725
      %v727 = vshrl.u32 %v688, 16
      %v729 = vor.u32 %v727, %v725
      %v731 = vshll.u32 %v689, 16
      %v733 = vrot.slane %v731, 1
      %v734 = vsel %vm690, %v729, %v733
      %v736 = vsel %vm440, %v702, 0
      %v739 = vsel %vm440, %v710, 0
      %v742 = vsel %vm440, %v718, 0
      %v745 = vsel %vm440, %v726, 0
      %v748 = vsel %vm440, %v734, 0
      %v751 = vsel %vm456, %v661, 0
      %753 = vmatprep.subr.bf16.mxu0 0
      %754 = vmatpush1.bf16.msra.mxu0 %v751
      %755 = vmatprep.subr.bf16.mxu0 0
      %756 = vmatpush1.bf16.msra.mxu0 0
      %757 = vmatprep.subr.bf16.mxu0 0
      %758 = vmatpush1.bf16.msra.mxu0 0
      %759 = vmatprep.subr.bf16.mxu0 0
      %760 = vmatpush1.bf16.msra.mxu0 0
      %761 = vmatprep.subr.bf16.mxu0 0
      %762 = vmatpush1.bf16.msra.mxu0 0
      %763 = vmatprep.subr.bf16.mxu0 0
      %764 = vmatpush1.bf16.msra.mxu0 0
      %765 = vmatprep.subr.bf16.mxu0 0
      %766 = vmatpush1.bf16.msra.mxu0 0
      %767 = vmatprep.subr.bf16.mxu0 0
      %768 = vmatpush1.bf16.msra.mxu0 0
      %769 = vmatprep.subr.bf16.mxu0 0
      %770 = vmatpush1.bf16.msra.mxu0 0
      %771 = vmatprep.subr.bf16.mxu0 0
      %772 = vmatpush1.bf16.msra.mxu0 0
      %773 = vmatprep.subr.bf16.mxu0 0
      %774 = vmatpush1.bf16.msra.mxu0 0
      %775 = vmatprep.subr.bf16.mxu0 0
      %776 = vmatpush1.bf16.msra.mxu0 0
      %777 = vmatprep.subr.bf16.mxu0 0
      %778 = vmatpush1.bf16.msra.mxu0 0
      %779 = vmatprep.subr.bf16.mxu0 0
      %780 = vmatpush1.bf16.msra.mxu0 0
      %781 = vmatprep.subr.bf16.mxu0 0
      %782 = vmatpush1.bf16.msra.mxu0 0
      %783 = vmatprep.subr.bf16.mxu0 0
      %784 = vmatpush1.bf16.msra.mxu0 0
      %785 = vmatprep.mubr.bf16.mxu0 0
      %786 = vmatmul.mubr.bf16.gmra.mrb[0].mxu0 %v736
      %v787 = vpop.f32.mrb[0].mxu0
      %v788 = vadd.f32 0.0, %v787
      %v789 = vpop.f32.mrb[0].mxu0
      %v790 = vpop.f32.mrb[0].mxu0
      %v791 = vadd.f32 0.0, %v790
      %v792 = vpop.f32.mrb[0].mxu0
      %793 = vmatprep.mubr.bf16.mxu0 0
      %794 = vmatmul.mubr.bf16.gmra.mrb[0].mxu0 %v739
      %v795 = vpop.f32.mrb[0].mxu0
      %v796 = vadd.f32 0.0, %v795
      %v797 = vpop.f32.mrb[0].mxu0
      %v798 = vpop.f32.mrb[0].mxu0
      %v799 = vadd.f32 0.0, %v798
      %v800 = vpop.f32.mrb[0].mxu0
      %801 = vmatprep.mubr.bf16.mxu0 0
      %802 = vmatmul.mubr.bf16.gmra.mrb[0].mxu0 %v742
      %v803 = vpop.f32.mrb[0].mxu0
      %v804 = vadd.f32 0.0, %v803
      %v805 = vpop.f32.mrb[0].mxu0
      %v806 = vpop.f32.mrb[0].mxu0
      %v807 = vadd.f32 0.0, %v806
      %v808 = vpop.f32.mrb[0].mxu0
      %809 = vmatprep.mubr.bf16.mxu0 0
      %810 = vmatmul.mubr.bf16.gmra.mrb[0].mxu0 %v745
      %v811 = vpop.f32.mrb[0].mxu0
      %v812 = vadd.f32 0.0, %v811
      %v813 = vpop.f32.mrb[0].mxu0
      %v814 = vpop.f32.mrb[0].mxu0
      %v815 = vadd.f32 0.0, %v814
      %v816 = vpop.f32.mrb[0].mxu0
      %817 = vmatprep.mubr.bf16.mxu0 0
      %818 = vmatmul.mubr.bf16.gmra.mrb[0].mxu0 %v748
      %v819 = vpop.f32.mrb[0].mxu0
      %v820 = vadd.f32 0.0, %v819
      %v821 = vpop.f32.mrb[0].mxu0
      %v822 = vpop.f32.mrb[0].mxu0
      %v823 = vadd.f32 0.0, %v822
      %v824 = vpop.f32.mrb[0].mxu0
      %825 = vdwg.mxu0
      %v826 = vadd.f32 %v611, %v788
      %v827 = vadd.f32 %v614, %v791
      %v828 = vadd.f32 %v619, %v796
      %v829 = vadd.f32 %v622, %v799
      %v830 = vadd.f32 %v627, %v804
      %v831 = vadd.f32 %v630, %v807
      %v832 = vadd.f32 %v635, %v812
      %v833 = vadd.f32 %v638, %v815
      %v834 = vadd.f32 %v643, %v820
      %v835 = vadd.f32 %v646, %v823
      %s836 = scalar_lea.vmem %s369, 104
      %v837 = vld [vmem:[%s836] sm:$0xf]
      %v838 = vld [vmem:[%s836 + $0x4] sm:$0xf]
      %v839 = vld [vmem:[%s836 + $0x8] sm:$0xf]
      %v840 = vld [vmem:[%s836 + $0xc] sm:$0xf]
      %v841 = vld [vmem:[%s836 + $0x10] sm:$0xf]
      %v842 = vld [vmem:[%s836 + $0x14] sm:$0xf]
      %v843 = vld [vmem:[%s836 + $0x18] sm:$0xf]
      %v844 = vld [vmem:[%s836 + $0x1c] sm:$0xf]
      %v845 = vld [vmem:[%s836 + $0x20] sm:$0xf]
      %v846 = vld [vmem:[%s836 + $0x24] sm:$0xf]
      %s847 = scalar_lea.vmem %s2, 12
      %v848 = vld [vmem:[%s847] sm:$0xf]
      %v859 = vunpack.c.l.b16 %v837
      %v860 = vunpack.c.l.b16 %v838
      %v861 = vunpack.c.l.b16 %v839
      %v862 = vunpack.c.l.b16 %v840
      %v863 = vunpack.c.l.b16 %v841
      %v864 = vunpack.c.l.b16 %v842
      %v865 = vunpack.c.l.b16 %v843
      %v866 = vunpack.c.l.b16 %v844
      %v867 = vunpack.c.l.b16 %v845
      %v868 = vunpack.c.l.b16 %v846
      %v869 = vpack.c.b16 %v860, %v859
      %v870 = vpack.c.b16 %v862, %v861
      %v871 = vpack.c.b16 %v864, %v863
      %v872 = vpack.c.b16 %v866, %v865
      %v873 = vpack.c.b16 %v868, %v867
      %v875 = vsel %vm440, %v869, 0
      %v878 = vsel %vm440, %v870, 0
      %v881 = vsel %vm440, %v871, 0
      %v884 = vsel %vm440, %v872, 0
      %v887 = vsel %vm440, %v873, 0
      %v890 = vsel %vm456, %v848, 0
      %892 = vmatprep.subr.bf16.mxu0 0
      %893 = vmatpush1.bf16.msra.mxu0 %v890
      %894 = vmatprep.subr.bf16.mxu0 0
      %895 = vmatpush1.bf16.msra.mxu0 0
      %896 = vmatprep.subr.bf16.mxu0 0
      %897 = vmatpush1.bf16.msra.mxu0 0
      %898 = vmatprep.subr.bf16.mxu0 0
      %899 = vmatpush1.bf16.msra.mxu0 0
      %900 = vmatprep.subr.bf16.mxu0 0
      %901 = vmatpush1.bf16.msra.mxu0 0
      %902 = vmatprep.subr.bf16.mxu0 0
      %903 = vmatpush1.bf16.msra.mxu0 0
      %904 = vmatprep.subr.bf16.mxu0 0
      %905 = vmatpush1.bf16.msra.mxu0 0
      %906 = vmatprep.subr.bf16.mxu0 0
      %907 = vmatpush1.bf16.msra.mxu0 0
      %908 = vmatprep.subr.bf16.mxu0 0
      %909 = vmatpush1.bf16.msra.mxu0 0
      %910 = vmatprep.subr.bf16.mxu0 0
      %911 = vmatpush1.bf16.msra.mxu0 0
      %912 = vmatprep.subr.bf16.mxu0 0
      %913 = vmatpush1.bf16.msra.mxu0 0
      %914 = vmatprep.subr.bf16.mxu0 0
      %915 = vmatpush1.bf16.msra.mxu0 0
      %916 = vmatprep.subr.bf16.mxu0 0
      %917 = vmatpush1.bf16.msra.mxu0 0
      %918 = vmatprep.subr.bf16.mxu0 0
      %919 = vmatpush1.bf16.msra.mxu0 0
      %920 = vmatprep.subr.bf16.mxu0 0
      %921 = vmatpush1.bf16.msra.mxu0 0
      %922 = vmatprep.subr.bf16.mxu0 0
      %923 = vmatpush1.bf16.msra.mxu0 0
      %924 = vmatprep.mubr.bf16.mxu0 0
      %925 = vmatmul.mubr.bf16.gmra.mrb[0].mxu0 %v875
      %v926 = vpop.f32.mrb[0].mxu0
      %v927 = vadd.f32 0.0, %v926
      %v928 = vpop.f32.mrb[0].mxu0
      %v929 = vpop.f32.mrb[0].mxu0
      %v930 = vadd.f32 0.0, %v929
      %v931 = vpop.f32.mrb[0].mxu0
      %932 = vmatprep.mubr.bf16.mxu0 0
      %933 = vmatmul.mubr.bf16.gmra.mrb[0].mxu0 %v878
      %v934 = vpop.f32.mrb[0].mxu0
      %v935 = vadd.f32 0.0, %v934
      %v936 = vpop.f32.mrb[0].mxu0
      %v937 = vpop.f32.mrb[0].mxu0
      %v938 = vadd.f32 0.0, %v937
      %v939 = vpop.f32.mrb[0].mxu0
      %940 = vmatprep.mubr.bf16.mxu0 0
      %941 = vmatmul.mubr.bf16.gmra.mrb[0].mxu0 %v881
      %v942 = vpop.f32.mrb[0].mxu0
      %v943 = vadd.f32 0.0, %v942
      %v944 = vpop.f32.mrb[0].mxu0
      %v945 = vpop.f32.mrb[0].mxu0
      %v946 = vadd.f32 0.0, %v945
      %v947 = vpop.f32.mrb[0].mxu0
      %948 = vmatprep.mubr.bf16.mxu0 0
      %949 = vmatmul.mubr.bf16.gmra.mrb[0].mxu0 %v884
      %v950 = vpop.f32.mrb[0].mxu0
      %v951 = vadd.f32 0.0, %v950
      %v952 = vpop.f32.mrb[0].mxu0
      %v953 = vpop.f32.mrb[0].mxu0
      %v954 = vadd.f32 0.0, %v953
      %v955 = vpop.f32.mrb[0].mxu0
      %956 = vmatprep.mubr.bf16.mxu0 0
      %957 = vmatmul.mubr.bf16.gmra.mrb[0].mxu0 %v887
      %v958 = vpop.f32.mrb[0].mxu0
      %v959 = vadd.f32 0.0, %v958
      %v960 = vpop.f32.mrb[0].mxu0
      %v961 = vpop.f32.mrb[0].mxu0
      %v962 = vadd.f32 0.0, %v961
      %v963 = vpop.f32.mrb[0].mxu0
      %964 = vdwg.mxu0
      %v965 = vadd.f32 %v826, %v927
      %v966 = vadd.f32 %v827, %v930
      %v967 = vadd.f32 %v828, %v935
      %v968 = vadd.f32 %v829, %v938
      %v969 = vadd.f32 %v830, %v943
      %v970 = vadd.f32 %v831, %v946
      %v971 = vadd.f32 %v832, %v951
      %v972 = vadd.f32 %v833, %v954
      %v973 = vadd.f32 %v834, %v959
      %v974 = vadd.f32 %v835, %v962
      %s975 = scalar_lea.vmem %s369, 156
      %v976 = vld [vmem:[%s975] sm:$0xf]
      %v977 = vld [vmem:[%s975 + $0x4] sm:$0xf]
      %v978 = vld [vmem:[%s975 + $0x8] sm:$0xf]
      %v979 = vld [vmem:[%s975 + $0xc] sm:$0xf]
      %v980 = vld [vmem:[%s975 + $0x10] sm:$0xf]
      %v981 = vld [vmem:[%s975 + $0x14] sm:$0xf]
      %v982 = vld [vmem:[%s975 + $0x18] sm:$0xf]
      %v983 = vld [vmem:[%s975 + $0x1c] sm:$0xf]
      %v984 = vld [vmem:[%s975 + $0x20] sm:$0xf]
      %v985 = vld [vmem:[%s975 + $0x24] sm:$0xf]
      %s986 = scalar_lea.vmem %s2, 16
      %v987 = vld [vmem:[%s986] sm:$0xf]
      %v998 = vunpack.c.l.b16 %v976
      %v999 = vunpack.c.l.b16 %v977
      %v1000 = vunpack.c.l.b16 %v978
      %v1001 = vunpack.c.l.b16 %v979
      %v1002 = vunpack.c.l.b16 %v980
      %v1003 = vunpack.c.l.b16 %v981
      %v1004 = vunpack.c.l.b16 %v982
      %v1005 = vunpack.c.l.b16 %v983
      %v1006 = vunpack.c.l.b16 %v984
      %v1007 = vunpack.c.l.b16 %v985
      %v1008 = vpack.c.b16 %v999, %v998
      %v1009 = vpack.c.b16 %v1001, %v1000
      %v1010 = vpack.c.b16 %v1003, %v1002
      %v1011 = vpack.c.b16 %v1005, %v1004
      %v1012 = vpack.c.b16 %v1007, %v1006
      %v1014 = vsel %vm440, %v1008, 0
      %v1017 = vsel %vm440, %v1009, 0
      %v1020 = vsel %vm440, %v1010, 0
      %v1023 = vsel %vm440, %v1011, 0
      %v1026 = vsel %vm440, %v1012, 0
      %v1029 = vsel %vm456, %v987, 0
      %1031 = vmatprep.subr.bf16.mxu0 0
      %1032 = vmatpush1.bf16.msra.mxu0 %v1029
      %1033 = vmatprep.subr.bf16.mxu0 0
      %1034 = vmatpush1.bf16.msra.mxu0 0
      %1035 = vmatprep.subr.bf16.mxu0 0
      %1036 = vmatpush1.bf16.msra.mxu0 0
      %1037 = vmatprep.subr.bf16.mxu0 0
      %1038 = vmatpush1.bf16.msra.mxu0 0
      %1039 = vmatprep.subr.bf16.mxu0 0
      %1040 = vmatpush1.bf16.msra.mxu0 0
      %1041 = vmatprep.subr.bf16.mxu0 0
      %1042 = vmatpush1.bf16.msra.mxu0 0
      %1043 = vmatprep.subr.bf16.mxu0 0
      %1044 = vmatpush1.bf16.msra.mxu0 0
      %1045 = vmatprep.subr.bf16.mxu0 0
      %1046 = vmatpush1.bf16.msra.mxu0 0
      %1047 = vmatprep.subr.bf16.mxu0 0
      %1048 = vmatpush1.bf16.msra.mxu0 0
      %1049 = vmatprep.subr.bf16.mxu0 0
      %1050 = vmatpush1.bf16.msra.mxu0 0
      %1051 = vmatprep.subr.bf16.mxu0 0
      %1052 = vmatpush1.bf16.msra.mxu0 0
      %1053 = vmatprep.subr.bf16.mxu0 0
      %1054 = vmatpush1.bf16.msra.mxu0 0
      %1055 = vmatprep.subr.bf16.mxu0 0
      %1056 = vmatpush1.bf16.msra.mxu0 0
      %1057 = vmatprep.subr.bf16.mxu0 0
      %1058 = vmatpush1.bf16.msra.mxu0 0
      %1059 = vmatprep.subr.bf16.mxu0 0
      %1060 = vmatpush1.bf16.msra.mxu0 0
      %1061 = vmatprep.subr.bf16.mxu0 0
      %1062 = vmatpush1.bf16.msra.mxu0 0
      %1063 = vmatprep.mubr.bf16.mxu0 0
      %1064 = vmatmul.mubr.bf16.gmra.mrb[0].mxu0 %v1014
      %v1065 = vpop.f32.mrb[0].mxu0
      %v1066 = vadd.f32 0.0, %v1065
      %v1067 = vpop.f32.mrb[0].mxu0
      %v1068 = vpop.f32.mrb[0].mxu0
      %v1069 = vadd.f32 0.0, %v1068
      %v1070 = vpop.f32.mrb[0].mxu0
      %1071 = vmatprep.mubr.bf16.mxu0 0
      %1072 = vmatmul.mubr.bf16.gmra.mrb[0].mxu0 %v1017
      %v1073 = vpop.f32.mrb[0].mxu0
      %v1074 = vadd.f32 0.0, %v1073
      %v1075 = vpop.f32.mrb[0].mxu0
      %v1076 = vpop.f32.mrb[0].mxu0
      %v1077 = vadd.f32 0.0, %v1076
      %v1078 = vpop.f32.mrb[0].mxu0
      %1079 = vmatprep.mubr.bf16.mxu0 0
      %1080 = vmatmul.mubr.bf16.gmra.mrb[0].mxu0 %v1020
      %v1081 = vpop.f32.mrb[0].mxu0
      %v1082 = vadd.f32 0.0, %v1081
      %v1083 = vpop.f32.mrb[0].mxu0
      %v1084 = vpop.f32.mrb[0].mxu0
      %v1085 = vadd.f32 0.0, %v1084
      %v1086 = vpop.f32.mrb[0].mxu0
      %1087 = vmatprep.mubr.bf16.mxu0 0
      %1088 = vmatmul.mubr.bf16.gmra.mrb[0].mxu0 %v1023
      %v1089 = vpop.f32.mrb[0].mxu0
      %v1090 = vadd.f32 0.0, %v1089
      %v1091 = vpop.f32.mrb[0].mxu0
      %v1092 = vpop.f32.mrb[0].mxu0
      %v1093 = vadd.f32 0.0, %v1092
      %v1094 = vpop.f32.mrb[0].mxu0
      %1095 = vmatprep.mubr.bf16.mxu0 0
      %1096 = vmatmul.mubr.bf16.gmra.mrb[0].mxu0 %v1026
      %v1097 = vpop.f32.mrb[0].mxu0
      %v1098 = vadd.f32 0.0, %v1097
      %v1099 = vpop.f32.mrb[0].mxu0
      %v1100 = vpop.f32.mrb[0].mxu0
      %v1101 = vadd.f32 0.0, %v1100
      %v1102 = vpop.f32.mrb[0].mxu0
      %1103 = vdwg.mxu0
      %v1104 = vadd.f32 %v965, %v1066
      %v1105 = vadd.f32 %v966, %v1069
      %v1106 = vadd.f32 %v967, %v1074
      %v1107 = vadd.f32 %v968, %v1077
      %v1108 = vadd.f32 %v969, %v1082
      %v1109 = vadd.f32 %v970, %v1085
      %v1110 = vadd.f32 %v971, %v1090
      %v1111 = vadd.f32 %v972, %v1093
      %v1112 = vadd.f32 %v973, %v1098
      %v1113 = vadd.f32 %v974, %v1101
      %v1114 = vld [vmem:[%s836] sm:$0xf]
      %v1115 = vld [vmem:[%s836 + $0x4] sm:$0xf]
      %v1116 = vld [vmem:[%s836 + $0x8] sm:$0xf]
      %v1117 = vld [vmem:[%s836 + $0xc] sm:$0xf]
      %v1118 = vld [vmem:[%s836 + $0x10] sm:$0xf]
      %v1119 = vld [vmem:[%s836 + $0x14] sm:$0xf]
      %v1120 = vld [vmem:[%s836 + $0x18] sm:$0xf]
      %v1121 = vld [vmem:[%s836 + $0x1c] sm:$0xf]
      %v1122 = vld [vmem:[%s836 + $0x20] sm:$0xf]
      %v1123 = vld [vmem:[%s836 + $0x24] sm:$0xf]
      %v1124 = vld [vmem:[%s836 + $0x28] sm:$0x1]
      %s1125 = scalar_lea.vmem %s2, 20
      %v1126 = vld [vmem:[%s1125] sm:$0xf]
      %v1138 = vunpack.c.l.b16 %v1114
      %v1139 = vunpack.c.l.b16 %v1115
      %v1140 = vunpack.c.l.b16 %v1116
      %v1141 = vunpack.c.l.b16 %v1117
      %v1142 = vunpack.c.l.b16 %v1118
      %v1143 = vunpack.c.l.b16 %v1119
      %v1144 = vunpack.c.l.b16 %v1120
      %v1145 = vunpack.c.l.b16 %v1121
      %v1146 = vunpack.c.l.b16 %v1122
      %v1147 = vunpack.c.l.b16 %v1123
      %v1148 = vunpack.c.l.b16 %v1124
      %v1149 = vpack.c.b16 %v1139, %v1138
      %v1150 = vpack.c.b16 %v1141, %v1140
      %v1151 = vpack.c.b16 %v1143, %v1142
      %v1152 = vpack.c.b16 %v1145, %v1144
      %v1153 = vpack.c.b16 %v1147, %v1146
      %v1154 = vpack.c.b16 %v1148, %v1148
      %v1156 = vshrl.u32 %v1149, 16
      %v1158 = vshll.u32 %v1149, 16
      %v1160 = vrot.slane %v1158, 1
      %v1161 = vor.u32 %v1156, %v1160
      %v1163 = vshll.u32 %v1150, 16
      %v1165 = vrot.slane %v1163, 1
      %v1166 = vsel %vm690, %v1161, %v1165
      %v1167 = vshrl.u32 %v1150, 16
      %v1169 = vor.u32 %v1167, %v1165
      %v1171 = vshll.u32 %v1151, 16
      %v1173 = vrot.slane %v1171, 1
      %v1174 = vsel %vm690, %v1169, %v1173
      %v1175 = vshrl.u32 %v1151, 16
      %v1177 = vor.u32 %v1175, %v1173
      %v1179 = vshll.u32 %v1152, 16
      %v1181 = vrot.slane %v1179, 1
      %v1182 = vsel %vm690, %v1177, %v1181
      %v1183 = vshrl.u32 %v1152, 16
      %v1185 = vor.u32 %v1183, %v1181
      %v1187 = vshll.u32 %v1153, 16
      %v1189 = vrot.slane %v1187, 1
      %v1190 = vsel %vm690, %v1185, %v1189
      %v1191 = vshrl.u32 %v1153, 16
      %v1193 = vor.u32 %v1191, %v1189
      %v1195 = vshll.u32 %v1154, 16
      %v1197 = vrot.slane %v1195, 1
      %v1198 = vsel %vm690, %v1193, %v1197
      %v1200 = vsel %vm440, %v1166, 0
      %v1203 = vsel %vm440, %v1174, 0
      %v1206 = vsel %vm440, %v1182, 0
      %v1209 = vsel %vm440, %v1190, 0
      %v1212 = vsel %vm440, %v1198, 0
      %v1215 = vsel %vm456, %v1126, 0
      %1217 = vmatprep.subr.bf16.mxu0 0
      %1218 = vmatpush1.bf16.msra.mxu0 %v1215
      %1219 = vmatprep.subr.bf16.mxu0 0
      %1220 = vmatpush1.bf16.msra.mxu0 0
      %1221 = vmatprep.subr.bf16.mxu0 0
      %1222 = vmatpush1.bf16.msra.mxu0 0
      %1223 = vmatprep.subr.bf16.mxu0 0
      %1224 = vmatpush1.bf16.msra.mxu0 0
      %1225 = vmatprep.subr.bf16.mxu0 0
      %1226 = vmatpush1.bf16.msra.mxu0 0
      %1227 = vmatprep.subr.bf16.mxu0 0
      %1228 = vmatpush1.bf16.msra.mxu0 0
      %1229 = vmatprep.subr.bf16.mxu0 0
      %1230 = vmatpush1.bf16.msra.mxu0 0
      %1231 = vmatprep.subr.bf16.mxu0 0
      %1232 = vmatpush1.bf16.msra.mxu0 0
      %1233 = vmatprep.subr.bf16.mxu0 0
      %1234 = vmatpush1.bf16.msra.mxu0 0
      %1235 = vmatprep.subr.bf16.mxu0 0
      %1236 = vmatpush1.bf16.msra.mxu0 0
      %1237 = vmatprep.subr.bf16.mxu0 0
      %1238 = vmatpush1.bf16.msra.mxu0 0
      %1239 = vmatprep.subr.bf16.mxu0 0
      %1240 = vmatpush1.bf16.msra.mxu0 0
      %1241 = vmatprep.subr.bf16.mxu0 0
      %1242 = vmatpush1.bf16.msra.mxu0 0
      %1243 = vmatprep.subr.bf16.mxu0 0
      %1244 = vmatpush1.bf16.msra.mxu0 0
      %1245 = vmatprep.subr.bf16.mxu0 0
      %1246 = vmatpush1.bf16.msra.mxu0 0
      %1247 = vmatprep.subr.bf16.mxu0 0
      %1248 = vmatpush1.bf16.msra.mxu0 0
      %1249 = vmatprep.mubr.bf16.mxu0 0
      %1250 = vmatmul.mubr.bf16.gmra.mrb[0].mxu0 %v1200
      %v1251 = vpop.f32.mrb[0].mxu0
      %v1252 = vadd.f32 0.0, %v1251
      %v1253 = vpop.f32.mrb[0].mxu0
      %v1254 = vpop.f32.mrb[0].mxu0
      %v1255 = vadd.f32 0.0, %v1254
      %v1256 = vpop.f32.mrb[0].mxu0
      %1257 = vmatprep.mubr.bf16.mxu0 0
      %1258 = vmatmul.mubr.bf16.gmra.mrb[0].mxu0 %v1203
      %v1259 = vpop.f32.mrb[0].mxu0
      %v1260 = vadd.f32 0.0, %v1259
      %v1261 = vpop.f32.mrb[0].mxu0
      %v1262 = vpop.f32.mrb[0].mxu0
      %v1263 = vadd.f32 0.0, %v1262
      %v1264 = vpop.f32.mrb[0].mxu0
      %1265 = vmatprep.mubr.bf16.mxu0 0
      %1266 = vmatmul.mubr.bf16.gmra.mrb[0].mxu0 %v1206
      %v1267 = vpop.f32.mrb[0].mxu0
      %v1268 = vadd.f32 0.0, %v1267
      %v1269 = vpop.f32.mrb[0].mxu0
      %v1270 = vpop.f32.mrb[0].mxu0
      %v1271 = vadd.f32 0.0, %v1270
      %v1272 = vpop.f32.mrb[0].mxu0
      %1273 = vmatprep.mubr.bf16.mxu0 0
      %1274 = vmatmul.mubr.bf16.gmra.mrb[0].mxu0 %v1209
      %v1275 = vpop.f32.mrb[0].mxu0
      %v1276 = vadd.f32 0.0, %v1275
      %v1277 = vpop.f32.mrb[0].mxu0
      %v1278 = vpop.f32.mrb[0].mxu0
      %v1279 = vadd.f32 0.0, %v1278
      %v1280 = vpop.f32.mrb[0].mxu0
      %1281 = vmatprep.mubr.bf16.mxu0 0
      %1282 = vmatmul.mubr.bf16.gmra.mrb[0].mxu0 %v1212
      %v1283 = vpop.f32.mrb[0].mxu0
      %v1284 = vadd.f32 0.0, %v1283
      %v1285 = vpop.f32.mrb[0].mxu0
      %v1286 = vpop.f32.mrb[0].mxu0
      %v1287 = vadd.f32 0.0, %v1286
      %v1288 = vpop.f32.mrb[0].mxu0
      %1289 = vdwg.mxu0
      %v1290 = vadd.f32 %v1104, %v1252
      %v1291 = vadd.f32 %v1105, %v1255
      %v1292 = vadd.f32 %v1106, %v1260
      %v1293 = vadd.f32 %v1107, %v1263
      %v1294 = vadd.f32 %v1108, %v1268
      %v1295 = vadd.f32 %v1109, %v1271
      %v1296 = vadd.f32 %v1110, %v1276
      %v1297 = vadd.f32 %v1111, %v1279
      %v1298 = vadd.f32 %v1112, %v1284
      %v1299 = vadd.f32 %v1113, %v1287
      %v1300 = vld [vmem:[%s369 + $0x4] sm:$0xe]
      %v1301 = vld [vmem:[%s369 + $0x8] sm:$0xf]
      %v1302 = vld [vmem:[%s369 + $0xc] sm:$0xf]
      %v1303 = vld [vmem:[%s369 + $0x10] sm:$0xf]
      %v1304 = vld [vmem:[%s369 + $0x14] sm:$0xf]
      %v1305 = vld [vmem:[%s369 + $0x18] sm:$0xf]
      %v1306 = vld [vmem:[%s369 + $0x1c] sm:$0xf]
      %v1307 = vld [vmem:[%s369 + $0x20] sm:$0xf]
      %v1308 = vld [vmem:[%s369 + $0x24] sm:$0xf]
      %v1309 = vld [vmem:[%s369 + $0x28] sm:$0xf]
      %v1310 = vld [vmem:[%s369 + $0x2c] sm:$0x1]
      %s1311 = scalar_lea.vmem %s2, 24
      %v1312 = vld [vmem:[%s1311] sm:$0xf]
      %v1324 = vunpack.c.l.b16 %v1300
      %v1325 = vunpack.c.l.b16 %v1301
      %v1326 = vunpack.c.l.b16 %v1302
      %v1327 = vunpack.c.l.b16 %v1303
      %v1328 = vunpack.c.l.b16 %v1304
      %v1329 = vunpack.c.l.b16 %v1305
      %v1330 = vunpack.c.l.b16 %v1306
      %v1331 = vunpack.c.l.b16 %v1307
      %v1332 = vunpack.c.l.b16 %v1308
      %v1333 = vunpack.c.l.b16 %v1309
      %v1334 = vunpack.c.l.b16 %v1310
      %v1335 = vpack.c.b16 %v1325, %v1324
      %v1336 = vpack.c.b16 %v1327, %v1326
      %v1337 = vpack.c.b16 %v1329, %v1328
      %v1338 = vpack.c.b16 %v1331, %v1330
      %v1339 = vpack.c.b16 %v1333, %v1332
      %v1340 = vpack.c.b16 %v1334, %v1334
      %vm1341 = vcmask 1046528
      %v1342 = vrot.slane %v1335, 1
      %v1343 = vrot.slane %v1336, 1
      %v1344 = vsel %vm1341, %v1342, %v1343
      %v1345 = vrot.slane %v1337, 1
      %v1346 = vsel %vm1341, %v1343, %v1345
      %v1347 = vrot.slane %v1338, 1
      %v1348 = vsel %vm1341, %v1345, %v1347
      %v1349 = vrot.slane %v1339, 1
      %v1350 = vsel %vm1341, %v1347, %v1349
      %v1351 = vrot.slane %v1340, 1
      %v1352 = vsel %vm1341, %v1349, %v1351
      %v1354 = vsel %vm440, %v1344, 0
      %v1357 = vsel %vm440, %v1346, 0
      %v1360 = vsel %vm440, %v1348, 0
      %v1363 = vsel %vm440, %v1350, 0
      %v1366 = vsel %vm440, %v1352, 0
      %v1369 = vsel %vm456, %v1312, 0
      %1371 = vmatprep.subr.bf16.mxu0 0
      %1372 = vmatpush1.bf16.msra.mxu0 %v1369
      %1373 = vmatprep.subr.bf16.mxu0 0
      %1374 = vmatpush1.bf16.msra.mxu0 0
      %1375 = vmatprep.subr.bf16.mxu0 0
      %1376 = vmatpush1.bf16.msra.mxu0 0
      %1377 = vmatprep.subr.bf16.mxu0 0
      %1378 = vmatpush1.bf16.msra.mxu0 0
      %1379 = vmatprep.subr.bf16.mxu0 0
      %1380 = vmatpush1.bf16.msra.mxu0 0
      %1381 = vmatprep.subr.bf16.mxu0 0
      %1382 = vmatpush1.bf16.msra.mxu0 0
      %1383 = vmatprep.subr.bf16.mxu0 0
      %1384 = vmatpush1.bf16.msra.mxu0 0
      %1385 = vmatprep.subr.bf16.mxu0 0
      %1386 = vmatpush1.bf16.msra.mxu0 0
      %1387 = vmatprep.subr.bf16.mxu0 0
      %1388 = vmatpush1.bf16.msra.mxu0 0
      %1389 = vmatprep.subr.bf16.mxu0 0
      %1390 = vmatpush1.bf16.msra.mxu0 0
      %1391 = vmatprep.subr.bf16.mxu0 0
      %1392 = vmatpush1.bf16.msra.mxu0 0
      %1393 = vmatprep.subr.bf16.mxu0 0
      %1394 = vmatpush1.bf16.msra.mxu0 0
      %1395 = vmatprep.subr.bf16.mxu0 0
      %1396 = vmatpush1.bf16.msra.mxu0 0
      %1397 = vmatprep.subr.bf16.mxu0 0
      %1398 = vmatpush1.bf16.msra.mxu0 0
      %1399 = vmatprep.subr.bf16.mxu0 0
      %1400 = vmatpush1.bf16.msra.mxu0 0
      %1401 = vmatprep.subr.bf16.mxu0 0
      %1402 = vmatpush1.bf16.msra.mxu0 0
      %1403 = vmatprep.mubr.bf16.mxu0 0
      %1404 = vmatmul.mubr.bf16.gmra.mrb[0].mxu0 %v1354
      %v1405 = vpop.f32.mrb[0].mxu0
      %v1406 = vadd.f32 0.0, %v1405
      %v1407 = vpop.f32.mrb[0].mxu0
      %v1408 = vpop.f32.mrb[0].mxu0
      %v1409 = vadd.f32 0.0, %v1408
      %v1410 = vpop.f32.mrb[0].mxu0
      %1411 = vmatprep.mubr.bf16.mxu0 0
      %1412 = vmatmul.mubr.bf16.gmra.mrb[0].mxu0 %v1357
      %v1413 = vpop.f32.mrb[0].mxu0
      %v1414 = vadd.f32 0.0, %v1413
      %v1415 = vpop.f32.mrb[0].mxu0
      %v1416 = vpop.f32.mrb[0].mxu0
      %v1417 = vadd.f32 0.0, %v1416
      %v1418 = vpop.f32.mrb[0].mxu0
      %1419 = vmatprep.mubr.bf16.mxu0 0
      %1420 = vmatmul.mubr.bf16.gmra.mrb[0].mxu0 %v1360
      %v1421 = vpop.f32.mrb[0].mxu0
      %v1422 = vadd.f32 0.0, %v1421
      %v1423 = vpop.f32.mrb[0].mxu0
      %v1424 = vpop.f32.mrb[0].mxu0
      %v1425 = vadd.f32 0.0, %v1424
      %v1426 = vpop.f32.mrb[0].mxu0
      %1427 = vmatprep.mubr.bf16.mxu0 0
      %1428 = vmatmul.mubr.bf16.gmra.mrb[0].mxu0 %v1363
      %v1429 = vpop.f32.mrb[0].mxu0
      %v1430 = vadd.f32 0.0, %v1429
      %v1431 = vpop.f32.mrb[0].mxu0
      %v1432 = vpop.f32.mrb[0].mxu0
      %v1433 = vadd.f32 0.0, %v1432
      %v1434 = vpop.f32.mrb[0].mxu0
      %1435 = vmatprep.mubr.bf16.mxu0 0
      %1436 = vmatmul.mubr.bf16.gmra.mrb[0].mxu0 %v1366
      %v1437 = vpop.f32.mrb[0].mxu0
      %v1438 = vadd.f32 0.0, %v1437
      %v1439 = vpop.f32.mrb[0].mxu0
      %v1440 = vpop.f32.mrb[0].mxu0
      %v1441 = vadd.f32 0.0, %v1440
      %v1442 = vpop.f32.mrb[0].mxu0
      %1443 = vdwg.mxu0
      %v1444 = vadd.f32 %v1290, %v1406
      %v1445 = vadd.f32 %v1291, %v1409
      %v1446 = vadd.f32 %v1292, %v1414
      %v1447 = vadd.f32 %v1293, %v1417
      %v1448 = vadd.f32 %v1294, %v1422
      %v1449 = vadd.f32 %v1295, %v1425
      %v1450 = vadd.f32 %v1296, %v1430
      %v1451 = vadd.f32 %v1297, %v1433
      %v1452 = vadd.f32 %v1298, %v1438
      %v1453 = vadd.f32 %v1299, %v1441
      %v1454 = vld [vmem:[%s402 + $0x4] sm:$0xe]
      %v1455 = vld [vmem:[%s402 + $0x8] sm:$0xf]
      %v1456 = vld [vmem:[%s402 + $0xc] sm:$0xf]
      %v1457 = vld [vmem:[%s402 + $0x10] sm:$0xf]
      %v1458 = vld [vmem:[%s402 + $0x14] sm:$0xf]
      %v1459 = vld [vmem:[%s402 + $0x18] sm:$0xf]
      %v1460 = vld [vmem:[%s402 + $0x1c] sm:$0xf]
      %v1461 = vld [vmem:[%s402 + $0x20] sm:$0xf]
      %v1462 = vld [vmem:[%s402 + $0x24] sm:$0xf]
      %v1463 = vld [vmem:[%s402 + $0x28] sm:$0xf]
      %v1464 = vld [vmem:[%s402 + $0x2c] sm:$0x1]
      %s1465 = scalar_lea.vmem %s2, 28
      %v1466 = vld [vmem:[%s1465] sm:$0xf]
      %v1478 = vunpack.c.l.b16 %v1454
      %v1479 = vunpack.c.l.b16 %v1455
      %v1480 = vunpack.c.l.b16 %v1456
      %v1481 = vunpack.c.l.b16 %v1457
      %v1482 = vunpack.c.l.b16 %v1458
      %v1483 = vunpack.c.l.b16 %v1459
      %v1484 = vunpack.c.l.b16 %v1460
      %v1485 = vunpack.c.l.b16 %v1461
      %v1486 = vunpack.c.l.b16 %v1462
      %v1487 = vunpack.c.l.b16 %v1463
      %v1488 = vunpack.c.l.b16 %v1464
      %v1489 = vpack.c.b16 %v1479, %v1478
      %v1490 = vpack.c.b16 %v1481, %v1480
      %v1491 = vpack.c.b16 %v1483, %v1482
      %v1492 = vpack.c.b16 %v1485, %v1484
      %v1493 = vpack.c.b16 %v1487, %v1486
      %v1494 = vpack.c.b16 %v1488, %v1488
      %v1495 = vrot.slane %v1489, 1
      %v1496 = vrot.slane %v1490, 1
      %v1497 = vsel %vm1341, %v1495, %v1496
      %v1498 = vrot.slane %v1491, 1
      %v1499 = vsel %vm1341, %v1496, %v1498
      %v1500 = vrot.slane %v1492, 1
      %v1501 = vsel %vm1341, %v1498, %v1500
      %v1502 = vrot.slane %v1493, 1
      %v1503 = vsel %vm1341, %v1500, %v1502
      %v1504 = vrot.slane %v1494, 1
      %v1505 = vsel %vm1341, %v1502, %v1504
      %v1507 = vsel %vm440, %v1497, 0
      %v1510 = vsel %vm440, %v1499, 0
      %v1513 = vsel %vm440, %v1501, 0
      %v1516 = vsel %vm440, %v1503, 0
      %v1519 = vsel %vm440, %v1505, 0
      %v1522 = vsel %vm456, %v1466, 0
      %1524 = vmatprep.subr.bf16.mxu0 0
      %1525 = vmatpush1.bf16.msra.mxu0 %v1522
      %1526 = vmatprep.subr.bf16.mxu0 0
      %1527 = vmatpush1.bf16.msra.mxu0 0
      %1528 = vmatprep.subr.bf16.mxu0 0
      %1529 = vmatpush1.bf16.msra.mxu0 0
      %1530 = vmatprep.subr.bf16.mxu0 0
      %1531 = vmatpush1.bf16.msra.mxu0 0
      %1532 = vmatprep.subr.bf16.mxu0 0
      %1533 = vmatpush1.bf16.msra.mxu0 0
      %1534 = vmatprep.subr.bf16.mxu0 0
      %1535 = vmatpush1.bf16.msra.mxu0 0
      %1536 = vmatprep.subr.bf16.mxu0 0
      %1537 = vmatpush1.bf16.msra.mxu0 0
      %1538 = vmatprep.subr.bf16.mxu0 0
      %1539 = vmatpush1.bf16.msra.mxu0 0
      %1540 = vmatprep.subr.bf16.mxu0 0
      %1541 = vmatpush1.bf16.msra.mxu0 0
      %1542 = vmatprep.subr.bf16.mxu0 0
      %1543 = vmatpush1.bf16.msra.mxu0 0
      %1544 = vmatprep.subr.bf16.mxu0 0
      %1545 = vmatpush1.bf16.msra.mxu0 0
      %1546 = vmatprep.subr.bf16.mxu0 0
      %1547 = vmatpush1.bf16.msra.mxu0 0
      %1548 = vmatprep.subr.bf16.mxu0 0
      %1549 = vmatpush1.bf16.msra.mxu0 0
      %1550 = vmatprep.subr.bf16.mxu0 0
      %1551 = vmatpush1.bf16.msra.mxu0 0
      %1552 = vmatprep.subr.bf16.mxu0 0
      %1553 = vmatpush1.bf16.msra.mxu0 0
      %1554 = vmatprep.subr.bf16.mxu0 0
      %1555 = vmatpush1.bf16.msra.mxu0 0
      %1556 = vmatprep.mubr.bf16.mxu0 0
      %1557 = vmatmul.mubr.bf16.gmra.mrb[0].mxu0 %v1507
      %v1558 = vpop.f32.mrb[0].mxu0
      %v1559 = vadd.f32 0.0, %v1558
      %v1560 = vpop.f32.mrb[0].mxu0
      %v1561 = vpop.f32.mrb[0].mxu0
      %v1562 = vadd.f32 0.0, %v1561
      %v1563 = vpop.f32.mrb[0].mxu0
      %1564 = vmatprep.mubr.bf16.mxu0 0
      %1565 = vmatmul.mubr.bf16.gmra.mrb[0].mxu0 %v1510
      %v1566 = vpop.f32.mrb[0].mxu0
      %v1567 = vadd.f32 0.0, %v1566
      %v1568 = vpop.f32.mrb[0].mxu0
      %v1569 = vpop.f32.mrb[0].mxu0
      %v1570 = vadd.f32 0.0, %v1569
      %v1571 = vpop.f32.mrb[0].mxu0
      %1572 = vmatprep.mubr.bf16.mxu0 0
      %1573 = vmatmul.mubr.bf16.gmra.mrb[0].mxu0 %v1513
      %v1574 = vpop.f32.mrb[0].mxu0
      %v1575 = vadd.f32 0.0, %v1574
      %v1576 = vpop.f32.mrb[0].mxu0
      %v1577 = vpop.f32.mrb[0].mxu0
      %v1578 = vadd.f32 0.0, %v1577
      %v1579 = vpop.f32.mrb[0].mxu0
      %1580 = vmatprep.mubr.bf16.mxu0 0
      %1581 = vmatmul.mubr.bf16.gmra.mrb[0].mxu0 %v1516
      %v1582 = vpop.f32.mrb[0].mxu0
      %v1583 = vadd.f32 0.0, %v1582
      %v1584 = vpop.f32.mrb[0].mxu0
      %v1585 = vpop.f32.mrb[0].mxu0
      %v1586 = vadd.f32 0.0, %v1585
      %v1587 = vpop.f32.mrb[0].mxu0
      %1588 = vmatprep.mubr.bf16.mxu0 0
      %1589 = vmatmul.mubr.bf16.gmra.mrb[0].mxu0 %v1519
      %v1590 = vpop.f32.mrb[0].mxu0
      %v1591 = vadd.f32 0.0, %v1590
      %v1592 = vpop.f32.mrb[0].mxu0
      %v1593 = vpop.f32.mrb[0].mxu0
      %v1594 = vadd.f32 0.0, %v1593
      %v1595 = vpop.f32.mrb[0].mxu0
      %1596 = vdwg.mxu0
      %v1597 = vadd.f32 %v1444, %v1559
      %v1598 = vadd.f32 %v1445, %v1562
      %v1599 = vadd.f32 %v1446, %v1567
      %v1600 = vadd.f32 %v1447, %v1570
      %v1601 = vadd.f32 %v1448, %v1575
      %v1602 = vadd.f32 %v1449, %v1578
      %v1603 = vadd.f32 %v1450, %v1583
      %v1604 = vadd.f32 %v1451, %v1586
      %v1605 = vadd.f32 %v1452, %v1591
      %v1606 = vadd.f32 %v1453, %v1594
      %v1607 = vld [vmem:[%s369 + $0x2c] sm:$0x3]
      %s1608 = scalar_lea.vmem %s2, 32
      %v1609 = vld [vmem:[%s1608] sm:$0xf]
      %v1611 = vunpack.c.l.b16 %v1607
      %v1612 = vpack.c.b16 %v1611, %v1611
      %vm1613 = vsmask.f32 6400
      %v1615 = vshrl.u32 %v1335, 16
      %v1617 = vrot.slane %v1615, 1
      %v1618 = vshll.u32 %v1335, 16
      %v1620 = vrot.slane %v1618, 2
      %v1621 = vor.u32 %v1617, %v1620
      %v1623 = vshrl.u32 %v1336, 16
      %v1625 = vrot.slane %v1623, 1
      %v1626 = vshll.u32 %v1336, 16
      %v1628 = vrot.slane %v1626, 2
      %v1629 = vor.u32 %v1625, %v1628
      %v1630 = vsel %vm1613, %v1621, %v1629
      %v1632 = vshrl.u32 %v1337, 16
      %v1634 = vrot.slane %v1632, 1
      %v1635 = vshll.u32 %v1337, 16
      %v1637 = vrot.slane %v1635, 2
      %v1638 = vor.u32 %v1634, %v1637
      %v1639 = vsel %vm1613, %v1629, %v1638
      %v1641 = vshrl.u32 %v1338, 16
      %v1643 = vrot.slane %v1641, 1
      %v1644 = vshll.u32 %v1338, 16
      %v1646 = vrot.slane %v1644, 2
      %v1647 = vor.u32 %v1643, %v1646
      %v1648 = vsel %vm1613, %v1638, %v1647
      %v1650 = vshrl.u32 %v1339, 16
      %v1652 = vrot.slane %v1650, 1
      %v1653 = vshll.u32 %v1339, 16
      %v1655 = vrot.slane %v1653, 2
      %v1656 = vor.u32 %v1652, %v1655
      %v1657 = vsel %vm1613, %v1647, %v1656
      %v1659 = vshrl.u32 %v1612, 16
      %v1661 = vrot.slane %v1659, 1
      %v1662 = vshll.u32 %v1612, 16
      %v1664 = vrot.slane %v1662, 2
      %v1665 = vor.u32 %v1661, %v1664
      %v1666 = vsel %vm1613, %v1656, %v1665
      %v1668 = vsel %vm440, %v1630, 0
      %v1671 = vsel %vm440, %v1639, 0
      %v1674 = vsel %vm440, %v1648, 0
      %v1677 = vsel %vm440, %v1657, 0
      %v1680 = vsel %vm440, %v1666, 0
      %v1683 = vsel %vm456, %v1609, 0
      %1685 = vmatprep.subr.bf16.mxu0 0
      %1686 = vmatpush1.bf16.msra.mxu0 %v1683
      %1687 = vmatprep.subr.bf16.mxu0 0
      %1688 = vmatpush1.bf16.msra.mxu0 0
      %1689 = vmatprep.subr.bf16.mxu0 0
      %1690 = vmatpush1.bf16.msra.mxu0 0
      %1691 = vmatprep.subr.bf16.mxu0 0
      %1692 = vmatpush1.bf16.msra.mxu0 0
      %1693 = vmatprep.subr.bf16.mxu0 0
      %1694 = vmatpush1.bf16.msra.mxu0 0
      %1695 = vmatprep.subr.bf16.mxu0 0
      %1696 = vmatpush1.bf16.msra.mxu0 0
      %1697 = vmatprep.subr.bf16.mxu0 0
      %1698 = vmatpush1.bf16.msra.mxu0 0
      %1699 = vmatprep.subr.bf16.mxu0 0
      %1700 = vmatpush1.bf16.msra.mxu0 0
      %1701 = vmatprep.subr.bf16.mxu0 0
      %1702 = vmatpush1.bf16.msra.mxu0 0
      %1703 = vmatprep.subr.bf16.mxu0 0
      %1704 = vmatpush1.bf16.msra.mxu0 0
      %1705 = vmatprep.subr.bf16.mxu0 0
      %1706 = vmatpush1.bf16.msra.mxu0 0
      %1707 = vmatprep.subr.bf16.mxu0 0
      %1708 = vmatpush1.bf16.msra.mxu0 0
      %1709 = vmatprep.subr.bf16.mxu0 0
      %1710 = vmatpush1.bf16.msra.mxu0 0
      %1711 = vmatprep.subr.bf16.mxu0 0
      %1712 = vmatpush1.bf16.msra.mxu0 0
      %1713 = vmatprep.subr.bf16.mxu0 0
      %1714 = vmatpush1.bf16.msra.mxu0 0
      %1715 = vmatprep.subr.bf16.mxu0 0
      %1716 = vmatpush1.bf16.msra.mxu0 0
      %1717 = vmatprep.mubr.bf16.mxu0 0
      %1718 = vmatmul.mubr.bf16.gmra.mrb[0].mxu0 %v1668
      %v1719 = vpop.f32.mrb[0].mxu0
      %v1720 = vadd.f32 0.0, %v1719
      %v1721 = vpop.f32.mrb[0].mxu0
      %v1722 = vpop.f32.mrb[0].mxu0
      %v1723 = vadd.f32 0.0, %v1722
      %v1724 = vpop.f32.mrb[0].mxu0
      %1725 = vmatprep.mubr.bf16.mxu0 0
      %1726 = vmatmul.mubr.bf16.gmra.mrb[0].mxu0 %v1671
      %v1727 = vpop.f32.mrb[0].mxu0
      %v1728 = vadd.f32 0.0, %v1727
      %v1729 = vpop.f32.mrb[0].mxu0
      %v1730 = vpop.f32.mrb[0].mxu0
      %v1731 = vadd.f32 0.0, %v1730
      %v1732 = vpop.f32.mrb[0].mxu0
      %1733 = vmatprep.mubr.bf16.mxu0 0
      %1734 = vmatmul.mubr.bf16.gmra.mrb[0].mxu0 %v1674
      %v1735 = vpop.f32.mrb[0].mxu0
      %v1736 = vadd.f32 0.0, %v1735
      %v1737 = vpop.f32.mrb[0].mxu0
      %v1738 = vpop.f32.mrb[0].mxu0
      %v1739 = vadd.f32 0.0, %v1738
      %v1740 = vpop.f32.mrb[0].mxu0
      %1741 = vmatprep.mubr.bf16.mxu0 0
      %1742 = vmatmul.mubr.bf16.gmra.mrb[0].mxu0 %v1677
      %v1743 = vpop.f32.mrb[0].mxu0
      %v1744 = vadd.f32 0.0, %v1743
      %v1745 = vpop.f32.mrb[0].mxu0
      %v1746 = vpop.f32.mrb[0].mxu0
      %v1747 = vadd.f32 0.0, %v1746
      %v1748 = vpop.f32.mrb[0].mxu0
      %1749 = vmatprep.mubr.bf16.mxu0 0
      %1750 = vmatmul.mubr.bf16.gmra.mrb[0].mxu0 %v1680
      %v1751 = vpop.f32.mrb[0].mxu0
      %v1752 = vadd.f32 0.0, %v1751
      %v1753 = vpop.f32.mrb[0].mxu0
      %v1754 = vpop.f32.mrb[0].mxu0
      %v1755 = vadd.f32 0.0, %v1754
      %v1756 = vpop.f32.mrb[0].mxu0
      %1757 = vdwg.mxu0
      %v1758 = vadd.f32 %v1597, %v1720
      %v1759 = vadd.f32 %v1598, %v1723
      %v1760 = vadd.f32 %v1599, %v1728
      %v1761 = vadd.f32 %v1600, %v1731
      %v1762 = vadd.f32 %v1601, %v1736
      %v1763 = vadd.f32 %v1602, %v1739
      %v1764 = vadd.f32 %v1603, %v1744
      %v1765 = vadd.f32 %v1604, %v1747
      %v1766 = vadd.f32 %v1605, %v1752
      %v1767 = vadd.f32 %v1606, %v1755
      %v1768 = vld [vmem:[%s3] sm:$0x1]
      %v1770 = vlaneseq
      %v1771 = vshrl.u32 %v1770, 7
      %v1772 = vsub.s32 0, %v1771
      %v1773 = vrot.slane %v1768, %v1772
      %v1775 = vadd.f32 %v1758, %v1773
      %v1776 = vadd.f32 %v1759, %v1773
      %v1777 = vadd.f32 %v1760, %v1773
      %v1778 = vadd.f32 %v1761, %v1773
      %v1779 = vadd.f32 %v1762, %v1773
      %v1780 = vadd.f32 %v1763, %v1773
      %v1781 = vadd.f32 %v1764, %v1773
      %v1782 = vadd.f32 %v1765, %v1773
      %v1783 = vadd.f32 %v1766, %v1773
      %v1784 = vadd.f32 %v1767, %v1773
      %v1785 = vmax.f32 %v1775, 0.0
      %v1786 = vmax.f32 %v1776, 0.0
      %v1787 = vmax.f32 %v1777, 0.0
      %v1788 = vmax.f32 %v1778, 0.0
      %v1789 = vmax.f32 %v1779, 0.0
      %v1790 = vmax.f32 %v1780, 0.0
      %v1791 = vmax.f32 %v1781, 0.0
      %v1792 = vmax.f32 %v1782, 0.0
      %v1793 = vmax.f32 %v1783, 0.0
      %v1794 = vmax.f32 %v1784, 0.0
      %1796 = vset.pattern.permute.xlu0 0
      %1797 = vperm.xlu0 %1796, %v381
      %v1798 = vpop.permute.xlu0 %1797
      %1801 = vset.pattern.permute.xlu0 0
      %1802 = vperm.xlu0 %1801, %v382
      %v1803 = vpop.permute.xlu0 %1802
      %1806 = vset.pattern.permute.xlu0 0
      %1807 = vperm.xlu0 %1806, %v383
      %v1808 = vpop.permute.xlu0 %1807
      %1811 = vset.pattern.permute.xlu0 0
      %1812 = vperm.xlu0 %1811, %v384
      %v1813 = vpop.permute.xlu0 %1812
      %1816 = vset.pattern.permute.xlu0 0
      %1817 = vperm.xlu0 %1816, %v385
      %v1818 = vpop.permute.xlu0 %1817
      %1821 = vset.pattern.permute.xlu0 0
      %1822 = vperm.xlu0 %1821, %v386
      %v1823 = vpop.permute.xlu0 %1822
      %1826 = vset.pattern.permute.xlu0 0
      %1827 = vperm.xlu0 %1826, %v387
      %v1828 = vpop.permute.xlu0 %1827
      %1831 = vset.pattern.permute.xlu0 0
      %1832 = vperm.xlu0 %1831, %v388
      %v1833 = vpop.permute.xlu0 %1832
      %1836 = vset.pattern.permute.xlu0 0
      %1837 = vperm.xlu0 %1836, %v389
      %v1838 = vpop.permute.xlu0 %1837
      %1841 = vset.pattern.permute.xlu0 0
      %1842 = vperm.xlu0 %1841, %v390
      %v1843 = vpop.permute.xlu0 %1842
      %v1845 = vmul.f32 %v1785, %v1798
      %v1846 = vmul.f32 %v1786, %v1803
      %v1847 = vmul.f32 %v1787, %v1808
      %v1848 = vmul.f32 %v1788, %v1813
      %v1849 = vmul.f32 %v1789, %v1818
      %v1850 = vmul.f32 %v1790, %v1823
      %v1851 = vmul.f32 %v1791, %v1828
      %v1852 = vmul.f32 %v1792, %v1833
      %v1853 = vmul.f32 %v1793, %v1838
      %v1854 = vmul.f32 %v1794, %v1843
      %1855 = vst [vmem:[#allocation2] sm:$0xf] 0
      %1856 = vst [vmem:[#allocation2 + $0x4] sm:$0xf] 0
      %1857 = vst [vmem:[#allocation2 + $0x8] sm:$0xf] 0
      %1858 = vst [vmem:[#allocation2 + $0xc] sm:$0xf] 0
      %1859 = vst [vmem:[#allocation2 + $0x10] sm:$0xf] 0
      %1860 = vst [vmem:[#allocation2 + $0x14] sm:$0xf] 0
      %1861 = vst [vmem:[#allocation2 + $0x18] sm:$0xf] 0
      %1862 = vst [vmem:[#allocation2 + $0x1c] sm:$0xf] 0
      %1863 = vst [vmem:[#allocation2 + $0x20] sm:$0xf] 0
      %1864 = vst [vmem:[#allocation2 + $0x24] sm:$0xf] 0
      %1865 = vst [vmem:[#allocation2 + $0x28] sm:$0xf] 0
      %1866 = vst [vmem:[#allocation2 + $0x2c] sm:$0xf] 0
      %1867 = vst [vmem:[#allocation2 + $0x30] sm:$0xf] 0
      %1868 = vst [vmem:[#allocation2 + $0x34] sm:$0x7] 0
      %v1869 = vpack.c.bf16 %v1846, %v1845
      %v1870 = vpack.c.bf16 %v1848, %v1847
      %v1871 = vpack.c.bf16 %v1850, %v1849
      %v1872 = vpack.c.bf16 %v1852, %v1851
      %v1873 = vpack.c.bf16 %v1854, %v1853
      %v1879 = vunpack.c.l.b16 %v1869
      %v1880 = vunpack.c.h.b16 %v1869
      %v1881 = vunpack.c.l.b16 %v1870
      %v1882 = vunpack.c.h.b16 %v1870
      %v1883 = vunpack.c.l.b16 %v1871
      %v1884 = vunpack.c.h.b16 %v1871
      %v1885 = vunpack.c.l.b16 %v1872
      %v1886 = vunpack.c.h.b16 %v1872
      %v1887 = vunpack.c.l.b16 %v1873
      %v1888 = vunpack.c.h.b16 %v1873
      %v1889 = vpack.c.b16 %v1879, %v1879
      %v1890 = vpack.c.b16 %v1880, %v1880
      %v1891 = vpack.c.b16 %v1881, %v1881
      %v1892 = vpack.c.b16 %v1882, %v1882
      %v1893 = vpack.c.b16 %v1883, %v1883
      %v1894 = vpack.c.b16 %v1884, %v1884
      %v1895 = vpack.c.b16 %v1885, %v1885
      %v1896 = vpack.c.b16 %v1886, %v1886
      %v1897 = vpack.c.b16 %v1887, %v1887
      %v1898 = vpack.c.b16 %v1888, %v1888
      %vm1899 = vsmask.f32 1280
      %vm1900 = vsmask.f32 5392
      %vm1901 = vmor %vm1899, %vm1900
      %v1903 = vshrl.u32 %v1889, 16
      %v1905 = vrot.slane %v1903, 6
      %v1906 = vshll.u32 %v1889, 16
      %v1908 = vrot.slane %v1906, 7
      %v1909 = vor.u32 %v1905, %v1908
      %v1910 = vrot.slane %v1909, 4
      %v1912 = vshrl.u32 %v1890, 16
      %v1914 = vrot.slane %v1912, 6
      %v1915 = vshll.u32 %v1890, 16
      %v1917 = vrot.slane %v1915, 7
      %v1918 = vor.u32 %v1914, %v1917
      %v1919 = vsel %vm1901, %v1910, %v1918
      %v1920 = vrot.slane %v1918, 4
      %v1922 = vshrl.u32 %v1891, 16
      %v1924 = vrot.slane %v1922, 6
      %v1925 = vshll.u32 %v1891, 16
      %v1927 = vrot.slane %v1925, 7
      %v1928 = vor.u32 %v1924, %v1927
      %v1929 = vsel %vm1901, %v1920, %v1928
      %v1930 = vrot.slane %v1928, 4
      %v1932 = vshrl.u32 %v1892, 16
      %v1934 = vrot.slane %v1932, 6
      %v1935 = vshll.u32 %v1892, 16
      %v1937 = vrot.slane %v1935, 7
      %v1938 = vor.u32 %v1934, %v1937
      %v1939 = vsel %vm1901, %v1930, %v1938
      %v1940 = vrot.slane %v1938, 4
      %v1942 = vshrl.u32 %v1893, 16
      %v1944 = vrot.slane %v1942, 6
      %v1945 = vshll.u32 %v1893, 16
      %v1947 = vrot.slane %v1945, 7
      %v1948 = vor.u32 %v1944, %v1947
      %v1949 = vsel %vm1901, %v1940, %v1948
      %v1950 = vrot.slane %v1948, 4
      %v1952 = vshrl.u32 %v1894, 16
      %v1954 = vrot.slane %v1952, 6
      %v1955 = vshll.u32 %v1894, 16
      %v1957 = vrot.slane %v1955, 7
      %v1958 = vor.u32 %v1954, %v1957
      %v1959 = vsel %vm1901, %v1950, %v1958
      %v1960 = vrot.slane %v1958, 4
      %v1962 = vshrl.u32 %v1895, 16
      %v1964 = vrot.slane %v1962, 6
      %v1965 = vshll.u32 %v1895, 16
      %v1967 = vrot.slane %v1965, 7
      %v1968 = vor.u32 %v1964, %v1967
      %v1969 = vsel %vm1901, %v1960, %v1968
      %v1970 = vrot.slane %v1968, 4
      %v1972 = vshrl.u32 %v1896, 16
      %v1974 = vrot.slane %v1972, 6
      %v1975 = vshll.u32 %v1896, 16
      %v1977 = vrot.slane %v1975, 7
      %v1978 = vor.u32 %v1974, %v1977
      %v1979 = vsel %vm1901, %v1970, %v1978
      %v1980 = vrot.slane %v1978, 4
      %v1982 = vshrl.u32 %v1897, 16
      %v1984 = vrot.slane %v1982, 6
      %v1985 = vshll.u32 %v1897, 16
      %v1987 = vrot.slane %v1985, 7
      %v1988 = vor.u32 %v1984, %v1987
      %v1989 = vsel %vm1901, %v1980, %v1988
      %v1990 = vrot.slane %v1988, 4
      %v1992 = vshrl.u32 %v1898, 16
      %v1994 = vrot.slane %v1992, 6
      %v1995 = vshll.u32 %v1898, 16
      %v1997 = vrot.slane %v1995, 7
      %v1998 = vor.u32 %v1994, %v1997
      %v1999 = vsel %vm1901, %v1990, %v1998
      %v2000 = vrot.slane %v1998, 4
      %vm2012 = vcmask 1043457
      %vm2013 = vsmask.f32 7942
      %vm2014 = vmand %vm2012, %vm2013
      %v2015 = vld [vmem:[#allocation2 + $0x4] sm:$0xe]
      %v2016 = vsel %vm2014, %v1909, %v2015
      %2017 = vst [vmem:[#allocation2 + $0x4] sm:$0xe] %v2016
      %2018 = vst [vmem:[#allocation2 + $0x8] sm:$0xf] %v1919
      %2019 = vst [vmem:[#allocation2 + $0xc] sm:$0xf] %v1929
      %2020 = vst [vmem:[#allocation2 + $0x10] sm:$0xf] %v1939
      %2021 = vst [vmem:[#allocation2 + $0x14] sm:$0xf] %v1949
      %2022 = vst [vmem:[#allocation2 + $0x18] sm:$0xf] %v1959
      %2023 = vst [vmem:[#allocation2 + $0x1c] sm:$0xf] %v1969
      %2024 = vst [vmem:[#allocation2 + $0x20] sm:$0xf] %v1979
      %2025 = vst [vmem:[#allocation2 + $0x24] sm:$0xf] %v1989
      %2026 = vst [vmem:[#allocation2 + $0x28] sm:$0xf] %v1999
      %vm2027 = vcmask 1041408
      %vm2028 = vmand %vm2027, %vm1899
      %v2029 = vld [vmem:[#allocation2 + $0x2c] sm:$0x3]
      %v2030 = vsel %vm2028, %v2000, %v2029
      %2031 = vst [vmem:[#allocation2 + $0x2c] sm:$0x3] %v2030
      %v2032 = vld [vmem:[%s374] sm:$0xf]
      %v2033 = vld [vmem:[%s374 + $0x4] sm:$0xf]
      %v2034 = vld [vmem:[%s374 + $0x8] sm:$0xf]
      %v2035 = vld [vmem:[%s374 + $0xc] sm:$0xf]
      %v2036 = vld [vmem:[%s374 + $0x10] sm:$0xf]
      %v2037 = vld [vmem:[%s374 + $0x14] sm:$0xf]
      %v2038 = vld [vmem:[%s374 + $0x18] sm:$0xf]
      %v2039 = vld [vmem:[%s374 + $0x1c] sm:$0xf]
      %v2040 = vld [vmem:[%s374 + $0x20] sm:$0xf]
      %v2041 = vld [vmem:[%s374 + $0x24] sm:$0xf]
      %v2042 = vld [vmem:[%s4] sm:$0xf]
      %v2043 = vld [vmem:[%s4 + $0x4] sm:$0xf]
      %v2044 = vld [vmem:[%s374 + $0x28] sm:$0x1]
      %s2045 = scalar_lea.vmem %s4, 8
      %v2046 = vld [vmem:[%s2045] sm:$0xf]
      %v2047 = vld [vmem:[%s2045 + $0x4] sm:$0xf]
      %v2059 = vunpack.c.l.b16 %v2032
      %v2060 = vunpack.c.l.b16 %v2033
      %v2061 = vunpack.c.l.b16 %v2034
      %v2062 = vunpack.c.l.b16 %v2035
      %v2063 = vunpack.c.l.b16 %v2036
      %v2064 = vunpack.c.l.b16 %v2037
      %v2065 = vunpack.c.l.b16 %v2038
      %v2066 = vunpack.c.l.b16 %v2039
      %v2067 = vunpack.c.l.b16 %v2040
      %v2068 = vunpack.c.l.b16 %v2041
      %v2069 = vunpack.c.l.b16 %v2044
      %v2070 = vpack.c.b16 %v2060, %v2059
      %v2071 = vpack.c.b16 %v2062, %v2061
      %v2072 = vpack.c.b16 %v2064, %v2063
      %v2073 = vpack.c.b16 %v2066, %v2065
      %v2074 = vpack.c.b16 %v2068, %v2067
      %v2075 = vpack.c.b16 %v2069, %v2069
      %v2077 = vshrl.u32 %v2070, 16
      %v2079 = vshll.u32 %v2070, 16
      %v2081 = vrot.slane %v2079, 1
      %v2082 = vor.u32 %v2077, %v2081
      %v2084 = vshll.u32 %v2071, 16
      %v2086 = vrot.slane %v2084, 1
      %v2087 = vsel %vm690, %v2082, %v2086
      %v2088 = vshrl.u32 %v2071, 16
      %v2090 = vor.u32 %v2088, %v2086
      %v2092 = vshll.u32 %v2072, 16
      %v2094 = vrot.slane %v2092, 1
      %v2095 = vsel %vm690, %v2090, %v2094
      %v2096 = vshrl.u32 %v2072, 16
      %v2098 = vor.u32 %v2096, %v2094
      %v2100 = vshll.u32 %v2073, 16
      %v2102 = vrot.slane %v2100, 1
      %v2103 = vsel %vm690, %v2098, %v2102
      %v2104 = vshrl.u32 %v2073, 16
      %v2106 = vor.u32 %v2104, %v2102
      %v2108 = vshll.u32 %v2074, 16
      %v2110 = vrot.slane %v2108, 1
      %v2111 = vsel %vm690, %v2106, %v2110
      %v2112 = vshrl.u32 %v2074, 16
      %v2114 = vor.u32 %v2112, %v2110
      %v2116 = vshll.u32 %v2075, 16
      %v2118 = vrot.slane %v2116, 1
      %v2119 = vsel %vm690, %v2114, %v2118
      %v2122 = vunpack.c.l.b16 %v2046
      %v2123 = vunpack.c.l.b16 %v2047
      %v2124 = vpack.c.b16 %v2123, %v2122
      %vm2126 = vcmask 130048
      %v2128 = vsel %vm2126, %v2087, 0
      %v2131 = vsel %vm2126, %v2095, 0
      %v2134 = vsel %vm2126, %v2103, 0
      %v2137 = vsel %vm2126, %v2111, 0
      %v2140 = vsel %vm2126, %v2119, 0
      %2142 = vmatprep.subr.bf16.mxu0 0
      %2143 = vmatpush1.bf16.msra.mxu0 %v2124
      %2144 = vmatprep.subr.bf16.mxu0 0
      %2145 = vmatpush1.bf16.msra.mxu0 0
      %2146 = vmatprep.subr.bf16.mxu0 0
      %2147 = vmatpush1.bf16.msra.mxu0 0
      %2148 = vmatprep.subr.bf16.mxu0 0
      %2149 = vmatpush1.bf16.msra.mxu0 0
      %2150 = vmatprep.subr.bf16.mxu0 0
      %2151 = vmatpush1.bf16.msra.mxu0 0
      %2152 = vmatprep.subr.bf16.mxu0 0
      %2153 = vmatpush1.bf16.msra.mxu0 0
      %2154 = vmatprep.subr.bf16.mxu0 0
      %2155 = vmatpush1.bf16.msra.mxu0 0
      %2156 = vmatprep.subr.bf16.mxu0 0
      %2157 = vmatpush1.bf16.msra.mxu0 0
      %2158 = vmatprep.subr.bf16.mxu0 0
      %2159 = vmatpush1.bf16.msra.mxu0 0
      %2160 = vmatprep.subr.bf16.mxu0 0
      %2161 = vmatpush1.bf16.msra.mxu0 0
      %2162 = vmatprep.subr.bf16.mxu0 0
      %2163 = vmatpush1.bf16.msra.mxu0 0
      %2164 = vmatprep.subr.bf16.mxu0 0
      %2165 = vmatpush1.bf16.msra.mxu0 0
      %2166 = vmatprep.subr.bf16.mxu0 0
      %2167 = vmatpush1.bf16.msra.mxu0 0
      %2168 = vmatprep.subr.bf16.mxu0 0
      %2169 = vmatpush1.bf16.msra.mxu0 0
      %2170 = vmatprep.subr.bf16.mxu0 0
      %2171 = vmatpush1.bf16.msra.mxu0 0
      %2172 = vmatprep.subr.bf16.mxu0 0
      %2173 = vmatpush1.bf16.msra.mxu0 0
      %2174 = vmatprep.mubr.bf16.mxu0 0
      %2175 = vmatmul.mubr.bf16.gmra.mrb[0].mxu0 %v2128
      %v2176 = vpop.f32.mrb[0].mxu0
      %v2177 = vadd.f32 0.0, %v2176
      %v2178 = vpop.f32.mrb[0].mxu0
      %v2179 = vpop.f32.mrb[0].mxu0
      %v2180 = vadd.f32 0.0, %v2179
      %v2181 = vpop.f32.mrb[0].mxu0
      %2182 = vmatprep.mubr.bf16.mxu0 0
      %2183 = vmatmul.mubr.bf16.gmra.mrb[0].mxu0 %v2131
      %v2184 = vpop.f32.mrb[0].mxu0
      %v2185 = vadd.f32 0.0, %v2184
      %v2186 = vpop.f32.mrb[0].mxu0
      %v2187 = vpop.f32.mrb[0].mxu0
      %v2188 = vadd.f32 0.0, %v2187
      %v2189 = vpop.f32.mrb[0].mxu0
      %2190 = vmatprep.mubr.bf16.mxu0 0
      %2191 = vmatmul.mubr.bf16.gmra.mrb[0].mxu0 %v2134
      %v2192 = vpop.f32.mrb[0].mxu0
      %v2193 = vadd.f32 0.0, %v2192
      %v2194 = vpop.f32.mrb[0].mxu0
      %v2195 = vpop.f32.mrb[0].mxu0
      %v2196 = vadd.f32 0.0, %v2195
      %v2197 = vpop.f32.mrb[0].mxu0
      %2198 = vmatprep.mubr.bf16.mxu0 0
      %2199 = vmatmul.mubr.bf16.gmra.mrb[0].mxu0 %v2137
      %v2200 = vpop.f32.mrb[0].mxu0
      %v2201 = vadd.f32 0.0, %v2200
      %v2202 = vpop.f32.mrb[0].mxu0
      %v2203 = vpop.f32.mrb[0].mxu0
      %v2204 = vadd.f32 0.0, %v2203
      %v2205 = vpop.f32.mrb[0].mxu0
      %2206 = vmatprep.mubr.bf16.mxu0 0
      %2207 = vmatmul.mubr.bf16.gmra.mrb[0].mxu0 %v2140
      %v2208 = vpop.f32.mrb[0].mxu0
      %v2209 = vadd.f32 0.0, %v2208
      %v2210 = vpop.f32.mrb[0].mxu0
      %v2211 = vpop.f32.mrb[0].mxu0
      %v2212 = vadd.f32 0.0, %v2211
      %v2213 = vpop.f32.mrb[0].mxu0
      %2214 = vdwg.mxu0
      %v2217 = vunpack.c.l.b16 %v2042
      %v2218 = vunpack.c.l.b16 %v2043
      %v2219 = vpack.c.b16 %v2218, %v2217
      %v2221 = vsel %vm2126, %v2070, 0
      %v2223 = vsel %vm2126, %v2071, 0
      %v2225 = vsel %vm2126, %v2072, 0
      %v2227 = vsel %vm2126, %v2073, 0
      %v2229 = vsel %vm2126, %v2074, 0
      %2231 = vmatprep.subr.bf16.mxu0 0
      %2232 = vmatpush1.bf16.msra.mxu0 %v2219
      %2233 = vmatprep.subr.bf16.mxu0 0
      %2234 = vmatpush1.bf16.msra.mxu0 0
      %2235 = vmatprep.subr.bf16.mxu0 0
      %2236 = vmatpush1.bf16.msra.mxu0 0
      %2237 = vmatprep.subr.bf16.mxu0 0
      %2238 = vmatpush1.bf16.msra.mxu0 0
      %2239 = vmatprep.subr.bf16.mxu0 0
      %2240 = vmatpush1.bf16.msra.mxu0 0
      %2241 = vmatprep.subr.bf16.mxu0 0
      %2242 = vmatpush1.bf16.msra.mxu0 0
      %2243 = vmatprep.subr.bf16.mxu0 0
      %2244 = vmatpush1.bf16.msra.mxu0 0
      %2245 = vmatprep.subr.bf16.mxu0 0
      %2246 = vmatpush1.bf16.msra.mxu0 0
      %2247 = vmatprep.subr.bf16.mxu0 0
      %2248 = vmatpush1.bf16.msra.mxu0 0
      %2249 = vmatprep.subr.bf16.mxu0 0
      %2250 = vmatpush1.bf16.msra.mxu0 0
      %2251 = vmatprep.subr.bf16.mxu0 0
      %2252 = vmatpush1.bf16.msra.mxu0 0
      %2253 = vmatprep.subr.bf16.mxu0 0
      %2254 = vmatpush1.bf16.msra.mxu0 0
      %2255 = vmatprep.subr.bf16.mxu0 0
      %2256 = vmatpush1.bf16.msra.mxu0 0
      %2257 = vmatprep.subr.bf16.mxu0 0
      %2258 = vmatpush1.bf16.msra.mxu0 0
      %2259 = vmatprep.subr.bf16.mxu0 0
      %2260 = vmatpush1.bf16.msra.mxu0 0
      %2261 = vmatprep.subr.bf16.mxu0 0
      %2262 = vmatpush1.bf16.msra.mxu0 0
      %2263 = vmatprep.mubr.bf16.mxu0 0
      %2264 = vmatmul.mubr.bf16.gmra.mrb[0].mxu0 %v2221
      %v2265 = vpop.f32.mrb[0].mxu0
      %v2266 = vadd.f32 %v2177, %v2265
      %v2267 = vpop.f32.mrb[0].mxu0
      %v2268 = vpop.f32.mrb[0].mxu0
      %v2269 = vadd.f32 %v2180, %v2268
      %v2270 = vpop.f32.mrb[0].mxu0
      %2271 = vmatprep.mubr.bf16.mxu0 0
      %2272 = vmatmul.mubr.bf16.gmra.mrb[0].mxu0 %v2223
      %v2273 = vpop.f32.mrb[0].mxu0
      %v2274 = vadd.f32 %v2185, %v2273
      %v2275 = vpop.f32.mrb[0].mxu0
      %v2276 = vpop.f32.mrb[0].mxu0
      %v2277 = vadd.f32 %v2188, %v2276
      %v2278 = vpop.f32.mrb[0].mxu0
      %2279 = vmatprep.mubr.bf16.mxu0 0
      %2280 = vmatmul.mubr.bf16.gmra.mrb[0].mxu0 %v2225
      %v2281 = vpop.f32.mrb[0].mxu0
      %v2282 = vadd.f32 %v2193, %v2281
      %v2283 = vpop.f32.mrb[0].mxu0
      %v2284 = vpop.f32.mrb[0].mxu0
      %v2285 = vadd.f32 %v2196, %v2284
      %v2286 = vpop.f32.mrb[0].mxu0
      %2287 = vmatprep.mubr.bf16.mxu0 0
      %2288 = vmatmul.mubr.bf16.gmra.mrb[0].mxu0 %v2227
      %v2289 = vpop.f32.mrb[0].mxu0
      %v2290 = vadd.f32 %v2201, %v2289
      %v2291 = vpop.f32.mrb[0].mxu0
      %v2292 = vpop.f32.mrb[0].mxu0
      %v2293 = vadd.f32 %v2204, %v2292
      %v2294 = vpop.f32.mrb[0].mxu0
      %2295 = vmatprep.mubr.bf16.mxu0 0
      %2296 = vmatmul.mubr.bf16.gmra.mrb[0].mxu0 %v2229
      %v2297 = vpop.f32.mrb[0].mxu0
      %v2298 = vadd.f32 %v2209, %v2297
      %v2299 = vpop.f32.mrb[0].mxu0
      %v2300 = vpop.f32.mrb[0].mxu0
      %v2301 = vadd.f32 %v2212, %v2300
      %v2302 = vpop.f32.mrb[0].mxu0
      %2303 = vdwg.mxu0
      %v2304 = vld [vmem:[%s374] sm:$0xe]
      %s2305 = scalar_lea.vmem %s4, 16
      %v2306 = vld [vmem:[%s2305] sm:$0xf]
      %v2307 = vld [vmem:[%s2305 + $0x4] sm:$0xf]
      %v2309 = vunpack.c.l.b16 %v2304
      %v2310 = vpack.c.b16 %v2060, %v2309
      %v2311 = vrot.slane %v2310, 1
      %v2312 = vrot.slane %v2071, 1
      %v2313 = vsel %vm1341, %v2311, %v2312
      %v2314 = vrot.slane %v2072, 1
      %v2315 = vsel %vm1341, %v2312, %v2314
      %v2316 = vrot.slane %v2073, 1
      %v2317 = vsel %vm1341, %v2314, %v2316
      %v2318 = vrot.slane %v2074, 1
      %v2319 = vsel %vm1341, %v2316, %v2318
      %v2320 = vrot.slane %v2075, 1
      %v2321 = vsel %vm1341, %v2318, %v2320
      %v2324 = vunpack.c.l.b16 %v2306
      %v2325 = vunpack.c.l.b16 %v2307
      %v2326 = vpack.c.b16 %v2325, %v2324
      %v2329 = vsel %vm2126, %v2313, 0
      %v2332 = vsel %vm2126, %v2315, 0
      %v2335 = vsel %vm2126, %v2317, 0
      %v2338 = vsel %vm2126, %v2319, 0
      %v2341 = vsel %vm2126, %v2321, 0
      %2343 = vmatprep.subr.bf16.mxu0 0
      %2344 = vmatpush1.bf16.msra.mxu0 %v2326
      %2345 = vmatprep.subr.bf16.mxu0 0
      %2346 = vmatpush1.bf16.msra.mxu0 0
      %2347 = vmatprep.subr.bf16.mxu0 0
      %2348 = vmatpush1.bf16.msra.mxu0 0
      %2349 = vmatprep.subr.bf16.mxu0 0
      %2350 = vmatpush1.bf16.msra.mxu0 0
      %2351 = vmatprep.subr.bf16.mxu0 0
      %2352 = vmatpush1.bf16.msra.mxu0 0
      %2353 = vmatprep.subr.bf16.mxu0 0
      %2354 = vmatpush1.bf16.msra.mxu0 0
      %2355 = vmatprep.subr.bf16.mxu0 0
      %2356 = vmatpush1.bf16.msra.mxu0 0
      %2357 = vmatprep.subr.bf16.mxu0 0
      %2358 = vmatpush1.bf16.msra.mxu0 0
      %2359 = vmatprep.subr.bf16.mxu0 0
      %2360 = vmatpush1.bf16.msra.mxu0 0
      %2361 = vmatprep.subr.bf16.mxu0 0
      %2362 = vmatpush1.bf16.msra.mxu0 0
      %2363 = vmatprep.subr.bf16.mxu0 0
      %2364 = vmatpush1.bf16.msra.mxu0 0
      %2365 = vmatprep.subr.bf16.mxu0 0
      %2366 = vmatpush1.bf16.msra.mxu0 0
      %2367 = vmatprep.subr.bf16.mxu0 0
      %2368 = vmatpush1.bf16.msra.mxu0 0
      %2369 = vmatprep.subr.bf16.mxu0 0
      %2370 = vmatpush1.bf16.msra.mxu0 0
      %2371 = vmatprep.subr.bf16.mxu0 0
      %2372 = vmatpush1.bf16.msra.mxu0 0
      %2373 = vmatprep.subr.bf16.mxu0 0
      %2374 = vmatpush1.bf16.msra.mxu0 0
      %2375 = vmatprep.mubr.bf16.mxu0 0
      %2376 = vmatmul.mubr.bf16.gmra.mrb[0].mxu0 %v2329
      %v2377 = vpop.f32.mrb[0].mxu0
      %v2378 = vadd.f32 0.0, %v2377
      %v2379 = vpop.f32.mrb[0].mxu0
      %v2380 = vpop.f32.mrb[0].mxu0
      %v2381 = vadd.f32 0.0, %v2380
      %v2382 = vpop.f32.mrb[0].mxu0
      %2383 = vmatprep.mubr.bf16.mxu0 0
      %2384 = vmatmul.mubr.bf16.gmra.mrb[0].mxu0 %v2332
      %v2385 = vpop.f32.mrb[0].mxu0
      %v2386 = vadd.f32 0.0, %v2385
      %v2387 = vpop.f32.mrb[0].mxu0
      %v2388 = vpop.f32.mrb[0].mxu0
      %v2389 = vadd.f32 0.0, %v2388
      %v2390 = vpop.f32.mrb[0].mxu0
      %2391 = vmatprep.mubr.bf16.mxu0 0
      %2392 = vmatmul.mubr.bf16.gmra.mrb[0].mxu0 %v2335
      %v2393 = vpop.f32.mrb[0].mxu0
      %v2394 = vadd.f32 0.0, %v2393
      %v2395 = vpop.f32.mrb[0].mxu0
      %v2396 = vpop.f32.mrb[0].mxu0
      %v2397 = vadd.f32 0.0, %v2396
      %v2398 = vpop.f32.mrb[0].mxu0
      %2399 = vmatprep.mubr.bf16.mxu0 0
      %2400 = vmatmul.mubr.bf16.gmra.mrb[0].mxu0 %v2338
      %v2401 = vpop.f32.mrb[0].mxu0
      %v2402 = vadd.f32 0.0, %v2401
      %v2403 = vpop.f32.mrb[0].mxu0
      %v2404 = vpop.f32.mrb[0].mxu0
      %v2405 = vadd.f32 0.0, %v2404
      %v2406 = vpop.f32.mrb[0].mxu0
      %2407 = vmatprep.mubr.bf16.mxu0 0
      %2408 = vmatmul.mubr.bf16.gmra.mrb[0].mxu0 %v2341
      %v2409 = vpop.f32.mrb[0].mxu0
      %v2410 = vadd.f32 0.0, %v2409
      %v2411 = vpop.f32.mrb[0].mxu0
      %v2412 = vpop.f32.mrb[0].mxu0
      %v2413 = vadd.f32 0.0, %v2412
      %v2414 = vpop.f32.mrb[0].mxu0
      %2415 = vdwg.mxu0
      %v2416 = vadd.f32 %v2266, %v2378
      %v2417 = vadd.f32 %v2269, %v2381
      %v2418 = vadd.f32 %v2274, %v2386
      %v2419 = vadd.f32 %v2277, %v2389
      %v2420 = vadd.f32 %v2282, %v2394
      %v2421 = vadd.f32 %v2285, %v2397
      %v2422 = vadd.f32 %v2290, %v2402
      %v2423 = vadd.f32 %v2293, %v2405
      %v2424 = vadd.f32 %v2298, %v2410
      %v2425 = vadd.f32 %v2301, %v2413
      %v2426 = vld [vmem:[%s374 + $0x4] sm:$0xe]
      %v2427 = vld [vmem:[%s374 + $0x8] sm:$0xf]
      %v2428 = vld [vmem:[%s374 + $0xc] sm:$0xf]
      %v2429 = vld [vmem:[%s374 + $0x10] sm:$0xf]
      %v2430 = vld [vmem:[%s374 + $0x14] sm:$0xf]
      %v2431 = vld [vmem:[%s374 + $0x18] sm:$0xf]
      %v2432 = vld [vmem:[%s374 + $0x1c] sm:$0xf]
      %v2433 = vld [vmem:[%s374 + $0x20] sm:$0xf]
      %v2434 = vld [vmem:[%s374 + $0x24] sm:$0xf]
      %v2435 = vld [vmem:[%s374 + $0x28] sm:$0xf]
      %v2436 = vld [vmem:[%s374 + $0x2c] sm:$0x1]
      %s2437 = scalar_lea.vmem %s4, 24
      %v2438 = vld [vmem:[%s2437] sm:$0xf]
      %v2439 = vld [vmem:[%s2437 + $0x4] sm:$0xf]
      %v2451 = vunpack.c.l.b16 %v2426
      %v2452 = vunpack.c.l.b16 %v2427
      %v2453 = vunpack.c.l.b16 %v2428
      %v2454 = vunpack.c.l.b16 %v2429
      %v2455 = vunpack.c.l.b16 %v2430
      %v2456 = vunpack.c.l.b16 %v2431
      %v2457 = vunpack.c.l.b16 %v2432
      %v2458 = vunpack.c.l.b16 %v2433
      %v2459 = vunpack.c.l.b16 %v2434
      %v2460 = vunpack.c.l.b16 %v2435
      %v2461 = vunpack.c.l.b16 %v2436
      %v2462 = vpack.c.b16 %v2452, %v2451
      %v2463 = vpack.c.b16 %v2454, %v2453
      %v2464 = vpack.c.b16 %v2456, %v2455
      %v2465 = vpack.c.b16 %v2458, %v2457
      %v2466 = vpack.c.b16 %v2460, %v2459
      %v2467 = vpack.c.b16 %v2461, %v2461
      %v2468 = vrot.slane %v2462, 1
      %v2469 = vrot.slane %v2463, 1
      %v2470 = vsel %vm1341, %v2468, %v2469
      %v2471 = vrot.slane %v2464, 1
      %v2472 = vsel %vm1341, %v2469, %v2471
      %v2473 = vrot.slane %v2465, 1
      %v2474 = vsel %vm1341, %v2471, %v2473
      %v2475 = vrot.slane %v2466, 1
      %v2476 = vsel %vm1341, %v2473, %v2475
      %v2477 = vrot.slane %v2467, 1
      %v2478 = vsel %vm1341, %v2475, %v2477
      %v2481 = vunpack.c.l.b16 %v2438
      %v2482 = vunpack.c.l.b16 %v2439
      %v2483 = vpack.c.b16 %v2482, %v2481
      %v2486 = vsel %vm2126, %v2470, 0
      %v2489 = vsel %vm2126, %v2472, 0
      %v2492 = vsel %vm2126, %v2474, 0
      %v2495 = vsel %vm2126, %v2476, 0
      %v2498 = vsel %vm2126, %v2478, 0
      %2500 = vmatprep.subr.bf16.mxu0 0
      %2501 = vmatpush1.bf16.msra.mxu0 %v2483
      %2502 = vmatprep.subr.bf16.mxu0 0
      %2503 = vmatpush1.bf16.msra.mxu0 0
      %2504 = vmatprep.subr.bf16.mxu0 0
      %2505 = vmatpush1.bf16.msra.mxu0 0
      %2506 = vmatprep.subr.bf16.mxu0 0
      %2507 = vmatpush1.bf16.msra.mxu0 0
      %2508 = vmatprep.subr.bf16.mxu0 0
      %2509 = vmatpush1.bf16.msra.mxu0 0
      %2510 = vmatprep.subr.bf16.mxu0 0
      %2511 = vmatpush1.bf16.msra.mxu0 0
      %2512 = vmatprep.subr.bf16.mxu0 0
      %2513 = vmatpush1.bf16.msra.mxu0 0
      %2514 = vmatprep.subr.bf16.mxu0 0
      %2515 = vmatpush1.bf16.msra.mxu0 0
      %2516 = vmatprep.subr.bf16.mxu0 0
      %2517 = vmatpush1.bf16.msra.mxu0 0
      %2518 = vmatprep.subr.bf16.mxu0 0
      %2519 = vmatpush1.bf16.msra.mxu0 0
      %2520 = vmatprep.subr.bf16.mxu0 0
      %2521 = vmatpush1.bf16.msra.mxu0 0
      %2522 = vmatprep.subr.bf16.mxu0 0
      %2523 = vmatpush1.bf16.msra.mxu0 0
      %2524 = vmatprep.subr.bf16.mxu0 0
      %2525 = vmatpush1.bf16.msra.mxu0 0
      %2526 = vmatprep.subr.bf16.mxu0 0
      %2527 = vmatpush1.bf16.msra.mxu0 0
      %2528 = vmatprep.subr.bf16.mxu0 0
      %2529 = vmatpush1.bf16.msra.mxu0 0
      %2530 = vmatprep.subr.bf16.mxu0 0
      %2531 = vmatpush1.bf16.msra.mxu0 0
      %2532 = vmatprep.mubr.bf16.mxu0 0
      %2533 = vmatmul.mubr.bf16.gmra.mrb[0].mxu0 %v2486
      %v2534 = vpop.f32.mrb[0].mxu0
      %v2535 = vadd.f32 0.0, %v2534
      %v2536 = vpop.f32.mrb[0].mxu0
      %v2537 = vpop.f32.mrb[0].mxu0
      %v2538 = vadd.f32 0.0, %v2537
      %v2539 = vpop.f32.mrb[0].mxu0
      %2540 = vmatprep.mubr.bf16.mxu0 0
      %2541 = vmatmul.mubr.bf16.gmra.mrb[0].mxu0 %v2489
      %v2542 = vpop.f32.mrb[0].mxu0
      %v2543 = vadd.f32 0.0, %v2542
      %v2544 = vpop.f32.mrb[0].mxu0
      %v2545 = vpop.f32.mrb[0].mxu0
      %v2546 = vadd.f32 0.0, %v2545
      %v2547 = vpop.f32.mrb[0].mxu0
      %2548 = vmatprep.mubr.bf16.mxu0 0
      %2549 = vmatmul.mubr.bf16.gmra.mrb[0].mxu0 %v2492
      %v2550 = vpop.f32.mrb[0].mxu0
      %v2551 = vadd.f32 0.0, %v2550
      %v2552 = vpop.f32.mrb[0].mxu0
      %v2553 = vpop.f32.mrb[0].mxu0
      %v2554 = vadd.f32 0.0, %v2553
      %v2555 = vpop.f32.mrb[0].mxu0
      %2556 = vmatprep.mubr.bf16.mxu0 0
      %2557 = vmatmul.mubr.bf16.gmra.mrb[0].mxu0 %v2495
      %v2558 = vpop.f32.mrb[0].mxu0
      %v2559 = vadd.f32 0.0, %v2558
      %v2560 = vpop.f32.mrb[0].mxu0
      %v2561 = vpop.f32.mrb[0].mxu0
      %v2562 = vadd.f32 0.0, %v2561
      %v2563 = vpop.f32.mrb[0].mxu0
      %2564 = vmatprep.mubr.bf16.mxu0 0
      %2565 = vmatmul.mubr.bf16.gmra.mrb[0].mxu0 %v2498
      %v2566 = vpop.f32.mrb[0].mxu0
      %v2567 = vadd.f32 0.0, %v2566
      %v2568 = vpop.f32.mrb[0].mxu0
      %v2569 = vpop.f32.mrb[0].mxu0
      %v2570 = vadd.f32 0.0, %v2569
      %v2571 = vpop.f32.mrb[0].mxu0
      %2572 = vdwg.mxu0
      %v2573 = vadd.f32 %v2416, %v2535
      %v2574 = vadd.f32 %v2417, %v2538
      %v2575 = vadd.f32 %v2418, %v2543
      %v2576 = vadd.f32 %v2419, %v2546
      %v2577 = vadd.f32 %v2420, %v2551
      %v2578 = vadd.f32 %v2421, %v2554
      %v2579 = vadd.f32 %v2422, %v2559
      %v2580 = vadd.f32 %v2423, %v2562
      %v2581 = vadd.f32 %v2424, %v2567
      %v2582 = vadd.f32 %v2425, %v2570
      %v2583 = vld [vmem:[%s374 + $0x2c] sm:$0x3]
      %s2584 = scalar_lea.vmem %s4, 32
      %v2585 = vld [vmem:[%s2584] sm:$0xf]
      %v2586 = vld [vmem:[%s2584 + $0x4] sm:$0xf]
      %v2588 = vunpack.c.l.b16 %v2583
      %v2589 = vpack.c.b16 %v2588, %v2588
      %v2591 = vshrl.u32 %v2462, 16
      %v2593 = vrot.slane %v2591, 1
      %v2594 = vshll.u32 %v2462, 16
      %v2596 = vrot.slane %v2594, 2
      %v2597 = vor.u32 %v2593, %v2596
      %v2599 = vshrl.u32 %v2463, 16
      %v2601 = vrot.slane %v2599, 1
      %v2602 = vshll.u32 %v2463, 16
      %v2604 = vrot.slane %v2602, 2
      %v2605 = vor.u32 %v2601, %v2604
      %v2606 = vsel %vm1613, %v2597, %v2605
      %v2608 = vshrl.u32 %v2464, 16
      %v2610 = vrot.slane %v2608, 1
      %v2611 = vshll.u32 %v2464, 16
      %v2613 = vrot.slane %v2611, 2
      %v2614 = vor.u32 %v2610, %v2613
      %v2615 = vsel %vm1613, %v2605, %v2614
      %v2617 = vshrl.u32 %v2465, 16
      %v2619 = vrot.slane %v2617, 1
      %v2620 = vshll.u32 %v2465, 16
      %v2622 = vrot.slane %v2620, 2
      %v2623 = vor.u32 %v2619, %v2622
      %v2624 = vsel %vm1613, %v2614, %v2623
      %v2626 = vshrl.u32 %v2466, 16
      %v2628 = vrot.slane %v2626, 1
      %v2629 = vshll.u32 %v2466, 16
      %v2631 = vrot.slane %v2629, 2
      %v2632 = vor.u32 %v2628, %v2631
      %v2633 = vsel %vm1613, %v2623, %v2632
      %v2635 = vshrl.u32 %v2589, 16
      %v2637 = vrot.slane %v2635, 1
      %v2638 = vshll.u32 %v2589, 16
      %v2640 = vrot.slane %v2638, 2
      %v2641 = vor.u32 %v2637, %v2640
      %v2642 = vsel %vm1613, %v2632, %v2641
      %v2645 = vunpack.c.l.b16 %v2585
      %v2646 = vunpack.c.l.b16 %v2586
      %v2647 = vpack.c.b16 %v2646, %v2645
      %v2650 = vsel %vm2126, %v2606, 0
      %v2653 = vsel %vm2126, %v2615, 0
      %v2656 = vsel %vm2126, %v2624, 0
      %v2659 = vsel %vm2126, %v2633, 0
      %v2662 = vsel %vm2126, %v2642, 0
      %2664 = vmatprep.subr.bf16.mxu0 0
      %2665 = vmatpush1.bf16.msra.mxu0 %v2647
      %2666 = vmatprep.subr.bf16.mxu0 0
      %2667 = vmatpush1.bf16.msra.mxu0 0
      %2668 = vmatprep.subr.bf16.mxu0 0
      %2669 = vmatpush1.bf16.msra.mxu0 0
      %2670 = vmatprep.subr.bf16.mxu0 0
      %2671 = vmatpush1.bf16.msra.mxu0 0
      %2672 = vmatprep.subr.bf16.mxu0 0
      %2673 = vmatpush1.bf16.msra.mxu0 0
      %2674 = vmatprep.subr.bf16.mxu0 0
      %2675 = vmatpush1.bf16.msra.mxu0 0
      %2676 = vmatprep.subr.bf16.mxu0 0
      %2677 = vmatpush1.bf16.msra.mxu0 0
      %2678 = vmatprep.subr.bf16.mxu0 0
      %2679 = vmatpush1.bf16.msra.mxu0 0
      %2680 = vmatprep.subr.bf16.mxu0 0
      %2681 = vmatpush1.bf16.msra.mxu0 0
      %2682 = vmatprep.subr.bf16.mxu0 0
      %2683 = vmatpush1.bf16.msra.mxu0 0
      %2684 = vmatprep.subr.bf16.mxu0 0
      %2685 = vmatpush1.bf16.msra.mxu0 0
      %2686 = vmatprep.subr.bf16.mxu0 0
      %2687 = vmatpush1.bf16.msra.mxu0 0
      %2688 = vmatprep.subr.bf16.mxu0 0
      %2689 = vmatpush1.bf16.msra.mxu0 0
      %2690 = vmatprep.subr.bf16.mxu0 0
      %2691 = vmatpush1.bf16.msra.mxu0 0
      %2692 = vmatprep.subr.bf16.mxu0 0
      %2693 = vmatpush1.bf16.msra.mxu0 0
      %2694 = vmatprep.subr.bf16.mxu0 0
      %2695 = vmatpush1.bf16.msra.mxu0 0
      %2696 = vmatprep.mubr.bf16.mxu0 0
      %2697 = vmatmul.mubr.bf16.gmra.mrb[0].mxu0 %v2650
      %v2698 = vpop.f32.mrb[0].mxu0
      %v2699 = vadd.f32 0.0, %v2698
      %v2700 = vpop.f32.mrb[0].mxu0
      %v2701 = vpop.f32.mrb[0].mxu0
      %v2702 = vadd.f32 0.0, %v2701
      %v2703 = vpop.f32.mrb[0].mxu0
      %2704 = vmatprep.mubr.bf16.mxu0 0
      %2705 = vmatmul.mubr.bf16.gmra.mrb[0].mxu0 %v2653
      %v2706 = vpop.f32.mrb[0].mxu0
      %v2707 = vadd.f32 0.0, %v2706
      %v2708 = vpop.f32.mrb[0].mxu0
      %v2709 = vpop.f32.mrb[0].mxu0
      %v2710 = vadd.f32 0.0, %v2709
      %v2711 = vpop.f32.mrb[0].mxu0
      %2712 = vmatprep.mubr.bf16.mxu0 0
      %2713 = vmatmul.mubr.bf16.gmra.mrb[0].mxu0 %v2656
      %v2714 = vpop.f32.mrb[0].mxu0
      %v2715 = vadd.f32 0.0, %v2714
      %v2716 = vpop.f32.mrb[0].mxu0
      %v2717 = vpop.f32.mrb[0].mxu0
      %v2718 = vadd.f32 0.0, %v2717
      %v2719 = vpop.f32.mrb[0].mxu0
      %2720 = vmatprep.mubr.bf16.mxu0 0
      %2721 = vmatmul.mubr.bf16.gmra.mrb[0].mxu0 %v2659
      %v2722 = vpop.f32.mrb[0].mxu0
      %v2723 = vadd.f32 0.0, %v2722
      %v2724 = vpop.f32.mrb[0].mxu0
      %v2725 = vpop.f32.mrb[0].mxu0
      %v2726 = vadd.f32 0.0, %v2725
      %v2727 = vpop.f32.mrb[0].mxu0
      %2728 = vmatprep.mubr.bf16.mxu0 0
      %2729 = vmatmul.mubr.bf16.gmra.mrb[0].mxu0 %v2662
      %v2730 = vpop.f32.mrb[0].mxu0
      %v2731 = vadd.f32 0.0, %v2730
      %v2732 = vpop.f32.mrb[0].mxu0
      %v2733 = vpop.f32.mrb[0].mxu0
      %v2734 = vadd.f32 0.0, %v2733
      %v2735 = vpop.f32.mrb[0].mxu0
      %2736 = vdwg.mxu0
      %v2737 = vadd.f32 %v2573, %v2699
      %v2738 = vadd.f32 %v2574, %v2702
      %v2739 = vadd.f32 %v2575, %v2707
      %v2740 = vadd.f32 %v2576, %v2710
      %v2741 = vadd.f32 %v2577, %v2715
      %v2742 = vadd.f32 %v2578, %v2718
      %v2743 = vadd.f32 %v2579, %v2723
      %v2744 = vadd.f32 %v2580, %v2726
      %v2745 = vadd.f32 %v2581, %v2731
      %v2746 = vadd.f32 %v2582, %v2734
      %v2747 = vld [vmem:[%s374 + $0x4] sm:$0xc]
      %s2748 = scalar_lea.vmem %s4, 40
      %v2749 = vld [vmem:[%s2748] sm:$0xf]
      %v2750 = vld [vmem:[%s2748 + $0x4] sm:$0xf]
      %v2752 = vunpack.c.l.b16 %v2747
      %v2753 = vpack.c.b16 %v2452, %v2752
      %vm2754 = vcmask 1045504
      %v2755 = vrot.slane %v2753, 2
      %v2756 = vrot.slane %v2463, 2
      %v2757 = vsel %vm2754, %v2755, %v2756
      %v2758 = vrot.slane %v2464, 2
      %v2759 = vsel %vm2754, %v2756, %v2758
      %v2760 = vrot.slane %v2465, 2
      %v2761 = vsel %vm2754, %v2758, %v2760
      %v2762 = vrot.slane %v2466, 2
      %v2763 = vsel %vm2754, %v2760, %v2762
      %v2764 = vrot.slane %v2589, 2
      %v2765 = vsel %vm2754, %v2762, %v2764
      %v2768 = vunpack.c.l.b16 %v2749
      %v2769 = vunpack.c.l.b16 %v2750
      %v2770 = vpack.c.b16 %v2769, %v2768
      %v2773 = vsel %vm2126, %v2757, 0
      %v2776 = vsel %vm2126, %v2759, 0
      %v2779 = vsel %vm2126, %v2761, 0
      %v2782 = vsel %vm2126, %v2763, 0
      %v2785 = vsel %vm2126, %v2765, 0
      %2787 = vmatprep.subr.bf16.mxu0 0
      %2788 = vmatpush1.bf16.msra.mxu0 %v2770
      %2789 = vmatprep.subr.bf16.mxu0 0
      %2790 = vmatpush1.bf16.msra.mxu0 0
      %2791 = vmatprep.subr.bf16.mxu0 0
      %2792 = vmatpush1.bf16.msra.mxu0 0
      %2793 = vmatprep.subr.bf16.mxu0 0
      %2794 = vmatpush1.bf16.msra.mxu0 0
      %2795 = vmatprep.subr.bf16.mxu0 0
      %2796 = vmatpush1.bf16.msra.mxu0 0
      %2797 = vmatprep.subr.bf16.mxu0 0
      %2798 = vmatpush1.bf16.msra.mxu0 0
      %2799 = vmatprep.subr.bf16.mxu0 0
      %2800 = vmatpush1.bf16.msra.mxu0 0
      %2801 = vmatprep.subr.bf16.mxu0 0
      %2802 = vmatpush1.bf16.msra.mxu0 0
      %2803 = vmatprep.subr.bf16.mxu0 0
      %2804 = vmatpush1.bf16.msra.mxu0 0
      %2805 = vmatprep.subr.bf16.mxu0 0
      %2806 = vmatpush1.bf16.msra.mxu0 0
      %2807 = vmatprep.subr.bf16.mxu0 0
      %2808 = vmatpush1.bf16.msra.mxu0 0
      %2809 = vmatprep.subr.bf16.mxu0 0
      %2810 = vmatpush1.bf16.msra.mxu0 0
      %2811 = vmatprep.subr.bf16.mxu0 0
      %2812 = vmatpush1.bf16.msra.mxu0 0
      %2813 = vmatprep.subr.bf16.mxu0 0
      %2814 = vmatpush1.bf16.msra.mxu0 0
      %2815 = vmatprep.subr.bf16.mxu0 0
      %2816 = vmatpush1.bf16.msra.mxu0 0
      %2817 = vmatprep.subr.bf16.mxu0 0
      %2818 = vmatpush1.bf16.msra.mxu0 0
      %2819 = vmatprep.mubr.bf16.mxu0 0
      %2820 = vmatmul.mubr.bf16.gmra.mrb[0].mxu0 %v2773
      %v2821 = vpop.f32.mrb[0].mxu0
      %v2822 = vadd.f32 0.0, %v2821
      %v2823 = vpop.f32.mrb[0].mxu0
      %v2824 = vpop.f32.mrb[0].mxu0
      %v2825 = vadd.f32 0.0, %v2824
      %v2826 = vpop.f32.mrb[0].mxu0
      %2827 = vmatprep.mubr.bf16.mxu0 0
      %2828 = vmatmul.mubr.bf16.gmra.mrb[0].mxu0 %v2776
      %v2829 = vpop.f32.mrb[0].mxu0
      %v2830 = vadd.f32 0.0, %v2829
      %v2831 = vpop.f32.mrb[0].mxu0
      %v2832 = vpop.f32.mrb[0].mxu0
      %v2833 = vadd.f32 0.0, %v2832
      %v2834 = vpop.f32.mrb[0].mxu0
      %2835 = vmatprep.mubr.bf16.mxu0 0
      %2836 = vmatmul.mubr.bf16.gmra.mrb[0].mxu0 %v2779
      %v2837 = vpop.f32.mrb[0].mxu0
      %v2838 = vadd.f32 0.0, %v2837
      %v2839 = vpop.f32.mrb[0].mxu0
      %v2840 = vpop.f32.mrb[0].mxu0
      %v2841 = vadd.f32 0.0, %v2840
      %v2842 = vpop.f32.mrb[0].mxu0
      %2843 = vmatprep.mubr.bf16.mxu0 0
      %2844 = vmatmul.mubr.bf16.gmra.mrb[0].mxu0 %v2782
      %v2845 = vpop.f32.mrb[0].mxu0
      %v2846 = vadd.f32 0.0, %v2845
      %v2847 = vpop.f32.mrb[0].mxu0
      %v2848 = vpop.f32.mrb[0].mxu0
      %v2849 = vadd.f32 0.0, %v2848
      %v2850 = vpop.f32.mrb[0].mxu0
      %2851 = vmatprep.mubr.bf16.mxu0 0
      %2852 = vmatmul.mubr.bf16.gmra.mrb[0].mxu0 %v2785
      %v2853 = vpop.f32.mrb[0].mxu0
      %v2854 = vadd.f32 0.0, %v2853
      %v2855 = vpop.f32.mrb[0].mxu0
      %v2856 = vpop.f32.mrb[0].mxu0
      %v2857 = vadd.f32 0.0, %v2856
      %v2858 = vpop.f32.mrb[0].mxu0
      %2859 = vdwg.mxu0
      %v2860 = vadd.f32 %v2737, %v2822
      %v2861 = vadd.f32 %v2738, %v2825
      %v2862 = vadd.f32 %v2739, %v2830
      %v2863 = vadd.f32 %v2740, %v2833
      %v2864 = vadd.f32 %v2741, %v2838
      %v2865 = vadd.f32 %v2742, %v2841
      %v2866 = vadd.f32 %v2743, %v2846
      %v2867 = vadd.f32 %v2744, %v2849
      %v2868 = vadd.f32 %v2745, %v2854
      %v2869 = vadd.f32 %v2746, %v2857
      %v2870 = vld [vmem:[%s374 + $0x8] sm:$0xc]
      %v2871 = vld [vmem:[%s374 + $0xc] sm:$0xf]
      %v2872 = vld [vmem:[%s374 + $0x10] sm:$0xf]
      %v2873 = vld [vmem:[%s374 + $0x14] sm:$0xf]
      %v2874 = vld [vmem:[%s374 + $0x18] sm:$0xf]
      %v2875 = vld [vmem:[%s374 + $0x1c] sm:$0xf]
      %v2876 = vld [vmem:[%s374 + $0x20] sm:$0xf]
      %v2877 = vld [vmem:[%s374 + $0x24] sm:$0xf]
      %v2878 = vld [vmem:[%s374 + $0x28] sm:$0xf]
      %v2879 = vld [vmem:[%s374 + $0x2c] sm:$0xf]
      %v2880 = vld [vmem:[%s374 + $0x30] sm:$0x3]
      %s2881 = scalar_lea.vmem %s4, 48
      %v2882 = vld [vmem:[%s2881] sm:$0xf]
      %v2883 = vld [vmem:[%s2881 + $0x4] sm:$0xf]
      %v2895 = vunpack.c.l.b16 %v2870
      %v2896 = vunpack.c.l.b16 %v2871
      %v2897 = vunpack.c.l.b16 %v2872
      %v2898 = vunpack.c.l.b16 %v2873
      %v2899 = vunpack.c.l.b16 %v2874
      %v2900 = vunpack.c.l.b16 %v2875
      %v2901 = vunpack.c.l.b16 %v2876
      %v2902 = vunpack.c.l.b16 %v2877
      %v2903 = vunpack.c.l.b16 %v2878
      %v2904 = vunpack.c.l.b16 %v2879
      %v2905 = vunpack.c.l.b16 %v2880
      %v2906 = vpack.c.b16 %v2896, %v2895
      %v2907 = vpack.c.b16 %v2898, %v2897
      %v2908 = vpack.c.b16 %v2900, %v2899
      %v2909 = vpack.c.b16 %v2902, %v2901
      %v2910 = vpack.c.b16 %v2904, %v2903
      %v2911 = vpack.c.b16 %v2905, %v2905
      %v2912 = vrot.slane %v2906, 2
      %v2913 = vrot.slane %v2907, 2
      %v2914 = vsel %vm2754, %v2912, %v2913
      %v2915 = vrot.slane %v2908, 2
      %v2916 = vsel %vm2754, %v2913, %v2915
      %v2917 = vrot.slane %v2909, 2
      %v2918 = vsel %vm2754, %v2915, %v2917
      %v2919 = vrot.slane %v2910, 2
      %v2920 = vsel %vm2754, %v2917, %v2919
      %v2921 = vrot.slane %v2911, 2
      %v2922 = vsel %vm2754, %v2919, %v2921
      %v2925 = vunpack.c.l.b16 %v2882
      %v2926 = vunpack.c.l.b16 %v2883
      %v2927 = vpack.c.b16 %v2926, %v2925
      %v2930 = vsel %vm2126, %v2914, 0
      %v2933 = vsel %vm2126, %v2916, 0
      %v2936 = vsel %vm2126, %v2918, 0
      %v2939 = vsel %vm2126, %v2920, 0
      %v2942 = vsel %vm2126, %v2922, 0
      %2944 = vmatprep.subr.bf16.mxu0 0
      %2945 = vmatpush1.bf16.msra.mxu0 %v2927
      %2946 = vmatprep.subr.bf16.mxu0 0
      %2947 = vmatpush1.bf16.msra.mxu0 0
      %2948 = vmatprep.subr.bf16.mxu0 0
      %2949 = vmatpush1.bf16.msra.mxu0 0
      %2950 = vmatprep.subr.bf16.mxu0 0
      %2951 = vmatpush1.bf16.msra.mxu0 0
      %2952 = vmatprep.subr.bf16.mxu0 0
      %2953 = vmatpush1.bf16.msra.mxu0 0
      %2954 = vmatprep.subr.bf16.mxu0 0
      %2955 = vmatpush1.bf16.msra.mxu0 0
      %2956 = vmatprep.subr.bf16.mxu0 0
      %2957 = vmatpush1.bf16.msra.mxu0 0
      %2958 = vmatprep.subr.bf16.mxu0 0
      %2959 = vmatpush1.bf16.msra.mxu0 0
      %2960 = vmatprep.subr.bf16.mxu0 0
      %2961 = vmatpush1.bf16.msra.mxu0 0
      %2962 = vmatprep.subr.bf16.mxu0 0
      %2963 = vmatpush1.bf16.msra.mxu0 0
      %2964 = vmatprep.subr.bf16.mxu0 0
      %2965 = vmatpush1.bf16.msra.mxu0 0
      %2966 = vmatprep.subr.bf16.mxu0 0
      %2967 = vmatpush1.bf16.msra.mxu0 0
      %2968 = vmatprep.subr.bf16.mxu0 0
      %2969 = vmatpush1.bf16.msra.mxu0 0
      %2970 = vmatprep.subr.bf16.mxu0 0
      %2971 = vmatpush1.bf16.msra.mxu0 0
      %2972 = vmatprep.subr.bf16.mxu0 0
      %2973 = vmatpush1.bf16.msra.mxu0 0
      %2974 = vmatprep.subr.bf16.mxu0 0
      %2975 = vmatpush1.bf16.msra.mxu0 0
      %2976 = vmatprep.mubr.bf16.mxu0 0
      %2977 = vmatmul.mubr.bf16.gmra.mrb[0].mxu0 %v2930
      %v2978 = vpop.f32.mrb[0].mxu0
      %v2979 = vadd.f32 0.0, %v2978
      %v2980 = vpop.f32.mrb[0].mxu0
      %v2981 = vpop.f32.mrb[0].mxu0
      %v2982 = vadd.f32 0.0, %v2981
      %v2983 = vpop.f32.mrb[0].mxu0
      %2984 = vmatprep.mubr.bf16.mxu0 0
      %2985 = vmatmul.mubr.bf16.gmra.mrb[0].mxu0 %v2933
      %v2986 = vpop.f32.mrb[0].mxu0
      %v2987 = vadd.f32 0.0, %v2986
      %v2988 = vpop.f32.mrb[0].mxu0
      %v2989 = vpop.f32.mrb[0].mxu0
      %v2990 = vadd.f32 0.0, %v2989
      %v2991 = vpop.f32.mrb[0].mxu0
      %2992 = vmatprep.mubr.bf16.mxu0 0
      %2993 = vmatmul.mubr.bf16.gmra.mrb[0].mxu0 %v2936
      %v2994 = vpop.f32.mrb[0].mxu0
      %v2995 = vadd.f32 0.0, %v2994
      %v2996 = vpop.f32.mrb[0].mxu0
      %v2997 = vpop.f32.mrb[0].mxu0
      %v2998 = vadd.f32 0.0, %v2997
      %v2999 = vpop.f32.mrb[0].mxu0
      %3000 = vmatprep.mubr.bf16.mxu0 0
      %3001 = vmatmul.mubr.bf16.gmra.mrb[0].mxu0 %v2939
      %v3002 = vpop.f32.mrb[0].mxu0
      %v3003 = vadd.f32 0.0, %v3002
      %v3004 = vpop.f32.mrb[0].mxu0
      %v3005 = vpop.f32.mrb[0].mxu0
      %v3006 = vadd.f32 0.0, %v3005
      %v3007 = vpop.f32.mrb[0].mxu0
      %3008 = vmatprep.mubr.bf16.mxu0 0
      %3009 = vmatmul.mubr.bf16.gmra.mrb[0].mxu0 %v2942
      %v3010 = vpop.f32.mrb[0].mxu0
      %v3011 = vadd.f32 0.0, %v3010
      %v3012 = vpop.f32.mrb[0].mxu0
      %v3013 = vpop.f32.mrb[0].mxu0
      %v3014 = vadd.f32 0.0, %v3013
      %v3015 = vpop.f32.mrb[0].mxu0
      %3016 = vdwg.mxu0
      %v3017 = vadd.f32 %v2860, %v2979
      %v3018 = vadd.f32 %v2861, %v2982
      %v3019 = vadd.f32 %v2862, %v2987
      %v3020 = vadd.f32 %v2863, %v2990
      %v3021 = vadd.f32 %v2864, %v2995
      %v3022 = vadd.f32 %v2865, %v2998
      %v3023 = vadd.f32 %v2866, %v3003
      %v3024 = vadd.f32 %v2867, %v3006
      %v3025 = vadd.f32 %v2868, %v3011
      %v3026 = vadd.f32 %v2869, %v3014
      %v3027 = vld [vmem:[%s374 + $0x30] sm:$0x7]
      %s3028 = scalar_lea.vmem %s4, 56
      %v3029 = vld [vmem:[%s3028] sm:$0xf]
      %v3030 = vld [vmem:[%s3028 + $0x4] sm:$0xf]
      %v3032 = vunpack.c.l.b16 %v3027
      %v3033 = vpack.c.b16 %v3032, %v3032
      %vm3034 = vsmask.f32 5376
      %v3036 = vshrl.u32 %v2906, 16
      %v3038 = vrot.slane %v3036, 2
      %v3039 = vshll.u32 %v2906, 16
      %v3041 = vrot.slane %v3039, 3
      %v3042 = vor.u32 %v3038, %v3041
      %v3044 = vshrl.u32 %v2907, 16
      %v3046 = vrot.slane %v3044, 2
      %v3047 = vshll.u32 %v2907, 16
      %v3049 = vrot.slane %v3047, 3
      %v3050 = vor.u32 %v3046, %v3049
      %v3051 = vsel %vm3034, %v3042, %v3050
      %v3053 = vshrl.u32 %v2908, 16
      %v3055 = vrot.slane %v3053, 2
      %v3056 = vshll.u32 %v2908, 16
      %v3058 = vrot.slane %v3056, 3
      %v3059 = vor.u32 %v3055, %v3058
      %v3060 = vsel %vm3034, %v3050, %v3059
      %v3062 = vshrl.u32 %v2909, 16
      %v3064 = vrot.slane %v3062, 2
      %v3065 = vshll.u32 %v2909, 16
      %v3067 = vrot.slane %v3065, 3
      %v3068 = vor.u32 %v3064, %v3067
      %v3069 = vsel %vm3034, %v3059, %v3068
      %v3071 = vshrl.u32 %v2910, 16
      %v3073 = vrot.slane %v3071, 2
      %v3074 = vshll.u32 %v2910, 16
      %v3076 = vrot.slane %v3074, 3
      %v3077 = vor.u32 %v3073, %v3076
      %v3078 = vsel %vm3034, %v3068, %v3077
      %v3080 = vshrl.u32 %v3033, 16
      %v3082 = vrot.slane %v3080, 2
      %v3083 = vshll.u32 %v3033, 16
      %v3085 = vrot.slane %v3083, 3
      %v3086 = vor.u32 %v3082, %v3085
      %v3087 = vsel %vm3034, %v3077, %v3086
      %v3090 = vunpack.c.l.b16 %v3029
      %v3091 = vunpack.c.l.b16 %v3030
      %v3092 = vpack.c.b16 %v3091, %v3090
      %v3095 = vsel %vm2126, %v3051, 0
      %v3098 = vsel %vm2126, %v3060, 0
      %v3101 = vsel %vm2126, %v3069, 0
      %v3104 = vsel %vm2126, %v3078, 0
      %v3107 = vsel %vm2126, %v3087, 0
      %3109 = vmatprep.subr.bf16.mxu0 0
      %3110 = vmatpush1.bf16.msra.mxu0 %v3092
      %3111 = vmatprep.subr.bf16.mxu0 0
      %3112 = vmatpush1.bf16.msra.mxu0 0
      %3113 = vmatprep.subr.bf16.mxu0 0
      %3114 = vmatpush1.bf16.msra.mxu0 0
      %3115 = vmatprep.subr.bf16.mxu0 0
      %3116 = vmatpush1.bf16.msra.mxu0 0
      %3117 = vmatprep.subr.bf16.mxu0 0
      %3118 = vmatpush1.bf16.msra.mxu0 0
      %3119 = vmatprep.subr.bf16.mxu0 0
      %3120 = vmatpush1.bf16.msra.mxu0 0
      %3121 = vmatprep.subr.bf16.mxu0 0
      %3122 = vmatpush1.bf16.msra.mxu0 0
      %3123 = vmatprep.subr.bf16.mxu0 0
      %3124 = vmatpush1.bf16.msra.mxu0 0
      %3125 = vmatprep.subr.bf16.mxu0 0
      %3126 = vmatpush1.bf16.msra.mxu0 0
      %3127 = vmatprep.subr.bf16.mxu0 0
      %3128 = vmatpush1.bf16.msra.mxu0 0
      %3129 = vmatprep.subr.bf16.mxu0 0
      %3130 = vmatpush1.bf16.msra.mxu0 0
      %3131 = vmatprep.subr.bf16.mxu0 0
      %3132 = vmatpush1.bf16.msra.mxu0 0
      %3133 = vmatprep.subr.bf16.mxu0 0
      %3134 = vmatpush1.bf16.msra.mxu0 0
      %3135 = vmatprep.subr.bf16.mxu0 0
      %3136 = vmatpush1.bf16.msra.mxu0 0
      %3137 = vmatprep.subr.bf16.mxu0 0
      %3138 = vmatpush1.bf16.msra.mxu0 0
      %3139 = vmatprep.subr.bf16.mxu0 0
      %3140 = vmatpush1.bf16.msra.mxu0 0
      %3141 = vmatprep.mubr.bf16.mxu0 0
      %3142 = vmatmul.mubr.bf16.gmra.mrb[0].mxu0 %v3095
      %v3143 = vpop.f32.mrb[0].mxu0
      %v3144 = vadd.f32 0.0, %v3143
      %v3145 = vpop.f32.mrb[0].mxu0
      %v3146 = vpop.f32.mrb[0].mxu0
      %v3147 = vadd.f32 0.0, %v3146
      %v3148 = vpop.f32.mrb[0].mxu0
      %3149 = vmatprep.mubr.bf16.mxu0 0
      %3150 = vmatmul.mubr.bf16.gmra.mrb[0].mxu0 %v3098
      %v3151 = vpop.f32.mrb[0].mxu0
      %v3152 = vadd.f32 0.0, %v3151
      %v3153 = vpop.f32.mrb[0].mxu0
      %v3154 = vpop.f32.mrb[0].mxu0
      %v3155 = vadd.f32 0.0, %v3154
      %v3156 = vpop.f32.mrb[0].mxu0
      %3157 = vmatprep.mubr.bf16.mxu0 0
      %3158 = vmatmul.mubr.bf16.gmra.mrb[0].mxu0 %v3101
      %v3159 = vpop.f32.mrb[0].mxu0
      %v3160 = vadd.f32 0.0, %v3159
      %v3161 = vpop.f32.mrb[0].mxu0
      %v3162 = vpop.f32.mrb[0].mxu0
      %v3163 = vadd.f32 0.0, %v3162
      %v3164 = vpop.f32.mrb[0].mxu0
      %3165 = vmatprep.mubr.bf16.mxu0 0
      %3166 = vmatmul.mubr.bf16.gmra.mrb[0].mxu0 %v3104
      %v3167 = vpop.f32.mrb[0].mxu0
      %v3168 = vadd.f32 0.0, %v3167
      %v3169 = vpop.f32.mrb[0].mxu0
      %v3170 = vpop.f32.mrb[0].mxu0
      %v3171 = vadd.f32 0.0, %v3170
      %v3172 = vpop.f32.mrb[0].mxu0
      %3173 = vmatprep.mubr.bf16.mxu0 0
      %3174 = vmatmul.mubr.bf16.gmra.mrb[0].mxu0 %v3107
      %v3175 = vpop.f32.mrb[0].mxu0
      %v3176 = vadd.f32 0.0, %v3175
      %v3177 = vpop.f32.mrb[0].mxu0
      %v3178 = vpop.f32.mrb[0].mxu0
      %v3179 = vadd.f32 0.0, %v3178
      %v3180 = vpop.f32.mrb[0].mxu0
      %3181 = vdwg.mxu0
      %v3182 = vadd.f32 %v3017, %v3144
      %v3183 = vadd.f32 %v3018, %v3147
      %v3184 = vadd.f32 %v3019, %v3152
      %v3185 = vadd.f32 %v3020, %v3155
      %v3186 = vadd.f32 %v3021, %v3160
      %v3187 = vadd.f32 %v3022, %v3163
      %v3188 = vadd.f32 %v3023, %v3168
      %v3189 = vadd.f32 %v3024, %v3171
      %v3190 = vadd.f32 %v3025, %v3176
      %v3191 = vadd.f32 %v3026, %v3179
      %v3192 = vld [vmem:[%s374 + $0x8] sm:$0x8]
      %s3193 = scalar_lea.vmem %s4, 64
      %v3194 = vld [vmem:[%s3193] sm:$0xf]
      %v3195 = vld [vmem:[%s3193 + $0x4] sm:$0xf]
      %v3197 = vunpack.c.l.b16 %v3192
      %v3198 = vpack.c.b16 %v2896, %v3197
      %vm3199 = vcmask 1044480
      %v3200 = vrot.slane %v3198, 3
      %v3201 = vrot.slane %v2907, 3
      %v3202 = vsel %vm3199, %v3200, %v3201
      %v3203 = vrot.slane %v2908, 3
      %v3204 = vsel %vm3199, %v3201, %v3203
      %v3205 = vrot.slane %v2909, 3
      %v3206 = vsel %vm3199, %v3203, %v3205
      %v3207 = vrot.slane %v2910, 3
      %v3208 = vsel %vm3199, %v3205, %v3207
      %v3209 = vrot.slane %v3033, 3
      %v3210 = vsel %vm3199, %v3207, %v3209
      %v3213 = vunpack.c.l.b16 %v3194
      %v3214 = vunpack.c.l.b16 %v3195
      %v3215 = vpack.c.b16 %v3214, %v3213
      %v3218 = vsel %vm2126, %v3202, 0
      %v3221 = vsel %vm2126, %v3204, 0
      %v3224 = vsel %vm2126, %v3206, 0
      %v3227 = vsel %vm2126, %v3208, 0
      %v3230 = vsel %vm2126, %v3210, 0
      %3232 = vmatprep.subr.bf16.mxu0 0
      %3233 = vmatpush1.bf16.msra.mxu0 %v3215
      %3234 = vmatprep.subr.bf16.mxu0 0
      %3235 = vmatpush1.bf16.msra.mxu0 0
      %3236 = vmatprep.subr.bf16.mxu0 0
      %3237 = vmatpush1.bf16.msra.mxu0 0
      %3238 = vmatprep.subr.bf16.mxu0 0
      %3239 = vmatpush1.bf16.msra.mxu0 0
      %3240 = vmatprep.subr.bf16.mxu0 0
      %3241 = vmatpush1.bf16.msra.mxu0 0
      %3242 = vmatprep.subr.bf16.mxu0 0
      %3243 = vmatpush1.bf16.msra.mxu0 0
      %3244 = vmatprep.subr.bf16.mxu0 0
      %3245 = vmatpush1.bf16.msra.mxu0 0
      %3246 = vmatprep.subr.bf16.mxu0 0
      %3247 = vmatpush1.bf16.msra.mxu0 0
      %3248 = vmatprep.subr.bf16.mxu0 0
      %3249 = vmatpush1.bf16.msra.mxu0 0
      %3250 = vmatprep.subr.bf16.mxu0 0
      %3251 = vmatpush1.bf16.msra.mxu0 0
      %3252 = vmatprep.subr.bf16.mxu0 0
      %3253 = vmatpush1.bf16.msra.mxu0 0
      %3254 = vmatprep.subr.bf16.mxu0 0
      %3255 = vmatpush1.bf16.msra.mxu0 0
      %3256 = vmatprep.subr.bf16.mxu0 0
      %3257 = vmatpush1.bf16.msra.mxu0 0
      %3258 = vmatprep.subr.bf16.mxu0 0
      %3259 = vmatpush1.bf16.msra.mxu0 0
      %3260 = vmatprep.subr.bf16.mxu0 0
      %3261 = vmatpush1.bf16.msra.mxu0 0
      %3262 = vmatprep.subr.bf16.mxu0 0
      %3263 = vmatpush1.bf16.msra.mxu0 0
      %3264 = vmatprep.mubr.bf16.mxu0 0
      %3265 = vmatmul.mubr.bf16.gmra.mrb[0].mxu0 %v3218
      %v3266 = vpop.f32.mrb[0].mxu0
      %v3267 = vadd.f32 0.0, %v3266
      %v3268 = vpop.f32.mrb[0].mxu0
      %v3269 = vpop.f32.mrb[0].mxu0
      %v3270 = vadd.f32 0.0, %v3269
      %v3271 = vpop.f32.mrb[0].mxu0
      %3272 = vmatprep.mubr.bf16.mxu0 0
      %3273 = vmatmul.mubr.bf16.gmra.mrb[0].mxu0 %v3221
      %v3274 = vpop.f32.mrb[0].mxu0
      %v3275 = vadd.f32 0.0, %v3274
      %v3276 = vpop.f32.mrb[0].mxu0
      %v3277 = vpop.f32.mrb[0].mxu0
      %v3278 = vadd.f32 0.0, %v3277
      %v3279 = vpop.f32.mrb[0].mxu0
      %3280 = vmatprep.mubr.bf16.mxu0 0
      %3281 = vmatmul.mubr.bf16.gmra.mrb[0].mxu0 %v3224
      %v3282 = vpop.f32.mrb[0].mxu0
      %v3283 = vadd.f32 0.0, %v3282
      %v3284 = vpop.f32.mrb[0].mxu0
      %v3285 = vpop.f32.mrb[0].mxu0
      %v3286 = vadd.f32 0.0, %v3285
      %v3287 = vpop.f32.mrb[0].mxu0
      %3288 = vmatprep.mubr.bf16.mxu0 0
      %3289 = vmatmul.mubr.bf16.gmra.mrb[0].mxu0 %v3227
      %v3290 = vpop.f32.mrb[0].mxu0
      %v3291 = vadd.f32 0.0, %v3290
      %v3292 = vpop.f32.mrb[0].mxu0
      %v3293 = vpop.f32.mrb[0].mxu0
      %v3294 = vadd.f32 0.0, %v3293
      %v3295 = vpop.f32.mrb[0].mxu0
      %3296 = vmatprep.mubr.bf16.mxu0 0
      %3297 = vmatmul.mubr.bf16.gmra.mrb[0].mxu0 %v3230
      %v3298 = vpop.f32.mrb[0].mxu0
      %v3299 = vadd.f32 0.0, %v3298
      %v3300 = vpop.f32.mrb[0].mxu0
      %v3301 = vpop.f32.mrb[0].mxu0
      %v3302 = vadd.f32 0.0, %v3301
      %v3303 = vpop.f32.mrb[0].mxu0
      %3304 = vdwg.mxu0
      %v3305 = vadd.f32 %v3182, %v3267
      %v3306 = vadd.f32 %v3183, %v3270
      %v3307 = vadd.f32 %v3184, %v3275
      %v3308 = vadd.f32 %v3185, %v3278
      %v3309 = vadd.f32 %v3186, %v3283
      %v3310 = vadd.f32 %v3187, %v3286
      %v3311 = vadd.f32 %v3188, %v3291
      %v3312 = vadd.f32 %v3189, %v3294
      %v3313 = vadd.f32 %v3190, %v3299
      %v3314 = vadd.f32 %v3191, %v3302
      %v3315 = vld [vmem:[%s5] sm:$0x1]
      %v3317 = vlaneseq
      %v3318 = vshrl.u32 %v3317, 7
      %v3319 = vsub.s32 0, %v3318
      %v3320 = vrot.slane %v3315, %v3319
      %v3322 = vadd.f32 %v3305, %v3320
      %v3323 = vadd.f32 %v3306, %v3320
      %v3324 = vadd.f32 %v3307, %v3320
      %v3325 = vadd.f32 %v3308, %v3320
      %v3326 = vadd.f32 %v3309, %v3320
      %v3327 = vadd.f32 %v3310, %v3320
      %v3328 = vadd.f32 %v3311, %v3320
      %v3329 = vadd.f32 %v3312, %v3320
      %v3330 = vadd.f32 %v3313, %v3320
      %v3331 = vadd.f32 %v3314, %v3320
      %v3332 = vmax.f32 %v3322, 0.0
      %v3333 = vmax.f32 %v3323, 0.0
      %v3334 = vmax.f32 %v3324, 0.0
      %v3335 = vmax.f32 %v3325, 0.0
      %v3336 = vmax.f32 %v3326, 0.0
      %v3337 = vmax.f32 %v3327, 0.0
      %v3338 = vmax.f32 %v3328, 0.0
      %v3339 = vmax.f32 %v3329, 0.0
      %v3340 = vmax.f32 %v3330, 0.0
      %v3341 = vmax.f32 %v3331, 0.0
      %v3342 = vmul.f32 %v3332, %v1798
      %v3343 = vmul.f32 %v3333, %v1803
      %v3344 = vmul.f32 %v3334, %v1808
      %v3345 = vmul.f32 %v3335, %v1813
      %v3346 = vmul.f32 %v3336, %v1818
      %v3347 = vmul.f32 %v3337, %v1823
      %v3348 = vmul.f32 %v3338, %v1828
      %v3349 = vmul.f32 %v3339, %v1833
      %v3350 = vmul.f32 %v3340, %v1838
      %v3351 = vmul.f32 %v3341, %v1843
      %3352 = vst [vmem:[#allocation3] sm:$0xf] 0
      %3353 = vst [vmem:[#allocation3 + $0x4] sm:$0xf] 0
      %3354 = vst [vmem:[#allocation3 + $0x8] sm:$0xf] 0
      %3355 = vst [vmem:[#allocation3 + $0xc] sm:$0xf] 0
      %3356 = vst [vmem:[#allocation3 + $0x10] sm:$0xf] 0
      %3357 = vst [vmem:[#allocation3 + $0x14] sm:$0xf] 0
      %3358 = vst [vmem:[#allocation3 + $0x18] sm:$0xf] 0
      %3359 = vst [vmem:[#allocation3 + $0x1c] sm:$0xf] 0
      %3360 = vst [vmem:[#allocation3 + $0x20] sm:$0xf] 0
      %3361 = vst [vmem:[#allocation3 + $0x24] sm:$0xf] 0
      %3362 = vst [vmem:[#allocation3 + $0x28] sm:$0xf] 0
      %3363 = vst [vmem:[#allocation3 + $0x2c] sm:$0xf] 0
      %3364 = vst [vmem:[#allocation3 + $0x30] sm:$0xf] 0
      %3365 = vst [vmem:[#allocation3 + $0x34] sm:$0x7] 0
      %v3366 = vpack.c.bf16 %v3343, %v3342
      %v3367 = vpack.c.bf16 %v3345, %v3344
      %v3368 = vpack.c.bf16 %v3347, %v3346
      %v3369 = vpack.c.bf16 %v3349, %v3348
      %v3370 = vpack.c.bf16 %v3351, %v3350
      %v3376 = vunpack.c.l.b16 %v3366
      %v3377 = vunpack.c.h.b16 %v3366
      %v3378 = vunpack.c.l.b16 %v3367
      %v3379 = vunpack.c.h.b16 %v3367
      %v3380 = vunpack.c.l.b16 %v3368
      %v3381 = vunpack.c.h.b16 %v3368
      %v3382 = vunpack.c.l.b16 %v3369
      %v3383 = vunpack.c.h.b16 %v3369
      %v3384 = vunpack.c.l.b16 %v3370
      %v3385 = vunpack.c.h.b16 %v3370
      %v3386 = vpack.c.b16 %v3376, %v3376
      %v3387 = vpack.c.b16 %v3377, %v3377
      %v3388 = vpack.c.b16 %v3378, %v3378
      %v3389 = vpack.c.b16 %v3379, %v3379
      %v3390 = vpack.c.b16 %v3380, %v3380
      %v3391 = vpack.c.b16 %v3381, %v3381
      %v3392 = vpack.c.b16 %v3382, %v3382
      %v3393 = vpack.c.b16 %v3383, %v3383
      %v3394 = vpack.c.b16 %v3384, %v3384
      %v3395 = vpack.c.b16 %v3385, %v3385
      %v3397 = vshrl.u32 %v3386, 16
      %v3399 = vrot.slane %v3397, 6
      %v3400 = vshll.u32 %v3386, 16
      %v3402 = vrot.slane %v3400, 7
      %v3403 = vor.u32 %v3399, %v3402
      %v3404 = vrot.slane %v3403, 4
      %v3406 = vshrl.u32 %v3387, 16
      %v3408 = vrot.slane %v3406, 6
      %v3409 = vshll.u32 %v3387, 16
      %v3411 = vrot.slane %v3409, 7
      %v3412 = vor.u32 %v3408, %v3411
      %v3413 = vsel %vm1901, %v3404, %v3412
      %v3414 = vrot.slane %v3412, 4
      %v3416 = vshrl.u32 %v3388, 16
      %v3418 = vrot.slane %v3416, 6
      %v3419 = vshll.u32 %v3388, 16
      %v3421 = vrot.slane %v3419, 7
      %v3422 = vor.u32 %v3418, %v3421
      %v3423 = vsel %vm1901, %v3414, %v3422
      %v3424 = vrot.slane %v3422, 4
      %v3426 = vshrl.u32 %v3389, 16
      %v3428 = vrot.slane %v3426, 6
      %v3429 = vshll.u32 %v3389, 16
      %v3431 = vrot.slane %v3429, 7
      %v3432 = vor.u32 %v3428, %v3431
      %v3433 = vsel %vm1901, %v3424, %v3432
      %v3434 = vrot.slane %v3432, 4
      %v3436 = vshrl.u32 %v3390, 16
      %v3438 = vrot.slane %v3436, 6
      %v3439 = vshll.u32 %v3390, 16
      %v3441 = vrot.slane %v3439, 7
      %v3442 = vor.u32 %v3438, %v3441
      %v3443 = vsel %vm1901, %v3434, %v3442
      %v3444 = vrot.slane %v3442, 4
      %v3446 = vshrl.u32 %v3391, 16
      %v3448 = vrot.slane %v3446, 6
      %v3449 = vshll.u32 %v3391, 16
      %v3451 = vrot.slane %v3449, 7
      %v3452 = vor.u32 %v3448, %v3451
      %v3453 = vsel %vm1901, %v3444, %v3452
      %v3454 = vrot.slane %v3452, 4
      %v3456 = vshrl.u32 %v3392, 16
      %v3458 = vrot.slane %v3456, 6
      %v3459 = vshll.u32 %v3392, 16
      %v3461 = vrot.slane %v3459, 7
      %v3462 = vor.u32 %v3458, %v3461
      %v3463 = vsel %vm1901, %v3454, %v3462
      %v3464 = vrot.slane %v3462, 4
      %v3466 = vshrl.u32 %v3393, 16
      %v3468 = vrot.slane %v3466, 6
      %v3469 = vshll.u32 %v3393, 16
      %v3471 = vrot.slane %v3469, 7
      %v3472 = vor.u32 %v3468, %v3471
      %v3473 = vsel %vm1901, %v3464, %v3472
      %v3474 = vrot.slane %v3472, 4
      %v3476 = vshrl.u32 %v3394, 16
      %v3478 = vrot.slane %v3476, 6
      %v3479 = vshll.u32 %v3394, 16
      %v3481 = vrot.slane %v3479, 7
      %v3482 = vor.u32 %v3478, %v3481
      %v3483 = vsel %vm1901, %v3474, %v3482
      %v3484 = vrot.slane %v3482, 4
      %v3486 = vshrl.u32 %v3395, 16
      %v3488 = vrot.slane %v3486, 6
      %v3489 = vshll.u32 %v3395, 16
      %v3491 = vrot.slane %v3489, 7
      %v3492 = vor.u32 %v3488, %v3491
      %v3493 = vsel %vm1901, %v3484, %v3492
      %v3494 = vrot.slane %v3492, 4
      %v3506 = vld [vmem:[#allocation3 + $0x4] sm:$0xe]
      %v3507 = vsel %vm2014, %v3403, %v3506
      %3508 = vst [vmem:[#allocation3 + $0x4] sm:$0xe] %v3507
      %3509 = vst [vmem:[#allocation3 + $0x8] sm:$0xf] %v3413
      %3510 = vst [vmem:[#allocation3 + $0xc] sm:$0xf] %v3423
      %3511 = vst [vmem:[#allocation3 + $0x10] sm:$0xf] %v3433
      %3512 = vst [vmem:[#allocation3 + $0x14] sm:$0xf] %v3443
      %3513 = vst [vmem:[#allocation3 + $0x18] sm:$0xf] %v3453
      %3514 = vst [vmem:[#allocation3 + $0x1c] sm:$0xf] %v3463
      %3515 = vst [vmem:[#allocation3 + $0x20] sm:$0xf] %v3473
      %3516 = vst [vmem:[#allocation3 + $0x24] sm:$0xf] %v3483
      %3517 = vst [vmem:[#allocation3 + $0x28] sm:$0xf] %v3493
      %v3518 = vld [vmem:[#allocation3 + $0x2c] sm:$0x3]
      %v3519 = vsel %vm2028, %v3494, %v3518
      %3520 = vst [vmem:[#allocation3 + $0x2c] sm:$0x3] %v3519
      %v3521 = vld [vmem:[#allocation2] sm:$0xf]
      %v3522 = vld [vmem:[#allocation2 + $0x4] sm:$0xf]
      %v3523 = vld [vmem:[#allocation2 + $0x8] sm:$0xf]
      %v3524 = vld [vmem:[#allocation2 + $0xc] sm:$0xf]
      %v3525 = vld [vmem:[#allocation2 + $0x10] sm:$0xf]
      %v3526 = vld [vmem:[#allocation2 + $0x14] sm:$0xf]
      %v3527 = vld [vmem:[#allocation2 + $0x18] sm:$0xf]
      %v3528 = vld [vmem:[#allocation2 + $0x1c] sm:$0xf]
      %v3529 = vld [vmem:[#allocation2 + $0x20] sm:$0xf]
      %v3530 = vld [vmem:[#allocation2 + $0x24] sm:$0xf]
      %v3531 = vld [vmem:[#allocation3] sm:$0xf]
      %v3532 = vld [vmem:[#allocation3 + $0x4] sm:$0xf]
      %v3533 = vld [vmem:[#allocation3 + $0x8] sm:$0xf]
      %v3534 = vld [vmem:[#allocation3 + $0xc] sm:$0xf]
      %v3535 = vld [vmem:[#allocation3 + $0x10] sm:$0xf]
      %v3536 = vld [vmem:[#allocation3 + $0x14] sm:$0xf]
      %v3537 = vld [vmem:[#allocation3 + $0x18] sm:$0xf]
      %v3538 = vld [vmem:[#allocation3 + $0x1c] sm:$0xf]
      %v3539 = vld [vmem:[#allocation3 + $0x20] sm:$0xf]
      %v3540 = vld [vmem:[#allocation3 + $0x24] sm:$0xf]
      %v3541 = vld [vmem:[%s6] sm:$0xf]
      %v3542 = vld [vmem:[%s6 + $0x4] sm:$0xf]
      %v3543 = vld [vmem:[%s6 + $0x8] sm:$0xf]
      %v3544 = vld [vmem:[%s6 + $0xc] sm:$0xf]
      %v3545 = vld [vmem:[%s6 + $0x10] sm:$0xf]
      %v3546 = vld [vmem:[%s6 + $0x14] sm:$0xf]
      %v3547 = vld [vmem:[%s6 + $0x18] sm:$0xf]
      %v3548 = vld [vmem:[%s6 + $0x1c] sm:$0xf]
      %v3549 = vld [vmem:[%s6 + $0x20] sm:$0xf]
      %v3550 = vld [vmem:[%s6 + $0x24] sm:$0xf]
      %v3551 = vld [vmem:[%s6 + $0x28] sm:$0xf]
      %v3552 = vld [vmem:[%s6 + $0x2c] sm:$0xf]
      %v3553 = vld [vmem:[%s6 + $0x30] sm:$0xf]
      %v3554 = vld [vmem:[%s6 + $0x34] sm:$0xf]
      %v3555 = vld [vmem:[%s6 + $0x38] sm:$0xf]
      %v3556 = vld [vmem:[%s6 + $0x3c] sm:$0xf]
      %v3557 = vld [vmem:[%s7] sm:$0xf]
      %v3558 = vld [vmem:[%s7 + $0x4] sm:$0xf]
      %v3559 = vld [vmem:[%s7 + $0x8] sm:$0xf]
      %v3560 = vld [vmem:[%s7 + $0xc] sm:$0xf]
      %v3561 = vld [vmem:[%s7 + $0x10] sm:$0xf]
      %v3562 = vld [vmem:[%s7 + $0x14] sm:$0xf]
      %v3563 = vld [vmem:[%s7 + $0x18] sm:$0xf]
      %v3564 = vld [vmem:[%s7 + $0x1c] sm:$0xf]
      %v3565 = vld [vmem:[%s7 + $0x20] sm:$0xf]
      %v3566 = vld [vmem:[%s7 + $0x24] sm:$0xf]
      %v3567 = vld [vmem:[%s7 + $0x28] sm:$0xf]
      %v3568 = vld [vmem:[%s7 + $0x2c] sm:$0xf]
      %v3569 = vld [vmem:[%s7 + $0x30] sm:$0xf]
      %v3570 = vld [vmem:[%s7 + $0x34] sm:$0xf]
      %v3571 = vld [vmem:[%s7 + $0x38] sm:$0xf]
      %v3572 = vld [vmem:[%s7 + $0x3c] sm:$0xf]
      %v3583 = vunpack.c.l.b16 %v3531
      %v3584 = vunpack.c.l.b16 %v3532
      %v3585 = vunpack.c.l.b16 %v3533
      %v3586 = vunpack.c.l.b16 %v3534
      %v3587 = vunpack.c.l.b16 %v3535
      %v3588 = vunpack.c.l.b16 %v3536
      %v3589 = vunpack.c.l.b16 %v3537
      %v3590 = vunpack.c.l.b16 %v3538
      %v3591 = vunpack.c.l.b16 %v3539
      %v3592 = vunpack.c.l.b16 %v3540
      %v3593 = vpack.c.b16 %v3584, %v3583
      %v3594 = vpack.c.b16 %v3586, %v3585
      %v3595 = vpack.c.b16 %v3588, %v3587
      %v3596 = vpack.c.b16 %v3590, %v3589
      %v3597 = vpack.c.b16 %v3592, %v3591
      %v3619 = vunpack.c.l.b16 %v3557
      %v3620 = vunpack.c.l.b16 %v3558
      %v3621 = vunpack.c.l.b16 %v3559
      %v3622 = vunpack.c.l.b16 %v3560
      %v3623 = vunpack.c.l.b16 %v3561
      %v3624 = vunpack.c.l.b16 %v3562
      %v3625 = vunpack.c.l.b16 %v3563
      %v3626 = vunpack.c.l.b16 %v3564
      %v3627 = vunpack.c.l.b16 %v3565
      %v3628 = vunpack.c.l.b16 %v3566
      %v3629 = vunpack.c.l.b16 %v3567
      %v3630 = vunpack.c.l.b16 %v3568
      %v3631 = vunpack.c.l.b16 %v3569
      %v3632 = vunpack.c.l.b16 %v3570
      %v3633 = vunpack.c.l.b16 %v3571
      %v3634 = vunpack.c.l.b16 %v3572
      %v3635 = vpack.c.b16 %v3620, %v3619
      %v3636 = vpack.c.b16 %v3622, %v3621
      %v3637 = vpack.c.b16 %v3624, %v3623
      %v3638 = vpack.c.b16 %v3626, %v3625
      %v3639 = vpack.c.b16 %v3628, %v3627
      %v3640 = vpack.c.b16 %v3630, %v3629
      %v3641 = vpack.c.b16 %v3632, %v3631
      %v3642 = vpack.c.b16 %v3634, %v3633
      %3651 = vmatprep.subr.bf16.mxu0 0
      %3652 = vmatpush1.bf16.msra.mxu0 %v3635
      %3653 = vmatprep.subr.bf16.mxu0 0
      %3654 = vmatpush1.bf16.msra.mxu0 %v3636
      %3655 = vmatprep.subr.bf16.mxu0 0
      %3656 = vmatpush1.bf16.msra.mxu0 %v3637
      %3657 = vmatprep.subr.bf16.mxu0 0
      %3658 = vmatpush1.bf16.msra.mxu0 %v3638
      %3659 = vmatprep.subr.bf16.mxu0 0
      %3660 = vmatpush1.bf16.msra.mxu0 %v3639
      %3661 = vmatprep.subr.bf16.mxu0 0
      %3662 = vmatpush1.bf16.msra.mxu0 %v3640
      %3663 = vmatprep.subr.bf16.mxu0 0
      %3664 = vmatpush1.bf16.msra.mxu0 %v3641
      %3665 = vmatprep.subr.bf16.mxu0 0
      %3666 = vmatpush1.bf16.msra.mxu0 %v3642
      %3667 = vmatprep.subr.bf16.mxu0 0
      %3668 = vmatpush1.bf16.msra.mxu0 0
      %3669 = vmatprep.subr.bf16.mxu0 0
      %3670 = vmatpush1.bf16.msra.mxu0 0
      %3671 = vmatprep.subr.bf16.mxu0 0
      %3672 = vmatpush1.bf16.msra.mxu0 0
      %3673 = vmatprep.subr.bf16.mxu0 0
      %3674 = vmatpush1.bf16.msra.mxu0 0
      %3675 = vmatprep.subr.bf16.mxu0 0
      %3676 = vmatpush1.bf16.msra.mxu0 0
      %3677 = vmatprep.subr.bf16.mxu0 0
      %3678 = vmatpush1.bf16.msra.mxu0 0
      %3679 = vmatprep.subr.bf16.mxu0 0
      %3680 = vmatpush1.bf16.msra.mxu0 0
      %3681 = vmatprep.subr.bf16.mxu0 0
      %3682 = vmatpush1.bf16.msra.mxu0 0
      %3683 = vmatprep.mubr.bf16.mxu0 0
      %3684 = vmatmul.mubr.bf16.gmra.mrb[0].mxu0 %v3593
      %v3685 = vpop.f32.mrb[0].mxu0
      %v3686 = vadd.f32 0.0, %v3685
      %v3687 = vpop.f32.mrb[0].mxu0
      %v3688 = vpop.f32.mrb[0].mxu0
      %v3689 = vadd.f32 0.0, %v3688
      %v3690 = vpop.f32.mrb[0].mxu0
      %3691 = vmatprep.mubr.bf16.mxu0 0
      %3692 = vmatmul.mubr.bf16.gmra.mrb[0].mxu0 %v3594
      %v3693 = vpop.f32.mrb[0].mxu0
      %v3694 = vadd.f32 0.0, %v3693
      %v3695 = vpop.f32.mrb[0].mxu0
      %v3696 = vpop.f32.mrb[0].mxu0
      %v3697 = vadd.f32 0.0, %v3696
      %v3698 = vpop.f32.mrb[0].mxu0
      %3699 = vmatprep.mubr.bf16.mxu0 0
      %3700 = vmatmul.mubr.bf16.gmra.mrb[0].mxu0 %v3595
      %v3701 = vpop.f32.mrb[0].mxu0
      %v3702 = vadd.f32 0.0, %v3701
      %v3703 = vpop.f32.mrb[0].mxu0
      %v3704 = vpop.f32.mrb[0].mxu0
      %v3705 = vadd.f32 0.0, %v3704
      %v3706 = vpop.f32.mrb[0].mxu0
      %3707 = vmatprep.mubr.bf16.mxu0 0
      %3708 = vmatmul.mubr.bf16.gmra.mrb[0].mxu0 %v3596
      %v3709 = vpop.f32.mrb[0].mxu0
      %v3710 = vadd.f32 0.0, %v3709
      %v3711 = vpop.f32.mrb[0].mxu0
      %v3712 = vpop.f32.mrb[0].mxu0
      %v3713 = vadd.f32 0.0, %v3712
      %v3714 = vpop.f32.mrb[0].mxu0
      %3715 = vmatprep.mubr.bf16.mxu0 0
      %3716 = vmatmul.mubr.bf16.gmra.mrb[0].mxu0 %v3597
      %v3717 = vpop.f32.mrb[0].mxu0
      %v3718 = vadd.f32 0.0, %v3717
      %v3719 = vpop.f32.mrb[0].mxu0
      %v3720 = vpop.f32.mrb[0].mxu0
      %v3721 = vadd.f32 0.0, %v3720
      %v3722 = vpop.f32.mrb[0].mxu0
      %3723 = vdwg.mxu0
      %v3734 = vunpack.c.l.b16 %v3521
      %v3735 = vunpack.c.l.b16 %v3522
      %v3736 = vunpack.c.l.b16 %v3523
      %v3737 = vunpack.c.l.b16 %v3524
      %v3738 = vunpack.c.l.b16 %v3525
      %v3739 = vunpack.c.l.b16 %v3526
      %v3740 = vunpack.c.l.b16 %v3527
      %v3741 = vunpack.c.l.b16 %v3528
      %v3742 = vunpack.c.l.b16 %v3529
      %v3743 = vunpack.c.l.b16 %v3530
      %v3744 = vpack.c.b16 %v3735, %v3734
      %v3745 = vpack.c.b16 %v3737, %v3736
      %v3746 = vpack.c.b16 %v3739, %v3738
      %v3747 = vpack.c.b16 %v3741, %v3740
      %v3748 = vpack.c.b16 %v3743, %v3742
      %v3770 = vunpack.c.l.b16 %v3541
      %v3771 = vunpack.c.l.b16 %v3542
      %v3772 = vunpack.c.l.b16 %v3543
      %v3773 = vunpack.c.l.b16 %v3544
      %v3774 = vunpack.c.l.b16 %v3545
      %v3775 = vunpack.c.l.b16 %v3546
      %v3776 = vunpack.c.l.b16 %v3547
      %v3777 = vunpack.c.l.b16 %v3548
      %v3778 = vunpack.c.l.b16 %v3549
      %v3779 = vunpack.c.l.b16 %v3550
      %v3780 = vunpack.c.l.b16 %v3551
      %v3781 = vunpack.c.l.b16 %v3552
      %v3782 = vunpack.c.l.b16 %v3553
      %v3783 = vunpack.c.l.b16 %v3554
      %v3784 = vunpack.c.l.b16 %v3555
      %v3785 = vunpack.c.l.b16 %v3556
      %v3786 = vpack.c.b16 %v3771, %v3770
      %v3787 = vpack.c.b16 %v3773, %v3772
      %v3788 = vpack.c.b16 %v3775, %v3774
      %v3789 = vpack.c.b16 %v3777, %v3776
      %v3790 = vpack.c.b16 %v3779, %v3778
      %v3791 = vpack.c.b16 %v3781, %v3780
      %v3792 = vpack.c.b16 %v3783, %v3782
      %v3793 = vpack.c.b16 %v3785, %v3784
      %3802 = vmatprep.subr.bf16.mxu0 0
      %3803 = vmatpush1.bf16.msra.mxu0 %v3786
      %3804 = vmatprep.subr.bf16.mxu0 0
      %3805 = vmatpush1.bf16.msra.mxu0 %v3787
      %3806 = vmatprep.subr.bf16.mxu0 0
      %3807 = vmatpush1.bf16.msra.mxu0 %v3788
      %3808 = vmatprep.subr.bf16.mxu0 0
      %3809 = vmatpush1.bf16.msra.mxu0 %v3789
      %3810 = vmatprep.subr.bf16.mxu0 0
      %3811 = vmatpush1.bf16.msra.mxu0 %v3790
      %3812 = vmatprep.subr.bf16.mxu0 0
      %3813 = vmatpush1.bf16.msra.mxu0 %v3791
      %3814 = vmatprep.subr.bf16.mxu0 0
      %3815 = vmatpush1.bf16.msra.mxu0 %v3792
      %3816 = vmatprep.subr.bf16.mxu0 0
      %3817 = vmatpush1.bf16.msra.mxu0 %v3793
      %3818 = vmatprep.subr.bf16.mxu0 0
      %3819 = vmatpush1.bf16.msra.mxu0 0
      %3820 = vmatprep.subr.bf16.mxu0 0
      %3821 = vmatpush1.bf16.msra.mxu0 0
      %3822 = vmatprep.subr.bf16.mxu0 0
      %3823 = vmatpush1.bf16.msra.mxu0 0
      %3824 = vmatprep.subr.bf16.mxu0 0
      %3825 = vmatpush1.bf16.msra.mxu0 0
      %3826 = vmatprep.subr.bf16.mxu0 0
      %3827 = vmatpush1.bf16.msra.mxu0 0
      %3828 = vmatprep.subr.bf16.mxu0 0
      %3829 = vmatpush1.bf16.msra.mxu0 0
      %3830 = vmatprep.subr.bf16.mxu0 0
      %3831 = vmatpush1.bf16.msra.mxu0 0
      %3832 = vmatprep.subr.bf16.mxu0 0
      %3833 = vmatpush1.bf16.msra.mxu0 0
      %3834 = vmatprep.mubr.bf16.mxu0 0
      %3835 = vmatmul.mubr.bf16.gmra.mrb[0].mxu0 %v3744
      %v3836 = vpop.f32.mrb[0].mxu0
      %v3837 = vadd.f32 %v3686, %v3836
      %v3838 = vpop.f32.mrb[0].mxu0
      %v3839 = vpop.f32.mrb[0].mxu0
      %v3840 = vadd.f32 %v3689, %v3839
      %v3841 = vpop.f32.mrb[0].mxu0
      %3842 = vmatprep.mubr.bf16.mxu0 0
      %3843 = vmatmul.mubr.bf16.gmra.mrb[0].mxu0 %v3745
      %v3844 = vpop.f32.mrb[0].mxu0
      %v3845 = vadd.f32 %v3694, %v3844
      %v3846 = vpop.f32.mrb[0].mxu0
      %v3847 = vpop.f32.mrb[0].mxu0
      %v3848 = vadd.f32 %v3697, %v3847
      %v3849 = vpop.f32.mrb[0].mxu0
      %3850 = vmatprep.mubr.bf16.mxu0 0
      %3851 = vmatmul.mubr.bf16.gmra.mrb[0].mxu0 %v3746
      %v3852 = vpop.f32.mrb[0].mxu0
      %v3853 = vadd.f32 %v3702, %v3852
      %v3854 = vpop.f32.mrb[0].mxu0
      %v3855 = vpop.f32.mrb[0].mxu0
      %v3856 = vadd.f32 %v3705, %v3855
      %v3857 = vpop.f32.mrb[0].mxu0
      %3858 = vmatprep.mubr.bf16.mxu0 0
      %3859 = vmatmul.mubr.bf16.gmra.mrb[0].mxu0 %v3747
      %v3860 = vpop.f32.mrb[0].mxu0
      %v3861 = vadd.f32 %v3710, %v3860
      %v3862 = vpop.f32.mrb[0].mxu0
      %v3863 = vpop.f32.mrb[0].mxu0
      %v3864 = vadd.f32 %v3713, %v3863
      %v3865 = vpop.f32.mrb[0].mxu0
      %3866 = vmatprep.mubr.bf16.mxu0 0
      %3867 = vmatmul.mubr.bf16.gmra.mrb[0].mxu0 %v3748
      %v3868 = vpop.f32.mrb[0].mxu0
      %v3869 = vadd.f32 %v3718, %v3868
      %v3870 = vpop.f32.mrb[0].mxu0
      %v3871 = vpop.f32.mrb[0].mxu0
      %v3872 = vadd.f32 %v3721, %v3871
      %v3873 = vpop.f32.mrb[0].mxu0
      %3874 = vdwg.mxu0
      %v3875 = vld [vmem:[#allocation2] sm:$0xf]
      %v3876 = vld [vmem:[#allocation2 + $0x4] sm:$0xf]
      %v3877 = vld [vmem:[#allocation2 + $0x8] sm:$0xf]
      %v3878 = vld [vmem:[#allocation2 + $0xc] sm:$0xf]
      %v3879 = vld [vmem:[#allocation2 + $0x10] sm:$0xf]
      %v3880 = vld [vmem:[#allocation2 + $0x14] sm:$0xf]
      %v3881 = vld [vmem:[#allocation2 + $0x18] sm:$0xf]
      %v3882 = vld [vmem:[#allocation2 + $0x1c] sm:$0xf]
      %v3883 = vld [vmem:[#allocation2 + $0x20] sm:$0xf]
      %v3884 = vld [vmem:[#allocation2 + $0x24] sm:$0xf]
      %v3885 = vld [vmem:[#allocation2 + $0x28] sm:$0x1]
      %v3886 = vld [vmem:[#allocation3] sm:$0xf]
      %v3887 = vld [vmem:[#allocation3 + $0x4] sm:$0xf]
      %v3888 = vld [vmem:[#allocation3 + $0x8] sm:$0xf]
      %v3889 = vld [vmem:[#allocation3 + $0xc] sm:$0xf]
      %v3890 = vld [vmem:[#allocation3 + $0x10] sm:$0xf]
      %v3891 = vld [vmem:[#allocation3 + $0x14] sm:$0xf]
      %v3892 = vld [vmem:[#allocation3 + $0x18] sm:$0xf]
      %v3893 = vld [vmem:[#allocation3 + $0x1c] sm:$0xf]
      %v3894 = vld [vmem:[#allocation3 + $0x20] sm:$0xf]
      %v3895 = vld [vmem:[#allocation3 + $0x24] sm:$0xf]
      %v3896 = vld [vmem:[#allocation3 + $0x28] sm:$0x1]
      %s3897 = scalar_lea.vmem %s6, 64
      %v3898 = vld [vmem:[%s3897] sm:$0xf]
      %v3899 = vld [vmem:[%s3897 + $0x4] sm:$0xf]
      %v3900 = vld [vmem:[%s3897 + $0x8] sm:$0xf]
      %v3901 = vld [vmem:[%s3897 + $0xc] sm:$0xf]
      %v3902 = vld [vmem:[%s3897 + $0x10] sm:$0xf]
      %v3903 = vld [vmem:[%s3897 + $0x14] sm:$0xf]
      %v3904 = vld [vmem:[%s3897 + $0x18] sm:$0xf]
      %v3905 = vld [vmem:[%s3897 + $0x1c] sm:$0xf]
      %v3906 = vld [vmem:[%s3897 + $0x20] sm:$0xf]
      %v3907 = vld [vmem:[%s3897 + $0x24] sm:$0xf]
      %v3908 = vld [vmem:[%s3897 + $0x28] sm:$0xf]
      %v3909 = vld [vmem:[%s3897 + $0x2c] sm:$0xf]
      %v3910 = vld [vmem:[%s3897 + $0x30] sm:$0xf]
      %v3911 = vld [vmem:[%s3897 + $0x34] sm:$0xf]
      %v3912 = vld [vmem:[%s3897 + $0x38] sm:$0xf]
      %v3913 = vld [vmem:[%s3897 + $0x3c] sm:$0xf]
      %v3925 = vunpack.c.l.b16 %v3875
      %v3926 = vunpack.c.l.b16 %v3876
      %v3927 = vunpack.c.l.b16 %v3877
      %v3928 = vunpack.c.l.b16 %v3878
      %v3929 = vunpack.c.l.b16 %v3879
      %v3930 = vunpack.c.l.b16 %v3880
      %v3931 = vunpack.c.l.b16 %v3881
      %v3932 = vunpack.c.l.b16 %v3882
      %v3933 = vunpack.c.l.b16 %v3883
      %v3934 = vunpack.c.l.b16 %v3884
      %v3935 = vunpack.c.l.b16 %v3885
      %v3936 = vpack.c.b16 %v3926, %v3925
      %v3937 = vpack.c.b16 %v3928, %v3927
      %v3938 = vpack.c.b16 %v3930, %v3929
      %v3939 = vpack.c.b16 %v3932, %v3931
      %v3940 = vpack.c.b16 %v3934, %v3933
      %v3941 = vpack.c.b16 %v3935, %v3935
      %v3943 = vshrl.u32 %v3936, 16
      %v3945 = vshll.u32 %v3936, 16
      %v3947 = vrot.slane %v3945, 1
      %v3948 = vor.u32 %v3943, %v3947
      %v3950 = vshll.u32 %v3937, 16
      %v3952 = vrot.slane %v3950, 1
      %v3953 = vsel %vm690, %v3948, %v3952
      %v3954 = vshrl.u32 %v3937, 16
      %v3956 = vor.u32 %v3954, %v3952
      %v3958 = vshll.u32 %v3938, 16
      %v3960 = vrot.slane %v3958, 1
      %v3961 = vsel %vm690, %v3956, %v3960
      %v3962 = vshrl.u32 %v3938, 16
      %v3964 = vor.u32 %v3962, %v3960
      %v3966 = vshll.u32 %v3939, 16
      %v3968 = vrot.slane %v3966, 1
      %v3969 = vsel %vm690, %v3964, %v3968
      %v3970 = vshrl.u32 %v3939, 16
      %v3972 = vor.u32 %v3970, %v3968
      %v3974 = vshll.u32 %v3940, 16
      %v3976 = vrot.slane %v3974, 1
      %v3977 = vsel %vm690, %v3972, %v3976
      %v3978 = vshrl.u32 %v3940, 16
      %v3980 = vor.u32 %v3978, %v3976
      %v3982 = vshll.u32 %v3941, 16
      %v3984 = vrot.slane %v3982, 1
      %v3985 = vsel %vm690, %v3980, %v3984
      %v4007 = vunpack.c.l.b16 %v3898
      %v4008 = vunpack.c.l.b16 %v3899
      %v4009 = vunpack.c.l.b16 %v3900
      %v4010 = vunpack.c.l.b16 %v3901
      %v4011 = vunpack.c.l.b16 %v3902
      %v4012 = vunpack.c.l.b16 %v3903
      %v4013 = vunpack.c.l.b16 %v3904
      %v4014 = vunpack.c.l.b16 %v3905
      %v4015 = vunpack.c.l.b16 %v3906
      %v4016 = vunpack.c.l.b16 %v3907
      %v4017 = vunpack.c.l.b16 %v3908
      %v4018 = vunpack.c.l.b16 %v3909
      %v4019 = vunpack.c.l.b16 %v3910
      %v4020 = vunpack.c.l.b16 %v3911
      %v4021 = vunpack.c.l.b16 %v3912
      %v4022 = vunpack.c.l.b16 %v3913
      %v4023 = vpack.c.b16 %v4008, %v4007
      %v4024 = vpack.c.b16 %v4010, %v4009
      %v4025 = vpack.c.b16 %v4012, %v4011
      %v4026 = vpack.c.b16 %v4014, %v4013
      %v4027 = vpack.c.b16 %v4016, %v4015
      %v4028 = vpack.c.b16 %v4018, %v4017
      %v4029 = vpack.c.b16 %v4020, %v4019
      %v4030 = vpack.c.b16 %v4022, %v4021
      %4039 = vmatprep.subr.bf16.mxu0 0
      %4040 = vmatpush1.bf16.msra.mxu0 %v4023
      %4041 = vmatprep.subr.bf16.mxu0 0
      %4042 = vmatpush1.bf16.msra.mxu0 %v4024
      %4043 = vmatprep.subr.bf16.mxu0 0
      %4044 = vmatpush1.bf16.msra.mxu0 %v4025
      %4045 = vmatprep.subr.bf16.mxu0 0
      %4046 = vmatpush1.bf16.msra.mxu0 %v4026
      %4047 = vmatprep.subr.bf16.mxu0 0
      %4048 = vmatpush1.bf16.msra.mxu0 %v4027
      %4049 = vmatprep.subr.bf16.mxu0 0
      %4050 = vmatpush1.bf16.msra.mxu0 %v4028
      %4051 = vmatprep.subr.bf16.mxu0 0
      %4052 = vmatpush1.bf16.msra.mxu0 %v4029
      %4053 = vmatprep.subr.bf16.mxu0 0
      %4054 = vmatpush1.bf16.msra.mxu0 %v4030
      %4055 = vmatprep.subr.bf16.mxu0 0
      %4056 = vmatpush1.bf16.msra.mxu0 0
      %4057 = vmatprep.subr.bf16.mxu0 0
      %4058 = vmatpush1.bf16.msra.mxu0 0
      %4059 = vmatprep.subr.bf16.mxu0 0
      %4060 = vmatpush1.bf16.msra.mxu0 0
      %4061 = vmatprep.subr.bf16.mxu0 0
      %4062 = vmatpush1.bf16.msra.mxu0 0
      %4063 = vmatprep.subr.bf16.mxu0 0
      %4064 = vmatpush1.bf16.msra.mxu0 0
      %4065 = vmatprep.subr.bf16.mxu0 0
      %4066 = vmatpush1.bf16.msra.mxu0 0
      %4067 = vmatprep.subr.bf16.mxu0 0
      %4068 = vmatpush1.bf16.msra.mxu0 0
      %4069 = vmatprep.subr.bf16.mxu0 0
      %4070 = vmatpush1.bf16.msra.mxu0 0
      %4071 = vmatprep.mubr.bf16.mxu0 0
      %4072 = vmatmul.mubr.bf16.gmra.mrb[0].mxu0 %v3953
      %v4073 = vpop.f32.mrb[0].mxu0
      %v4074 = vadd.f32 0.0, %v4073
      %v4075 = vpop.f32.mrb[0].mxu0
      %v4076 = vpop.f32.mrb[0].mxu0
      %v4077 = vadd.f32 0.0, %v4076
      %v4078 = vpop.f32.mrb[0].mxu0
      %4079 = vmatprep.mubr.bf16.mxu0 0
      %4080 = vmatmul.mubr.bf16.gmra.mrb[0].mxu0 %v3961
      %v4081 = vpop.f32.mrb[0].mxu0
      %v4082 = vadd.f32 0.0, %v4081
      %v4083 = vpop.f32.mrb[0].mxu0
      %v4084 = vpop.f32.mrb[0].mxu0
      %v4085 = vadd.f32 0.0, %v4084
      %v4086 = vpop.f32.mrb[0].mxu0
      %4087 = vmatprep.mubr.bf16.mxu0 0
      %4088 = vmatmul.mubr.bf16.gmra.mrb[0].mxu0 %v3969
      %v4089 = vpop.f32.mrb[0].mxu0
      %v4090 = vadd.f32 0.0, %v4089
      %v4091 = vpop.f32.mrb[0].mxu0
      %v4092 = vpop.f32.mrb[0].mxu0
      %v4093 = vadd.f32 0.0, %v4092
      %v4094 = vpop.f32.mrb[0].mxu0
      %4095 = vmatprep.mubr.bf16.mxu0 0
      %4096 = vmatmul.mubr.bf16.gmra.mrb[0].mxu0 %v3977
      %v4097 = vpop.f32.mrb[0].mxu0
      %v4098 = vadd.f32 0.0, %v4097
      %v4099 = vpop.f32.mrb[0].mxu0
      %v4100 = vpop.f32.mrb[0].mxu0
      %v4101 = vadd.f32 0.0, %v4100
      %v4102 = vpop.f32.mrb[0].mxu0
      %4103 = vmatprep.mubr.bf16.mxu0 0
      %4104 = vmatmul.mubr.bf16.gmra.mrb[0].mxu0 %v3985
      %v4105 = vpop.f32.mrb[0].mxu0
      %v4106 = vadd.f32 0.0, %v4105
      %v4107 = vpop.f32.mrb[0].mxu0
      %v4108 = vpop.f32.mrb[0].mxu0
      %v4109 = vadd.f32 0.0, %v4108
      %v4110 = vpop.f32.mrb[0].mxu0
      %4111 = vdwg.mxu0
      %v4112 = vadd.f32 %v3837, %v4074
      %v4113 = vadd.f32 %v3840, %v4077
      %v4114 = vadd.f32 %v3845, %v4082
      %v4115 = vadd.f32 %v3848, %v4085
      %v4116 = vadd.f32 %v3853, %v4090
      %v4117 = vadd.f32 %v3856, %v4093
      %v4118 = vadd.f32 %v3861, %v4098
      %v4119 = vadd.f32 %v3864, %v4101
      %v4120 = vadd.f32 %v3869, %v4106
      %v4121 = vadd.f32 %v3872, %v4109
      %s4122 = scalar_lea.vmem %s7, 64
      %v4123 = vld [vmem:[%s4122] sm:$0xf]
      %v4124 = vld [vmem:[%s4122 + $0x4] sm:$0xf]
      %v4125 = vld [vmem:[%s4122 + $0x8] sm:$0xf]
      %v4126 = vld [vmem:[%s4122 + $0xc] sm:$0xf]
      %v4127 = vld [vmem:[%s4122 + $0x10] sm:$0xf]
      %v4128 = vld [vmem:[%s4122 + $0x14] sm:$0xf]
      %v4129 = vld [vmem:[%s4122 + $0x18] sm:$0xf]
      %v4130 = vld [vmem:[%s4122 + $0x1c] sm:$0xf]
      %v4131 = vld [vmem:[%s4122 + $0x20] sm:$0xf]
      %v4132 = vld [vmem:[%s4122 + $0x24] sm:$0xf]
      %v4133 = vld [vmem:[%s4122 + $0x28] sm:$0xf]
      %v4134 = vld [vmem:[%s4122 + $0x2c] sm:$0xf]
      %v4135 = vld [vmem:[%s4122 + $0x30] sm:$0xf]
      %v4136 = vld [vmem:[%s4122 + $0x34] sm:$0xf]
      %v4137 = vld [vmem:[%s4122 + $0x38] sm:$0xf]
      %v4138 = vld [vmem:[%s4122 + $0x3c] sm:$0xf]
      %v4150 = vunpack.c.l.b16 %v3886
      %v4151 = vunpack.c.l.b16 %v3887
      %v4152 = vunpack.c.l.b16 %v3888
      %v4153 = vunpack.c.l.b16 %v3889
      %v4154 = vunpack.c.l.b16 %v3890
      %v4155 = vunpack.c.l.b16 %v3891
      %v4156 = vunpack.c.l.b16 %v3892
      %v4157 = vunpack.c.l.b16 %v3893
      %v4158 = vunpack.c.l.b16 %v3894
      %v4159 = vunpack.c.l.b16 %v3895
      %v4160 = vunpack.c.l.b16 %v3896
      %v4161 = vpack.c.b16 %v4151, %v4150
      %v4162 = vpack.c.b16 %v4153, %v4152
      %v4163 = vpack.c.b16 %v4155, %v4154
      %v4164 = vpack.c.b16 %v4157, %v4156
      %v4165 = vpack.c.b16 %v4159, %v4158
      %v4166 = vpack.c.b16 %v4160, %v4160
      %v4168 = vshrl.u32 %v4161, 16
      %v4170 = vshll.u32 %v4161, 16
      %v4172 = vrot.slane %v4170, 1
      %v4173 = vor.u32 %v4168, %v4172
      %v4175 = vshll.u32 %v4162, 16
      %v4177 = vrot.slane %v4175, 1
      %v4178 = vsel %vm690, %v4173, %v4177
      %v4179 = vshrl.u32 %v4162, 16
      %v4181 = vor.u32 %v4179, %v4177
      %v4183 = vshll.u32 %v4163, 16
      %v4185 = vrot.slane %v4183, 1
      %v4186 = vsel %vm690, %v4181, %v4185
      %v4187 = vshrl.u32 %v4163, 16
      %v4189 = vor.u32 %v4187, %v4185
      %v4191 = vshll.u32 %v4164, 16
      %v4193 = vrot.slane %v4191, 1
      %v4194 = vsel %vm690, %v4189, %v4193
      %v4195 = vshrl.u32 %v4164, 16
      %v4197 = vor.u32 %v4195, %v4193
      %v4199 = vshll.u32 %v4165, 16
      %v4201 = vrot.slane %v4199, 1
      %v4202 = vsel %vm690, %v4197, %v4201
      %v4203 = vshrl.u32 %v4165, 16
      %v4205 = vor.u32 %v4203, %v4201
      %v4207 = vshll.u32 %v4166, 16
      %v4209 = vrot.slane %v4207, 1
      %v4210 = vsel %vm690, %v4205, %v4209
      %v4232 = vunpack.c.l.b16 %v4123
      %v4233 = vunpack.c.l.b16 %v4124
      %v4234 = vunpack.c.l.b16 %v4125
      %v4235 = vunpack.c.l.b16 %v4126
      %v4236 = vunpack.c.l.b16 %v4127
      %v4237 = vunpack.c.l.b16 %v4128
      %v4238 = vunpack.c.l.b16 %v4129
      %v4239 = vunpack.c.l.b16 %v4130
      %v4240 = vunpack.c.l.b16 %v4131
      %v4241 = vunpack.c.l.b16 %v4132
      %v4242 = vunpack.c.l.b16 %v4133
      %v4243 = vunpack.c.l.b16 %v4134
      %v4244 = vunpack.c.l.b16 %v4135
      %v4245 = vunpack.c.l.b16 %v4136
      %v4246 = vunpack.c.l.b16 %v4137
      %v4247 = vunpack.c.l.b16 %v4138
      %v4248 = vpack.c.b16 %v4233, %v4232
      %v4249 = vpack.c.b16 %v4235, %v4234
      %v4250 = vpack.c.b16 %v4237, %v4236
      %v4251 = vpack.c.b16 %v4239, %v4238
      %v4252 = vpack.c.b16 %v4241, %v4240
      %v4253 = vpack.c.b16 %v4243, %v4242
      %v4254 = vpack.c.b16 %v4245, %v4244
      %v4255 = vpack.c.b16 %v4247, %v4246
      %4264 = vmatprep.subr.bf16.mxu0 0
      %4265 = vmatpush1.bf16.msra.mxu0 %v4248
      %4266 = vmatprep.subr.bf16.mxu0 0
      %4267 = vmatpush1.bf16.msra.mxu0 %v4249
      %4268 = vmatprep.subr.bf16.mxu0 0
      %4269 = vmatpush1.bf16.msra.mxu0 %v4250
      %4270 = vmatprep.subr.bf16.mxu0 0
      %4271 = vmatpush1.bf16.msra.mxu0 %v4251
      %4272 = vmatprep.subr.bf16.mxu0 0
      %4273 = vmatpush1.bf16.msra.mxu0 %v4252
      %4274 = vmatprep.subr.bf16.mxu0 0
      %4275 = vmatpush1.bf16.msra.mxu0 %v4253
      %4276 = vmatprep.subr.bf16.mxu0 0
      %4277 = vmatpush1.bf16.msra.mxu0 %v4254
      %4278 = vmatprep.subr.bf16.mxu0 0
      %4279 = vmatpush1.bf16.msra.mxu0 %v4255
      %4280 = vmatprep.subr.bf16.mxu0 0
      %4281 = vmatpush1.bf16.msra.mxu0 0
      %4282 = vmatprep.subr.bf16.mxu0 0
      %4283 = vmatpush1.bf16.msra.mxu0 0
      %4284 = vmatprep.subr.bf16.mxu0 0
      %4285 = vmatpush1.bf16.msra.mxu0 0
      %4286 = vmatprep.subr.bf16.mxu0 0
      %4287 = vmatpush1.bf16.msra.mxu0 0
      %4288 = vmatprep.subr.bf16.mxu0 0
      %4289 = vmatpush1.bf16.msra.mxu0 0
      %4290 = vmatprep.subr.bf16.mxu0 0
      %4291 = vmatpush1.bf16.msra.mxu0 0
      %4292 = vmatprep.subr.bf16.mxu0 0
      %4293 = vmatpush1.bf16.msra.mxu0 0
      %4294 = vmatprep.subr.bf16.mxu0 0
      %4295 = vmatpush1.bf16.msra.mxu0 0
      %4296 = vmatprep.mubr.bf16.mxu0 0
      %4297 = vmatmul.mubr.bf16.gmra.mrb[0].mxu0 %v4178
      %v4298 = vpop.f32.mrb[0].mxu0
      %v4299 = vadd.f32 0.0, %v4298
      %v4300 = vpop.f32.mrb[0].mxu0
      %v4301 = vpop.f32.mrb[0].mxu0
      %v4302 = vadd.f32 0.0, %v4301
      %v4303 = vpop.f32.mrb[0].mxu0
      %4304 = vmatprep.mubr.bf16.mxu0 0
      %4305 = vmatmul.mubr.bf16.gmra.mrb[0].mxu0 %v4186
      %v4306 = vpop.f32.mrb[0].mxu0
      %v4307 = vadd.f32 0.0, %v4306
      %v4308 = vpop.f32.mrb[0].mxu0
      %v4309 = vpop.f32.mrb[0].mxu0
      %v4310 = vadd.f32 0.0, %v4309
      %v4311 = vpop.f32.mrb[0].mxu0
      %4312 = vmatprep.mubr.bf16.mxu0 0
      %4313 = vmatmul.mubr.bf16.gmra.mrb[0].mxu0 %v4194
      %v4314 = vpop.f32.mrb[0].mxu0
      %v4315 = vadd.f32 0.0, %v4314
      %v4316 = vpop.f32.mrb[0].mxu0
      %v4317 = vpop.f32.mrb[0].mxu0
      %v4318 = vadd.f32 0.0, %v4317
      %v4319 = vpop.f32.mrb[0].mxu0
      %4320 = vmatprep.mubr.bf16.mxu0 0
      %4321 = vmatmul.mubr.bf16.gmra.mrb[0].mxu0 %v4202
      %v4322 = vpop.f32.mrb[0].mxu0
      %v4323 = vadd.f32 0.0, %v4322
      %v4324 = vpop.f32.mrb[0].mxu0
      %v4325 = vpop.f32.mrb[0].mxu0
      %v4326 = vadd.f32 0.0, %v4325
      %v4327 = vpop.f32.mrb[0].mxu0
      %4328 = vmatprep.mubr.bf16.mxu0 0
      %4329 = vmatmul.mubr.bf16.gmra.mrb[0].mxu0 %v4210
      %v4330 = vpop.f32.mrb[0].mxu0
      %v4331 = vadd.f32 0.0, %v4330
      %v4332 = vpop.f32.mrb[0].mxu0
      %v4333 = vpop.f32.mrb[0].mxu0
      %v4334 = vadd.f32 0.0, %v4333
      %v4335 = vpop.f32.mrb[0].mxu0
      %4336 = vdwg.mxu0
      %v4337 = vadd.f32 %v4112, %v4299
      %v4338 = vadd.f32 %v4113, %v4302
      %v4339 = vadd.f32 %v4114, %v4307
      %v4340 = vadd.f32 %v4115, %v4310
      %v4341 = vadd.f32 %v4116, %v4315
      %v4342 = vadd.f32 %v4117, %v4318
      %v4343 = vadd.f32 %v4118, %v4323
      %v4344 = vadd.f32 %v4119, %v4326
      %v4345 = vadd.f32 %v4120, %v4331
      %v4346 = vadd.f32 %v4121, %v4334
      %v4347 = vld [vmem:[#allocation2] sm:$0xe]
      %v4348 = vld [vmem:[#allocation3] sm:$0xe]
      %s4349 = scalar_lea.vmem %s6, 128
      %v4350 = vld [vmem:[%s4349] sm:$0xf]
      %v4351 = vld [vmem:[%s4349 + $0x4] sm:$0xf]
      %v4352 = vld [vmem:[%s4349 + $0x8] sm:$0xf]
      %v4353 = vld [vmem:[%s4349 + $0xc] sm:$0xf]
      %v4354 = vld [vmem:[%s4349 + $0x10] sm:$0xf]
      %v4355 = vld [vmem:[%s4349 + $0x14] sm:$0xf]
      %v4356 = vld [vmem:[%s4349 + $0x18] sm:$0xf]
      %v4357 = vld [vmem:[%s4349 + $0x1c] sm:$0xf]
      %v4358 = vld [vmem:[%s4349 + $0x20] sm:$0xf]
      %v4359 = vld [vmem:[%s4349 + $0x24] sm:$0xf]
      %v4360 = vld [vmem:[%s4349 + $0x28] sm:$0xf]
      %v4361 = vld [vmem:[%s4349 + $0x2c] sm:$0xf]
      %v4362 = vld [vmem:[%s4349 + $0x30] sm:$0xf]
      %v4363 = vld [vmem:[%s4349 + $0x34] sm:$0xf]
      %v4364 = vld [vmem:[%s4349 + $0x38] sm:$0xf]
      %v4365 = vld [vmem:[%s4349 + $0x3c] sm:$0xf]
      %v4367 = vunpack.c.l.b16 %v4347
      %v4368 = vpack.c.b16 %v3926, %v4367
      %v4369 = vrot.slane %v4368, 1
      %v4370 = vrot.slane %v3937, 1
      %v4371 = vsel %vm1341, %v4369, %v4370
      %v4372 = vrot.slane %v3938, 1
      %v4373 = vsel %vm1341, %v4370, %v4372
      %v4374 = vrot.slane %v3939, 1
      %v4375 = vsel %vm1341, %v4372, %v4374
      %v4376 = vrot.slane %v3940, 1
      %v4377 = vsel %vm1341, %v4374, %v4376
      %v4378 = vrot.slane %v3941, 1
      %v4379 = vsel %vm1341, %v4376, %v4378
      %v4401 = vunpack.c.l.b16 %v4350
      %v4402 = vunpack.c.l.b16 %v4351
      %v4403 = vunpack.c.l.b16 %v4352
      %v4404 = vunpack.c.l.b16 %v4353
      %v4405 = vunpack.c.l.b16 %v4354
      %v4406 = vunpack.c.l.b16 %v4355
      %v4407 = vunpack.c.l.b16 %v4356
      %v4408 = vunpack.c.l.b16 %v4357
      %v4409 = vunpack.c.l.b16 %v4358
      %v4410 = vunpack.c.l.b16 %v4359
      %v4411 = vunpack.c.l.b16 %v4360
      %v4412 = vunpack.c.l.b16 %v4361
      %v4413 = vunpack.c.l.b16 %v4362
      %v4414 = vunpack.c.l.b16 %v4363
      %v4415 = vunpack.c.l.b16 %v4364
      %v4416 = vunpack.c.l.b16 %v4365
      %v4417 = vpack.c.b16 %v4402, %v4401
      %v4418 = vpack.c.b16 %v4404, %v4403
      %v4419 = vpack.c.b16 %v4406, %v4405
      %v4420 = vpack.c.b16 %v4408, %v4407
      %v4421 = vpack.c.b16 %v4410, %v4409
      %v4422 = vpack.c.b16 %v4412, %v4411
      %v4423 = vpack.c.b16 %v4414, %v4413
      %v4424 = vpack.c.b16 %v4416, %v4415
      %4433 = vmatprep.subr.bf16.mxu0 0
      %4434 = vmatpush1.bf16.msra.mxu0 %v4417
      %4435 = vmatprep.subr.bf16.mxu0 0
      %4436 = vmatpush1.bf16.msra.mxu0 %v4418
      %4437 = vmatprep.subr.bf16.mxu0 0
      %4438 = vmatpush1.bf16.msra.mxu0 %v4419
      %4439 = vmatprep.subr.bf16.mxu0 0
      %4440 = vmatpush1.bf16.msra.mxu0 %v4420
      %4441 = vmatprep.subr.bf16.mxu0 0
      %4442 = vmatpush1.bf16.msra.mxu0 %v4421
      %4443 = vmatprep.subr.bf16.mxu0 0
      %4444 = vmatpush1.bf16.msra.mxu0 %v4422
      %4445 = vmatprep.subr.bf16.mxu0 0
      %4446 = vmatpush1.bf16.msra.mxu0 %v4423
      %4447 = vmatprep.subr.bf16.mxu0 0
      %4448 = vmatpush1.bf16.msra.mxu0 %v4424
      %4449 = vmatprep.subr.bf16.mxu0 0
      %4450 = vmatpush1.bf16.msra.mxu0 0
      %4451 = vmatprep.subr.bf16.mxu0 0
      %4452 = vmatpush1.bf16.msra.mxu0 0
      %4453 = vmatprep.subr.bf16.mxu0 0
      %4454 = vmatpush1.bf16.msra.mxu0 0
      %4455 = vmatprep.subr.bf16.mxu0 0
      %4456 = vmatpush1.bf16.msra.mxu0 0
      %4457 = vmatprep.subr.bf16.mxu0 0
      %4458 = vmatpush1.bf16.msra.mxu0 0
      %4459 = vmatprep.subr.bf16.mxu0 0
      %4460 = vmatpush1.bf16.msra.mxu0 0
      %4461 = vmatprep.subr.bf16.mxu0 0
      %4462 = vmatpush1.bf16.msra.mxu0 0
      %4463 = vmatprep.subr.bf16.mxu0 0
      %4464 = vmatpush1.bf16.msra.mxu0 0
      %4465 = vmatprep.mubr.bf16.mxu0 0
      %4466 = vmatmul.mubr.bf16.gmra.mrb[0].mxu0 %v4371
      %v4467 = vpop.f32.mrb[0].mxu0
      %v4468 = vadd.f32 0.0, %v4467
      %v4469 = vpop.f32.mrb[0].mxu0
      %v4470 = vpop.f32.mrb[0].mxu0
      %v4471 = vadd.f32 0.0, %v4470
      %v4472 = vpop.f32.mrb[0].mxu0
      %4473 = vmatprep.mubr.bf16.mxu0 0
      %4474 = vmatmul.mubr.bf16.gmra.mrb[0].mxu0 %v4373
      %v4475 = vpop.f32.mrb[0].mxu0
      %v4476 = vadd.f32 0.0, %v4475
      %v4477 = vpop.f32.mrb[0].mxu0
      %v4478 = vpop.f32.mrb[0].mxu0
      %v4479 = vadd.f32 0.0, %v4478
      %v4480 = vpop.f32.mrb[0].mxu0
      %4481 = vmatprep.mubr.bf16.mxu0 0
      %4482 = vmatmul.mubr.bf16.gmra.mrb[0].mxu0 %v4375
      %v4483 = vpop.f32.mrb[0].mxu0
      %v4484 = vadd.f32 0.0, %v4483
      %v4485 = vpop.f32.mrb[0].mxu0
      %v4486 = vpop.f32.mrb[0].mxu0
      %v4487 = vadd.f32 0.0, %v4486
      %v4488 = vpop.f32.mrb[0].mxu0
      %4489 = vmatprep.mubr.bf16.mxu0 0
      %4490 = vmatmul.mubr.bf16.gmra.mrb[0].mxu0 %v4377
      %v4491 = vpop.f32.mrb[0].mxu0
      %v4492 = vadd.f32 0.0, %v4491
      %v4493 = vpop.f32.mrb[0].mxu0
      %v4494 = vpop.f32.mrb[0].mxu0
      %v4495 = vadd.f32 0.0, %v4494
      %v4496 = vpop.f32.mrb[0].mxu0
      %4497 = vmatprep.mubr.bf16.mxu0 0
      %4498 = vmatmul.mubr.bf16.gmra.mrb[0].mxu0 %v4379
      %v4499 = vpop.f32.mrb[0].mxu0
      %v4500 = vadd.f32 0.0, %v4499
      %v4501 = vpop.f32.mrb[0].mxu0
      %v4502 = vpop.f32.mrb[0].mxu0
      %v4503 = vadd.f32 0.0, %v4502
      %v4504 = vpop.f32.mrb[0].mxu0
      %4505 = vdwg.mxu0
      %v4506 = vadd.f32 %v4337, %v4468
      %v4507 = vadd.f32 %v4338, %v4471
      %v4508 = vadd.f32 %v4339, %v4476
      %v4509 = vadd.f32 %v4340, %v4479
      %v4510 = vadd.f32 %v4341, %v4484
      %v4511 = vadd.f32 %v4342, %v4487
      %v4512 = vadd.f32 %v4343, %v4492
      %v4513 = vadd.f32 %v4344, %v4495
      %v4514 = vadd.f32 %v4345, %v4500
      %v4515 = vadd.f32 %v4346, %v4503
      %s4516 = scalar_lea.vmem %s7, 128
      %v4517 = vld [vmem:[%s4516] sm:$0xf]
      %v4518 = vld [vmem:[%s4516 + $0x4] sm:$0xf]
      %v4519 = vld [vmem:[%s4516 + $0x8] sm:$0xf]
      %v4520 = vld [vmem:[%s4516 + $0xc] sm:$0xf]
      %v4521 = vld [vmem:[%s4516 + $0x10] sm:$0xf]
      %v4522 = vld [vmem:[%s4516 + $0x14] sm:$0xf]
      %v4523 = vld [vmem:[%s4516 + $0x18] sm:$0xf]
      %v4524 = vld [vmem:[%s4516 + $0x1c] sm:$0xf]
      %v4525 = vld [vmem:[%s4516 + $0x20] sm:$0xf]
      %v4526 = vld [vmem:[%s4516 + $0x24] sm:$0xf]
      %v4527 = vld [vmem:[%s4516 + $0x28] sm:$0xf]
      %v4528 = vld [vmem:[%s4516 + $0x2c] sm:$0xf]
      %v4529 = vld [vmem:[%s4516 + $0x30] sm:$0xf]
      %v4530 = vld [vmem:[%s4516 + $0x34] sm:$0xf]
      %v4531 = vld [vmem:[%s4516 + $0x38] sm:$0xf]
      %v4532 = vld [vmem:[%s4516 + $0x3c] sm:$0xf]
      %v4534 = vunpack.c.l.b16 %v4348
      %v4535 = vpack.c.b16 %v4151, %v4534
      %v4536 = vrot.slane %v4535, 1
      %v4537 = vrot.slane %v4162, 1
      %v4538 = vsel %vm1341, %v4536, %v4537
      %v4539 = vrot.slane %v4163, 1
      %v4540 = vsel %vm1341, %v4537, %v4539
      %v4541 = vrot.slane %v4164, 1
      %v4542 = vsel %vm1341, %v4539, %v4541
      %v4543 = vrot.slane %v4165, 1
      %v4544 = vsel %vm1341, %v4541, %v4543
      %v4545 = vrot.slane %v4166, 1
      %v4546 = vsel %vm1341, %v4543, %v4545
      %v4568 = vunpack.c.l.b16 %v4517
      %v4569 = vunpack.c.l.b16 %v4518
      %v4570 = vunpack.c.l.b16 %v4519
      %v4571 = vunpack.c.l.b16 %v4520
      %v4572 = vunpack.c.l.b16 %v4521
      %v4573 = vunpack.c.l.b16 %v4522
      %v4574 = vunpack.c.l.b16 %v4523
      %v4575 = vunpack.c.l.b16 %v4524
      %v4576 = vunpack.c.l.b16 %v4525
      %v4577 = vunpack.c.l.b16 %v4526
      %v4578 = vunpack.c.l.b16 %v4527
      %v4579 = vunpack.c.l.b16 %v4528
      %v4580 = vunpack.c.l.b16 %v4529
      %v4581 = vunpack.c.l.b16 %v4530
      %v4582 = vunpack.c.l.b16 %v4531
      %v4583 = vunpack.c.l.b16 %v4532
      %v4584 = vpack.c.b16 %v4569, %v4568
      %v4585 = vpack.c.b16 %v4571, %v4570
      %v4586 = vpack.c.b16 %v4573, %v4572
      %v4587 = vpack.c.b16 %v4575, %v4574
      %v4588 = vpack.c.b16 %v4577, %v4576
      %v4589 = vpack.c.b16 %v4579, %v4578
      %v4590 = vpack.c.b16 %v4581, %v4580
      %v4591 = vpack.c.b16 %v4583, %v4582
      %4600 = vmatprep.subr.bf16.mxu0 0
      %4601 = vmatpush1.bf16.msra.mxu0 %v4584
      %4602 = vmatprep.subr.bf16.mxu0 0
      %4603 = vmatpush1.bf16.msra.mxu0 %v4585
      %4604 = vmatprep.subr.bf16.mxu0 0
      %4605 = vmatpush1.bf16.msra.mxu0 %v4586
      %4606 = vmatprep.subr.bf16.mxu0 0
      %4607 = vmatpush1.bf16.msra.mxu0 %v4587
      %4608 = vmatprep.subr.bf16.mxu0 0
      %4609 = vmatpush1.bf16.msra.mxu0 %v4588
      %4610 = vmatprep.subr.bf16.mxu0 0
      %4611 = vmatpush1.bf16.msra.mxu0 %v4589
      %4612 = vmatprep.subr.bf16.mxu0 0
      %4613 = vmatpush1.bf16.msra.mxu0 %v4590
      %4614 = vmatprep.subr.bf16.mxu0 0
      %4615 = vmatpush1.bf16.msra.mxu0 %v4591
      %4616 = vmatprep.subr.bf16.mxu0 0
      %4617 = vmatpush1.bf16.msra.mxu0 0
      %4618 = vmatprep.subr.bf16.mxu0 0
      %4619 = vmatpush1.bf16.msra.mxu0 0
      %4620 = vmatprep.subr.bf16.mxu0 0
      %4621 = vmatpush1.bf16.msra.mxu0 0
      %4622 = vmatprep.subr.bf16.mxu0 0
      %4623 = vmatpush1.bf16.msra.mxu0 0
      %4624 = vmatprep.subr.bf16.mxu0 0
      %4625 = vmatpush1.bf16.msra.mxu0 0
      %4626 = vmatprep.subr.bf16.mxu0 0
      %4627 = vmatpush1.bf16.msra.mxu0 0
      %4628 = vmatprep.subr.bf16.mxu0 0
      %4629 = vmatpush1.bf16.msra.mxu0 0
      %4630 = vmatprep.subr.bf16.mxu0 0
      %4631 = vmatpush1.bf16.msra.mxu0 0
      %4632 = vmatprep.mubr.bf16.mxu0 0
      %4633 = vmatmul.mubr.bf16.gmra.mrb[0].mxu0 %v4538
      %v4634 = vpop.f32.mrb[0].mxu0
      %v4635 = vadd.f32 0.0, %v4634
      %v4636 = vpop.f32.mrb[0].mxu0
      %v4637 = vpop.f32.mrb[0].mxu0
      %v4638 = vadd.f32 0.0, %v4637
      %v4639 = vpop.f32.mrb[0].mxu0
      %4640 = vmatprep.mubr.bf16.mxu0 0
      %4641 = vmatmul.mubr.bf16.gmra.mrb[0].mxu0 %v4540
      %v4642 = vpop.f32.mrb[0].mxu0
      %v4643 = vadd.f32 0.0, %v4642
      %v4644 = vpop.f32.mrb[0].mxu0
      %v4645 = vpop.f32.mrb[0].mxu0
      %v4646 = vadd.f32 0.0, %v4645
      %v4647 = vpop.f32.mrb[0].mxu0
      %4648 = vmatprep.mubr.bf16.mxu0 0
      %4649 = vmatmul.mubr.bf16.gmra.mrb[0].mxu0 %v4542
      %v4650 = vpop.f32.mrb[0].mxu0
      %v4651 = vadd.f32 0.0, %v4650
      %v4652 = vpop.f32.mrb[0].mxu0
      %v4653 = vpop.f32.mrb[0].mxu0
      %v4654 = vadd.f32 0.0, %v4653
      %v4655 = vpop.f32.mrb[0].mxu0
      %4656 = vmatprep.mubr.bf16.mxu0 0
      %4657 = vmatmul.mubr.bf16.gmra.mrb[0].mxu0 %v4544
      %v4658 = vpop.f32.mrb[0].mxu0
      %v4659 = vadd.f32 0.0, %v4658
      %v4660 = vpop.f32.mrb[0].mxu0
      %v4661 = vpop.f32.mrb[0].mxu0
      %v4662 = vadd.f32 0.0, %v4661
      %v4663 = vpop.f32.mrb[0].mxu0
      %4664 = vmatprep.mubr.bf16.mxu0 0
      %4665 = vmatmul.mubr.bf16.gmra.mrb[0].mxu0 %v4546
      %v4666 = vpop.f32.mrb[0].mxu0
      %v4667 = vadd.f32 0.0, %v4666
      %v4668 = vpop.f32.mrb[0].mxu0
      %v4669 = vpop.f32.mrb[0].mxu0
      %v4670 = vadd.f32 0.0, %v4669
      %v4671 = vpop.f32.mrb[0].mxu0
      %4672 = vdwg.mxu0
      %v4673 = vadd.f32 %v4506, %v4635
      %v4674 = vadd.f32 %v4507, %v4638
      %v4675 = vadd.f32 %v4508, %v4643
      %v4676 = vadd.f32 %v4509, %v4646
      %v4677 = vadd.f32 %v4510, %v4651
      %v4678 = vadd.f32 %v4511, %v4654
      %v4679 = vadd.f32 %v4512, %v4659
      %v4680 = vadd.f32 %v4513, %v4662
      %v4681 = vadd.f32 %v4514, %v4667
      %v4682 = vadd.f32 %v4515, %v4670
      %v4683 = vld [vmem:[#allocation2 + $0x4] sm:$0xe]
      %v4684 = vld [vmem:[#allocation2 + $0x8] sm:$0xf]
      %v4685 = vld [vmem:[#allocation2 + $0xc] sm:$0xf]
      %v4686 = vld [vmem:[#allocation2 + $0x10] sm:$0xf]
      %v4687 = vld [vmem:[#allocation2 + $0x14] sm:$0xf]
      %v4688 = vld [vmem:[#allocation2 + $0x18] sm:$0xf]
      %v4689 = vld [vmem:[#allocation2 + $0x1c] sm:$0xf]
      %v4690 = vld [vmem:[#allocation2 + $0x20] sm:$0xf]
      %v4691 = vld [vmem:[#allocation2 + $0x24] sm:$0xf]
      %v4692 = vld [vmem:[#allocation2 + $0x28] sm:$0xf]
      %v4693 = vld [vmem:[#allocation2 + $0x2c] sm:$0x1]
      %v4694 = vld [vmem:[#allocation3 + $0x4] sm:$0xe]
      %v4695 = vld [vmem:[#allocation3 + $0x8] sm:$0xf]
      %v4696 = vld [vmem:[#allocation3 + $0xc] sm:$0xf]
      %v4697 = vld [vmem:[#allocation3 + $0x10] sm:$0xf]
      %v4698 = vld [vmem:[#allocation3 + $0x14] sm:$0xf]
      %v4699 = vld [vmem:[#allocation3 + $0x18] sm:$0xf]
      %v4700 = vld [vmem:[#allocation3 + $0x1c] sm:$0xf]
      %v4701 = vld [vmem:[#allocation3 + $0x20] sm:$0xf]
      %v4702 = vld [vmem:[#allocation3 + $0x24] sm:$0xf]
      %v4703 = vld [vmem:[#allocation3 + $0x28] sm:$0xf]
      %v4704 = vld [vmem:[#allocation3 + $0x2c] sm:$0x1]
      %s4705 = scalar_lea.vmem %s6, 192
      %v4706 = vld [vmem:[%s4705] sm:$0xf]
      %v4707 = vld [vmem:[%s4705 + $0x4] sm:$0xf]
      %v4708 = vld [vmem:[%s4705 + $0x8] sm:$0xf]
      %v4709 = vld [vmem:[%s4705 + $0xc] sm:$0xf]
      %v4710 = vld [vmem:[%s4705 + $0x10] sm:$0xf]
      %v4711 = vld [vmem:[%s4705 + $0x14] sm:$0xf]
      %v4712 = vld [vmem:[%s4705 + $0x18] sm:$0xf]
      %v4713 = vld [vmem:[%s4705 + $0x1c] sm:$0xf]
      %v4714 = vld [vmem:[%s4705 + $0x20] sm:$0xf]
      %v4715 = vld [vmem:[%s4705 + $0x24] sm:$0xf]
      %v4716 = vld [vmem:[%s4705 + $0x28] sm:$0xf]
      %v4717 = vld [vmem:[%s4705 + $0x2c] sm:$0xf]
      %v4718 = vld [vmem:[%s4705 + $0x30] sm:$0xf]
      %v4719 = vld [vmem:[%s4705 + $0x34] sm:$0xf]
      %v4720 = vld [vmem:[%s4705 + $0x38] sm:$0xf]
      %v4721 = vld [vmem:[%s4705 + $0x3c] sm:$0xf]
      %v4733 = vunpack.c.l.b16 %v4683
      %v4734 = vunpack.c.l.b16 %v4684
      %v4735 = vunpack.c.l.b16 %v4685
      %v4736 = vunpack.c.l.b16 %v4686
      %v4737 = vunpack.c.l.b16 %v4687
      %v4738 = vunpack.c.l.b16 %v4688
      %v4739 = vunpack.c.l.b16 %v4689
      %v4740 = vunpack.c.l.b16 %v4690
      %v4741 = vunpack.c.l.b16 %v4691
      %v4742 = vunpack.c.l.b16 %v4692
      %v4743 = vunpack.c.l.b16 %v4693
      %v4744 = vpack.c.b16 %v4734, %v4733
      %v4745 = vpack.c.b16 %v4736, %v4735
      %v4746 = vpack.c.b16 %v4738, %v4737
      %v4747 = vpack.c.b16 %v4740, %v4739
      %v4748 = vpack.c.b16 %v4742, %v4741
      %v4749 = vpack.c.b16 %v4743, %v4743
      %v4750 = vrot.slane %v4744, 1
      %v4751 = vrot.slane %v4745, 1
      %v4752 = vsel %vm1341, %v4750, %v4751
      %v4753 = vrot.slane %v4746, 1
      %v4754 = vsel %vm1341, %v4751, %v4753
      %v4755 = vrot.slane %v4747, 1
      %v4756 = vsel %vm1341, %v4753, %v4755
      %v4757 = vrot.slane %v4748, 1
      %v4758 = vsel %vm1341, %v4755, %v4757
      %v4759 = vrot.slane %v4749, 1
      %v4760 = vsel %vm1341, %v4757, %v4759
      %v4782 = vunpack.c.l.b16 %v4706
      %v4783 = vunpack.c.l.b16 %v4707
      %v4784 = vunpack.c.l.b16 %v4708
      %v4785 = vunpack.c.l.b16 %v4709
      %v4786 = vunpack.c.l.b16 %v4710
      %v4787 = vunpack.c.l.b16 %v4711
      %v4788 = vunpack.c.l.b16 %v4712
      %v4789 = vunpack.c.l.b16 %v4713
      %v4790 = vunpack.c.l.b16 %v4714
      %v4791 = vunpack.c.l.b16 %v4715
      %v4792 = vunpack.c.l.b16 %v4716
      %v4793 = vunpack.c.l.b16 %v4717
      %v4794 = vunpack.c.l.b16 %v4718
      %v4795 = vunpack.c.l.b16 %v4719
      %v4796 = vunpack.c.l.b16 %v4720
      %v4797 = vunpack.c.l.b16 %v4721
      %v4798 = vpack.c.b16 %v4783, %v4782
      %v4799 = vpack.c.b16 %v4785, %v4784
      %v4800 = vpack.c.b16 %v4787, %v4786
      %v4801 = vpack.c.b16 %v4789, %v4788
      %v4802 = vpack.c.b16 %v4791, %v4790
      %v4803 = vpack.c.b16 %v4793, %v4792
      %v4804 = vpack.c.b16 %v4795, %v4794
      %v4805 = vpack.c.b16 %v4797, %v4796
      %4814 = vmatprep.subr.bf16.mxu0 0
      %4815 = vmatpush1.bf16.msra.mxu0 %v4798
      %4816 = vmatprep.subr.bf16.mxu0 0
      %4817 = vmatpush1.bf16.msra.mxu0 %v4799
      %4818 = vmatprep.subr.bf16.mxu0 0
      %4819 = vmatpush1.bf16.msra.mxu0 %v4800
      %4820 = vmatprep.subr.bf16.mxu0 0
      %4821 = vmatpush1.bf16.msra.mxu0 %v4801
      %4822 = vmatprep.subr.bf16.mxu0 0
      %4823 = vmatpush1.bf16.msra.mxu0 %v4802
      %4824 = vmatprep.subr.bf16.mxu0 0
      %4825 = vmatpush1.bf16.msra.mxu0 %v4803
      %4826 = vmatprep.subr.bf16.mxu0 0
      %4827 = vmatpush1.bf16.msra.mxu0 %v4804
      %4828 = vmatprep.subr.bf16.mxu0 0
      %4829 = vmatpush1.bf16.msra.mxu0 %v4805
      %4830 = vmatprep.subr.bf16.mxu0 0
      %4831 = vmatpush1.bf16.msra.mxu0 0
      %4832 = vmatprep.subr.bf16.mxu0 0
      %4833 = vmatpush1.bf16.msra.mxu0 0
      %4834 = vmatprep.subr.bf16.mxu0 0
      %4835 = vmatpush1.bf16.msra.mxu0 0
      %4836 = vmatprep.subr.bf16.mxu0 0
      %4837 = vmatpush1.bf16.msra.mxu0 0
      %4838 = vmatprep.subr.bf16.mxu0 0
      %4839 = vmatpush1.bf16.msra.mxu0 0
      %4840 = vmatprep.subr.bf16.mxu0 0
      %4841 = vmatpush1.bf16.msra.mxu0 0
      %4842 = vmatprep.subr.bf16.mxu0 0
      %4843 = vmatpush1.bf16.msra.mxu0 0
      %4844 = vmatprep.subr.bf16.mxu0 0
      %4845 = vmatpush1.bf16.msra.mxu0 0
      %4846 = vmatprep.mubr.bf16.mxu0 0
      %4847 = vmatmul.mubr.bf16.gmra.mrb[0].mxu0 %v4752
      %v4848 = vpop.f32.mrb[0].mxu0
      %v4849 = vadd.f32 0.0, %v4848
      %v4850 = vpop.f32.mrb[0].mxu0
      %v4851 = vpop.f32.mrb[0].mxu0
      %v4852 = vadd.f32 0.0, %v4851
      %v4853 = vpop.f32.mrb[0].mxu0
      %4854 = vmatprep.mubr.bf16.mxu0 0
      %4855 = vmatmul.mubr.bf16.gmra.mrb[0].mxu0 %v4754
      %v4856 = vpop.f32.mrb[0].mxu0
      %v4857 = vadd.f32 0.0, %v4856
      %v4858 = vpop.f32.mrb[0].mxu0
      %v4859 = vpop.f32.mrb[0].mxu0
      %v4860 = vadd.f32 0.0, %v4859
      %v4861 = vpop.f32.mrb[0].mxu0
      %4862 = vmatprep.mubr.bf16.mxu0 0
      %4863 = vmatmul.mubr.bf16.gmra.mrb[0].mxu0 %v4756
      %v4864 = vpop.f32.mrb[0].mxu0
      %v4865 = vadd.f32 0.0, %v4864
      %v4866 = vpop.f32.mrb[0].mxu0
      %v4867 = vpop.f32.mrb[0].mxu0
      %v4868 = vadd.f32 0.0, %v4867
      %v4869 = vpop.f32.mrb[0].mxu0
      %4870 = vmatprep.mubr.bf16.mxu0 0
      %4871 = vmatmul.mubr.bf16.gmra.mrb[0].mxu0 %v4758
      %v4872 = vpop.f32.mrb[0].mxu0
      %v4873 = vadd.f32 0.0, %v4872
      %v4874 = vpop.f32.mrb[0].mxu0
      %v4875 = vpop.f32.mrb[0].mxu0
      %v4876 = vadd.f32 0.0, %v4875
      %v4877 = vpop.f32.mrb[0].mxu0
      %4878 = vmatprep.mubr.bf16.mxu0 0
      %4879 = vmatmul.mubr.bf16.gmra.mrb[0].mxu0 %v4760
      %v4880 = vpop.f32.mrb[0].mxu0
      %v4881 = vadd.f32 0.0, %v4880
      %v4882 = vpop.f32.mrb[0].mxu0
      %v4883 = vpop.f32.mrb[0].mxu0
      %v4884 = vadd.f32 0.0, %v4883
      %v4885 = vpop.f32.mrb[0].mxu0
      %4886 = vdwg.mxu0
      %v4887 = vadd.f32 %v4673, %v4849
      %v4888 = vadd.f32 %v4674, %v4852
      %v4889 = vadd.f32 %v4675, %v4857
      %v4890 = vadd.f32 %v4676, %v4860
      %v4891 = vadd.f32 %v4677, %v4865
      %v4892 = vadd.f32 %v4678, %v4868
      %v4893 = vadd.f32 %v4679, %v4873
      %v4894 = vadd.f32 %v4680, %v4876
      %v4895 = vadd.f32 %v4681, %v4881
      %v4896 = vadd.f32 %v4682, %v4884
      %s4897 = scalar_lea.vmem %s7, 192
      %v4898 = vld [vmem:[%s4897] sm:$0xf]
      %v4899 = vld [vmem:[%s4897 + $0x4] sm:$0xf]
      %v4900 = vld [vmem:[%s4897 + $0x8] sm:$0xf]
      %v4901 = vld [vmem:[%s4897 + $0xc] sm:$0xf]
      %v4902 = vld [vmem:[%s4897 + $0x10] sm:$0xf]
      %v4903 = vld [vmem:[%s4897 + $0x14] sm:$0xf]
      %v4904 = vld [vmem:[%s4897 + $0x18] sm:$0xf]
      %v4905 = vld [vmem:[%s4897 + $0x1c] sm:$0xf]
      %v4906 = vld [vmem:[%s4897 + $0x20] sm:$0xf]
      %v4907 = vld [vmem:[%s4897 + $0x24] sm:$0xf]
      %v4908 = vld [vmem:[%s4897 + $0x28] sm:$0xf]
      %v4909 = vld [vmem:[%s4897 + $0x2c] sm:$0xf]
      %v4910 = vld [vmem:[%s4897 + $0x30] sm:$0xf]
      %v4911 = vld [vmem:[%s4897 + $0x34] sm:$0xf]
      %v4912 = vld [vmem:[%s4897 + $0x38] sm:$0xf]
      %v4913 = vld [vmem:[%s4897 + $0x3c] sm:$0xf]
      %v4925 = vunpack.c.l.b16 %v4694
      %v4926 = vunpack.c.l.b16 %v4695
      %v4927 = vunpack.c.l.b16 %v4696
      %v4928 = vunpack.c.l.b16 %v4697
      %v4929 = vunpack.c.l.b16 %v4698
      %v4930 = vunpack.c.l.b16 %v4699
      %v4931 = vunpack.c.l.b16 %v4700
      %v4932 = vunpack.c.l.b16 %v4701
      %v4933 = vunpack.c.l.b16 %v4702
      %v4934 = vunpack.c.l.b16 %v4703
      %v4935 = vunpack.c.l.b16 %v4704
      %v4936 = vpack.c.b16 %v4926, %v4925
      %v4937 = vpack.c.b16 %v4928, %v4927
      %v4938 = vpack.c.b16 %v4930, %v4929
      %v4939 = vpack.c.b16 %v4932, %v4931
      %v4940 = vpack.c.b16 %v4934, %v4933
      %v4941 = vpack.c.b16 %v4935, %v4935
      %v4942 = vrot.slane %v4936, 1
      %v4943 = vrot.slane %v4937, 1
      %v4944 = vsel %vm1341, %v4942, %v4943
      %v4945 = vrot.slane %v4938, 1
      %v4946 = vsel %vm1341, %v4943, %v4945
      %v4947 = vrot.slane %v4939, 1
      %v4948 = vsel %vm1341, %v4945, %v4947
      %v4949 = vrot.slane %v4940, 1
      %v4950 = vsel %vm1341, %v4947, %v4949
      %v4951 = vrot.slane %v4941, 1
      %v4952 = vsel %vm1341, %v4949, %v4951
      %v4974 = vunpack.c.l.b16 %v4898
      %v4975 = vunpack.c.l.b16 %v4899
      %v4976 = vunpack.c.l.b16 %v4900
      %v4977 = vunpack.c.l.b16 %v4901
      %v4978 = vunpack.c.l.b16 %v4902
      %v4979 = vunpack.c.l.b16 %v4903
      %v4980 = vunpack.c.l.b16 %v4904
      %v4981 = vunpack.c.l.b16 %v4905
      %v4982 = vunpack.c.l.b16 %v4906
      %v4983 = vunpack.c.l.b16 %v4907
      %v4984 = vunpack.c.l.b16 %v4908
      %v4985 = vunpack.c.l.b16 %v4909
      %v4986 = vunpack.c.l.b16 %v4910
      %v4987 = vunpack.c.l.b16 %v4911
      %v4988 = vunpack.c.l.b16 %v4912
      %v4989 = vunpack.c.l.b16 %v4913
      %v4990 = vpack.c.b16 %v4975, %v4974
      %v4991 = vpack.c.b16 %v4977, %v4976
      %v4992 = vpack.c.b16 %v4979, %v4978
      %v4993 = vpack.c.b16 %v4981, %v4980
      %v4994 = vpack.c.b16 %v4983, %v4982
      %v4995 = vpack.c.b16 %v4985, %v4984
      %v4996 = vpack.c.b16 %v4987, %v4986
      %v4997 = vpack.c.b16 %v4989, %v4988
      %5006 = vmatprep.subr.bf16.mxu0 0
      %5007 = vmatpush1.bf16.msra.mxu0 %v4990
      %5008 = vmatprep.subr.bf16.mxu0 0
      %5009 = vmatpush1.bf16.msra.mxu0 %v4991
      %5010 = vmatprep.subr.bf16.mxu0 0
      %5011 = vmatpush1.bf16.msra.mxu0 %v4992
      %5012 = vmatprep.subr.bf16.mxu0 0
      %5013 = vmatpush1.bf16.msra.mxu0 %v4993
      %5014 = vmatprep.subr.bf16.mxu0 0
      %5015 = vmatpush1.bf16.msra.mxu0 %v4994
      %5016 = vmatprep.subr.bf16.mxu0 0
      %5017 = vmatpush1.bf16.msra.mxu0 %v4995
      %5018 = vmatprep.subr.bf16.mxu0 0
      %5019 = vmatpush1.bf16.msra.mxu0 %v4996
      %5020 = vmatprep.subr.bf16.mxu0 0
      %5021 = vmatpush1.bf16.msra.mxu0 %v4997
      %5022 = vmatprep.subr.bf16.mxu0 0
      %5023 = vmatpush1.bf16.msra.mxu0 0
      %5024 = vmatprep.subr.bf16.mxu0 0
      %5025 = vmatpush1.bf16.msra.mxu0 0
      %5026 = vmatprep.subr.bf16.mxu0 0
      %5027 = vmatpush1.bf16.msra.mxu0 0
      %5028 = vmatprep.subr.bf16.mxu0 0
      %5029 = vmatpush1.bf16.msra.mxu0 0
      %5030 = vmatprep.subr.bf16.mxu0 0
      %5031 = vmatpush1.bf16.msra.mxu0 0
      %5032 = vmatprep.subr.bf16.mxu0 0
      %5033 = vmatpush1.bf16.msra.mxu0 0
      %5034 = vmatprep.subr.bf16.mxu0 0
      %5035 = vmatpush1.bf16.msra.mxu0 0
      %5036 = vmatprep.subr.bf16.mxu0 0
      %5037 = vmatpush1.bf16.msra.mxu0 0
      %5038 = vmatprep.mubr.bf16.mxu0 0
      %5039 = vmatmul.mubr.bf16.gmra.mrb[0].mxu0 %v4944
      %v5040 = vpop.f32.mrb[0].mxu0
      %v5041 = vadd.f32 0.0, %v5040
      %v5042 = vpop.f32.mrb[0].mxu0
      %v5043 = vpop.f32.mrb[0].mxu0
      %v5044 = vadd.f32 0.0, %v5043
      %v5045 = vpop.f32.mrb[0].mxu0
      %5046 = vmatprep.mubr.bf16.mxu0 0
      %5047 = vmatmul.mubr.bf16.gmra.mrb[0].mxu0 %v4946
      %v5048 = vpop.f32.mrb[0].mxu0
      %v5049 = vadd.f32 0.0, %v5048
      %v5050 = vpop.f32.mrb[0].mxu0
      %v5051 = vpop.f32.mrb[0].mxu0
      %v5052 = vadd.f32 0.0, %v5051
      %v5053 = vpop.f32.mrb[0].mxu0
      %5054 = vmatprep.mubr.bf16.mxu0 0
      %5055 = vmatmul.mubr.bf16.gmra.mrb[0].mxu0 %v4948
      %v5056 = vpop.f32.mrb[0].mxu0
      %v5057 = vadd.f32 0.0, %v5056
      %v5058 = vpop.f32.mrb[0].mxu0
      %v5059 = vpop.f32.mrb[0].mxu0
      %v5060 = vadd.f32 0.0, %v5059
      %v5061 = vpop.f32.mrb[0].mxu0
      %5062 = vmatprep.mubr.bf16.mxu0 0
      %5063 = vmatmul.mubr.bf16.gmra.mrb[0].mxu0 %v4950
      %v5064 = vpop.f32.mrb[0].mxu0
      %v5065 = vadd.f32 0.0, %v5064
      %v5066 = vpop.f32.mrb[0].mxu0
      %v5067 = vpop.f32.mrb[0].mxu0
      %v5068 = vadd.f32 0.0, %v5067
      %v5069 = vpop.f32.mrb[0].mxu0
      %5070 = vmatprep.mubr.bf16.mxu0 0
      %5071 = vmatmul.mubr.bf16.gmra.mrb[0].mxu0 %v4952
      %v5072 = vpop.f32.mrb[0].mxu0
      %v5073 = vadd.f32 0.0, %v5072
      %v5074 = vpop.f32.mrb[0].mxu0
      %v5075 = vpop.f32.mrb[0].mxu0
      %v5076 = vadd.f32 0.0, %v5075
      %v5077 = vpop.f32.mrb[0].mxu0
      %5078 = vdwg.mxu0
      %v5079 = vadd.f32 %v4887, %v5041
      %v5080 = vadd.f32 %v4888, %v5044
      %v5081 = vadd.f32 %v4889, %v5049
      %v5082 = vadd.f32 %v4890, %v5052
      %v5083 = vadd.f32 %v4891, %v5057
      %v5084 = vadd.f32 %v4892, %v5060
      %v5085 = vadd.f32 %v4893, %v5065
      %v5086 = vadd.f32 %v4894, %v5068
      %v5087 = vadd.f32 %v4895, %v5073
      %v5088 = vadd.f32 %v4896, %v5076
      %v5089 = vld [vmem:[#allocation2 + $0x2c] sm:$0x3]
      %v5090 = vld [vmem:[#allocation3 + $0x2c] sm:$0x3]
      %s5091 = scalar_lea.vmem %s6, 256
      %v5092 = vld [vmem:[%s5091] sm:$0xf]
      %v5093 = vld [vmem:[%s5091 + $0x4] sm:$0xf]
      %v5094 = vld [vmem:[%s5091 + $0x8] sm:$0xf]
      %v5095 = vld [vmem:[%s5091 + $0xc] sm:$0xf]
      %v5096 = vld [vmem:[%s5091 + $0x10] sm:$0xf]
      %v5097 = vld [vmem:[%s5091 + $0x14] sm:$0xf]
      %v5098 = vld [vmem:[%s5091 + $0x18] sm:$0xf]
      %v5099 = vld [vmem:[%s5091 + $0x1c] sm:$0xf]
      %v5100 = vld [vmem:[%s5091 + $0x20] sm:$0xf]
      %v5101 = vld [vmem:[%s5091 + $0x24] sm:$0xf]
      %v5102 = vld [vmem:[%s5091 + $0x28] sm:$0xf]
      %v5103 = vld [vmem:[%s5091 + $0x2c] sm:$0xf]
      %v5104 = vld [vmem:[%s5091 + $0x30] sm:$0xf]
      %v5105 = vld [vmem:[%s5091 + $0x34] sm:$0xf]
      %v5106 = vld [vmem:[%s5091 + $0x38] sm:$0xf]
      %v5107 = vld [vmem:[%s5091 + $0x3c] sm:$0xf]
      %v5109 = vunpack.c.l.b16 %v5089
      %v5110 = vpack.c.b16 %v5109, %v5109
      %v5112 = vshrl.u32 %v4744, 16
      %v5114 = vrot.slane %v5112, 1
      %v5115 = vshll.u32 %v4744, 16
      %v5117 = vrot.slane %v5115, 2
      %v5118 = vor.u32 %v5114, %v5117
      %v5120 = vshrl.u32 %v4745, 16
      %v5122 = vrot.slane %v5120, 1
      %v5123 = vshll.u32 %v4745, 16
      %v5125 = vrot.slane %v5123, 2
      %v5126 = vor.u32 %v5122, %v5125
      %v5127 = vsel %vm1613, %v5118, %v5126
      %v5129 = vshrl.u32 %v4746, 16
      %v5131 = vrot.slane %v5129, 1
      %v5132 = vshll.u32 %v4746, 16
      %v5134 = vrot.slane %v5132, 2
      %v5135 = vor.u32 %v5131, %v5134
      %v5136 = vsel %vm1613, %v5126, %v5135
      %v5138 = vshrl.u32 %v4747, 16
      %v5140 = vrot.slane %v5138, 1
      %v5141 = vshll.u32 %v4747, 16
      %v5143 = vrot.slane %v5141, 2
      %v5144 = vor.u32 %v5140, %v5143
      %v5145 = vsel %vm1613, %v5135, %v5144
      %v5147 = vshrl.u32 %v4748, 16
      %v5149 = vrot.slane %v5147, 1
      %v5150 = vshll.u32 %v4748, 16
      %v5152 = vrot.slane %v5150, 2
      %v5153 = vor.u32 %v5149, %v5152
      %v5154 = vsel %vm1613, %v5144, %v5153
      %v5156 = vshrl.u32 %v5110, 16
      %v5158 = vrot.slane %v5156, 1
      %v5159 = vshll.u32 %v5110, 16
      %v5161 = vrot.slane %v5159, 2
      %v5162 = vor.u32 %v5158, %v5161
      %v5163 = vsel %vm1613, %v5153, %v5162
      %v5185 = vunpack.c.l.b16 %v5092
      %v5186 = vunpack.c.l.b16 %v5093
      %v5187 = vunpack.c.l.b16 %v5094
      %v5188 = vunpack.c.l.b16 %v5095
      %v5189 = vunpack.c.l.b16 %v5096
      %v5190 = vunpack.c.l.b16 %v5097
      %v5191 = vunpack.c.l.b16 %v5098
      %v5192 = vunpack.c.l.b16 %v5099
      %v5193 = vunpack.c.l.b16 %v5100
      %v5194 = vunpack.c.l.b16 %v5101
      %v5195 = vunpack.c.l.b16 %v5102
      %v5196 = vunpack.c.l.b16 %v5103
      %v5197 = vunpack.c.l.b16 %v5104
      %v5198 = vunpack.c.l.b16 %v5105
      %v5199 = vunpack.c.l.b16 %v5106
      %v5200 = vunpack.c.l.b16 %v5107
      %v5201 = vpack.c.b16 %v5186, %v5185
      %v5202 = vpack.c.b16 %v5188, %v5187
      %v5203 = vpack.c.b16 %v5190, %v5189
      %v5204 = vpack.c.b16 %v5192, %v5191
      %v5205 = vpack.c.b16 %v5194, %v5193
      %v5206 = vpack.c.b16 %v5196, %v5195
      %v5207 = vpack.c.b16 %v5198, %v5197
      %v5208 = vpack.c.b16 %v5200, %v5199
      %5217 = vmatprep.subr.bf16.mxu0 0
      %5218 = vmatpush1.bf16.msra.mxu0 %v5201
      %5219 = vmatprep.subr.bf16.mxu0 0
      %5220 = vmatpush1.bf16.msra.mxu0 %v5202
      %5221 = vmatprep.subr.bf16.mxu0 0
      %5222 = vmatpush1.bf16.msra.mxu0 %v5203
      %5223 = vmatprep.subr.bf16.mxu0 0
      %5224 = vmatpush1.bf16.msra.mxu0 %v5204
      %5225 = vmatprep.subr.bf16.mxu0 0
      %5226 = vmatpush1.bf16.msra.mxu0 %v5205
      %5227 = vmatprep.subr.bf16.mxu0 0
      %5228 = vmatpush1.bf16.msra.mxu0 %v5206
      %5229 = vmatprep.subr.bf16.mxu0 0
      %5230 = vmatpush1.bf16.msra.mxu0 %v5207
      %5231 = vmatprep.subr.bf16.mxu0 0
      %5232 = vmatpush1.bf16.msra.mxu0 %v5208
      %5233 = vmatprep.subr.bf16.mxu0 0
      %5234 = vmatpush1.bf16.msra.mxu0 0
      %5235 = vmatprep.subr.bf16.mxu0 0
      %5236 = vmatpush1.bf16.msra.mxu0 0
      %5237 = vmatprep.subr.bf16.mxu0 0
      %5238 = vmatpush1.bf16.msra.mxu0 0
      %5239 = vmatprep.subr.bf16.mxu0 0
      %5240 = vmatpush1.bf16.msra.mxu0 0
      %5241 = vmatprep.subr.bf16.mxu0 0
      %5242 = vmatpush1.bf16.msra.mxu0 0
      %5243 = vmatprep.subr.bf16.mxu0 0
      %5244 = vmatpush1.bf16.msra.mxu0 0
      %5245 = vmatprep.subr.bf16.mxu0 0
      %5246 = vmatpush1.bf16.msra.mxu0 0
      %5247 = vmatprep.subr.bf16.mxu0 0
      %5248 = vmatpush1.bf16.msra.mxu0 0
      %5249 = vmatprep.mubr.bf16.mxu0 0
      %5250 = vmatmul.mubr.bf16.gmra.mrb[0].mxu0 %v5127
      %v5251 = vpop.f32.mrb[0].mxu0
      %v5252 = vadd.f32 0.0, %v5251
      %v5253 = vpop.f32.mrb[0].mxu0
      %v5254 = vpop.f32.mrb[0].mxu0
      %v5255 = vadd.f32 0.0, %v5254
      %v5256 = vpop.f32.mrb[0].mxu0
      %5257 = vmatprep.mubr.bf16.mxu0 0
      %5258 = vmatmul.mubr.bf16.gmra.mrb[0].mxu0 %v5136
      %v5259 = vpop.f32.mrb[0].mxu0
      %v5260 = vadd.f32 0.0, %v5259
      %v5261 = vpop.f32.mrb[0].mxu0
      %v5262 = vpop.f32.mrb[0].mxu0
      %v5263 = vadd.f32 0.0, %v5262
      %v5264 = vpop.f32.mrb[0].mxu0
      %5265 = vmatprep.mubr.bf16.mxu0 0
      %5266 = vmatmul.mubr.bf16.gmra.mrb[0].mxu0 %v5145
      %v5267 = vpop.f32.mrb[0].mxu0
      %v5268 = vadd.f32 0.0, %v5267
      %v5269 = vpop.f32.mrb[0].mxu0
      %v5270 = vpop.f32.mrb[0].mxu0
      %v5271 = vadd.f32 0.0, %v5270
      %v5272 = vpop.f32.mrb[0].mxu0
      %5273 = vmatprep.mubr.bf16.mxu0 0
      %5274 = vmatmul.mubr.bf16.gmra.mrb[0].mxu0 %v5154
      %v5275 = vpop.f32.mrb[0].mxu0
      %v5276 = vadd.f32 0.0, %v5275
      %v5277 = vpop.f32.mrb[0].mxu0
      %v5278 = vpop.f32.mrb[0].mxu0
      %v5279 = vadd.f32 0.0, %v5278
      %v5280 = vpop.f32.mrb[0].mxu0
      %5281 = vmatprep.mubr.bf16.mxu0 0
      %5282 = vmatmul.mubr.bf16.gmra.mrb[0].mxu0 %v5163
      %v5283 = vpop.f32.mrb[0].mxu0
      %v5284 = vadd.f32 0.0, %v5283
      %v5285 = vpop.f32.mrb[0].mxu0
      %v5286 = vpop.f32.mrb[0].mxu0
      %v5287 = vadd.f32 0.0, %v5286
      %v5288 = vpop.f32.mrb[0].mxu0
      %5289 = vdwg.mxu0
      %v5290 = vadd.f32 %v5079, %v5252
      %v5291 = vadd.f32 %v5080, %v5255
      %v5292 = vadd.f32 %v5081, %v5260
      %v5293 = vadd.f32 %v5082, %v5263
      %v5294 = vadd.f32 %v5083, %v5268
      %v5295 = vadd.f32 %v5084, %v5271
      %v5296 = vadd.f32 %v5085, %v5276
      %v5297 = vadd.f32 %v5086, %v5279
      %v5298 = vadd.f32 %v5087, %v5284
      %v5299 = vadd.f32 %v5088, %v5287
      %s5300 = scalar_lea.vmem %s7, 256
      %v5301 = vld [vmem:[%s5300] sm:$0xf]
      %v5302 = vld [vmem:[%s5300 + $0x4] sm:$0xf]
      %v5303 = vld [vmem:[%s5300 + $0x8] sm:$0xf]
      %v5304 = vld [vmem:[%s5300 + $0xc] sm:$0xf]
      %v5305 = vld [vmem:[%s5300 + $0x10] sm:$0xf]
      %v5306 = vld [vmem:[%s5300 + $0x14] sm:$0xf]
      %v5307 = vld [vmem:[%s5300 + $0x18] sm:$0xf]
      %v5308 = vld [vmem:[%s5300 + $0x1c] sm:$0xf]
      %v5309 = vld [vmem:[%s5300 + $0x20] sm:$0xf]
      %v5310 = vld [vmem:[%s5300 + $0x24] sm:$0xf]
      %v5311 = vld [vmem:[%s5300 + $0x28] sm:$0xf]
      %v5312 = vld [vmem:[%s5300 + $0x2c] sm:$0xf]
      %v5313 = vld [vmem:[%s5300 + $0x30] sm:$0xf]
      %v5314 = vld [vmem:[%s5300 + $0x34] sm:$0xf]
      %v5315 = vld [vmem:[%s5300 + $0x38] sm:$0xf]
      %v5316 = vld [vmem:[%s5300 + $0x3c] sm:$0xf]
      %v5318 = vunpack.c.l.b16 %v5090
      %v5319 = vpack.c.b16 %v5318, %v5318
      %v5321 = vshrl.u32 %v4936, 16
      %v5323 = vrot.slane %v5321, 1
      %v5324 = vshll.u32 %v4936, 16
      %v5326 = vrot.slane %v5324, 2
      %v5327 = vor.u32 %v5323, %v5326
      %v5329 = vshrl.u32 %v4937, 16
      %v5331 = vrot.slane %v5329, 1
      %v5332 = vshll.u32 %v4937, 16
      %v5334 = vrot.slane %v5332, 2
      %v5335 = vor.u32 %v5331, %v5334
      %v5336 = vsel %vm1613, %v5327, %v5335
      %v5338 = vshrl.u32 %v4938, 16
      %v5340 = vrot.slane %v5338, 1
      %v5341 = vshll.u32 %v4938, 16
      %v5343 = vrot.slane %v5341, 2
      %v5344 = vor.u32 %v5340, %v5343
      %v5345 = vsel %vm1613, %v5335, %v5344
      %v5347 = vshrl.u32 %v4939, 16
      %v5349 = vrot.slane %v5347, 1
      %v5350 = vshll.u32 %v4939, 16
      %v5352 = vrot.slane %v5350, 2
      %v5353 = vor.u32 %v5349, %v5352
      %v5354 = vsel %vm1613, %v5344, %v5353
      %v5356 = vshrl.u32 %v4940, 16
      %v5358 = vrot.slane %v5356, 1
      %v5359 = vshll.u32 %v4940, 16
      %v5361 = vrot.slane %v5359, 2
      %v5362 = vor.u32 %v5358, %v5361
      %v5363 = vsel %vm1613, %v5353, %v5362
      %v5365 = vshrl.u32 %v5319, 16
      %v5367 = vrot.slane %v5365, 1
      %v5368 = vshll.u32 %v5319, 16
      %v5370 = vrot.slane %v5368, 2
      %v5371 = vor.u32 %v5367, %v5370
      %v5372 = vsel %vm1613, %v5362, %v5371
      %v5394 = vunpack.c.l.b16 %v5301
      %v5395 = vunpack.c.l.b16 %v5302
      %v5396 = vunpack.c.l.b16 %v5303
      %v5397 = vunpack.c.l.b16 %v5304
      %v5398 = vunpack.c.l.b16 %v5305
      %v5399 = vunpack.c.l.b16 %v5306
      %v5400 = vunpack.c.l.b16 %v5307
      %v5401 = vunpack.c.l.b16 %v5308
      %v5402 = vunpack.c.l.b16 %v5309
      %v5403 = vunpack.c.l.b16 %v5310
      %v5404 = vunpack.c.l.b16 %v5311
      %v5405 = vunpack.c.l.b16 %v5312
      %v5406 = vunpack.c.l.b16 %v5313
      %v5407 = vunpack.c.l.b16 %v5314
      %v5408 = vunpack.c.l.b16 %v5315
      %v5409 = vunpack.c.l.b16 %v5316
      %v5410 = vpack.c.b16 %v5395, %v5394
      %v5411 = vpack.c.b16 %v5397, %v5396
      %v5412 = vpack.c.b16 %v5399, %v5398
      %v5413 = vpack.c.b16 %v5401, %v5400
      %v5414 = vpack.c.b16 %v5403, %v5402
      %v5415 = vpack.c.b16 %v5405, %v5404
      %v5416 = vpack.c.b16 %v5407, %v5406
      %v5417 = vpack.c.b16 %v5409, %v5408
      %5426 = vmatprep.subr.bf16.mxu0 0
      %5427 = vmatpush1.bf16.msra.mxu0 %v5410
      %5428 = vmatprep.subr.bf16.mxu0 0
      %5429 = vmatpush1.bf16.msra.mxu0 %v5411
      %5430 = vmatprep.subr.bf16.mxu0 0
      %5431 = vmatpush1.bf16.msra.mxu0 %v5412
      %5432 = vmatprep.subr.bf16.mxu0 0
      %5433 = vmatpush1.bf16.msra.mxu0 %v5413
      %5434 = vmatprep.subr.bf16.mxu0 0
      %5435 = vmatpush1.bf16.msra.mxu0 %v5414
      %5436 = vmatprep.subr.bf16.mxu0 0
      %5437 = vmatpush1.bf16.msra.mxu0 %v5415
      %5438 = vmatprep.subr.bf16.mxu0 0
      %5439 = vmatpush1.bf16.msra.mxu0 %v5416
      %5440 = vmatprep.subr.bf16.mxu0 0
      %5441 = vmatpush1.bf16.msra.mxu0 %v5417
      %5442 = vmatprep.subr.bf16.mxu0 0
      %5443 = vmatpush1.bf16.msra.mxu0 0
      %5444 = vmatprep.subr.bf16.mxu0 0
      %5445 = vmatpush1.bf16.msra.mxu0 0
      %5446 = vmatprep.subr.bf16.mxu0 0
      %5447 = vmatpush1.bf16.msra.mxu0 0
      %5448 = vmatprep.subr.bf16.mxu0 0
      %5449 = vmatpush1.bf16.msra.mxu0 0
      %5450 = vmatprep.subr.bf16.mxu0 0
      %5451 = vmatpush1.bf16.msra.mxu0 0
      %5452 = vmatprep.subr.bf16.mxu0 0
      %5453 = vmatpush1.bf16.msra.mxu0 0
      %5454 = vmatprep.subr.bf16.mxu0 0
      %5455 = vmatpush1.bf16.msra.mxu0 0
      %5456 = vmatprep.subr.bf16.mxu0 0
      %5457 = vmatpush1.bf16.msra.mxu0 0
      %5458 = vmatprep.mubr.bf16.mxu0 0
      %5459 = vmatmul.mubr.bf16.gmra.mrb[0].mxu0 %v5336
      %v5460 = vpop.f32.mrb[0].mxu0
      %v5461 = vadd.f32 0.0, %v5460
      %v5462 = vpop.f32.mrb[0].mxu0
      %v5463 = vpop.f32.mrb[0].mxu0
      %v5464 = vadd.f32 0.0, %v5463
      %v5465 = vpop.f32.mrb[0].mxu0
      %5466 = vmatprep.mubr.bf16.mxu0 0
      %5467 = vmatmul.mubr.bf16.gmra.mrb[0].mxu0 %v5345
      %v5468 = vpop.f32.mrb[0].mxu0
      %v5469 = vadd.f32 0.0, %v5468
      %v5470 = vpop.f32.mrb[0].mxu0
      %v5471 = vpop.f32.mrb[0].mxu0
      %v5472 = vadd.f32 0.0, %v5471
      %v5473 = vpop.f32.mrb[0].mxu0
      %5474 = vmatprep.mubr.bf16.mxu0 0
      %5475 = vmatmul.mubr.bf16.gmra.mrb[0].mxu0 %v5354
      %v5476 = vpop.f32.mrb[0].mxu0
      %v5477 = vadd.f32 0.0, %v5476
      %v5478 = vpop.f32.mrb[0].mxu0
      %v5479 = vpop.f32.mrb[0].mxu0
      %v5480 = vadd.f32 0.0, %v5479
      %v5481 = vpop.f32.mrb[0].mxu0
      %5482 = vmatprep.mubr.bf16.mxu0 0
      %5483 = vmatmul.mubr.bf16.gmra.mrb[0].mxu0 %v5363
      %v5484 = vpop.f32.mrb[0].mxu0
      %v5485 = vadd.f32 0.0, %v5484
      %v5486 = vpop.f32.mrb[0].mxu0
      %v5487 = vpop.f32.mrb[0].mxu0
      %v5488 = vadd.f32 0.0, %v5487
      %v5489 = vpop.f32.mrb[0].mxu0
      %5490 = vmatprep.mubr.bf16.mxu0 0
      %5491 = vmatmul.mubr.bf16.gmra.mrb[0].mxu0 %v5372
      %v5492 = vpop.f32.mrb[0].mxu0
      %v5493 = vadd.f32 0.0, %v5492
      %v5494 = vpop.f32.mrb[0].mxu0
      %v5495 = vpop.f32.mrb[0].mxu0
      %v5496 = vadd.f32 0.0, %v5495
      %v5497 = vpop.f32.mrb[0].mxu0
      %5498 = vdwg.mxu0
      %v5499 = vadd.f32 %v5290, %v5461
      %v5500 = vadd.f32 %v5291, %v5464
      %v5501 = vadd.f32 %v5292, %v5469
      %v5502 = vadd.f32 %v5293, %v5472
      %v5503 = vadd.f32 %v5294, %v5477
      %v5504 = vadd.f32 %v5295, %v5480
      %v5505 = vadd.f32 %v5296, %v5485
      %v5506 = vadd.f32 %v5297, %v5488
      %v5507 = vadd.f32 %v5298, %v5493
      %v5508 = vadd.f32 %v5299, %v5496
      %v5509 = vld [vmem:[#allocation2 + $0x4] sm:$0xc]
      %v5510 = vld [vmem:[#allocation3 + $0x4] sm:$0xc]
      %s5511 = scalar_lea.vmem %s6, 320
      %v5512 = vld [vmem:[%s5511] sm:$0xf]
      %v5513 = vld [vmem:[%s5511 + $0x4] sm:$0xf]
      %v5514 = vld [vmem:[%s5511 + $0x8] sm:$0xf]
      %v5515 = vld [vmem:[%s5511 + $0xc] sm:$0xf]
      %v5516 = vld [vmem:[%s5511 + $0x10] sm:$0xf]
      %v5517 = vld [vmem:[%s5511 + $0x14] sm:$0xf]
      %v5518 = vld [vmem:[%s5511 + $0x18] sm:$0xf]
      %v5519 = vld [vmem:[%s5511 + $0x1c] sm:$0xf]
      %v5520 = vld [vmem:[%s5511 + $0x20] sm:$0xf]
      %v5521 = vld [vmem:[%s5511 + $0x24] sm:$0xf]
      %v5522 = vld [vmem:[%s5511 + $0x28] sm:$0xf]
      %v5523 = vld [vmem:[%s5511 + $0x2c] sm:$0xf]
      %v5524 = vld [vmem:[%s5511 + $0x30] sm:$0xf]
      %v5525 = vld [vmem:[%s5511 + $0x34] sm:$0xf]
      %v5526 = vld [vmem:[%s5511 + $0x38] sm:$0xf]
      %v5527 = vld [vmem:[%s5511 + $0x3c] sm:$0xf]
      %v5529 = vunpack.c.l.b16 %v5509
      %v5530 = vpack.c.b16 %v4734, %v5529
      %v5531 = vrot.slane %v5530, 2
      %v5532 = vrot.slane %v4745, 2
      %v5533 = vsel %vm2754, %v5531, %v5532
      %v5534 = vrot.slane %v4746, 2
      %v5535 = vsel %vm2754, %v5532, %v5534
      %v5536 = vrot.slane %v4747, 2
      %v5537 = vsel %vm2754, %v5534, %v5536
      %v5538 = vrot.slane %v4748, 2
      %v5539 = vsel %vm2754, %v5536, %v5538
      %v5540 = vrot.slane %v5110, 2
      %v5541 = vsel %vm2754, %v5538, %v5540
      %v5563 = vunpack.c.l.b16 %v5512
      %v5564 = vunpack.c.l.b16 %v5513
      %v5565 = vunpack.c.l.b16 %v5514
      %v5566 = vunpack.c.l.b16 %v5515
      %v5567 = vunpack.c.l.b16 %v5516
      %v5568 = vunpack.c.l.b16 %v5517
      %v5569 = vunpack.c.l.b16 %v5518
      %v5570 = vunpack.c.l.b16 %v5519
      %v5571 = vunpack.c.l.b16 %v5520
      %v5572 = vunpack.c.l.b16 %v5521
      %v5573 = vunpack.c.l.b16 %v5522
      %v5574 = vunpack.c.l.b16 %v5523
      %v5575 = vunpack.c.l.b16 %v5524
      %v5576 = vunpack.c.l.b16 %v5525
      %v5577 = vunpack.c.l.b16 %v5526
      %v5578 = vunpack.c.l.b16 %v5527
      %v5579 = vpack.c.b16 %v5564, %v5563
      %v5580 = vpack.c.b16 %v5566, %v5565
      %v5581 = vpack.c.b16 %v5568, %v5567
      %v5582 = vpack.c.b16 %v5570, %v5569
      %v5583 = vpack.c.b16 %v5572, %v5571
      %v5584 = vpack.c.b16 %v5574, %v5573
      %v5585 = vpack.c.b16 %v5576, %v5575
      %v5586 = vpack.c.b16 %v5578, %v5577
      %5595 = vmatprep.subr.bf16.mxu0 0
      %5596 = vmatpush1.bf16.msra.mxu0 %v5579
      %5597 = vmatprep.subr.bf16.mxu0 0
      %5598 = vmatpush1.bf16.msra.mxu0 %v5580
      %5599 = vmatprep.subr.bf16.mxu0 0
      %5600 = vmatpush1.bf16.msra.mxu0 %v5581
      %5601 = vmatprep.subr.bf16.mxu0 0
      %5602 = vmatpush1.bf16.msra.mxu0 %v5582
      %5603 = vmatprep.subr.bf16.mxu0 0
      %5604 = vmatpush1.bf16.msra.mxu0 %v5583
      %5605 = vmatprep.subr.bf16.mxu0 0
      %5606 = vmatpush1.bf16.msra.mxu0 %v5584
      %5607 = vmatprep.subr.bf16.mxu0 0
      %5608 = vmatpush1.bf16.msra.mxu0 %v5585
      %5609 = vmatprep.subr.bf16.mxu0 0
      %5610 = vmatpush1.bf16.msra.mxu0 %v5586
      %5611 = vmatprep.subr.bf16.mxu0 0
      %5612 = vmatpush1.bf16.msra.mxu0 0
      %5613 = vmatprep.subr.bf16.mxu0 0
      %5614 = vmatpush1.bf16.msra.mxu0 0
      %5615 = vmatprep.subr.bf16.mxu0 0
      %5616 = vmatpush1.bf16.msra.mxu0 0
      %5617 = vmatprep.subr.bf16.mxu0 0
      %5618 = vmatpush1.bf16.msra.mxu0 0
      %5619 = vmatprep.subr.bf16.mxu0 0
      %5620 = vmatpush1.bf16.msra.mxu0 0
      %5621 = vmatprep.subr.bf16.mxu0 0
      %5622 = vmatpush1.bf16.msra.mxu0 0
      %5623 = vmatprep.subr.bf16.mxu0 0
      %5624 = vmatpush1.bf16.msra.mxu0 0
      %5625 = vmatprep.subr.bf16.mxu0 0
      %5626 = vmatpush1.bf16.msra.mxu0 0
      %5627 = vmatprep.mubr.bf16.mxu0 0
      %5628 = vmatmul.mubr.bf16.gmra.mrb[0].mxu0 %v5533
      %v5629 = vpop.f32.mrb[0].mxu0
      %v5630 = vadd.f32 0.0, %v5629
      %v5631 = vpop.f32.mrb[0].mxu0
      %v5632 = vpop.f32.mrb[0].mxu0
      %v5633 = vadd.f32 0.0, %v5632
      %v5634 = vpop.f32.mrb[0].mxu0
      %5635 = vmatprep.mubr.bf16.mxu0 0
      %5636 = vmatmul.mubr.bf16.gmra.mrb[0].mxu0 %v5535
      %v5637 = vpop.f32.mrb[0].mxu0
      %v5638 = vadd.f32 0.0, %v5637
      %v5639 = vpop.f32.mrb[0].mxu0
      %v5640 = vpop.f32.mrb[0].mxu0
      %v5641 = vadd.f32 0.0, %v5640
      %v5642 = vpop.f32.mrb[0].mxu0
      %5643 = vmatprep.mubr.bf16.mxu0 0
      %5644 = vmatmul.mubr.bf16.gmra.mrb[0].mxu0 %v5537
      %v5645 = vpop.f32.mrb[0].mxu0
      %v5646 = vadd.f32 0.0, %v5645
      %v5647 = vpop.f32.mrb[0].mxu0
      %v5648 = vpop.f32.mrb[0].mxu0
      %v5649 = vadd.f32 0.0, %v5648
      %v5650 = vpop.f32.mrb[0].mxu0
      %5651 = vmatprep.mubr.bf16.mxu0 0
      %5652 = vmatmul.mubr.bf16.gmra.mrb[0].mxu0 %v5539
      %v5653 = vpop.f32.mrb[0].mxu0
      %v5654 = vadd.f32 0.0, %v5653
      %v5655 = vpop.f32.mrb[0].mxu0
      %v5656 = vpop.f32.mrb[0].mxu0
      %v5657 = vadd.f32 0.0, %v5656
      %v5658 = vpop.f32.mrb[0].mxu0
      %5659 = vmatprep.mubr.bf16.mxu0 0
      %5660 = vmatmul.mubr.bf16.gmra.mrb[0].mxu0 %v5541
      %v5661 = vpop.f32.mrb[0].mxu0
      %v5662 = vadd.f32 0.0, %v5661
      %v5663 = vpop.f32.mrb[0].mxu0
      %v5664 = vpop.f32.mrb[0].mxu0
      %v5665 = vadd.f32 0.0, %v5664
      %v5666 = vpop.f32.mrb[0].mxu0
      %5667 = vdwg.mxu0
      %v5668 = vadd.f32 %v5499, %v5630
      %v5669 = vadd.f32 %v5500, %v5633
      %v5670 = vadd.f32 %v5501, %v5638
      %v5671 = vadd.f32 %v5502, %v5641
      %v5672 = vadd.f32 %v5503, %v5646
      %v5673 = vadd.f32 %v5504, %v5649
      %v5674 = vadd.f32 %v5505, %v5654
      %v5675 = vadd.f32 %v5506, %v5657
      %v5676 = vadd.f32 %v5507, %v5662
      %v5677 = vadd.f32 %v5508, %v5665
      %s5678 = scalar_lea.vmem %s7, 320
      %v5679 = vld [vmem:[%s5678] sm:$0xf]
      %v5680 = vld [vmem:[%s5678 + $0x4] sm:$0xf]
      %v5681 = vld [vmem:[%s5678 + $0x8] sm:$0xf]
      %v5682 = vld [vmem:[%s5678 + $0xc] sm:$0xf]
      %v5683 = vld [vmem:[%s5678 + $0x10] sm:$0xf]
      %v5684 = vld [vmem:[%s5678 + $0x14] sm:$0xf]
      %v5685 = vld [vmem:[%s5678 + $0x18] sm:$0xf]
      %v5686 = vld [vmem:[%s5678 + $0x1c] sm:$0xf]
      %v5687 = vld [vmem:[%s5678 + $0x20] sm:$0xf]
      %v5688 = vld [vmem:[%s5678 + $0x24] sm:$0xf]
      %v5689 = vld [vmem:[%s5678 + $0x28] sm:$0xf]
      %v5690 = vld [vmem:[%s5678 + $0x2c] sm:$0xf]
      %v5691 = vld [vmem:[%s5678 + $0x30] sm:$0xf]
      %v5692 = vld [vmem:[%s5678 + $0x34] sm:$0xf]
      %v5693 = vld [vmem:[%s5678 + $0x38] sm:$0xf]
      %v5694 = vld [vmem:[%s5678 + $0x3c] sm:$0xf]
      %v5696 = vunpack.c.l.b16 %v5510
      %v5697 = vpack.c.b16 %v4926, %v5696
      %v5698 = vrot.slane %v5697, 2
      %v5699 = vrot.slane %v4937, 2
      %v5700 = vsel %vm2754, %v5698, %v5699
      %v5701 = vrot.slane %v4938, 2
      %v5702 = vsel %vm2754, %v5699, %v5701
      %v5703 = vrot.slane %v4939, 2
      %v5704 = vsel %vm2754, %v5701, %v5703
      %v5705 = vrot.slane %v4940, 2
      %v5706 = vsel %vm2754, %v5703, %v5705
      %v5707 = vrot.slane %v5319, 2
      %v5708 = vsel %vm2754, %v5705, %v5707
      %v5730 = vunpack.c.l.b16 %v5679
      %v5731 = vunpack.c.l.b16 %v5680
      %v5732 = vunpack.c.l.b16 %v5681
      %v5733 = vunpack.c.l.b16 %v5682
      %v5734 = vunpack.c.l.b16 %v5683
      %v5735 = vunpack.c.l.b16 %v5684
      %v5736 = vunpack.c.l.b16 %v5685
      %v5737 = vunpack.c.l.b16 %v5686
      %v5738 = vunpack.c.l.b16 %v5687
      %v5739 = vunpack.c.l.b16 %v5688
      %v5740 = vunpack.c.l.b16 %v5689
      %v5741 = vunpack.c.l.b16 %v5690
      %v5742 = vunpack.c.l.b16 %v5691
      %v5743 = vunpack.c.l.b16 %v5692
      %v5744 = vunpack.c.l.b16 %v5693
      %v5745 = vunpack.c.l.b16 %v5694
      %v5746 = vpack.c.b16 %v5731, %v5730
      %v5747 = vpack.c.b16 %v5733, %v5732
      %v5748 = vpack.c.b16 %v5735, %v5734
      %v5749 = vpack.c.b16 %v5737, %v5736
      %v5750 = vpack.c.b16 %v5739, %v5738
      %v5751 = vpack.c.b16 %v5741, %v5740
      %v5752 = vpack.c.b16 %v5743, %v5742
      %v5753 = vpack.c.b16 %v5745, %v5744
      %5762 = vmatprep.subr.bf16.mxu0 0
      %5763 = vmatpush1.bf16.msra.mxu0 %v5746
      %5764 = vmatprep.subr.bf16.mxu0 0
      %5765 = vmatpush1.bf16.msra.mxu0 %v5747
      %5766 = vmatprep.subr.bf16.mxu0 0
      %5767 = vmatpush1.bf16.msra.mxu0 %v5748
      %5768 = vmatprep.subr.bf16.mxu0 0
      %5769 = vmatpush1.bf16.msra.mxu0 %v5749
      %5770 = vmatprep.subr.bf16.mxu0 0
      %5771 = vmatpush1.bf16.msra.mxu0 %v5750
      %5772 = vmatprep.subr.bf16.mxu0 0
      %5773 = vmatpush1.bf16.msra.mxu0 %v5751
      %5774 = vmatprep.subr.bf16.mxu0 0
      %5775 = vmatpush1.bf16.msra.mxu0 %v5752
      %5776 = vmatprep.subr.bf16.mxu0 0
      %5777 = vmatpush1.bf16.msra.mxu0 %v5753
      %5778 = vmatprep.subr.bf16.mxu0 0
      %5779 = vmatpush1.bf16.msra.mxu0 0
      %5780 = vmatprep.subr.bf16.mxu0 0
      %5781 = vmatpush1.bf16.msra.mxu0 0
      %5782 = vmatprep.subr.bf16.mxu0 0
      %5783 = vmatpush1.bf16.msra.mxu0 0
      %5784 = vmatprep.subr.bf16.mxu0 0
      %5785 = vmatpush1.bf16.msra.mxu0 0
      %5786 = vmatprep.subr.bf16.mxu0 0
      %5787 = vmatpush1.bf16.msra.mxu0 0
      %5788 = vmatprep.subr.bf16.mxu0 0
      %5789 = vmatpush1.bf16.msra.mxu0 0
      %5790 = vmatprep.subr.bf16.mxu0 0
      %5791 = vmatpush1.bf16.msra.mxu0 0
      %5792 = vmatprep.subr.bf16.mxu0 0
      %5793 = vmatpush1.bf16.msra.mxu0 0
      %5794 = vmatprep.mubr.bf16.mxu0 0
      %5795 = vmatmul.mubr.bf16.gmra.mrb[0].mxu0 %v5700
      %v5796 = vpop.f32.mrb[0].mxu0
      %v5797 = vadd.f32 0.0, %v5796
      %v5798 = vpop.f32.mrb[0].mxu0
      %v5799 = vpop.f32.mrb[0].mxu0
      %v5800 = vadd.f32 0.0, %v5799
      %v5801 = vpop.f32.mrb[0].mxu0
      %5802 = vmatprep.mubr.bf16.mxu0 0
      %5803 = vmatmul.mubr.bf16.gmra.mrb[0].mxu0 %v5702
      %v5804 = vpop.f32.mrb[0].mxu0
      %v5805 = vadd.f32 0.0, %v5804
      %v5806 = vpop.f32.mrb[0].mxu0
      %v5807 = vpop.f32.mrb[0].mxu0
      %v5808 = vadd.f32 0.0, %v5807
      %v5809 = vpop.f32.mrb[0].mxu0
      %5810 = vmatprep.mubr.bf16.mxu0 0
      %5811 = vmatmul.mubr.bf16.gmra.mrb[0].mxu0 %v5704
      %v5812 = vpop.f32.mrb[0].mxu0
      %v5813 = vadd.f32 0.0, %v5812
      %v5814 = vpop.f32.mrb[0].mxu0
      %v5815 = vpop.f32.mrb[0].mxu0
      %v5816 = vadd.f32 0.0, %v5815
      %v5817 = vpop.f32.mrb[0].mxu0
      %5818 = vmatprep.mubr.bf16.mxu0 0
      %5819 = vmatmul.mubr.bf16.gmra.mrb[0].mxu0 %v5706
      %v5820 = vpop.f32.mrb[0].mxu0
      %v5821 = vadd.f32 0.0, %v5820
      %v5822 = vpop.f32.mrb[0].mxu0
      %v5823 = vpop.f32.mrb[0].mxu0
      %v5824 = vadd.f32 0.0, %v5823
      %v5825 = vpop.f32.mrb[0].mxu0
      %5826 = vmatprep.mubr.bf16.mxu0 0
      %5827 = vmatmul.mubr.bf16.gmra.mrb[0].mxu0 %v5708
      %v5828 = vpop.f32.mrb[0].mxu0
      %v5829 = vadd.f32 0.0, %v5828
      %v5830 = vpop.f32.mrb[0].mxu0
      %v5831 = vpop.f32.mrb[0].mxu0
      %v5832 = vadd.f32 0.0, %v5831
      %v5833 = vpop.f32.mrb[0].mxu0
      %5834 = vdwg.mxu0
      %v5835 = vadd.f32 %v5668, %v5797
      %v5836 = vadd.f32 %v5669, %v5800
      %v5837 = vadd.f32 %v5670, %v5805
      %v5838 = vadd.f32 %v5671, %v5808
      %v5839 = vadd.f32 %v5672, %v5813
      %v5840 = vadd.f32 %v5673, %v5816
      %v5841 = vadd.f32 %v5674, %v5821
      %v5842 = vadd.f32 %v5675, %v5824
      %v5843 = vadd.f32 %v5676, %v5829
      %v5844 = vadd.f32 %v5677, %v5832
      %v5845 = vld [vmem:[#allocation2 + $0x8] sm:$0xc]
      %v5846 = vld [vmem:[#allocation2 + $0xc] sm:$0xf]
      %v5847 = vld [vmem:[#allocation2 + $0x10] sm:$0xf]
      %v5848 = vld [vmem:[#allocation2 + $0x14] sm:$0xf]
      %v5849 = vld [vmem:[#allocation2 + $0x18] sm:$0xf]
      %v5850 = vld [vmem:[#allocation2 + $0x1c] sm:$0xf]
      %v5851 = vld [vmem:[#allocation2 + $0x20] sm:$0xf]
      %v5852 = vld [vmem:[#allocation2 + $0x24] sm:$0xf]
      %v5853 = vld [vmem:[#allocation2 + $0x28] sm:$0xf]
      %v5854 = vld [vmem:[#allocation2 + $0x2c] sm:$0xf]
      %v5855 = vld [vmem:[#allocation2 + $0x30] sm:$0x3]
      %v5856 = vld [vmem:[#allocation3 + $0x8] sm:$0xc]
      %v5857 = vld [vmem:[#allocation3 + $0xc] sm:$0xf]
      %v5858 = vld [vmem:[#allocation3 + $0x10] sm:$0xf]
      %v5859 = vld [vmem:[#allocation3 + $0x14] sm:$0xf]
      %v5860 = vld [vmem:[#allocation3 + $0x18] sm:$0xf]
      %v5861 = vld [vmem:[#allocation3 + $0x1c] sm:$0xf]
      %v5862 = vld [vmem:[#allocation3 + $0x20] sm:$0xf]
      %v5863 = vld [vmem:[#allocation3 + $0x24] sm:$0xf]
      %v5864 = vld [vmem:[#allocation3 + $0x28] sm:$0xf]
      %v5865 = vld [vmem:[#allocation3 + $0x2c] sm:$0xf]
      %v5866 = vld [vmem:[#allocation3 + $0x30] sm:$0x3]
      %s5867 = scalar_lea.vmem %s6, 384
      %v5868 = vld [vmem:[%s5867] sm:$0xf]
      %v5869 = vld [vmem:[%s5867 + $0x4] sm:$0xf]
      %v5870 = vld [vmem:[%s5867 + $0x8] sm:$0xf]
      %v5871 = vld [vmem:[%s5867 + $0xc] sm:$0xf]
      %v5872 = vld [vmem:[%s5867 + $0x10] sm:$0xf]
      %v5873 = vld [vmem:[%s5867 + $0x14] sm:$0xf]
      %v5874 = vld [vmem:[%s5867 + $0x18] sm:$0xf]
      %v5875 = vld [vmem:[%s5867 + $0x1c] sm:$0xf]
      %v5876 = vld [vmem:[%s5867 + $0x20] sm:$0xf]
      %v5877 = vld [vmem:[%s5867 + $0x24] sm:$0xf]
      %v5878 = vld [vmem:[%s5867 + $0x28] sm:$0xf]
      %v5879 = vld [vmem:[%s5867 + $0x2c] sm:$0xf]
      %v5880 = vld [vmem:[%s5867 + $0x30] sm:$0xf]
      %v5881 = vld [vmem:[%s5867 + $0x34] sm:$0xf]
      %v5882 = vld [vmem:[%s5867 + $0x38] sm:$0xf]
      %v5883 = vld [vmem:[%s5867 + $0x3c] sm:$0xf]
      %v5895 = vunpack.c.l.b16 %v5845
      %v5896 = vunpack.c.l.b16 %v5846
      %v5897 = vunpack.c.l.b16 %v5847
      %v5898 = vunpack.c.l.b16 %v5848
      %v5899 = vunpack.c.l.b16 %v5849
      %v5900 = vunpack.c.l.b16 %v5850
      %v5901 = vunpack.c.l.b16 %v5851
      %v5902 = vunpack.c.l.b16 %v5852
      %v5903 = vunpack.c.l.b16 %v5853
      %v5904 = vunpack.c.l.b16 %v5854
      %v5905 = vunpack.c.l.b16 %v5855
      %v5906 = vpack.c.b16 %v5896, %v5895
      %v5907 = vpack.c.b16 %v5898, %v5897
      %v5908 = vpack.c.b16 %v5900, %v5899
      %v5909 = vpack.c.b16 %v5902, %v5901
      %v5910 = vpack.c.b16 %v5904, %v5903
      %v5911 = vpack.c.b16 %v5905, %v5905
      %v5912 = vrot.slane %v5906, 2
      %v5913 = vrot.slane %v5907, 2
      %v5914 = vsel %vm2754, %v5912, %v5913
      %v5915 = vrot.slane %v5908, 2
      %v5916 = vsel %vm2754, %v5913, %v5915
      %v5917 = vrot.slane %v5909, 2
      %v5918 = vsel %vm2754, %v5915, %v5917
      %v5919 = vrot.slane %v5910, 2
      %v5920 = vsel %vm2754, %v5917, %v5919
      %v5921 = vrot.slane %v5911, 2
      %v5922 = vsel %vm2754, %v5919, %v5921
      %v5944 = vunpack.c.l.b16 %v5868
      %v5945 = vunpack.c.l.b16 %v5869
      %v5946 = vunpack.c.l.b16 %v5870
      %v5947 = vunpack.c.l.b16 %v5871
      %v5948 = vunpack.c.l.b16 %v5872
      %v5949 = vunpack.c.l.b16 %v5873
      %v5950 = vunpack.c.l.b16 %v5874
      %v5951 = vunpack.c.l.b16 %v5875
      %v5952 = vunpack.c.l.b16 %v5876
      %v5953 = vunpack.c.l.b16 %v5877
      %v5954 = vunpack.c.l.b16 %v5878
      %v5955 = vunpack.c.l.b16 %v5879
      %v5956 = vunpack.c.l.b16 %v5880
      %v5957 = vunpack.c.l.b16 %v5881
      %v5958 = vunpack.c.l.b16 %v5882
      %v5959 = vunpack.c.l.b16 %v5883
      %v5960 = vpack.c.b16 %v5945, %v5944
      %v5961 = vpack.c.b16 %v5947, %v5946
      %v5962 = vpack.c.b16 %v5949, %v5948
      %v5963 = vpack.c.b16 %v5951, %v5950
      %v5964 = vpack.c.b16 %v5953, %v5952
      %v5965 = vpack.c.b16 %v5955, %v5954
      %v5966 = vpack.c.b16 %v5957, %v5956
      %v5967 = vpack.c.b16 %v5959, %v5958
      %5976 = vmatprep.subr.bf16.mxu0 0
      %5977 = vmatpush1.bf16.msra.mxu0 %v5960
      %5978 = vmatprep.subr.bf16.mxu0 0
      %5979 = vmatpush1.bf16.msra.mxu0 %v5961
      %5980 = vmatprep.subr.bf16.mxu0 0
      %5981 = vmatpush1.bf16.msra.mxu0 %v5962
      %5982 = vmatprep.subr.bf16.mxu0 0
      %5983 = vmatpush1.bf16.msra.mxu0 %v5963
      %5984 = vmatprep.subr.bf16.mxu0 0
      %5985 = vmatpush1.bf16.msra.mxu0 %v5964
      %5986 = vmatprep.subr.bf16.mxu0 0
      %5987 = vmatpush1.bf16.msra.mxu0 %v5965
      %5988 = vmatprep.subr.bf16.mxu0 0
      %5989 = vmatpush1.bf16.msra.mxu0 %v5966
      %5990 = vmatprep.subr.bf16.mxu0 0
      %5991 = vmatpush1.bf16.msra.mxu0 %v5967
      %5992 = vmatprep.subr.bf16.mxu0 0
      %5993 = vmatpush1.bf16.msra.mxu0 0
      %5994 = vmatprep.subr.bf16.mxu0 0
      %5995 = vmatpush1.bf16.msra.mxu0 0
      %5996 = vmatprep.subr.bf16.mxu0 0
      %5997 = vmatpush1.bf16.msra.mxu0 0
      %5998 = vmatprep.subr.bf16.mxu0 0
      %5999 = vmatpush1.bf16.msra.mxu0 0
      %6000 = vmatprep.subr.bf16.mxu0 0
      %6001 = vmatpush1.bf16.msra.mxu0 0
      %6002 = vmatprep.subr.bf16.mxu0 0
      %6003 = vmatpush1.bf16.msra.mxu0 0
      %6004 = vmatprep.subr.bf16.mxu0 0
      %6005 = vmatpush1.bf16.msra.mxu0 0
      %6006 = vmatprep.subr.bf16.mxu0 0
      %6007 = vmatpush1.bf16.msra.mxu0 0
      %6008 = vmatprep.mubr.bf16.mxu0 0
      %6009 = vmatmul.mubr.bf16.gmra.mrb[0].mxu0 %v5914
      %v6010 = vpop.f32.mrb[0].mxu0
      %v6011 = vadd.f32 0.0, %v6010
      %v6012 = vpop.f32.mrb[0].mxu0
      %v6013 = vpop.f32.mrb[0].mxu0
      %v6014 = vadd.f32 0.0, %v6013
      %v6015 = vpop.f32.mrb[0].mxu0
      %6016 = vmatprep.mubr.bf16.mxu0 0
      %6017 = vmatmul.mubr.bf16.gmra.mrb[0].mxu0 %v5916
      %v6018 = vpop.f32.mrb[0].mxu0
      %v6019 = vadd.f32 0.0, %v6018
      %v6020 = vpop.f32.mrb[0].mxu0
      %v6021 = vpop.f32.mrb[0].mxu0
      %v6022 = vadd.f32 0.0, %v6021
      %v6023 = vpop.f32.mrb[0].mxu0
      %6024 = vmatprep.mubr.bf16.mxu0 0
      %6025 = vmatmul.mubr.bf16.gmra.mrb[0].mxu0 %v5918
      %v6026 = vpop.f32.mrb[0].mxu0
      %v6027 = vadd.f32 0.0, %v6026
      %v6028 = vpop.f32.mrb[0].mxu0
      %v6029 = vpop.f32.mrb[0].mxu0
      %v6030 = vadd.f32 0.0, %v6029
      %v6031 = vpop.f32.mrb[0].mxu0
      %6032 = vmatprep.mubr.bf16.mxu0 0
      %6033 = vmatmul.mubr.bf16.gmra.mrb[0].mxu0 %v5920
      %v6034 = vpop.f32.mrb[0].mxu0
      %v6035 = vadd.f32 0.0, %v6034
      %v6036 = vpop.f32.mrb[0].mxu0
      %v6037 = vpop.f32.mrb[0].mxu0
      %v6038 = vadd.f32 0.0, %v6037
      %v6039 = vpop.f32.mrb[0].mxu0
      %6040 = vmatprep.mubr.bf16.mxu0 0
      %6041 = vmatmul.mubr.bf16.gmra.mrb[0].mxu0 %v5922
      %v6042 = vpop.f32.mrb[0].mxu0
      %v6043 = vadd.f32 0.0, %v6042
      %v6044 = vpop.f32.mrb[0].mxu0
      %v6045 = vpop.f32.mrb[0].mxu0
      %v6046 = vadd.f32 0.0, %v6045
      %v6047 = vpop.f32.mrb[0].mxu0
      %6048 = vdwg.mxu0
      %v6049 = vadd.f32 %v5835, %v6011
      %v6050 = vadd.f32 %v5836, %v6014
      %v6051 = vadd.f32 %v5837, %v6019
      %v6052 = vadd.f32 %v5838, %v6022
      %v6053 = vadd.f32 %v5839, %v6027
      %v6054 = vadd.f32 %v5840, %v6030
      %v6055 = vadd.f32 %v5841, %v6035
      %v6056 = vadd.f32 %v5842, %v6038
      %v6057 = vadd.f32 %v5843, %v6043
      %v6058 = vadd.f32 %v5844, %v6046
      %s6059 = scalar_lea.vmem %s7, 384
      %v6060 = vld [vmem:[%s6059] sm:$0xf]
      %v6061 = vld [vmem:[%s6059 + $0x4] sm:$0xf]
      %v6062 = vld [vmem:[%s6059 + $0x8] sm:$0xf]
      %v6063 = vld [vmem:[%s6059 + $0xc] sm:$0xf]
      %v6064 = vld [vmem:[%s6059 + $0x10] sm:$0xf]
      %v6065 = vld [vmem:[%s6059 + $0x14] sm:$0xf]
      %v6066 = vld [vmem:[%s6059 + $0x18] sm:$0xf]
      %v6067 = vld [vmem:[%s6059 + $0x1c] sm:$0xf]
      %v6068 = vld [vmem:[%s6059 + $0x20] sm:$0xf]
      %v6069 = vld [vmem:[%s6059 + $0x24] sm:$0xf]
      %v6070 = vld [vmem:[%s6059 + $0x28] sm:$0xf]
      %v6071 = vld [vmem:[%s6059 + $0x2c] sm:$0xf]
      %v6072 = vld [vmem:[%s6059 + $0x30] sm:$0xf]
      %v6073 = vld [vmem:[%s6059 + $0x34] sm:$0xf]
      %v6074 = vld [vmem:[%s6059 + $0x38] sm:$0xf]
      %v6075 = vld [vmem:[%s6059 + $0x3c] sm:$0xf]
      %v6087 = vunpack.c.l.b16 %v5856
      %v6088 = vunpack.c.l.b16 %v5857
      %v6089 = vunpack.c.l.b16 %v5858
      %v6090 = vunpack.c.l.b16 %v5859
      %v6091 = vunpack.c.l.b16 %v5860
      %v6092 = vunpack.c.l.b16 %v5861
      %v6093 = vunpack.c.l.b16 %v5862
      %v6094 = vunpack.c.l.b16 %v5863
      %v6095 = vunpack.c.l.b16 %v5864
      %v6096 = vunpack.c.l.b16 %v5865
      %v6097 = vunpack.c.l.b16 %v5866
      %v6098 = vpack.c.b16 %v6088, %v6087
      %v6099 = vpack.c.b16 %v6090, %v6089
      %v6100 = vpack.c.b16 %v6092, %v6091
      %v6101 = vpack.c.b16 %v6094, %v6093
      %v6102 = vpack.c.b16 %v6096, %v6095
      %v6103 = vpack.c.b16 %v6097, %v6097
      %v6104 = vrot.slane %v6098, 2
      %v6105 = vrot.slane %v6099, 2
      %v6106 = vsel %vm2754, %v6104, %v6105
      %v6107 = vrot.slane %v6100, 2
      %v6108 = vsel %vm2754, %v6105, %v6107
      %v6109 = vrot.slane %v6101, 2
      %v6110 = vsel %vm2754, %v6107, %v6109
      %v6111 = vrot.slane %v6102, 2
      %v6112 = vsel %vm2754, %v6109, %v6111
      %v6113 = vrot.slane %v6103, 2
      %v6114 = vsel %vm2754, %v6111, %v6113
      %v6136 = vunpack.c.l.b16 %v6060
      %v6137 = vunpack.c.l.b16 %v6061
      %v6138 = vunpack.c.l.b16 %v6062
      %v6139 = vunpack.c.l.b16 %v6063
      %v6140 = vunpack.c.l.b16 %v6064
      %v6141 = vunpack.c.l.b16 %v6065
      %v6142 = vunpack.c.l.b16 %v6066
      %v6143 = vunpack.c.l.b16 %v6067
      %v6144 = vunpack.c.l.b16 %v6068
      %v6145 = vunpack.c.l.b16 %v6069
      %v6146 = vunpack.c.l.b16 %v6070
      %v6147 = vunpack.c.l.b16 %v6071
      %v6148 = vunpack.c.l.b16 %v6072
      %v6149 = vunpack.c.l.b16 %v6073
      %v6150 = vunpack.c.l.b16 %v6074
      %v6151 = vunpack.c.l.b16 %v6075
      %v6152 = vpack.c.b16 %v6137, %v6136
      %v6153 = vpack.c.b16 %v6139, %v6138
      %v6154 = vpack.c.b16 %v6141, %v6140
      %v6155 = vpack.c.b16 %v6143, %v6142
      %v6156 = vpack.c.b16 %v6145, %v6144
      %v6157 = vpack.c.b16 %v6147, %v6146
      %v6158 = vpack.c.b16 %v6149, %v6148
      %v6159 = vpack.c.b16 %v6151, %v6150
      %6168 = vmatprep.subr.bf16.mxu0 0
      %6169 = vmatpush1.bf16.msra.mxu0 %v6152
      %6170 = vmatprep.subr.bf16.mxu0 0
      %6171 = vmatpush1.bf16.msra.mxu0 %v6153
      %6172 = vmatprep.subr.bf16.mxu0 0
      %6173 = vmatpush1.bf16.msra.mxu0 %v6154
      %6174 = vmatprep.subr.bf16.mxu0 0
      %6175 = vmatpush1.bf16.msra.mxu0 %v6155
      %6176 = vmatprep.subr.bf16.mxu0 0
      %6177 = vmatpush1.bf16.msra.mxu0 %v6156
      %6178 = vmatprep.subr.bf16.mxu0 0
      %6179 = vmatpush1.bf16.msra.mxu0 %v6157
      %6180 = vmatprep.subr.bf16.mxu0 0
      %6181 = vmatpush1.bf16.msra.mxu0 %v6158
      %6182 = vmatprep.subr.bf16.mxu0 0
      %6183 = vmatpush1.bf16.msra.mxu0 %v6159
      %6184 = vmatprep.subr.bf16.mxu0 0
      %6185 = vmatpush1.bf16.msra.mxu0 0
      %6186 = vmatprep.subr.bf16.mxu0 0
      %6187 = vmatpush1.bf16.msra.mxu0 0
      %6188 = vmatprep.subr.bf16.mxu0 0
      %6189 = vmatpush1.bf16.msra.mxu0 0
      %6190 = vmatprep.subr.bf16.mxu0 0
      %6191 = vmatpush1.bf16.msra.mxu0 0
      %6192 = vmatprep.subr.bf16.mxu0 0
      %6193 = vmatpush1.bf16.msra.mxu0 0
      %6194 = vmatprep.subr.bf16.mxu0 0
      %6195 = vmatpush1.bf16.msra.mxu0 0
      %6196 = vmatprep.subr.bf16.mxu0 0
      %6197 = vmatpush1.bf16.msra.mxu0 0
      %6198 = vmatprep.subr.bf16.mxu0 0
      %6199 = vmatpush1.bf16.msra.mxu0 0
      %6200 = vmatprep.mubr.bf16.mxu0 0
      %6201 = vmatmul.mubr.bf16.gmra.mrb[0].mxu0 %v6106
      %v6202 = vpop.f32.mrb[0].mxu0
      %v6203 = vadd.f32 0.0, %v6202
      %v6204 = vpop.f32.mrb[0].mxu0
      %v6205 = vpop.f32.mrb[0].mxu0
      %v6206 = vadd.f32 0.0, %v6205
      %v6207 = vpop.f32.mrb[0].mxu0
      %6208 = vmatprep.mubr.bf16.mxu0 0
      %6209 = vmatmul.mubr.bf16.gmra.mrb[0].mxu0 %v6108
      %v6210 = vpop.f32.mrb[0].mxu0
      %v6211 = vadd.f32 0.0, %v6210
      %v6212 = vpop.f32.mrb[0].mxu0
      %v6213 = vpop.f32.mrb[0].mxu0
      %v6214 = vadd.f32 0.0, %v6213
      %v6215 = vpop.f32.mrb[0].mxu0
      %6216 = vmatprep.mubr.bf16.mxu0 0
      %6217 = vmatmul.mubr.bf16.gmra.mrb[0].mxu0 %v6110
      %v6218 = vpop.f32.mrb[0].mxu0
      %v6219 = vadd.f32 0.0, %v6218
      %v6220 = vpop.f32.mrb[0].mxu0
      %v6221 = vpop.f32.mrb[0].mxu0
      %v6222 = vadd.f32 0.0, %v6221
      %v6223 = vpop.f32.mrb[0].mxu0
      %6224 = vmatprep.mubr.bf16.mxu0 0
      %6225 = vmatmul.mubr.bf16.gmra.mrb[0].mxu0 %v6112
      %v6226 = vpop.f32.mrb[0].mxu0
      %v6227 = vadd.f32 0.0, %v6226
      %v6228 = vpop.f32.mrb[0].mxu0
      %v6229 = vpop.f32.mrb[0].mxu0
      %v6230 = vadd.f32 0.0, %v6229
      %v6231 = vpop.f32.mrb[0].mxu0
      %6232 = vmatprep.mubr.bf16.mxu0 0
      %6233 = vmatmul.mubr.bf16.gmra.mrb[0].mxu0 %v6114
      %v6234 = vpop.f32.mrb[0].mxu0
      %v6235 = vadd.f32 0.0, %v6234
      %v6236 = vpop.f32.mrb[0].mxu0
      %v6237 = vpop.f32.mrb[0].mxu0
      %v6238 = vadd.f32 0.0, %v6237
      %v6239 = vpop.f32.mrb[0].mxu0
      %6240 = vdwg.mxu0
      %v6241 = vadd.f32 %v6049, %v6203
      %v6242 = vadd.f32 %v6050, %v6206
      %v6243 = vadd.f32 %v6051, %v6211
      %v6244 = vadd.f32 %v6052, %v6214
      %v6245 = vadd.f32 %v6053, %v6219
      %v6246 = vadd.f32 %v6054, %v6222
      %v6247 = vadd.f32 %v6055, %v6227
      %v6248 = vadd.f32 %v6056, %v6230
      %v6249 = vadd.f32 %v6057, %v6235
      %v6250 = vadd.f32 %v6058, %v6238
      %v6251 = vld [vmem:[#allocation2 + $0x30] sm:$0x7]
      %v6252 = vld [vmem:[#allocation3 + $0x30] sm:$0x7]
      %s6253 = scalar_lea.vmem %s6, 448
      %v6254 = vld [vmem:[%s6253] sm:$0xf]
      %v6255 = vld [vmem:[%s6253 + $0x4] sm:$0xf]
      %v6256 = vld [vmem:[%s6253 + $0x8] sm:$0xf]
      %v6257 = vld [vmem:[%s6253 + $0xc] sm:$0xf]
      %v6258 = vld [vmem:[%s6253 + $0x10] sm:$0xf]
      %v6259 = vld [vmem:[%s6253 + $0x14] sm:$0xf]
      %v6260 = vld [vmem:[%s6253 + $0x18] sm:$0xf]
      %v6261 = vld [vmem:[%s6253 + $0x1c] sm:$0xf]
      %v6262 = vld [vmem:[%s6253 + $0x20] sm:$0xf]
      %v6263 = vld [vmem:[%s6253 + $0x24] sm:$0xf]
      %v6264 = vld [vmem:[%s6253 + $0x28] sm:$0xf]
      %v6265 = vld [vmem:[%s6253 + $0x2c] sm:$0xf]
      %v6266 = vld [vmem:[%s6253 + $0x30] sm:$0xf]
      %v6267 = vld [vmem:[%s6253 + $0x34] sm:$0xf]
      %v6268 = vld [vmem:[%s6253 + $0x38] sm:$0xf]
      %v6269 = vld [vmem:[%s6253 + $0x3c] sm:$0xf]
      %v6271 = vunpack.c.l.b16 %v6251
      %v6272 = vpack.c.b16 %v6271, %v6271
      %v6274 = vshrl.u32 %v5906, 16
      %v6276 = vrot.slane %v6274, 2
      %v6277 = vshll.u32 %v5906, 16
      %v6279 = vrot.slane %v6277, 3
      %v6280 = vor.u32 %v6276, %v6279
      %v6282 = vshrl.u32 %v5907, 16
      %v6284 = vrot.slane %v6282, 2
      %v6285 = vshll.u32 %v5907, 16
      %v6287 = vrot.slane %v6285, 3
      %v6288 = vor.u32 %v6284, %v6287
      %v6289 = vsel %vm3034, %v6280, %v6288
      %v6291 = vshrl.u32 %v5908, 16
      %v6293 = vrot.slane %v6291, 2
      %v6294 = vshll.u32 %v5908, 16
      %v6296 = vrot.slane %v6294, 3
      %v6297 = vor.u32 %v6293, %v6296
      %v6298 = vsel %vm3034, %v6288, %v6297
      %v6300 = vshrl.u32 %v5909, 16
      %v6302 = vrot.slane %v6300, 2
      %v6303 = vshll.u32 %v5909, 16
      %v6305 = vrot.slane %v6303, 3
      %v6306 = vor.u32 %v6302, %v6305
      %v6307 = vsel %vm3034, %v6297, %v6306
      %v6309 = vshrl.u32 %v5910, 16
      %v6311 = vrot.slane %v6309, 2
      %v6312 = vshll.u32 %v5910, 16
      %v6314 = vrot.slane %v6312, 3
      %v6315 = vor.u32 %v6311, %v6314
      %v6316 = vsel %vm3034, %v6306, %v6315
      %v6318 = vshrl.u32 %v6272, 16
      %v6320 = vrot.slane %v6318, 2
      %v6321 = vshll.u32 %v6272, 16
      %v6323 = vrot.slane %v6321, 3
      %v6324 = vor.u32 %v6320, %v6323
      %v6325 = vsel %vm3034, %v6315, %v6324
      %v6347 = vunpack.c.l.b16 %v6254
      %v6348 = vunpack.c.l.b16 %v6255
      %v6349 = vunpack.c.l.b16 %v6256
      %v6350 = vunpack.c.l.b16 %v6257
      %v6351 = vunpack.c.l.b16 %v6258
      %v6352 = vunpack.c.l.b16 %v6259
      %v6353 = vunpack.c.l.b16 %v6260
      %v6354 = vunpack.c.l.b16 %v6261
      %v6355 = vunpack.c.l.b16 %v6262
      %v6356 = vunpack.c.l.b16 %v6263
      %v6357 = vunpack.c.l.b16 %v6264
      %v6358 = vunpack.c.l.b16 %v6265
      %v6359 = vunpack.c.l.b16 %v6266
      %v6360 = vunpack.c.l.b16 %v6267
      %v6361 = vunpack.c.l.b16 %v6268
      %v6362 = vunpack.c.l.b16 %v6269
      %v6363 = vpack.c.b16 %v6348, %v6347
      %v6364 = vpack.c.b16 %v6350, %v6349
      %v6365 = vpack.c.b16 %v6352, %v6351
      %v6366 = vpack.c.b16 %v6354, %v6353
      %v6367 = vpack.c.b16 %v6356, %v6355
      %v6368 = vpack.c.b16 %v6358, %v6357
      %v6369 = vpack.c.b16 %v6360, %v6359
      %v6370 = vpack.c.b16 %v6362, %v6361
      %6379 = vmatprep.subr.bf16.mxu0 0
      %6380 = vmatpush1.bf16.msra.mxu0 %v6363
      %6381 = vmatprep.subr.bf16.mxu0 0
      %6382 = vmatpush1.bf16.msra.mxu0 %v6364
      %6383 = vmatprep.subr.bf16.mxu0 0
      %6384 = vmatpush1.bf16.msra.mxu0 %v6365
      %6385 = vmatprep.subr.bf16.mxu0 0
      %6386 = vmatpush1.bf16.msra.mxu0 %v6366
      %6387 = vmatprep.subr.bf16.mxu0 0
      %6388 = vmatpush1.bf16.msra.mxu0 %v6367
      %6389 = vmatprep.subr.bf16.mxu0 0
      %6390 = vmatpush1.bf16.msra.mxu0 %v6368
      %6391 = vmatprep.subr.bf16.mxu0 0
      %6392 = vmatpush1.bf16.msra.mxu0 %v6369
      %6393 = vmatprep.subr.bf16.mxu0 0
      %6394 = vmatpush1.bf16.msra.mxu0 %v6370
      %6395 = vmatprep.subr.bf16.mxu0 0
      %6396 = vmatpush1.bf16.msra.mxu0 0
      %6397 = vmatprep.subr.bf16.mxu0 0
      %6398 = vmatpush1.bf16.msra.mxu0 0
      %6399 = vmatprep.subr.bf16.mxu0 0
      %6400 = vmatpush1.bf16.msra.mxu0 0
      %6401 = vmatprep.subr.bf16.mxu0 0
      %6402 = vmatpush1.bf16.msra.mxu0 0
      %6403 = vmatprep.subr.bf16.mxu0 0
      %6404 = vmatpush1.bf16.msra.mxu0 0
      %6405 = vmatprep.subr.bf16.mxu0 0
      %6406 = vmatpush1.bf16.msra.mxu0 0
      %6407 = vmatprep.subr.bf16.mxu0 0
      %6408 = vmatpush1.bf16.msra.mxu0 0
      %6409 = vmatprep.subr.bf16.mxu0 0
      %6410 = vmatpush1.bf16.msra.mxu0 0
      %6411 = vmatprep.mubr.bf16.mxu0 0
      %6412 = vmatmul.mubr.bf16.gmra.mrb[0].mxu0 %v6289
      %v6413 = vpop.f32.mrb[0].mxu0
      %v6414 = vadd.f32 0.0, %v6413
      %v6415 = vpop.f32.mrb[0].mxu0
      %v6416 = vpop.f32.mrb[0].mxu0
      %v6417 = vadd.f32 0.0, %v6416
      %v6418 = vpop.f32.mrb[0].mxu0
      %6419 = vmatprep.mubr.bf16.mxu0 0
      %6420 = vmatmul.mubr.bf16.gmra.mrb[0].mxu0 %v6298
      %v6421 = vpop.f32.mrb[0].mxu0
      %v6422 = vadd.f32 0.0, %v6421
      %v6423 = vpop.f32.mrb[0].mxu0
      %v6424 = vpop.f32.mrb[0].mxu0
      %v6425 = vadd.f32 0.0, %v6424
      %v6426 = vpop.f32.mrb[0].mxu0
      %6427 = vmatprep.mubr.bf16.mxu0 0
      %6428 = vmatmul.mubr.bf16.gmra.mrb[0].mxu0 %v6307
      %v6429 = vpop.f32.mrb[0].mxu0
      %v6430 = vadd.f32 0.0, %v6429
      %v6431 = vpop.f32.mrb[0].mxu0
      %v6432 = vpop.f32.mrb[0].mxu0
      %v6433 = vadd.f32 0.0, %v6432
      %v6434 = vpop.f32.mrb[0].mxu0
      %6435 = vmatprep.mubr.bf16.mxu0 0
      %6436 = vmatmul.mubr.bf16.gmra.mrb[0].mxu0 %v6316
      %v6437 = vpop.f32.mrb[0].mxu0
      %v6438 = vadd.f32 0.0, %v6437
      %v6439 = vpop.f32.mrb[0].mxu0
      %v6440 = vpop.f32.mrb[0].mxu0
      %v6441 = vadd.f32 0.0, %v6440
      %v6442 = vpop.f32.mrb[0].mxu0
      %6443 = vmatprep.mubr.bf16.mxu0 0
      %6444 = vmatmul.mubr.bf16.gmra.mrb[0].mxu0 %v6325
      %v6445 = vpop.f32.mrb[0].mxu0
      %v6446 = vadd.f32 0.0, %v6445
      %v6447 = vpop.f32.mrb[0].mxu0
      %v6448 = vpop.f32.mrb[0].mxu0
      %v6449 = vadd.f32 0.0, %v6448
      %v6450 = vpop.f32.mrb[0].mxu0
      %6451 = vdwg.mxu0
      %v6452 = vadd.f32 %v6241, %v6414
      %v6453 = vadd.f32 %v6242, %v6417
      %v6454 = vadd.f32 %v6243, %v6422
      %v6455 = vadd.f32 %v6244, %v6425
      %v6456 = vadd.f32 %v6245, %v6430
      %v6457 = vadd.f32 %v6246, %v6433
      %v6458 = vadd.f32 %v6247, %v6438
      %v6459 = vadd.f32 %v6248, %v6441
      %v6460 = vadd.f32 %v6249, %v6446
      %v6461 = vadd.f32 %v6250, %v6449
      %s6462 = scalar_lea.vmem %s7, 448
      %v6463 = vld [vmem:[%s6462] sm:$0xf]
      %v6464 = vld [vmem:[%s6462 + $0x4] sm:$0xf]
      %v6465 = vld [vmem:[%s6462 + $0x8] sm:$0xf]
      %v6466 = vld [vmem:[%s6462 + $0xc] sm:$0xf]
      %v6467 = vld [vmem:[%s6462 + $0x10] sm:$0xf]
      %v6468 = vld [vmem:[%s6462 + $0x14] sm:$0xf]
      %v6469 = vld [vmem:[%s6462 + $0x18] sm:$0xf]
      %v6470 = vld [vmem:[%s6462 + $0x1c] sm:$0xf]
      %v6471 = vld [vmem:[%s6462 + $0x20] sm:$0xf]
      %v6472 = vld [vmem:[%s6462 + $0x24] sm:$0xf]
      %v6473 = vld [vmem:[%s6462 + $0x28] sm:$0xf]
      %v6474 = vld [vmem:[%s6462 + $0x2c] sm:$0xf]
      %v6475 = vld [vmem:[%s6462 + $0x30] sm:$0xf]
      %v6476 = vld [vmem:[%s6462 + $0x34] sm:$0xf]
      %v6477 = vld [vmem:[%s6462 + $0x38] sm:$0xf]
      %v6478 = vld [vmem:[%s6462 + $0x3c] sm:$0xf]
      %v6480 = vunpack.c.l.b16 %v6252
      %v6481 = vpack.c.b16 %v6480, %v6480
      %v6483 = vshrl.u32 %v6098, 16
      %v6485 = vrot.slane %v6483, 2
      %v6486 = vshll.u32 %v6098, 16
      %v6488 = vrot.slane %v6486, 3
      %v6489 = vor.u32 %v6485, %v6488
      %v6491 = vshrl.u32 %v6099, 16
      %v6493 = vrot.slane %v6491, 2
      %v6494 = vshll.u32 %v6099, 16
      %v6496 = vrot.slane %v6494, 3
      %v6497 = vor.u32 %v6493, %v6496
      %v6498 = vsel %vm3034, %v6489, %v6497
      %v6500 = vshrl.u32 %v6100, 16
      %v6502 = vrot.slane %v6500, 2
      %v6503 = vshll.u32 %v6100, 16
      %v6505 = vrot.slane %v6503, 3
      %v6506 = vor.u32 %v6502, %v6505
      %v6507 = vsel %vm3034, %v6497, %v6506
      %v6509 = vshrl.u32 %v6101, 16
      %v6511 = vrot.slane %v6509, 2
      %v6512 = vshll.u32 %v6101, 16
      %v6514 = vrot.slane %v6512, 3
      %v6515 = vor.u32 %v6511, %v6514
      %v6516 = vsel %vm3034, %v6506, %v6515
      %v6518 = vshrl.u32 %v6102, 16
      %v6520 = vrot.slane %v6518, 2
      %v6521 = vshll.u32 %v6102, 16
      %v6523 = vrot.slane %v6521, 3
      %v6524 = vor.u32 %v6520, %v6523
      %v6525 = vsel %vm3034, %v6515, %v6524
      %v6527 = vshrl.u32 %v6481, 16
      %v6529 = vrot.slane %v6527, 2
      %v6530 = vshll.u32 %v6481, 16
      %v6532 = vrot.slane %v6530, 3
      %v6533 = vor.u32 %v6529, %v6532
      %v6534 = vsel %vm3034, %v6524, %v6533
      %v6556 = vunpack.c.l.b16 %v6463
      %v6557 = vunpack.c.l.b16 %v6464
      %v6558 = vunpack.c.l.b16 %v6465
      %v6559 = vunpack.c.l.b16 %v6466
      %v6560 = vunpack.c.l.b16 %v6467
      %v6561 = vunpack.c.l.b16 %v6468
      %v6562 = vunpack.c.l.b16 %v6469
      %v6563 = vunpack.c.l.b16 %v6470
      %v6564 = vunpack.c.l.b16 %v6471
      %v6565 = vunpack.c.l.b16 %v6472
      %v6566 = vunpack.c.l.b16 %v6473
      %v6567 = vunpack.c.l.b16 %v6474
      %v6568 = vunpack.c.l.b16 %v6475
      %v6569 = vunpack.c.l.b16 %v6476
      %v6570 = vunpack.c.l.b16 %v6477
      %v6571 = vunpack.c.l.b16 %v6478
      %v6572 = vpack.c.b16 %v6557, %v6556
      %v6573 = vpack.c.b16 %v6559, %v6558
      %v6574 = vpack.c.b16 %v6561, %v6560
      %v6575 = vpack.c.b16 %v6563, %v6562
      %v6576 = vpack.c.b16 %v6565, %v6564
      %v6577 = vpack.c.b16 %v6567, %v6566
      %v6578 = vpack.c.b16 %v6569, %v6568
      %v6579 = vpack.c.b16 %v6571, %v6570
      %6588 = vmatprep.subr.bf16.mxu0 0
      %6589 = vmatpush1.bf16.msra.mxu0 %v6572
      %6590 = vmatprep.subr.bf16.mxu0 0
      %6591 = vmatpush1.bf16.msra.mxu0 %v6573
      %6592 = vmatprep.subr.bf16.mxu0 0
      %6593 = vmatpush1.bf16.msra.mxu0 %v6574
      %6594 = vmatprep.subr.bf16.mxu0 0
      %6595 = vmatpush1.bf16.msra.mxu0 %v6575
      %6596 = vmatprep.subr.bf16.mxu0 0
      %6597 = vmatpush1.bf16.msra.mxu0 %v6576
      %6598 = vmatprep.subr.bf16.mxu0 0
      %6599 = vmatpush1.bf16.msra.mxu0 %v6577
      %6600 = vmatprep.subr.bf16.mxu0 0
      %6601 = vmatpush1.bf16.msra.mxu0 %v6578
      %6602 = vmatprep.subr.bf16.mxu0 0
      %6603 = vmatpush1.bf16.msra.mxu0 %v6579
      %6604 = vmatprep.subr.bf16.mxu0 0
      %6605 = vmatpush1.bf16.msra.mxu0 0
      %6606 = vmatprep.subr.bf16.mxu0 0
      %6607 = vmatpush1.bf16.msra.mxu0 0
      %6608 = vmatprep.subr.bf16.mxu0 0
      %6609 = vmatpush1.bf16.msra.mxu0 0
      %6610 = vmatprep.subr.bf16.mxu0 0
      %6611 = vmatpush1.bf16.msra.mxu0 0
      %6612 = vmatprep.subr.bf16.mxu0 0
      %6613 = vmatpush1.bf16.msra.mxu0 0
      %6614 = vmatprep.subr.bf16.mxu0 0
      %6615 = vmatpush1.bf16.msra.mxu0 0
      %6616 = vmatprep.subr.bf16.mxu0 0
      %6617 = vmatpush1.bf16.msra.mxu0 0
      %6618 = vmatprep.subr.bf16.mxu0 0
      %6619 = vmatpush1.bf16.msra.mxu0 0
      %6620 = vmatprep.mubr.bf16.mxu0 0
      %6621 = vmatmul.mubr.bf16.gmra.mrb[0].mxu0 %v6498
      %v6622 = vpop.f32.mrb[0].mxu0
      %v6623 = vadd.f32 0.0, %v6622
      %v6624 = vpop.f32.mrb[0].mxu0
      %v6625 = vpop.f32.mrb[0].mxu0
      %v6626 = vadd.f32 0.0, %v6625
      %v6627 = vpop.f32.mrb[0].mxu0
      %6628 = vmatprep.mubr.bf16.mxu0 0
      %6629 = vmatmul.mubr.bf16.gmra.mrb[0].mxu0 %v6507
      %v6630 = vpop.f32.mrb[0].mxu0
      %v6631 = vadd.f32 0.0, %v6630
      %v6632 = vpop.f32.mrb[0].mxu0
      %v6633 = vpop.f32.mrb[0].mxu0
      %v6634 = vadd.f32 0.0, %v6633
      %v6635 = vpop.f32.mrb[0].mxu0
      %6636 = vmatprep.mubr.bf16.mxu0 0
      %6637 = vmatmul.mubr.bf16.gmra.mrb[0].mxu0 %v6516
      %v6638 = vpop.f32.mrb[0].mxu0
      %v6639 = vadd.f32 0.0, %v6638
      %v6640 = vpop.f32.mrb[0].mxu0
      %v6641 = vpop.f32.mrb[0].mxu0
      %v6642 = vadd.f32 0.0, %v6641
      %v6643 = vpop.f32.mrb[0].mxu0
      %6644 = vmatprep.mubr.bf16.mxu0 0
      %6645 = vmatmul.mubr.bf16.gmra.mrb[0].mxu0 %v6525
      %v6646 = vpop.f32.mrb[0].mxu0
      %v6647 = vadd.f32 0.0, %v6646
      %v6648 = vpop.f32.mrb[0].mxu0
      %v6649 = vpop.f32.mrb[0].mxu0
      %v6650 = vadd.f32 0.0, %v6649
      %v6651 = vpop.f32.mrb[0].mxu0
      %6652 = vmatprep.mubr.bf16.mxu0 0
      %6653 = vmatmul.mubr.bf16.gmra.mrb[0].mxu0 %v6534
      %v6654 = vpop.f32.mrb[0].mxu0
      %v6655 = vadd.f32 0.0, %v6654
      %v6656 = vpop.f32.mrb[0].mxu0
      %v6657 = vpop.f32.mrb[0].mxu0
      %v6658 = vadd.f32 0.0, %v6657
      %v6659 = vpop.f32.mrb[0].mxu0
      %6660 = vdwg.mxu0
      %v6661 = vadd.f32 %v6452, %v6623
      %v6662 = vadd.f32 %v6453, %v6626
      %v6663 = vadd.f32 %v6454, %v6631
      %v6664 = vadd.f32 %v6455, %v6634
      %v6665 = vadd.f32 %v6456, %v6639
      %v6666 = vadd.f32 %v6457, %v6642
      %v6667 = vadd.f32 %v6458, %v6647
      %v6668 = vadd.f32 %v6459, %v6650
      %v6669 = vadd.f32 %v6460, %v6655
      %v6670 = vadd.f32 %v6461, %v6658
      %v6671 = vld [vmem:[#allocation2 + $0x8] sm:$0x8]
      %v6672 = vld [vmem:[#allocation3 + $0x8] sm:$0x8]
      %s6673 = scalar_lea.vmem %s6, 512
      %v6674 = vld [vmem:[%s6673] sm:$0xf]
      %v6675 = vld [vmem:[%s6673 + $0x4] sm:$0xf]
      %v6676 = vld [vmem:[%s6673 + $0x8] sm:$0xf]
      %v6677 = vld [vmem:[%s6673 + $0xc] sm:$0xf]
      %v6678 = vld [vmem:[%s6673 + $0x10] sm:$0xf]
      %v6679 = vld [vmem:[%s6673 + $0x14] sm:$0xf]
      %v6680 = vld [vmem:[%s6673 + $0x18] sm:$0xf]
      %v6681 = vld [vmem:[%s6673 + $0x1c] sm:$0xf]
      %v6682 = vld [vmem:[%s6673 + $0x20] sm:$0xf]
      %v6683 = vld [vmem:[%s6673 + $0x24] sm:$0xf]
      %v6684 = vld [vmem:[%s6673 + $0x28] sm:$0xf]
      %v6685 = vld [vmem:[%s6673 + $0x2c] sm:$0xf]
      %v6686 = vld [vmem:[%s6673 + $0x30] sm:$0xf]
      %v6687 = vld [vmem:[%s6673 + $0x34] sm:$0xf]
      %v6688 = vld [vmem:[%s6673 + $0x38] sm:$0xf]
      %v6689 = vld [vmem:[%s6673 + $0x3c] sm:$0xf]
      %v6691 = vunpack.c.l.b16 %v6671
      %v6692 = vpack.c.b16 %v5896, %v6691
      %v6693 = vrot.slane %v6692, 3
      %v6694 = vrot.slane %v5907, 3
      %v6695 = vsel %vm3199, %v6693, %v6694
      %v6696 = vrot.slane %v5908, 3
      %v6697 = vsel %vm3199, %v6694, %v6696
      %v6698 = vrot.slane %v5909, 3
      %v6699 = vsel %vm3199, %v6696, %v6698
      %v6700 = vrot.slane %v5910, 3
      %v6701 = vsel %vm3199, %v6698, %v6700
      %v6702 = vrot.slane %v6272, 3
      %v6703 = vsel %vm3199, %v6700, %v6702
      %v6725 = vunpack.c.l.b16 %v6674
      %v6726 = vunpack.c.l.b16 %v6675
      %v6727 = vunpack.c.l.b16 %v6676
      %v6728 = vunpack.c.l.b16 %v6677
      %v6729 = vunpack.c.l.b16 %v6678
      %v6730 = vunpack.c.l.b16 %v6679
      %v6731 = vunpack.c.l.b16 %v6680
      %v6732 = vunpack.c.l.b16 %v6681
      %v6733 = vunpack.c.l.b16 %v6682
      %v6734 = vunpack.c.l.b16 %v6683
      %v6735 = vunpack.c.l.b16 %v6684
      %v6736 = vunpack.c.l.b16 %v6685
      %v6737 = vunpack.c.l.b16 %v6686
      %v6738 = vunpack.c.l.b16 %v6687
      %v6739 = vunpack.c.l.b16 %v6688
      %v6740 = vunpack.c.l.b16 %v6689
      %v6741 = vpack.c.b16 %v6726, %v6725
      %v6742 = vpack.c.b16 %v6728, %v6727
      %v6743 = vpack.c.b16 %v6730, %v6729
      %v6744 = vpack.c.b16 %v6732, %v6731
      %v6745 = vpack.c.b16 %v6734, %v6733
      %v6746 = vpack.c.b16 %v6736, %v6735
      %v6747 = vpack.c.b16 %v6738, %v6737
      %v6748 = vpack.c.b16 %v6740, %v6739
      %6757 = vmatprep.subr.bf16.mxu0 0
      %6758 = vmatpush1.bf16.msra.mxu0 %v6741
      %6759 = vmatprep.subr.bf16.mxu0 0
      %6760 = vmatpush1.bf16.msra.mxu0 %v6742
      %6761 = vmatprep.subr.bf16.mxu0 0
      %6762 = vmatpush1.bf16.msra.mxu0 %v6743
      %6763 = vmatprep.subr.bf16.mxu0 0
      %6764 = vmatpush1.bf16.msra.mxu0 %v6744
      %6765 = vmatprep.subr.bf16.mxu0 0
      %6766 = vmatpush1.bf16.msra.mxu0 %v6745
      %6767 = vmatprep.subr.bf16.mxu0 0
      %6768 = vmatpush1.bf16.msra.mxu0 %v6746
      %6769 = vmatprep.subr.bf16.mxu0 0
      %6770 = vmatpush1.bf16.msra.mxu0 %v6747
      %6771 = vmatprep.subr.bf16.mxu0 0
      %6772 = vmatpush1.bf16.msra.mxu0 %v6748
      %6773 = vmatprep.subr.bf16.mxu0 0
      %6774 = vmatpush1.bf16.msra.mxu0 0
      %6775 = vmatprep.subr.bf16.mxu0 0
      %6776 = vmatpush1.bf16.msra.mxu0 0
      %6777 = vmatprep.subr.bf16.mxu0 0
      %6778 = vmatpush1.bf16.msra.mxu0 0
      %6779 = vmatprep.subr.bf16.mxu0 0
      %6780 = vmatpush1.bf16.msra.mxu0 0
      %6781 = vmatprep.subr.bf16.mxu0 0
      %6782 = vmatpush1.bf16.msra.mxu0 0
      %6783 = vmatprep.subr.bf16.mxu0 0
      %6784 = vmatpush1.bf16.msra.mxu0 0
      %6785 = vmatprep.subr.bf16.mxu0 0
      %6786 = vmatpush1.bf16.msra.mxu0 0
      %6787 = vmatprep.subr.bf16.mxu0 0
      %6788 = vmatpush1.bf16.msra.mxu0 0
      %6789 = vmatprep.mubr.bf16.mxu0 0
      %6790 = vmatmul.mubr.bf16.gmra.mrb[0].mxu0 %v6695
      %v6791 = vpop.f32.mrb[0].mxu0
      %v6792 = vadd.f32 0.0, %v6791
      %v6793 = vpop.f32.mrb[0].mxu0
      %v6794 = vpop.f32.mrb[0].mxu0
      %v6795 = vadd.f32 0.0, %v6794
      %v6796 = vpop.f32.mrb[0].mxu0
      %6797 = vmatprep.mubr.bf16.mxu0 0
      %6798 = vmatmul.mubr.bf16.gmra.mrb[0].mxu0 %v6697
      %v6799 = vpop.f32.mrb[0].mxu0
      %v6800 = vadd.f32 0.0, %v6799
      %v6801 = vpop.f32.mrb[0].mxu0
      %v6802 = vpop.f32.mrb[0].mxu0
      %v6803 = vadd.f32 0.0, %v6802
      %v6804 = vpop.f32.mrb[0].mxu0
      %6805 = vmatprep.mubr.bf16.mxu0 0
      %6806 = vmatmul.mubr.bf16.gmra.mrb[0].mxu0 %v6699
      %v6807 = vpop.f32.mrb[0].mxu0
      %v6808 = vadd.f32 0.0, %v6807
      %v6809 = vpop.f32.mrb[0].mxu0
      %v6810 = vpop.f32.mrb[0].mxu0
      %v6811 = vadd.f32 0.0, %v6810
      %v6812 = vpop.f32.mrb[0].mxu0
      %6813 = vmatprep.mubr.bf16.mxu0 0
      %6814 = vmatmul.mubr.bf16.gmra.mrb[0].mxu0 %v6701
      %v6815 = vpop.f32.mrb[0].mxu0
      %v6816 = vadd.f32 0.0, %v6815
      %v6817 = vpop.f32.mrb[0].mxu0
      %v6818 = vpop.f32.mrb[0].mxu0
      %v6819 = vadd.f32 0.0, %v6818
      %v6820 = vpop.f32.mrb[0].mxu0
      %6821 = vmatprep.mubr.bf16.mxu0 0
      %6822 = vmatmul.mubr.bf16.gmra.mrb[0].mxu0 %v6703
      %v6823 = vpop.f32.mrb[0].mxu0
      %v6824 = vadd.f32 0.0, %v6823
      %v6825 = vpop.f32.mrb[0].mxu0
      %v6826 = vpop.f32.mrb[0].mxu0
      %v6827 = vadd.f32 0.0, %v6826
      %v6828 = vpop.f32.mrb[0].mxu0
      %6829 = vdwg.mxu0
      %v6830 = vadd.f32 %v6661, %v6792
      %v6831 = vadd.f32 %v6662, %v6795
      %v6832 = vadd.f32 %v6663, %v6800
      %v6833 = vadd.f32 %v6664, %v6803
      %v6834 = vadd.f32 %v6665, %v6808
      %v6835 = vadd.f32 %v6666, %v6811
      %v6836 = vadd.f32 %v6667, %v6816
      %v6837 = vadd.f32 %v6668, %v6819
      %v6838 = vadd.f32 %v6669, %v6824
      %v6839 = vadd.f32 %v6670, %v6827
      %s6840 = scalar_lea.vmem %s7, 512
      %v6841 = vld [vmem:[%s6840] sm:$0xf]
      %v6842 = vld [vmem:[%s6840 + $0x4] sm:$0xf]
      %v6843 = vld [vmem:[%s6840 + $0x8] sm:$0xf]
      %v6844 = vld [vmem:[%s6840 + $0xc] sm:$0xf]
      %v6845 = vld [vmem:[%s6840 + $0x10] sm:$0xf]
      %v6846 = vld [vmem:[%s6840 + $0x14] sm:$0xf]
      %v6847 = vld [vmem:[%s6840 + $0x18] sm:$0xf]
      %v6848 = vld [vmem:[%s6840 + $0x1c] sm:$0xf]
      %v6849 = vld [vmem:[%s6840 + $0x20] sm:$0xf]
      %v6850 = vld [vmem:[%s6840 + $0x24] sm:$0xf]
      %v6851 = vld [vmem:[%s6840 + $0x28] sm:$0xf]
      %v6852 = vld [vmem:[%s6840 + $0x2c] sm:$0xf]
      %v6853 = vld [vmem:[%s6840 + $0x30] sm:$0xf]
      %v6854 = vld [vmem:[%s6840 + $0x34] sm:$0xf]
      %v6855 = vld [vmem:[%s6840 + $0x38] sm:$0xf]
      %v6856 = vld [vmem:[%s6840 + $0x3c] sm:$0xf]
      %v6858 = vunpack.c.l.b16 %v6672
      %v6859 = vpack.c.b16 %v6088, %v6858
      %v6860 = vrot.slane %v6859, 3
      %v6861 = vrot.slane %v6099, 3
      %v6862 = vsel %vm3199, %v6860, %v6861
      %v6863 = vrot.slane %v6100, 3
      %v6864 = vsel %vm3199, %v6861, %v6863
      %v6865 = vrot.slane %v6101, 3
      %v6866 = vsel %vm3199, %v6863, %v6865
      %v6867 = vrot.slane %v6102, 3
      %v6868 = vsel %vm3199, %v6865, %v6867
      %v6869 = vrot.slane %v6481, 3
      %v6870 = vsel %vm3199, %v6867, %v6869
      %v6892 = vunpack.c.l.b16 %v6841
      %v6893 = vunpack.c.l.b16 %v6842
      %v6894 = vunpack.c.l.b16 %v6843
      %v6895 = vunpack.c.l.b16 %v6844
      %v6896 = vunpack.c.l.b16 %v6845
      %v6897 = vunpack.c.l.b16 %v6846
      %v6898 = vunpack.c.l.b16 %v6847
      %v6899 = vunpack.c.l.b16 %v6848
      %v6900 = vunpack.c.l.b16 %v6849
      %v6901 = vunpack.c.l.b16 %v6850
      %v6902 = vunpack.c.l.b16 %v6851
      %v6903 = vunpack.c.l.b16 %v6852
      %v6904 = vunpack.c.l.b16 %v6853
      %v6905 = vunpack.c.l.b16 %v6854
      %v6906 = vunpack.c.l.b16 %v6855
      %v6907 = vunpack.c.l.b16 %v6856
      %v6908 = vpack.c.b16 %v6893, %v6892
      %v6909 = vpack.c.b16 %v6895, %v6894
      %v6910 = vpack.c.b16 %v6897, %v6896
      %v6911 = vpack.c.b16 %v6899, %v6898
      %v6912 = vpack.c.b16 %v6901, %v6900
      %v6913 = vpack.c.b16 %v6903, %v6902
      %v6914 = vpack.c.b16 %v6905, %v6904
      %v6915 = vpack.c.b16 %v6907, %v6906
      %6924 = vmatprep.subr.bf16.mxu0 0
      %6925 = vmatpush1.bf16.msra.mxu0 %v6908
      %6926 = vmatprep.subr.bf16.mxu0 0
      %6927 = vmatpush1.bf16.msra.mxu0 %v6909
      %6928 = vmatprep.subr.bf16.mxu0 0
      %6929 = vmatpush1.bf16.msra.mxu0 %v6910
      %6930 = vmatprep.subr.bf16.mxu0 0
      %6931 = vmatpush1.bf16.msra.mxu0 %v6911
      %6932 = vmatprep.subr.bf16.mxu0 0
      %6933 = vmatpush1.bf16.msra.mxu0 %v6912
      %6934 = vmatprep.subr.bf16.mxu0 0
      %6935 = vmatpush1.bf16.msra.mxu0 %v6913
      %6936 = vmatprep.subr.bf16.mxu0 0
      %6937 = vmatpush1.bf16.msra.mxu0 %v6914
      %6938 = vmatprep.subr.bf16.mxu0 0
      %6939 = vmatpush1.bf16.msra.mxu0 %v6915
      %6940 = vmatprep.subr.bf16.mxu0 0
      %6941 = vmatpush1.bf16.msra.mxu0 0
      %6942 = vmatprep.subr.bf16.mxu0 0
      %6943 = vmatpush1.bf16.msra.mxu0 0
      %6944 = vmatprep.subr.bf16.mxu0 0
      %6945 = vmatpush1.bf16.msra.mxu0 0
      %6946 = vmatprep.subr.bf16.mxu0 0
      %6947 = vmatpush1.bf16.msra.mxu0 0
      %6948 = vmatprep.subr.bf16.mxu0 0
      %6949 = vmatpush1.bf16.msra.mxu0 0
      %6950 = vmatprep.subr.bf16.mxu0 0
      %6951 = vmatpush1.bf16.msra.mxu0 0
      %6952 = vmatprep.subr.bf16.mxu0 0
      %6953 = vmatpush1.bf16.msra.mxu0 0
      %6954 = vmatprep.subr.bf16.mxu0 0
      %6955 = vmatpush1.bf16.msra.mxu0 0
      %6956 = vmatprep.mubr.bf16.mxu0 0
      %6957 = vmatmul.mubr.bf16.gmra.mrb[0].mxu0 %v6862
      %v6958 = vpop.f32.mrb[0].mxu0
      %v6959 = vadd.f32 0.0, %v6958
      %v6960 = vpop.f32.mrb[0].mxu0
      %v6961 = vpop.f32.mrb[0].mxu0
      %v6962 = vadd.f32 0.0, %v6961
      %v6963 = vpop.f32.mrb[0].mxu0
      %6964 = vmatprep.mubr.bf16.mxu0 0
      %6965 = vmatmul.mubr.bf16.gmra.mrb[0].mxu0 %v6864
      %v6966 = vpop.f32.mrb[0].mxu0
      %v6967 = vadd.f32 0.0, %v6966
      %v6968 = vpop.f32.mrb[0].mxu0
      %v6969 = vpop.f32.mrb[0].mxu0
      %v6970 = vadd.f32 0.0, %v6969
      %v6971 = vpop.f32.mrb[0].mxu0
      %6972 = vmatprep.mubr.bf16.mxu0 0
      %6973 = vmatmul.mubr.bf16.gmra.mrb[0].mxu0 %v6866
      %v6974 = vpop.f32.mrb[0].mxu0
      %v6975 = vadd.f32 0.0, %v6974
      %v6976 = vpop.f32.mrb[0].mxu0
      %v6977 = vpop.f32.mrb[0].mxu0
      %v6978 = vadd.f32 0.0, %v6977
      %v6979 = vpop.f32.mrb[0].mxu0
      %6980 = vmatprep.mubr.bf16.mxu0 0
      %6981 = vmatmul.mubr.bf16.gmra.mrb[0].mxu0 %v6868
      %v6982 = vpop.f32.mrb[0].mxu0
      %v6983 = vadd.f32 0.0, %v6982
      %v6984 = vpop.f32.mrb[0].mxu0
      %v6985 = vpop.f32.mrb[0].mxu0
      %v6986 = vadd.f32 0.0, %v6985
      %v6987 = vpop.f32.mrb[0].mxu0
      %6988 = vmatprep.mubr.bf16.mxu0 0
      %6989 = vmatmul.mubr.bf16.gmra.mrb[0].mxu0 %v6870
      %v6990 = vpop.f32.mrb[0].mxu0
      %v6991 = vadd.f32 0.0, %v6990
      %v6992 = vpop.f32.mrb[0].mxu0
      %v6993 = vpop.f32.mrb[0].mxu0
      %v6994 = vadd.f32 0.0, %v6993
      %v6995 = vpop.f32.mrb[0].mxu0
      %6996 = vdwg.mxu0
      %v6997 = vadd.f32 %v6830, %v6959
      %v6998 = vadd.f32 %v6831, %v6962
      %v6999 = vadd.f32 %v6832, %v6967
      %v7000 = vadd.f32 %v6833, %v6970
      %v7001 = vadd.f32 %v6834, %v6975
      %v7002 = vadd.f32 %v6835, %v6978
      %v7003 = vadd.f32 %v6836, %v6983
      %v7004 = vadd.f32 %v6837, %v6986
      %v7005 = vadd.f32 %v6838, %v6991
      %v7006 = vadd.f32 %v6839, %v6994
      %v7007 = vld [vmem:[%s8] sm:$0x1]
      %v7009 = vlaneseq
      %v7010 = vshrl.u32 %v7009, 7
      %v7011 = vsub.s32 0, %v7010
      %v7012 = vrot.slane %v7007, %v7011
      %v7014 = vadd.f32 %v6997, %v7012
      %v7015 = vadd.f32 %v6998, %v7012
      %v7016 = vadd.f32 %v6999, %v7012
      %v7017 = vadd.f32 %v7000, %v7012
      %v7018 = vadd.f32 %v7001, %v7012
      %v7019 = vadd.f32 %v7002, %v7012
      %v7020 = vadd.f32 %v7003, %v7012
      %v7021 = vadd.f32 %v7004, %v7012
      %v7022 = vadd.f32 %v7005, %v7012
      %v7023 = vadd.f32 %v7006, %v7012
      %v7024 = vmax.f32 %v7014, 0.0
      %v7025 = vmax.f32 %v7015, 0.0
      %v7026 = vmax.f32 %v7016, 0.0
      %v7027 = vmax.f32 %v7017, 0.0
      %v7028 = vmax.f32 %v7018, 0.0
      %v7029 = vmax.f32 %v7019, 0.0
      %v7030 = vmax.f32 %v7020, 0.0
      %v7031 = vmax.f32 %v7021, 0.0
      %v7032 = vmax.f32 %v7022, 0.0
      %v7033 = vmax.f32 %v7023, 0.0
      %7034 = vxpose.xlu0.b32.start [1/16] %v7024, 128
      %7035 = vxpose.xlu0.b32.cont [2/16] %v7025, 128
      %7036 = vxpose.xlu0.b32.cont [3/16] %v7026, 128
      %7037 = vxpose.xlu0.b32.cont [4/16] %v7027, 128
      %7038 = vxpose.xlu0.b32.cont [5/16] %v7028, 128
      %7039 = vxpose.xlu0.b32.cont [6/16] %v7029, 128
      %7040 = vxpose.xlu0.b32.cont [7/16] %v7030, 128
      %7041 = vxpose.xlu0.b32.cont [8/16] %v7031, 128
      %7042 = vxpose.xlu0.b32.cont [9/16] %v7032, 128
      %7043 = vxpose.xlu0.b32.cont [10/16] %v7033, 128
      %7044 = vxpose.xlu0.b32.cont [11/16] 0.0, 128
      %7045 = vxpose.xlu0.b32.cont [12/16] 0.0, 128
      %7046 = vxpose.xlu0.b32.cont [13/16] 0.0, 128
      %7047 = vxpose.xlu0.b32.cont [14/16] 0.0, 128
      %7048 = vxpose.xlu0.b32.cont [15/16] 0.0, 128
      %7049 = vxpose.xlu0.b32.end [16/16] 0.0, 128
      %v7050 = vpop.trf.xlu0
      %v7051 = vpop.trf.xlu0
      %v7052 = vpop.trf.xlu0
      %v7053 = vpop.trf.xlu0
      %v7054 = vpop.trf.xlu0
      %v7055 = vpop.trf.xlu0
      %v7056 = vpop.trf.xlu0
      %v7057 = vpop.trf.xlu0
      %v7058 = vpop.trf.xlu0
      %v7059 = vpop.trf.xlu0
      %v7060 = vpop.trf.xlu0
      %v7061 = vpop.trf.xlu0
      %v7062 = vpop.trf.xlu0
      %v7063 = vpop.trf.xlu0
      %v7064 = vpop.trf.xlu0
      %v7065 = vpop.trf.xlu0
      %vm7066 = vcmask 654336
      %7067 = vst.msk [vmem:[%s379] sm:$0xff] %vm7066, %v7050
      %7068 = vst.msk [vmem:[%s379 + $0x8] sm:$0xff] %vm7066, %v7051
      %7069 = vst.msk [vmem:[%s379 + $0x10] sm:$0xff] %vm7066, %v7052
      %7070 = vst.msk [vmem:[%s379 + $0x18] sm:$0xff] %vm7066, %v7053
      %p7071 = scmp.lt.s32.totalorder %s21, 1
      %s7072 = scalar_select %p7071, %s21, 1
      %s7073 = smul.addr %s7072, 4
      %s7074 = smul.addr %s7073, 8
      %s7075 = scalar_lea.vmem %s10, %s7074
      // Predicated region
      $region61: #{map_to_node_forward.1} parent=59 // pred_check
        %p7076 = pneg %p259
      $region62: #{map_to_node_forward.1} parent=59 // pred_check_branch
        %7078 = sbr.rel (%p7076) target = $region64
      $region63: #{map_to_node_forward.1} parent=59 // pred_region
        _
      $region64: #{map_to_node_forward.1} parent=59 // pred_fallthru
        _
    $region60: #{map_to_node_forward.1} parent=5 // pred_fallthru
      _
    %p7079 = scmp.le.s32.totalorder 2, %s16
    // Predicated region
    $region65: #{map_to_node_forward.1} parent=5 // pred_check
      %p7080 = pneg %p7079
    $region66: #{map_to_node_forward.1} parent=5 // pred_check_branch
      %7082 = sbr.rel (%p7080) target = $region68
    $region67: #{map_to_node_forward.1} parent=5 // pred_region
      %s7083 = ssub.s32 %s16, 2
      // Predicated region
      $region69: #{map_to_node_forward.1} parent=67 // pred_check
        %p7084 = pneg %p265
      $region70: #{map_to_node_forward.1} parent=67 // pred_check_branch
        %7086 = sbr.rel (%p7084) target = $region72
      $region71: #{map_to_node_forward.1} parent=67 // pred_region
        %p7087 = scmp.lt.s32.totalorder %s22, 1
        %s7088 = scalar_select %p7087, %s22, 1
        %s7089 = smul.addr %s7088, 4
        %s7090 = smul.addr %s7089, 8
        %s7091 = scalar_lea.vmem %s10, %s7090
      $region72: #{map_to_node_forward.1} parent=67 // pred_fallthru
        _
    $region68: #{map_to_node_forward.1} parent=5 // pred_fallthru
      _
  $region6: #{map_to_node_forward.1} parent=0 // loop_footer
    %s20 = sadd.s32 1, %s16
  $region7: #{map_to_node_forward.1} parent=0 // loop_footer_branch
    %15 = sbr.rel target = $region3
  $region8: #{map_to_node_forward.1} parent=0 // loop_exit
    _

</llo_original>
